<compile_context>
chip_gen: v7x
topology: tpu7x:2x2x1
jax: 0.10.0
libtpu: 0.0.40
codegen_flags: <defaults>
</compile_context>

<pallas_src>
import functools

import jax
import jax.numpy as jnp
from jax.experimental import pallas as pl
from jax.experimental.pallas import tpu as pltpu


# ----------------------------------------------------------------------------
# Fused attention kernel: grid = (batch, query_tile).
# ----------------------------------------------------------------------------
def _attention_kernel(*refs, num_heads, scale, qkv_bias):
    if qkv_bias:
        (xf_ref, xq_ref, wq_ref, wkv_ref, bq_ref, bkv_ref,
         wp_ref, bp_ref, o_ref, kv_scr) = refs
    else:
        xf_ref, xq_ref, wq_ref, wkv_ref, wp_ref, bp_ref, o_ref, kv_scr = refs
        bq_ref = bkv_ref = None

    c = xf_ref.shape[2]
    hd = c // num_heads
    cdt = xq_ref.dtype            # MXU operand dtype (bf16 on the bf16 path)

    # --- K/V projection for the WHOLE sequence: one full-width matmul, done
    #     once per batch element.  The query-tile axis is the inner
    #     ("arbitrary") grid axis, so this scratch carries across tiles. ------
    @pl.when(pl.program_id(1) == 0)
    def _():
        kvf = jnp.dot(xf_ref[0], wkv_ref[...],
                      preferred_element_type=jnp.float32)         # (N, 2C) f32
        if qkv_bias:
            kvf = kvf + bkv_ref[...]
        kv_scr[...] = kvf.astype(cdt)

    # --- Q projection for this query tile: one full-width matmul. ------------
    qf = jnp.dot(xq_ref[0], wq_ref[...],
                 preferred_element_type=jnp.float32)               # (tq, C) f32
    if qkv_bias:
        qf = qf + bq_ref[...]
    qf = (qf * scale).astype(cdt)      # scale folded into q: tq*C ops, not tq*N

    # --- Per-head attention.  Scores are inherently hd-deep; softmax element-
    #     wise math stays in f32 (v5e-safe); normalization deferred to the
    #     (tq, hd) context via EUP approx-reciprocal. -------------------------
    ctx_heads = []
    for h in range(num_heads):         # static unroll, no carried accumulator
        qh = qf[:, h * hd:(h + 1) * hd]                            # (tq, hd)
        kh = kv_scr[:, h * hd:(h + 1) * hd]                        # (N, hd)
        vh = kv_scr[:, c + h * hd:c + (h + 1) * hd]                # (N, hd)

        s = jax.lax.dot_general(qh, kh, (((1,), (1,)), ((), ())),
                                preferred_element_type=jnp.float32)  # (tq, N)
        s = s - jnp.max(s, axis=-1, keepdims=True)
        p = jnp.exp(s)                                              # f32
        denom = jnp.sum(p, axis=-1, keepdims=True)                  # (tq, 1)

        ctx = jnp.dot(p.astype(cdt), vh,
                      preferred_element_type=jnp.float32)           # (tq, hd)
        ctx = ctx * pl.reciprocal(denom, approx=True)
        ctx_heads.append(ctx.astype(cdt))

    # --- One dense output projection over all heads (lane-concat, then
    #     (tq,C)@(C,C) on the MXU). --------------------------------------------
    ctx_all = jnp.concatenate(ctx_heads, axis=-1)                   # (tq, C)
    out = jnp.dot(ctx_all, wp_ref[...],
                  preferred_element_type=jnp.float32) + bp_ref[...]
    o_ref[0] = out.astype(o_ref.dtype)


# ----------------------------------------------------------------------------
# Wrapper: assemble un-split weights and launch the kernel.
# ----------------------------------------------------------------------------
def attention_forward(params, x, H, W, *, num_heads=8, sr_ratio=1,
                      qkv_bias=False, qk_scale=None, block_q=128):
    """x: (B, N, C) with N == H * W  ->  (B, N, C)."""
    B, N, C = x.shape
    assert N == H * W, "token count must equal H*W"
    assert C % num_heads == 0, "dim must be divisible by num_heads"
    if sr_ratio > 1:
        # TODO(synk): spatial-reduction path (strided conv + LayerNorm) not ported.
        raise NotImplementedError("sr_ratio > 1 is not implemented")

    hd = C // num_heads
    scale = float(qk_scale) if qk_scale is not None else float(hd ** -0.5)
    if block_q > N or N % block_q != 0:
        block_q = N
    n_qt = N // block_q
    dt = x.dtype

    wq = params["wq"].astype(dt)            # (C, C)
    wkv = params["wkv"].astype(dt)          # (C, 2C)
    wp = params["wp"].astype(dt)            # (C, C)
    bp = params["bp"].reshape(1, C).astype(jnp.float32)

    inputs = [x, x, wq, wkv]
    in_specs = [
        pl.BlockSpec((1, N, C), lambda b, qt: (b, 0, 0)),        # x (full, for K/V)
        pl.BlockSpec((1, block_q, C), lambda b, qt: (b, qt, 0)), # x (query tile)
        pl.BlockSpec((C, C), lambda b, qt: (0, 0)),              # Wq (un-split)
        pl.BlockSpec((C, 2 * C), lambda b, qt: (0, 0)),          # Wkv (un-split)
    ]
    if qkv_bias:
        inputs += [params["bq"].reshape(1, C).astype(jnp.float32),
                   params["bkv"].reshape(1, 2 * C).astype(jnp.float32)]
        in_specs += [pl.BlockSpec((1, C), lambda b, qt: (0, 0)),
                     pl.BlockSpec((1, 2 * C), lambda b, qt: (0, 0))]
    inputs += [wp, bp]
    in_specs += [pl.BlockSpec((C, C), lambda b, qt: (0, 0)),     # Wproj (un-split)
                 pl.BlockSpec((1, C), lambda b, qt: (0, 0))]     # bproj

    kernel = functools.partial(_attention_kernel, num_heads=num_heads,
                               scale=scale, qkv_bias=qkv_bias)

    return pl.pallas_call(
        kernel,
        out_shape=jax.ShapeDtypeStruct((B, N, C), x.dtype),
        grid_spec=pltpu.PrefetchScalarGridSpec(
            num_scalar_prefetch=0,
            grid=(B, n_qt),
            in_specs=in_specs,
            out_specs=pl.BlockSpec((1, block_q, C), lambda b, qt: (b, qt, 0)),
            scratch_shapes=[pltpu.VMEM((N, 2 * C), dt)],         # K/V, one batch elem
        ),
        compiler_params=pltpu.CompilerParams(
            dimension_semantics=("parallel", "arbitrary"),
            vmem_limit_bytes=32 * 1024 * 1024),
    )(*inputs)


# ----------------------------------------------------------------------------
# Parameter init (mirrors the PyTorch module: trunc_normal std=0.02 weights,
# zero proj bias; qkv biases only exist when qkv_bias=True).
# ----------------------------------------------------------------------------
def init_params(key, dim, qkv_bias=False):
    k1, k2, k3, k4, k5 = jax.random.split(key, 5)
    tn = lambda k, shape: 0.02 * jax.random.truncated_normal(
        k, -2.0, 2.0, shape, jnp.float32)
    p = {
        "wq": tn(k1, (dim, dim)),
        "wkv": tn(k2, (dim, 2 * dim)),
        "wp": tn(k3, (dim, dim)),
        "bp": jnp.zeros((dim,), jnp.float32),
    }
    if qkv_bias:
        # PyTorch inits these to zero; small random values here so the bias
        # code path is actually exercised by the correctness check.
        p["bq"] = 0.02 * jax.random.normal(k4, (dim,), jnp.float32)
        p["bkv"] = 0.02 * jax.random.normal(k5, (2 * dim,), jnp.float32)
    return p


# ----------------------------------------------------------------------------
# Pure-JAX reference (for correctness check of the Pallas path).
# ----------------------------------------------------------------------------
def attention_reference(params, x, H, W, *, num_heads=8, qk_scale=None):
    B, N, C = x.shape
    hd = C // num_heads
    scale = qk_scale if qk_scale is not None else hd ** -0.5
    q = x @ params["wq"]
    kv = x @ params["wkv"]
    if "bq" in params:
        q = q + params["bq"]
    if "bkv" in params:
        kv = kv + params["bkv"]
    k, v = kv[..., :C], kv[..., C:]
    q = q.reshape(B, N, num_heads, hd).transpose(0, 2, 1, 3)
    k = k.reshape(B, N, num_heads, hd).transpose(0, 2, 1, 3)
    v = v.reshape(B, N, num_heads, hd).transpose(0, 2, 1, 3)
    attn = jnp.einsum("bhqd,bhkd->bhqk", q, k) * scale
    attn = jax.nn.softmax(attn, axis=-1)
    out = jnp.einsum("bhqk,bhkd->bhqd", attn, v)
    out = out.transpose(0, 2, 1, 3).reshape(B, N, C)
    return out @ params["wp"] + params["bp"]


def _rel_err(a, b):
    a = a.astype(jnp.float32)
    b = b.astype(jnp.float32)
    return float(jnp.linalg.norm(a - b) / (jnp.linalg.norm(b) + 1e-12))


if __name__ == "__main__":
    key = jax.random.PRNGKey(0)
    kx, kp = jax.random.split(key)

    B, H, W = 2, 16, 16          # N = 256 tokens
    N = H * W
    dim, num_heads = 128, 8      # C = 128 -> lane-dense stores, head_dim = 16

    x = jax.random.normal(kx, (B, N, dim), jnp.float32)
    params = init_params(kp, dim)

    fwd = jax.jit(functools.partial(attention_forward, H=H, W=W,
                                    num_heads=num_heads))

    # --- f32 path (f32 MXU operands): correctness vs pure-JAX reference ------
    out = jax.block_until_ready(fwd(params, x))
    ref = attention_reference(params, x, H, W, num_heads=num_heads)
    assert out.shape == (B, N, dim)
    assert _rel_err(out, ref) < 1e-2, "f32 Pallas output mismatch vs reference"

    # --- bf16-over-HBM path (bf16 MXU operands, f32 accumulation) ------------
    x16 = x.astype(jnp.bfloat16)
    p16 = jax.tree_util.tree_map(lambda a: a.astype(jnp.bfloat16), params)
    out16 = jax.block_until_ready(fwd(p16, x16))
    assert out16.dtype == jnp.bfloat16
    assert bool(jnp.all(jnp.isfinite(out16.astype(jnp.float32))))
    assert _rel_err(out16, ref) < 5e-2, "bf16 Pallas output mismatch vs reference"

    # --- qkv_bias=True variant (exercises the bias code path) ----------------
    params_b = init_params(jax.random.PRNGKey(1), dim, qkv_bias=True)
    fwd_b = jax.jit(functools.partial(attention_forward, H=H, W=W,
                                      num_heads=num_heads, qkv_bias=True))
    out_b = jax.block_until_ready(fwd_b(params_b, x))
    ref_b = attention_reference(params_b, x, H, W, num_heads=num_heads)
    assert _rel_err(out_b, ref_b) < 1e-2, "qkv_bias Pallas output mismatch"

    print("KERNEL_OK")
</pallas_src>

<mosaic_0001>
module attributes {stable_mosaic.version = 11 : i64} {
  func.func @_attention_kernel(%arg0: i32, %arg1: i32, %arg2: memref<1x256x128xf32, #tpu.memory_space<vmem>>, %arg3: memref<1x128x128xf32, #tpu.memory_space<vmem>>, %arg4: memref<128x128xf32, #tpu.memory_space<vmem>>, %arg5: memref<128x256xf32, #tpu.memory_space<vmem>>, %arg6: memref<128x128xf32, #tpu.memory_space<vmem>>, %arg7: memref<1x128xf32, #tpu.memory_space<vmem>>, %arg8: memref<1x128x128xf32, #tpu.memory_space<vmem>>, %arg9: memref<256x256xf32, #tpu.memory_space<vmem>>) attributes {dimension_semantics = [#tpu.dimension_semantics<parallel>, #tpu.dimension_semantics<arbitrary>], iteration_bounds = array<i64: 2, 2>, scalar_prefetch = 0 : i64, scratch_operands = 1 : i64, tpu.core_type = #tpu.core_type<tc>, window_params = [{transform_indices = @transform_0, window_bounds = array<i64: 1, 256, 128>}, {transform_indices = @transform_1, window_bounds = array<i64: 1, 128, 128>}, {pipeline_mode = #tpu.pipeline_mode<synchronous>, transform_indices = @transform_2, window_bounds = array<i64: 128, 128>}, {pipeline_mode = #tpu.pipeline_mode<synchronous>, transform_indices = @transform_3, window_bounds = array<i64: 128, 256>}, {pipeline_mode = #tpu.pipeline_mode<synchronous>, transform_indices = @transform_4, window_bounds = array<i64: 128, 128>}, {pipeline_mode = #tpu.pipeline_mode<synchronous>, transform_indices = @transform_5, window_bounds = array<i64: 1, 128>}, {transform_indices = @transform_6, window_bounds = array<i64: 1, 128, 128>}]} {
    %c0_i32 = arith.constant 0 : i32
    %0 = arith.cmpi eq, %arg1, %c0_i32 : i32
    %1 = arith.extui %0 : i1 to i32
    %c0_i32_0 = arith.constant 0 : i32
    %2 = arith.cmpi ne, %1, %c0_i32_0 : i32
    scf.if %2 {
      %c0_63 = arith.constant 0 : index
      %c0_64 = arith.constant 0 : index
      %c0_65 = arith.constant 0 : index
      %138 = vector.load %arg2[%c0_63, %c0_64, %c0_65] : memref<1x256x128xf32, #tpu.memory_space<vmem>>, vector<1x256x128xf32>
      %139 = vector.shape_cast %138 : vector<1x256x128xf32> to vector<256x128xf32>
      %c0_66 = arith.constant 0 : index
      %c0_67 = arith.constant 0 : index
      %140 = vector.load %arg5[%c0_66, %c0_67] : memref<128x256xf32, #tpu.memory_space<vmem>>, vector<128x256xf32>
      %cst_68 = arith.constant dense<0.000000e+00> : vector<256x256xf32>
      %141 = tpu.matmul %139, %140, %cst_68 {dimension_numbers = #tpu.dot_dimension_numbers<[1], [0], [0], [1], [0, 0, 1, 1], [], []>} : vector<256x128xf32>, vector<128x256xf32>, vector<256x256xf32> -> vector<256x256xf32>
      %c0_69 = arith.constant 0 : index
      %c0_70 = arith.constant 0 : index
      %142 = vector.load %arg9[%c0_69, %c0_70] : memref<256x256xf32, #tpu.memory_space<vmem>>, vector<256x256xf32>
      tpu.vector_store %arg9[%c0_69, %c0_70], %141 {strides = array<i32>} : memref<256x256xf32, #tpu.memory_space<vmem>>, vector<256x256xf32>,
    } else {
    }
    %c0 = arith.constant 0 : index
    %c0_1 = arith.constant 0 : index
    %c0_2 = arith.constant 0 : index
    %3 = vector.load %arg3[%c0, %c0_1, %c0_2] : memref<1x128x128xf32, #tpu.memory_space<vmem>>, vector<1x128x128xf32>
    %4 = vector.shape_cast %3 : vector<1x128x128xf32> to vector<128x128xf32>
    %c0_3 = arith.constant 0 : index
    %c0_4 = arith.constant 0 : index
    %5 = vector.load %arg4[%c0_3, %c0_4] : memref<128x128xf32, #tpu.memory_space<vmem>>, vector<128x128xf32>
    %cst = arith.constant dense<0.000000e+00> : vector<128x128xf32>
    %6 = tpu.matmul %4, %5, %cst {dimension_numbers = #tpu.dot_dimension_numbers<[1], [0], [0], [1], [0, 0, 1, 1], [], []>} : vector<128x128xf32>, vector<128x128xf32>, vector<128x128xf32> -> vector<128x128xf32>
    %cst_5 = arith.constant 2.500000e-01 : f32
    %7 = vector.broadcast %cst_5 : f32 to vector<128x128xf32>
    %8 = arith.mulf %6, %7 : vector<128x128xf32>
    %9 = vector.extract_strided_slice %8 {offsets = [0, 0], sizes = [128, 16], strides = [1, 1]} : vector<128x128xf32> to vector<128x16xf32>
    %c0_6 = arith.constant 0 : index
    %c0_7 = arith.constant 0 : index
    %10 = vector.load %arg9[%c0_6, %c0_7] : memref<256x256xf32, #tpu.memory_space<vmem>>, vector<256x16xf32>
    %c0_8 = arith.constant 0 : index
    %c128 = arith.constant 128 : index
    %11 = vector.load %arg9[%c0_8, %c128] : memref<256x256xf32, #tpu.memory_space<vmem>>, vector<256x16xf32>
    %cst_9 = arith.constant dense<0.000000e+00> : vector<128x256xf32>
    %12 = tpu.matmul %9, %10, %cst_9 {dimension_numbers = #tpu.dot_dimension_numbers<[1], [1], [0], [0], [0, 0, 1, 0], [], []>} : vector<128x16xf32>, vector<256x16xf32>, vector<128x256xf32> -> vector<128x256xf32>
    %cst_10 = arith.constant dense<0xFF800000> : vector<128xf32>
    %13 = vector.multi_reduction <maximumf>, %12, %cst_10 [1] : vector<128x256xf32> to vector<128xf32>
    %14 = vector.shape_cast %13 : vector<128xf32> to vector<128x1xf32>
    %15 = vector.broadcast %14 : vector<128x1xf32> to vector<128x256xf32>
    %16 = arith.subf %12, %15 : vector<128x256xf32>
    %17 = math.exp %16 : vector<128x256xf32>
    %cst_11 = arith.constant dense<0.000000e+00> : vector<128xf32>
    %18 = vector.multi_reduction <add>, %17, %cst_11 [1] : vector<128x256xf32> to vector<128xf32>
    %19 = vector.shape_cast %18 : vector<128xf32> to vector<128x1xf32>
    %cst_12 = arith.constant dense<0.000000e+00> : vector<128x16xf32>
    %20 = tpu.matmul %17, %11, %cst_12 {dimension_numbers = #tpu.dot_dimension_numbers<[1], [0], [0], [1], [0, 0, 1, 1], [], []>} : vector<128x256xf32>, vector<256x16xf32>, vector<128x16xf32> -> vector<128x16xf32>
    %21 = tpu.reciprocal %19 {approx = true} : vector<128x1xf32> -> vector<128x1xf32>
    %22 = vector.broadcast %21 : vector<128x1xf32> to vector<128x16xf32>
    %23 = arith.mulf %20, %22 : vector<128x16xf32>
    %24 = vector.extract_strided_slice %8 {offsets = [0, 16], sizes = [128, 16], strides = [1, 1]} : vector<128x128xf32> to vector<128x16xf32>
    %c0_13 = arith.constant 0 : index
    %c16 = arith.constant 16 : index
    %25 = vector.load %arg9[%c0_13, %c16] : memref<256x256xf32, #tpu.memory_space<vmem>>, vector<256x16xf32>
    %c0_14 = arith.constant 0 : index
    %c144 = arith.constant 144 : index
    %26 = vector.load %arg9[%c0_14, %c144] : memref<256x256xf32, #tpu.memory_space<vmem>>, vector<256x16xf32>
    %cst_15 = arith.constant dense<0.000000e+00> : vector<128x256xf32>
    %27 = tpu.matmul %24, %25, %cst_15 {dimension_numbers = #tpu.dot_dimension_numbers<[1], [1], [0], [0], [0, 0, 1, 0], [], []>} : vector<128x16xf32>, vector<256x16xf32>, vector<128x256xf32> -> vector<128x256xf32>
    %cst_16 = arith.constant dense<0xFF800000> : vector<128xf32>
    %28 = vector.multi_reduction <maximumf>, %27, %cst_16 [1] : vector<128x256xf32> to vector<128xf32>
    %29 = vector.shape_cast %28 : vector<128xf32> to vector<128x1xf32>
    %30 = vector.broadcast %29 : vector<128x1xf32> to vector<128x256xf32>
    %31 = arith.subf %27, %30 : vector<128x256xf32>
    %32 = math.exp %31 : vector<128x256xf32>
    %cst_17 = arith.constant dense<0.000000e+00> : vector<128xf32>
    %33 = vector.multi_reduction <add>, %32, %cst_17 [1] : vector<128x256xf32> to vector<128xf32>
    %34 = vector.shape_cast %33 : vector<128xf32> to vector<128x1xf32>
    %cst_18 = arith.constant dense<0.000000e+00> : vector<128x16xf32>
    %35 = tpu.matmul %32, %26, %cst_18 {dimension_numbers = #tpu.dot_dimension_numbers<[1], [0], [0], [1], [0, 0, 1, 1], [], []>} : vector<128x256xf32>, vector<256x16xf32>, vector<128x16xf32> -> vector<128x16xf32>
    %36 = tpu.reciprocal %34 {approx = true} : vector<128x1xf32> -> vector<128x1xf32>
    %37 = vector.broadcast %36 : vector<128x1xf32> to vector<128x16xf32>
    %38 = arith.mulf %35, %37 : vector<128x16xf32>
    %39 = vector.extract_strided_slice %8 {offsets = [0, 32], sizes = [128, 16], strides = [1, 1]} : vector<128x128xf32> to vector<128x16xf32>
    %c0_19 = arith.constant 0 : index
    %c32 = arith.constant 32 : index
    %40 = vector.load %arg9[%c0_19, %c32] : memref<256x256xf32, #tpu.memory_space<vmem>>, vector<256x16xf32>
    %c0_20 = arith.constant 0 : index
    %c160 = arith.constant 160 : index
    %41 = vector.load %arg9[%c0_20, %c160] : memref<256x256xf32, #tpu.memory_space<vmem>>, vector<256x16xf32>
    %cst_21 = arith.constant dense<0.000000e+00> : vector<128x256xf32>
    %42 = tpu.matmul %39, %40, %cst_21 {dimension_numbers = #tpu.dot_dimension_numbers<[1], [1], [0], [0], [0, 0, 1, 0], [], []>} : vector<128x16xf32>, vector<256x16xf32>, vector<128x256xf32> -> vector<128x256xf32>
    %cst_22 = arith.constant dense<0xFF800000> : vector<128xf32>
    %43 = vector.multi_reduction <maximumf>, %42, %cst_22 [1] : vector<128x256xf32> to vector<128xf32>
    %44 = vector.shape_cast %43 : vector<128xf32> to vector<128x1xf32>
    %45 = vector.broadcast %44 : vector<128x1xf32> to vector<128x256xf32>
    %46 = arith.subf %42, %45 : vector<128x256xf32>
    %47 = math.exp %46 : vector<128x256xf32>
    %cst_23 = arith.constant dense<0.000000e+00> : vector<128xf32>
    %48 = vector.multi_reduction <add>, %47, %cst_23 [1] : vector<128x256xf32> to vector<128xf32>
    %49 = vector.shape_cast %48 : vector<128xf32> to vector<128x1xf32>
    %cst_24 = arith.constant dense<0.000000e+00> : vector<128x16xf32>
    %50 = tpu.matmul %47, %41, %cst_24 {dimension_numbers = #tpu.dot_dimension_numbers<[1], [0], [0], [1], [0, 0, 1, 1], [], []>} : vector<128x256xf32>, vector<256x16xf32>, vector<128x16xf32> -> vector<128x16xf32>
    %51 = tpu.reciprocal %49 {approx = true} : vector<128x1xf32> -> vector<128x1xf32>
    %52 = vector.broadcast %51 : vector<128x1xf32> to vector<128x16xf32>
    %53 = arith.mulf %50, %52 : vector<128x16xf32>
    %54 = vector.extract_strided_slice %8 {offsets = [0, 48], sizes = [128, 16], strides = [1, 1]} : vector<128x128xf32> to vector<128x16xf32>
    %c0_25 = arith.constant 0 : index
    %c48 = arith.constant 48 : index
    %55 = vector.load %arg9[%c0_25, %c48] : memref<256x256xf32, #tpu.memory_space<vmem>>, vector<256x16xf32>
    %c0_26 = arith.constant 0 : index
    %c176 = arith.constant 176 : index
    %56 = vector.load %arg9[%c0_26, %c176] : memref<256x256xf32, #tpu.memory_space<vmem>>, vector<256x16xf32>
    %cst_27 = arith.constant dense<0.000000e+00> : vector<128x256xf32>
    %57 = tpu.matmul %54, %55, %cst_27 {dimension_numbers = #tpu.dot_dimension_numbers<[1], [1], [0], [0], [0, 0, 1, 0], [], []>} : vector<128x16xf32>, vector<256x16xf32>, vector<128x256xf32> -> vector<128x256xf32>
    %cst_28 = arith.constant dense<0xFF800000> : vector<128xf32>
    %58 = vector.multi_reduction <maximumf>, %57, %cst_28 [1] : vector<128x256xf32> to vector<128xf32>
    %59 = vector.shape_cast %58 : vector<128xf32> to vector<128x1xf32>
    %60 = vector.broadcast %59 : vector<128x1xf32> to vector<128x256xf32>
    %61 = arith.subf %57, %60 : vector<128x256xf32>
    %62 = math.exp %61 : vector<128x256xf32>
    %cst_29 = arith.constant dense<0.000000e+00> : vector<128xf32>
    %63 = vector.multi_reduction <add>, %62, %cst_29 [1] : vector<128x256xf32> to vector<128xf32>
    %64 = vector.shape_cast %63 : vector<128xf32> to vector<128x1xf32>
    %cst_30 = arith.constant dense<0.000000e+00> : vector<128x16xf32>
    %65 = tpu.matmul %62, %56, %cst_30 {dimension_numbers = #tpu.dot_dimension_numbers<[1], [0], [0], [1], [0, 0, 1, 1], [], []>} : vector<128x256xf32>, vector<256x16xf32>, vector<128x16xf32> -> vector<128x16xf32>
    %66 = tpu.reciprocal %64 {approx = true} : vector<128x1xf32> -> vector<128x1xf32>
    %67 = vector.broadcast %66 : vector<128x1xf32> to vector<128x16xf32>
    %68 = arith.mulf %65, %67 : vector<128x16xf32>
    %69 = vector.extract_strided_slice %8 {offsets = [0, 64], sizes = [128, 16], strides = [1, 1]} : vector<128x128xf32> to vector<128x16xf32>
    %c0_31 = arith.constant 0 : index
    %c64 = arith.constant 64 : index
    %70 = vector.load %arg9[%c0_31, %c64] : memref<256x256xf32, #tpu.memory_space<vmem>>, vector<256x16xf32>
    %c0_32 = arith.constant 0 : index
    %c192 = arith.constant 192 : index
    %71 = vector.load %arg9[%c0_32, %c192] : memref<256x256xf32, #tpu.memory_space<vmem>>, vector<256x16xf32>
    %cst_33 = arith.constant dense<0.000000e+00> : vector<128x256xf32>
    %72 = tpu.matmul %69, %70, %cst_33 {dimension_numbers = #tpu.dot_dimension_numbers<[1], [1], [0], [0], [0, 0, 1, 0], [], []>} : vector<128x16xf32>, vector<256x16xf32>, vector<128x256xf32> -> vector<128x256xf32>
    %cst_34 = arith.constant dense<0xFF800000> : vector<128xf32>
    %73 = vector.multi_reduction <maximumf>, %72, %cst_34 [1] : vector<128x256xf32> to vector<128xf32>
    %74 = vector.shape_cast %73 : vector<128xf32> to vector<128x1xf32>
    %75 = vector.broadcast %74 : vector<128x1xf32> to vector<128x256xf32>
    %76 = arith.subf %72, %75 : vector<128x256xf32>
    %77 = math.exp %76 : vector<128x256xf32>
    %cst_35 = arith.constant dense<0.000000e+00> : vector<128xf32>
    %78 = vector.multi_reduction <add>, %77, %cst_35 [1] : vector<128x256xf32> to vector<128xf32>
    %79 = vector.shape_cast %78 : vector<128xf32> to vector<128x1xf32>
    %cst_36 = arith.constant dense<0.000000e+00> : vector<128x16xf32>
    %80 = tpu.matmul %77, %71, %cst_36 {dimension_numbers = #tpu.dot_dimension_numbers<[1], [0], [0], [1], [0, 0, 1, 1], [], []>} : vector<128x256xf32>, vector<256x16xf32>, vector<128x16xf32> -> vector<128x16xf32>
    %81 = tpu.reciprocal %79 {approx = true} : vector<128x1xf32> -> vector<128x1xf32>
    %82 = vector.broadcast %81 : vector<128x1xf32> to vector<128x16xf32>
    %83 = arith.mulf %80, %82 : vector<128x16xf32>
    %84 = vector.extract_strided_slice %8 {offsets = [0, 80], sizes = [128, 16], strides = [1, 1]} : vector<128x128xf32> to vector<128x16xf32>
    %c0_37 = arith.constant 0 : index
    %c80 = arith.constant 80 : index
    %85 = vector.load %arg9[%c0_37, %c80] : memref<256x256xf32, #tpu.memory_space<vmem>>, vector<256x16xf32>
    %c0_38 = arith.constant 0 : index
    %c208 = arith.constant 208 : index
    %86 = vector.load %arg9[%c0_38, %c208] : memref<256x256xf32, #tpu.memory_space<vmem>>, vector<256x16xf32>
    %cst_39 = arith.constant dense<0.000000e+00> : vector<128x256xf32>
    %87 = tpu.matmul %84, %85, %cst_39 {dimension_numbers = #tpu.dot_dimension_numbers<[1], [1], [0], [0], [0, 0, 1, 0], [], []>} : vector<128x16xf32>, vector<256x16xf32>, vector<128x256xf32> -> vector<128x256xf32>
    %cst_40 = arith.constant dense<0xFF800000> : vector<128xf32>
    %88 = vector.multi_reduction <maximumf>, %87, %cst_40 [1] : vector<128x256xf32> to vector<128xf32>
    %89 = vector.shape_cast %88 : vector<128xf32> to vector<128x1xf32>
    %90 = vector.broadcast %89 : vector<128x1xf32> to vector<128x256xf32>
    %91 = arith.subf %87, %90 : vector<128x256xf32>
    %92 = math.exp %91 : vector<128x256xf32>
    %cst_41 = arith.constant dense<0.000000e+00> : vector<128xf32>
    %93 = vector.multi_reduction <add>, %92, %cst_41 [1] : vector<128x256xf32> to vector<128xf32>
    %94 = vector.shape_cast %93 : vector<128xf32> to vector<128x1xf32>
    %cst_42 = arith.constant dense<0.000000e+00> : vector<128x16xf32>
    %95 = tpu.matmul %92, %86, %cst_42 {dimension_numbers = #tpu.dot_dimension_numbers<[1], [0], [0], [1], [0, 0, 1, 1], [], []>} : vector<128x256xf32>, vector<256x16xf32>, vector<128x16xf32> -> vector<128x16xf32>
    %96 = tpu.reciprocal %94 {approx = true} : vector<128x1xf32> -> vector<128x1xf32>
    %97 = vector.broadcast %96 : vector<128x1xf32> to vector<128x16xf32>
    %98 = arith.mulf %95, %97 : vector<128x16xf32>
    %99 = vector.extract_strided_slice %8 {offsets = [0, 96], sizes = [128, 16], strides = [1, 1]} : vector<128x128xf32> to vector<128x16xf32>
    %c0_43 = arith.constant 0 : index
    %c96 = arith.constant 96 : index
    %100 = vector.load %arg9[%c0_43, %c96] : memref<256x256xf32, #tpu.memory_space<vmem>>, vector<256x16xf32>
    %c0_44 = arith.constant 0 : index
    %c224 = arith.constant 224 : index
    %101 = vector.load %arg9[%c0_44, %c224] : memref<256x256xf32, #tpu.memory_space<vmem>>, vector<256x16xf32>
    %cst_45 = arith.constant dense<0.000000e+00> : vector<128x256xf32>
    %102 = tpu.matmul %99, %100, %cst_45 {dimension_numbers = #tpu.dot_dimension_numbers<[1], [1], [0], [0], [0, 0, 1, 0], [], []>} : vector<128x16xf32>, vector<256x16xf32>, vector<128x256xf32> -> vector<128x256xf32>
    %cst_46 = arith.constant dense<0xFF800000> : vector<128xf32>
    %103 = vector.multi_reduction <maximumf>, %102, %cst_46 [1] : vector<128x256xf32> to vector<128xf32>
    %104 = vector.shape_cast %103 : vector<128xf32> to vector<128x1xf32>
    %105 = vector.broadcast %104 : vector<128x1xf32> to vector<128x256xf32>
    %106 = arith.subf %102, %105 : vector<128x256xf32>
    %107 = math.exp %106 : vector<128x256xf32>
    %cst_47 = arith.constant dense<0.000000e+00> : vector<128xf32>
    %108 = vector.multi_reduction <add>, %107, %cst_47 [1] : vector<128x256xf32> to vector<128xf32>
    %109 = vector.shape_cast %108 : vector<128xf32> to vector<128x1xf32>
    %cst_48 = arith.constant dense<0.000000e+00> : vector<128x16xf32>
    %110 = tpu.matmul %107, %101, %cst_48 {dimension_numbers = #tpu.dot_dimension_numbers<[1], [0], [0], [1], [0, 0, 1, 1], [], []>} : vector<128x256xf32>, vector<256x16xf32>, vector<128x16xf32> -> vector<128x16xf32>
    %111 = tpu.reciprocal %109 {approx = true} : vector<128x1xf32> -> vector<128x1xf32>
    %112 = vector.broadcast %111 : vector<128x1xf32> to vector<128x16xf32>
    %113 = arith.mulf %110, %112 : vector<128x16xf32>
    %114 = vector.extract_strided_slice %8 {offsets = [0, 112], sizes = [128, 16], strides = [1, 1]} : vector<128x128xf32> to vector<128x16xf32>
    %c0_49 = arith.constant 0 : index
    %c112 = arith.constant 112 : index
    %115 = vector.load %arg9[%c0_49, %c112] : memref<256x256xf32, #tpu.memory_space<vmem>>, vector<256x16xf32>
    %c0_50 = arith.constant 0 : index
    %c240 = arith.constant 240 : index
    %116 = vector.load %arg9[%c0_50, %c240] : memref<256x256xf32, #tpu.memory_space<vmem>>, vector<256x16xf32>
    %cst_51 = arith.constant dense<0.000000e+00> : vector<128x256xf32>
    %117 = tpu.matmul %114, %115, %cst_51 {dimension_numbers = #tpu.dot_dimension_numbers<[1], [1], [0], [0], [0, 0, 1, 0], [], []>} : vector<128x16xf32>, vector<256x16xf32>, vector<128x256xf32> -> vector<128x256xf32>
    %cst_52 = arith.constant dense<0xFF800000> : vector<128xf32>
    %118 = vector.multi_reduction <maximumf>, %117, %cst_52 [1] : vector<128x256xf32> to vector<128xf32>
    %119 = vector.shape_cast %118 : vector<128xf32> to vector<128x1xf32>
    %120 = vector.broadcast %119 : vector<128x1xf32> to vector<128x256xf32>
    %121 = arith.subf %117, %120 : vector<128x256xf32>
    %122 = math.exp %121 : vector<128x256xf32>
    %cst_53 = arith.constant dense<0.000000e+00> : vector<128xf32>
    %123 = vector.multi_reduction <add>, %122, %cst_53 [1] : vector<128x256xf32> to vector<128xf32>
    %124 = vector.shape_cast %123 : vector<128xf32> to vector<128x1xf32>
    %cst_54 = arith.constant dense<0.000000e+00> : vector<128x16xf32>
    %125 = tpu.matmul %122, %116, %cst_54 {dimension_numbers = #tpu.dot_dimension_numbers<[1], [0], [0], [1], [0, 0, 1, 1], [], []>} : vector<128x256xf32>, vector<256x16xf32>, vector<128x16xf32> -> vector<128x16xf32>
    %126 = tpu.reciprocal %124 {approx = true} : vector<128x1xf32> -> vector<128x1xf32>
    %127 = vector.broadcast %126 : vector<128x1xf32> to vector<128x16xf32>
    %128 = arith.mulf %125, %127 : vector<128x16xf32>
    %129 = tpu.concatenate %23, %38, %53, %68, %83, %98, %113, %128 in 1 : vector<128x16xf32>, vector<128x16xf32>, vector<128x16xf32>, vector<128x16xf32>, vector<128x16xf32>, vector<128x16xf32>, vector<128x16xf32>, vector<128x16xf32> -> vector<128x128xf32>
    %c0_55 = arith.constant 0 : index
    %c0_56 = arith.constant 0 : index
    %130 = vector.load %arg6[%c0_55, %c0_56] : memref<128x128xf32, #tpu.memory_space<vmem>>, vector<128x128xf32>
    %cst_57 = arith.constant dense<0.000000e+00> : vector<128x128xf32>
    %131 = tpu.matmul %129, %130, %cst_57 {dimension_numbers = #tpu.dot_dimension_numbers<[1], [0], [0], [1], [0, 0, 1, 1], [], []>} : vector<128x128xf32>, vector<128x128xf32>, vector<128x128xf32> -> vector<128x128xf32>
    %c0_58 = arith.constant 0 : index
    %c0_59 = arith.constant 0 : index
    %132 = vector.load %arg7[%c0_58, %c0_59] : memref<1x128xf32, #tpu.memory_space<vmem>>, vector<1x128xf32>
    %133 = vector.broadcast %132 : vector<1x128xf32> to vector<128x128xf32>
    %134 = arith.addf %131, %133 : vector<128x128xf32>
    %c0_60 = arith.constant 0 : index
    %c0_61 = arith.constant 0 : index
    %c0_62 = arith.constant 0 : index
    %135 = vector.load %arg8[%c0_60, %c0_61, %c0_62] : memref<1x128x128xf32, #tpu.memory_space<vmem>>, vector<1x128x128xf32>
    %136 = vector.shape_cast %135 : vector<1x128x128xf32> to vector<128x128xf32>
    %137 = vector.shape_cast %134 : vector<128x128xf32> to vector<1x128x128xf32>
    tpu.vector_store %arg8[%c0_60, %c0_61, %c0_62], %137 {strides = array<i32>} : memref<1x128x128xf32, #tpu.memory_space<vmem>>, vector<1x128x128xf32>,
    return
  }
  func.func @transform_0(%arg0: i32, %arg1: i32) -> (i32, i32, i32) {
    %c0_i32 = arith.constant 0 : i32
    %c0_i32_0 = arith.constant 0 : i32
    %c0_i32_1 = arith.constant 0 : i32
    return %arg0, %c0_i32, %c0_i32_0 : i32, i32, i32
  }
  func.func @transform_1(%arg0: i32, %arg1: i32) -> (i32, i32, i32) {
    %c0_i32 = arith.constant 0 : i32
    %c0_i32_0 = arith.constant 0 : i32
    return %arg0, %arg1, %c0_i32 : i32, i32, i32
  }
  func.func @transform_2(%arg0: i32, %arg1: i32) -> (i32, i32) {
    %c0_i32 = arith.constant 0 : i32
    %c0_i32_0 = arith.constant 0 : i32
    %c0_i32_1 = arith.constant 0 : i32
    return %c0_i32, %c0_i32_0 : i32, i32
  }
  func.func @transform_3(%arg0: i32, %arg1: i32) -> (i32, i32) {
    %c0_i32 = arith.constant 0 : i32
    %c0_i32_0 = arith.constant 0 : i32
    %c0_i32_1 = arith.constant 0 : i32
    return %c0_i32, %c0_i32_0 : i32, i32
  }
  func.func @transform_4(%arg0: i32, %arg1: i32) -> (i32, i32) {
    %c0_i32 = arith.constant 0 : i32
    %c0_i32_0 = arith.constant 0 : i32
    %c0_i32_1 = arith.constant 0 : i32
    return %c0_i32, %c0_i32_0 : i32, i32
  }
  func.func @transform_5(%arg0: i32, %arg1: i32) -> (i32, i32) {
    %c0_i32 = arith.constant 0 : i32
    %c0_i32_0 = arith.constant 0 : i32
    %c0_i32_1 = arith.constant 0 : i32
    return %c0_i32, %c0_i32_0 : i32, i32
  }
  func.func @transform_6(%arg0: i32, %arg1: i32) -> (i32, i32, i32) {
    %c0_i32 = arith.constant 0 : i32
    %c0_i32_0 = arith.constant 0 : i32
    return %arg0, %arg1, %c0_i32 : i32, i32, i32
  }
}

</mosaic_0001>

<llo_original>
// kernel: attention_forward.1
$region0: #{attention_forward.1}
  #allocation0 [shape = 'u32[]', space=smem, size = 0x4, offset = 0x4, fixed_abs, tag = 'smem constant byte address 0x4 - core index']
  #allocation1 [shape = 'u32[144,128]{1,0:T(1,128)}', space=vmem, size = 0x12000, scoped, tag = 'internal scratch']
  #allocation2 [shape = 'f32[256,256]{1,0:T(8,128)}', space=vmem, size = 0x40000, scoped, tag = 'scratch operand']
  %s0 = inlined_call_operand.hbm [shape: f32[2,256,128], index: 0, kind: input, shape index: {}, may-alias: {0,1}]
  %s1 = inlined_call_operand.hbm [shape: f32[2,256,128], index: 1, kind: input, shape index: {}, may-alias: {0,1}]
  %s2 = inlined_call_operand.hbm [shape: f32[128,128], index: 2, kind: input, shape index: {}]
  %s3 = inlined_call_operand.hbm [shape: f32[128,256], index: 3, kind: input, shape index: {}]
  %s4 = inlined_call_operand.hbm [shape: f32[128,128], index: 4, kind: input, shape index: {}]
  %s5 = inlined_call_operand.vmem [shape: f32[1,128], index: 5, kind: input, shape index: {}]
  %s6 = inlined_call_operand.hbm [shape: f32[2,256,128], index: 6, kind: output, shape index: {}]
  %s7 = sld [smem:[#allocation0]]
  $region81: #{attention_forward.1} parent=0
    _
  %s9 = ssub.s32 1, %s7
  %s10 = scalar_select 0, %s9, %s7
  $region1: #{attention_forward.1} parent=0
    #allocation3 [shape = 'u8[262144]{0}', space=vmem, size = 0x40000, scoped, tag = 'input window, operand 0']
    #allocation4 [shape = 's32[2]{0}', space=sflag, size = 0x8, scoped, tag = 'scoped memory for attention_forward.1']
    #allocation5 [shape = 's32[2]{0}', space=sflag, size = 0x8, scoped, tag = 'scoped memory for attention_forward.1']
    #allocation6 [shape = 'u8[131072]{0}', space=vmem, size = 0x20000, scoped, tag = 'input window, operand 1']
    #allocation7 [shape = 's32[2]{0}', space=sflag, size = 0x8, scoped, tag = 'scoped memory for attention_forward.1']
    #allocation8 [shape = 'u8[65536]{0}', space=vmem, size = 0x10000, scoped, tag = 'input window, operand 2, single buffered']
    #allocation9 [shape = 'u8[131072]{0}', space=vmem, size = 0x20000, scoped, tag = 'input window, operand 3, single buffered']
    #allocation10 [shape = 's32[1]{0}', space=sflag, size = 0x4, scoped, tag = 'scoped memory for attention_forward.1']
    #allocation11 [shape = 'u8[65536]{0}', space=vmem, size = 0x10000, scoped, tag = 'input window, operand 4, single buffered']
    #allocation12 [shape = 'u8[131072]{0}', space=vmem, size = 0x20000, scoped, tag = 'output window, operand 0']
    %11 = vsyncpa [#allocation4], 0
    %s12 = scalar_lea.sflag [#allocation4], 1
    %13 = vsyncpa %s12, 0
    %14 = vsyncpa [#allocation7], 0
    %s15 = scalar_lea.sflag [#allocation7], 1
    %16 = vsyncpa %s15, 0
    %17 = vsyncpa [#allocation10], 0
    %18 = vsyncpa [#allocation5], 0
    %s19 = scalar_lea.sflag [#allocation5], 1
    %20 = vsyncpa %s19, 0
    loop: start=0, step=1, limit=6
    $region2: #{attention_forward.1} parent=1 // loop_pre_header
      _
    $region3: #{attention_forward.1} parent=1 // loop_header
      %s22 = sphi 0, %s26
      %p23 = scmp.ge.s32.totalorder %s22, 6
      %s29 = sphi 0, %s41
      %s30 = sphi 0, %s37
      %s31 = sphi 0, %s29
      %s32 = sphi 0, %s30
      %s33 = sphi 0, %s31
      %s34 = sphi 0, %s32
      %s44 = sphi 0, %s46
      %s47 = sphi 0, %s44
      %s48 = sphi 0, %s47
      %s64 = sphi 0, %s48
      %s72 = sphi 0, %s74
      %s75 = sphi 0, %s72
      %s76 = sphi 0, %s75
      %s92 = sphi 0, %s76
      %s96 = sphi 0, %s96
      %s98 = sphi 0, %s96
      %s99 = sphi 0, %s98
      %s113 = sphi 0, %s99
      %s117 = sphi 0, %s117
      %s119 = sphi 0, %s117
      %s120 = sphi 0, %s119
      %s134 = sphi 0, %s120
      %s138 = sphi 0, %s138
      %s140 = sphi 0, %s138
      %s141 = sphi 0, %s140
      %s155 = sphi 0, %s141
      %s159 = sphi 0, %s159
      %s161 = sphi 0, %s159
      %s162 = sphi 0, %s161
      %s176 = sphi 0, %s162
      %s184 = sphi 0, %s186
      %s187 = sphi 0, %s184
      %s188 = sphi 0, %s187
      %s204 = sphi 0, %s188
    $region4: #{attention_forward.1} parent=1 // loop_header_branch
      %25 = sbr.rel (%p23) target = $region8
    $region5: #{attention_forward.1} parent=1 // loop_body
      %s27 = ssub.s32 %s22, 1
      %s28 = ssub.s32 %s22, 2
      %s35 = sadd.s32 1, %s30
      %p36 = scmp.ge.s32.totalorder %s35, 2
      %s37 = scalar_select %p36, 0, %s35
      %s38 = sadd.s32 1, %s29
      %s39 = scalar_select %p36, %s38, %s29
      %p40 = scmp.ge.s32.totalorder %s39, 2
      %s41 = scalar_select %p40, 0, %s39
      %s42 = ssub.s32 %s29, %s41
      %p43 = scmp.eq.s32.totalorder %s42, 0
      %s45 = sadd.s32 %s44, 1
      %s46 = scalar_select %p43, %s44, %s45
      %p49 = pneg %p43
      %p50 = scmp.eq.s32.totalorder %s22, 3
      %p51 = por %p49, %p50
      %p52 = scmp.ne.s32.totalorder %s44, %s47
      %p53 = scmp.eq.s32.totalorder %s22, 0
      %p54 = por %p52, %p53
      %p55 = scmp.ne.s32.totalorder %s44, %s47
      %p56 = scmp.eq.s32.totalorder %s27, 3
      %p57 = por %p55, %p56
      %p58 = scmp.ne.s32.totalorder %s47, %s48
      %p59 = scmp.eq.s32.totalorder %s27, 0
      %p60 = por %p58, %p59
      %p61 = scmp.ne.s32.totalorder %s47, %s48
      %p62 = scmp.eq.s32.totalorder %s28, 3
      %p63 = por %p61, %p62
      %p65 = scmp.ne.s32.totalorder %s48, %s64
      %p66 = scmp.eq.s32.totalorder %s28, 0
      %p67 = por %p65, %p66
      %s68 = ssub.s32 %s29, %s41
      %s69 = ssub.s32 %s30, %s37
      %s70 = sor.u32 %s68, %s69
      %p71 = scmp.eq.s32.totalorder %s70, 0
      %s73 = sadd.s32 %s72, 1
      %s74 = scalar_select %p71, %s72, %s73
      %p77 = pneg %p71
      %p78 = scmp.eq.s32.totalorder %s22, 3
      %p79 = por %p77, %p78
      %p80 = scmp.ne.s32.totalorder %s72, %s75
      %p81 = scmp.eq.s32.totalorder %s22, 0
      %p82 = por %p80, %p81
      %p83 = scmp.ne.s32.totalorder %s72, %s75
      %p84 = scmp.eq.s32.totalorder %s27, 3
      %p85 = por %p83, %p84
      %p86 = scmp.ne.s32.totalorder %s75, %s76
      %p87 = scmp.eq.s32.totalorder %s27, 0
      %p88 = por %p86, %p87
      %p89 = scmp.ne.s32.totalorder %s75, %s76
      %p90 = scmp.eq.s32.totalorder %s28, 3
      %p91 = por %p89, %p90
      %p93 = scmp.ne.s32.totalorder %s76, %s92
      %p94 = scmp.eq.s32.totalorder %s28, 0
      %p95 = por %p93, %p94
      %s97 = sadd.s32 %s96, 1
      %p100 = scmp.eq.s32.totalorder %s22, 3
      %p101 = scmp.ne.s32.totalorder %s96, %s98
      %p102 = scmp.eq.s32.totalorder %s22, 0
      %p103 = por %p101, %p102
      %p104 = scmp.ne.s32.totalorder %s96, %s98
      %p105 = scmp.eq.s32.totalorder %s27, 3
      %p106 = por %p104, %p105
      %p107 = scmp.ne.s32.totalorder %s98, %s99
      %p108 = scmp.eq.s32.totalorder %s27, 0
      %p109 = por %p107, %p108
      %p110 = scmp.ne.s32.totalorder %s98, %s99
      %p111 = scmp.eq.s32.totalorder %s28, 3
      %p112 = por %p110, %p111
      %p114 = scmp.ne.s32.totalorder %s99, %s113
      %p115 = scmp.eq.s32.totalorder %s28, 0
      %p116 = por %p114, %p115
      %s118 = sadd.s32 %s117, 1
      %p121 = scmp.eq.s32.totalorder %s22, 3
      %p122 = scmp.ne.s32.totalorder %s117, %s119
      %p123 = scmp.eq.s32.totalorder %s22, 0
      %p124 = por %p122, %p123
      %p125 = scmp.ne.s32.totalorder %s117, %s119
      %p126 = scmp.eq.s32.totalorder %s27, 3
      %p127 = por %p125, %p126
      %p128 = scmp.ne.s32.totalorder %s119, %s120
      %p129 = scmp.eq.s32.totalorder %s27, 0
      %p130 = por %p128, %p129
      %p131 = scmp.ne.s32.totalorder %s119, %s120
      %p132 = scmp.eq.s32.totalorder %s28, 3
      %p133 = por %p131, %p132
      %p135 = scmp.ne.s32.totalorder %s120, %s134
      %p136 = scmp.eq.s32.totalorder %s28, 0
      %p137 = por %p135, %p136
      %s139 = sadd.s32 %s138, 1
      %p142 = scmp.eq.s32.totalorder %s22, 3
      %p143 = scmp.ne.s32.totalorder %s138, %s140
      %p144 = scmp.eq.s32.totalorder %s22, 0
      %p145 = por %p143, %p144
      %p146 = scmp.ne.s32.totalorder %s138, %s140
      %p147 = scmp.eq.s32.totalorder %s27, 3
      %p148 = por %p146, %p147
      %p149 = scmp.ne.s32.totalorder %s140, %s141
      %p150 = scmp.eq.s32.totalorder %s27, 0
      %p151 = por %p149, %p150
      %p152 = scmp.ne.s32.totalorder %s140, %s141
      %p153 = scmp.eq.s32.totalorder %s28, 3
      %p154 = por %p152, %p153
      %p156 = scmp.ne.s32.totalorder %s141, %s155
      %p157 = scmp.eq.s32.totalorder %s28, 0
      %p158 = por %p156, %p157
      %s160 = sadd.s32 %s159, 1
      %p163 = scmp.eq.s32.totalorder %s22, 3
      %p164 = scmp.ne.s32.totalorder %s159, %s161
      %p165 = scmp.eq.s32.totalorder %s22, 0
      %p166 = por %p164, %p165
      %p167 = scmp.ne.s32.totalorder %s159, %s161
      %p168 = scmp.eq.s32.totalorder %s27, 3
      %p169 = por %p167, %p168
      %p170 = scmp.ne.s32.totalorder %s161, %s162
      %p171 = scmp.eq.s32.totalorder %s27, 0
      %p172 = por %p170, %p171
      %p173 = scmp.ne.s32.totalorder %s161, %s162
      %p174 = scmp.eq.s32.totalorder %s28, 3
      %p175 = por %p173, %p174
      %p177 = scmp.ne.s32.totalorder %s162, %s176
      %p178 = scmp.eq.s32.totalorder %s28, 0
      %p179 = por %p177, %p178
      %s180 = ssub.s32 %s29, %s41
      %s181 = ssub.s32 %s30, %s37
      %s182 = sor.u32 %s180, %s181
      %p183 = scmp.eq.s32.totalorder %s182, 0
      %s185 = sadd.s32 %s184, 1
      %s186 = scalar_select %p183, %s184, %s185
      %p189 = pneg %p183
      %p190 = scmp.eq.s32.totalorder %s22, 3
      %p191 = por %p189, %p190
      %p192 = scmp.ne.s32.totalorder %s184, %s187
      %p193 = scmp.eq.s32.totalorder %s22, 0
      %p194 = por %p192, %p193
      %p195 = scmp.ne.s32.totalorder %s184, %s187
      %p196 = scmp.eq.s32.totalorder %s27, 3
      %p197 = por %p195, %p196
      %p198 = scmp.ne.s32.totalorder %s187, %s188
      %p199 = scmp.eq.s32.totalorder %s27, 0
      %p200 = por %p198, %p199
      %p201 = scmp.ne.s32.totalorder %s187, %s188
      %p202 = scmp.eq.s32.totalorder %s28, 3
      %p203 = por %p201, %p202
      %p205 = scmp.ne.s32.totalorder %s188, %s204
      %p206 = scmp.eq.s32.totalorder %s28, 0
      %p207 = por %p205, %p206
      %p208 = scmp.le.s32.totalorder 1, %s22
      %p209 = scmp.lt.s32.totalorder %s22, 5
      %p210 = pnand %p208, %p209
      %p211 = pneg %p210
      // Predicated region
      $region9: #{attention_forward.1} parent=5 // pred_check
        _
      $region10: #{attention_forward.1} parent=5 // pred_check_branch
        %213 = sbr.rel (%p210) target = $region12
      $region11: #{attention_forward.1} parent=5 // pred_region
        %s214 = ssub.s32 %s22, 1
        // Predicated region
        $region13: #{attention_forward.1} parent=11 // pred_check
          %p215 = pneg %p109
        $region14: #{attention_forward.1} parent=11 // pred_check_branch
          %217 = sbr.rel (%p215) target = $region16
        $region15: #{attention_forward.1} parent=11 // pred_region
          %s219 = ssub.s32 2048, 2048
          %220 = vsyncadd [#allocation7], %s219
          %s221 = sshll.u32 [#allocation8], 4
          %s222 = int_to_ptr.vmem [resolvable:$true] %s221
          %227 = dma.hbm_to_vmem [thread:$0]  %s2, 2048, %s222, [#allocation7], 128, 128, 8
        $region16: #{attention_forward.1} parent=11 // pred_fallthru
          _
        // Predicated region
        $region17: #{attention_forward.1} parent=11 // pred_check
          %p228 = pneg %p130
        $region18: #{attention_forward.1} parent=11 // pred_check_branch
          %230 = sbr.rel (%p228) target = $region20
        $region19: #{attention_forward.1} parent=11 // pred_region
          %s232 = ssub.s32 4096, 4096
          %233 = vsyncadd [#allocation10], %s232
          %s234 = sshll.u32 [#allocation9], 4
          %s235 = int_to_ptr.vmem [resolvable:$true] %s234
          %240 = dma.hbm_to_vmem [thread:$0]  %s3, 4096, %s235, [#allocation10], 256, 256, 16
        $region20: #{attention_forward.1} parent=11 // pred_fallthru
          _
        // Predicated region
        $region21: #{attention_forward.1} parent=11 // pred_check
          %p241 = pneg %p151
        $region22: #{attention_forward.1} parent=11 // pred_check_branch
          %243 = sbr.rel (%p241) target = $region24
        $region23: #{attention_forward.1} parent=11 // pred_region
          %s245 = ssub.s32 2048, 2048
          %246 = vsyncadd [#allocation10], %s245
          %s247 = sshll.u32 [#allocation11], 4
          %s248 = int_to_ptr.vmem [resolvable:$true] %s247
          %253 = dma.hbm_to_vmem [thread:$0]  %s4, 2048, %s248, [#allocation10], 128, 128, 8
        $region24: #{attention_forward.1} parent=11 // pred_fallthru
          _
        // Predicated region
        $region25: #{attention_forward.1} parent=11 // pred_check
          %p254 = pneg %p172
        $region26: #{attention_forward.1} parent=11 // pred_check_branch
          %256 = sbr.rel (%p254) target = $region28
        $region27: #{attention_forward.1} parent=11 // pred_region
          _
        $region28: #{attention_forward.1} parent=11 // pred_fallthru
          _
      $region12: #{attention_forward.1} parent=5 // pred_fallthru
        _
      %p257 = scmp.lt.s32.totalorder %s22, 4
      // Predicated region
      $region29: #{attention_forward.1} parent=5 // pred_check
        %p258 = pneg %p257
      $region30: #{attention_forward.1} parent=5 // pred_check_branch
        %260 = sbr.rel (%p258) target = $region32
      $region31: #{attention_forward.1} parent=5 // pred_region
        // Predicated region
        $region33: #{attention_forward.1} parent=31 // pred_check
          %p261 = pneg %p54
        $region34: #{attention_forward.1} parent=31 // pred_check_branch
          %263 = sbr.rel (%p261) target = $region36
        $region35: #{attention_forward.1} parent=31 // pred_region
          %s264 = sand.u32 %s44, 1
          %s265 = scalar_lea.sflag [#allocation4], %s264
          %s266 = sand.u32 %s44, 1
          %s267 = smul.addr %s266, 256
          %s268 = scalar_lea.vmem [#allocation3], %s267
          %s270 = ssub.s32 4096, 4096
          %271 = vsyncadd %s265, %s270
          %s272 = smul.addr %s29, 32
          %s273 = smul.addr %s272, 128
          %s274 = scalar_lea.hbm %s0, %s273
          %s275 = sshll.u32 %s268, 4
          %s276 = int_to_ptr.vmem [resolvable:$true] %s275
          %281 = dma.hbm_to_vmem [thread:$0]  %s274, 4096, %s276, %s265, 128, 128, 8
        $region36: #{attention_forward.1} parent=31 // pred_fallthru
          _
        // Predicated region
        $region37: #{attention_forward.1} parent=31 // pred_check
          %p282 = pneg %p82
        $region38: #{attention_forward.1} parent=31 // pred_check_branch
          %284 = sbr.rel (%p282) target = $region40
        $region39: #{attention_forward.1} parent=31 // pred_region
          %s285 = sand.u32 %s22, 1
          %s286 = scalar_lea.sflag [#allocation7], %s285
          %s287 = sand.u32 %s72, 1
          %s288 = smul.addr %s287, 128
          %s289 = scalar_lea.vmem [#allocation6], %s288
          %s290 = smul.u32 16, %s30
          %s292 = ssub.s32 2048, 2048
          %293 = vsyncadd %s286, %s292
          %s294 = smul.addr %s29, 32
          %s295 = sadd.s32 %s290, %s294
          %s296 = smul.addr %s295, 128
          %s297 = scalar_lea.hbm %s1, %s296
          %s298 = sshll.u32 %s289, 4
          %s299 = int_to_ptr.vmem [resolvable:$true] %s298
          %304 = dma.hbm_to_vmem [thread:$0]  %s297, 2048, %s299, %s286, 128, 128, 8
        $region40: #{attention_forward.1} parent=31 // pred_fallthru
          _
      $region32: #{attention_forward.1} parent=5 // pred_fallthru
        _
      %p305 = scmp.le.s32.totalorder 1, %s22
      %p306 = scmp.lt.s32.totalorder %s22, 5
      %p307 = pnand %p305, %p306
      %p308 = pneg %p307
      // Predicated region
      $region41: #{attention_forward.1} parent=5 // pred_check
        _
      $region42: #{attention_forward.1} parent=5 // pred_check_branch
        %310 = sbr.rel (%p307) target = $region44
      $region43: #{attention_forward.1} parent=5 // pred_region
        %s311 = ssub.s32 %s22, 1
        %s312 = sand.u32 %s47, 1
        %s313 = scalar_lea.sflag [#allocation4], %s312
        %s314 = sand.u32 %s47, 1
        %s315 = smul.addr %s314, 256
        %s316 = scalar_lea.vmem [#allocation3], %s315
        // Predicated region
        $region45: #{attention_forward.1} parent=43 // pred_check
          %p317 = pneg %p60
        $region46: #{attention_forward.1} parent=43 // pred_check_branch
          %319 = sbr.rel (%p317) target = $region48
        $region47: #{attention_forward.1} parent=43 // pred_region
          %320 = dma.done %s313, 4096
        $region48: #{attention_forward.1} parent=43 // pred_fallthru
          _
        %s321 = sand.u32 %s27, 1
        %s322 = scalar_lea.sflag [#allocation7], %s321
        %s323 = sand.u32 %s75, 1
        %s324 = smul.addr %s323, 128
        %s325 = scalar_lea.vmem [#allocation6], %s324
        // Predicated region
        $region49: #{attention_forward.1} parent=43 // pred_check
          %p326 = pneg %p88
        $region50: #{attention_forward.1} parent=43 // pred_check_branch
          %328 = sbr.rel (%p326) target = $region52
        $region51: #{attention_forward.1} parent=43 // pred_region
          %329 = dma.done %s322, 2048
        $region52: #{attention_forward.1} parent=43 // pred_fallthru
          _
        // Predicated region
        $region53: #{attention_forward.1} parent=43 // pred_check
          %p330 = pneg %p109
        $region54: #{attention_forward.1} parent=43 // pred_check_branch
          %332 = sbr.rel (%p330) target = $region56
        $region55: #{attention_forward.1} parent=43 // pred_region
          %333 = dma.done [#allocation7], 2048
        $region56: #{attention_forward.1} parent=43 // pred_fallthru
          _
        // Predicated region
        $region57: #{attention_forward.1} parent=43 // pred_check
          %p334 = pneg %p130
        $region58: #{attention_forward.1} parent=43 // pred_check_branch
          %336 = sbr.rel (%p334) target = $region60
        $region59: #{attention_forward.1} parent=43 // pred_region
          %337 = dma.done [#allocation10], 4096
        $region60: #{attention_forward.1} parent=43 // pred_fallthru
          _
        // Predicated region
        $region61: #{attention_forward.1} parent=43 // pred_check
          %p338 = pneg %p151
        $region62: #{attention_forward.1} parent=43 // pred_check_branch
          %340 = sbr.rel (%p338) target = $region64
        $region63: #{attention_forward.1} parent=43 // pred_region
          %341 = dma.done [#allocation10], 2048
        $region64: #{attention_forward.1} parent=43 // pred_fallthru
          _
        %s342 = sand.u32 %s47, 1
        %s343 = scalar_lea.sflag [#allocation4], %s342
        %s344 = sand.u32 %s47, 1
        %s345 = smul.addr %s344, 256
        %s346 = scalar_lea.vmem [#allocation3], %s345
        %p347 = pneg %p60
        %p348 = pneg %p57
        %s349 = sand.u32 %s27, 1
        %s350 = scalar_lea.sflag [#allocation7], %s349
        %s351 = sand.u32 %s75, 1
        %s352 = smul.addr %s351, 128
        %s353 = scalar_lea.vmem [#allocation6], %s352
        %p354 = pneg %p88
        %p355 = pneg %p85
        %p356 = pneg %p109
        %p357 = pneg %p106
        %p358 = pneg %p130
        %p359 = pneg %p127
        %p360 = pneg %p151
        %p361 = pneg %p148
        %p362 = pneg %p172
        %p363 = pneg %p169
        %p364 = pneg %p200
        %p365 = pneg %p197
        %s366 = sand.u32 %s187, 1
        %s367 = scalar_lea.sflag [#allocation5], %s366
        %s368 = sand.u32 %s187, 1
        %s369 = smul.addr %s368, 128
        %s370 = scalar_lea.vmem [#allocation12], %s369
        %s371 = smul.u32 16, %s32
        %s372 = smul.u32 16, %s32
        %p373 = scmp.eq.s32.totalorder %s32, 0
        // Predicated region
        $region65: #{attention_forward.1} parent=43 // pred_check
          %p374 = pneg %p373
        $region66: #{attention_forward.1} parent=43 // pred_check_branch
          %376 = sbr.rel (%p374) target = $region68
        $region67: #{attention_forward.1} parent=43 // pred_region
          %v377 = vld [vmem:[%s316] sm:$0xff]
          %v378 = vld [vmem:[%s316 + $0x8] sm:$0xff]
          %v379 = vld [vmem:[%s316 + $0x10] sm:$0xff]
          %v380 = vld [vmem:[%s316 + $0x18] sm:$0xff]
          %v381 = vld [vmem:[%s316 + $0x20] sm:$0xff]
          %v382 = vld [vmem:[%s316 + $0x28] sm:$0xff]
          %v383 = vld [vmem:[%s316 + $0x30] sm:$0xff]
          %v384 = vld [vmem:[%s316 + $0x38] sm:$0xff]
          %v385 = vld [vmem:[%s316 + $0x40] sm:$0xff]
          %v386 = vld [vmem:[%s316 + $0x48] sm:$0xff]
          %v387 = vld [vmem:[%s316 + $0x50] sm:$0xff]
          %v388 = vld [vmem:[%s316 + $0x58] sm:$0xff]
          %v389 = vld [vmem:[%s316 + $0x60] sm:$0xff]
          %v390 = vld [vmem:[%s316 + $0x68] sm:$0xff]
          %v391 = vld [vmem:[%s316 + $0x70] sm:$0xff]
          %v392 = vld [vmem:[%s316 + $0x78] sm:$0xff]
          %v393 = vld [vmem:[%s316 + $0x80] sm:$0xff]
          %v394 = vld [vmem:[%s316 + $0x88] sm:$0xff]
          %v395 = vld [vmem:[%s316 + $0x90] sm:$0xff]
          %v396 = vld [vmem:[%s316 + $0x98] sm:$0xff]
          %v397 = vld [vmem:[%s316 + $0xa0] sm:$0xff]
          %v398 = vld [vmem:[%s316 + $0xa8] sm:$0xff]
          %v399 = vld [vmem:[%s316 + $0xb0] sm:$0xff]
          %v400 = vld [vmem:[%s316 + $0xb8] sm:$0xff]
          %v401 = vld [vmem:[%s316 + $0xc0] sm:$0xff]
          %v402 = vld [vmem:[%s316 + $0xc8] sm:$0xff]
          %v403 = vld [vmem:[%s316 + $0xd0] sm:$0xff]
          %v404 = vld [vmem:[%s316 + $0xd8] sm:$0xff]
          %v405 = vld [vmem:[%s316 + $0xe0] sm:$0xff]
          %v406 = vld [vmem:[%s316 + $0xe8] sm:$0xff]
          %v407 = vld [vmem:[%s316 + $0xf0] sm:$0xff]
          %v408 = vld [vmem:[%s316 + $0xf8] sm:$0xff]
          %v409 = vld [vmem:[#allocation9] sm:$0xff]
          %v410 = vld [vmem:[#allocation9 + $0x8] sm:$0xff]
          %v411 = vld [vmem:[#allocation9 + $0x10] sm:$0xff]
          %v412 = vld [vmem:[#allocation9 + $0x18] sm:$0xff]
          %v413 = vld [vmem:[#allocation9 + $0x20] sm:$0xff]
          %v414 = vld [vmem:[#allocation9 + $0x28] sm:$0xff]
          %v415 = vld [vmem:[#allocation9 + $0x30] sm:$0xff]
          %v416 = vld [vmem:[#allocation9 + $0x38] sm:$0xff]
          %v417 = vld [vmem:[#allocation9 + $0x40] sm:$0xff]
          %v418 = vld [vmem:[#allocation9 + $0x48] sm:$0xff]
          %v419 = vld [vmem:[#allocation9 + $0x50] sm:$0xff]
          %v420 = vld [vmem:[#allocation9 + $0x58] sm:$0xff]
          %v421 = vld [vmem:[#allocation9 + $0x60] sm:$0xff]
          %v422 = vld [vmem:[#allocation9 + $0x68] sm:$0xff]
          %v423 = vld [vmem:[#allocation9 + $0x70] sm:$0xff]
          %v424 = vld [vmem:[#allocation9 + $0x78] sm:$0xff]
          %v425 = vld [vmem:[#allocation9 + $0x80] sm:$0xff]
          %v426 = vld [vmem:[#allocation9 + $0x88] sm:$0xff]
          %v427 = vld [vmem:[#allocation9 + $0x90] sm:$0xff]
          %v428 = vld [vmem:[#allocation9 + $0x98] sm:$0xff]
          %v429 = vld [vmem:[#allocation9 + $0xa0] sm:$0xff]
          %v430 = vld [vmem:[#allocation9 + $0xa8] sm:$0xff]
          %v431 = vld [vmem:[#allocation9 + $0xb0] sm:$0xff]
          %v432 = vld [vmem:[#allocation9 + $0xb8] sm:$0xff]
          %v433 = vld [vmem:[#allocation9 + $0xc0] sm:$0xff]
          %v434 = vld [vmem:[#allocation9 + $0xc8] sm:$0xff]
          %v435 = vld [vmem:[#allocation9 + $0xd0] sm:$0xff]
          %v436 = vld [vmem:[#allocation9 + $0xd8] sm:$0xff]
          %v437 = vld [vmem:[#allocation9 + $0xe0] sm:$0xff]
          %v438 = vld [vmem:[#allocation9 + $0xe8] sm:$0xff]
          %v439 = vld [vmem:[#allocation9 + $0xf0] sm:$0xff]
          %v440 = vld [vmem:[#allocation9 + $0xf8] sm:$0xff]
          %441 = vmatprep.subr.mxu0 %v410
          %442 = vmatpush1.msra.mxu0 %v409
          %443 = vmatprep.subr.mxu0 %v412
          %444 = vmatpush1.msra.mxu0 %v411
          %445 = vmatprep.subr.mxu0 %v414
          %446 = vmatpush1.msra.mxu0 %v413
          %447 = vmatprep.subr.mxu0 %v416
          %448 = vmatpush1.msra.mxu0 %v415
          %449 = vmatprep.subr.mxu0 %v418
          %450 = vmatpush1.msra.mxu0 %v417
          %451 = vmatprep.subr.mxu0 %v420
          %452 = vmatpush1.msra.mxu0 %v419
          %453 = vmatprep.subr.mxu0 %v422
          %454 = vmatpush1.msra.mxu0 %v421
          %455 = vmatprep.subr.mxu0 %v424
          %456 = vmatpush1.msra.mxu0 %v423
          %457 = vmatprep.subr.mxu0 %v426
          %458 = vmatpush1.msra.mxu0 %v425
          %459 = vmatprep.subr.mxu0 %v428
          %460 = vmatpush1.msra.mxu0 %v427
          %461 = vmatprep.subr.mxu0 %v430
          %462 = vmatpush1.msra.mxu0 %v429
          %463 = vmatprep.subr.mxu0 %v432
          %464 = vmatpush1.msra.mxu0 %v431
          %465 = vmatprep.subr.mxu0 %v434
          %466 = vmatpush1.msra.mxu0 %v433
          %467 = vmatprep.subr.mxu0 %v436
          %468 = vmatpush1.msra.mxu0 %v435
          %469 = vmatprep.subr.mxu0 %v438
          %470 = vmatpush1.msra.mxu0 %v437
          %471 = vmatprep.subr.mxu0 %v440
          %472 = vmatpush1.msra.mxu0 %v439
          %473 = vmatprep.subr.mxu0 0.0
          %474 = vmatpush1.msra.mxu0 0.0
          %475 = vmatprep.subr.mxu0 0.0
          %476 = vmatpush1.msra.mxu0 0.0
          %477 = vmatprep.subr.mxu0 0.0
          %478 = vmatpush1.msra.mxu0 0.0
          %479 = vmatprep.subr.mxu0 0.0
          %480 = vmatpush1.msra.mxu0 0.0
          %481 = vmatprep.subr.mxu0 0.0
          %482 = vmatpush1.msra.mxu0 0.0
          %483 = vmatprep.subr.mxu0 0.0
          %484 = vmatpush1.msra.mxu0 0.0
          %485 = vmatprep.subr.mxu0 0.0
          %486 = vmatpush1.msra.mxu0 0.0
          %487 = vmatprep.subr.mxu0 0.0
          %488 = vmatpush1.msra.mxu0 0.0
          %489 = vmatprep.subr.mxu0 0.0
          %490 = vmatpush1.msra.mxu0 0.0
          %491 = vmatprep.subr.mxu0 0.0
          %492 = vmatpush1.msra.mxu0 0.0
          %493 = vmatprep.subr.mxu0 0.0
          %494 = vmatpush1.msra.mxu0 0.0
          %495 = vmatprep.subr.mxu0 0.0
          %496 = vmatpush1.msra.mxu0 0.0
          %497 = vmatprep.subr.mxu0 0.0
          %498 = vmatpush1.msra.mxu0 0.0
          %499 = vmatprep.subr.mxu0 0.0
          %500 = vmatpush1.msra.mxu0 0.0
          %501 = vmatprep.subr.mxu0 0.0
          %502 = vmatpush1.msra.mxu0 0.0
          %503 = vmatprep.subr.mxu0 0.0
          %504 = vmatpush1.msra.mxu0 0.0
          %505 = vmatprep.mubr.f32.mxu0 0.0
          %506 = vmatmul.mubr.f32.gmra.mrb[0].mxu0 %v377
          %v507 = vpop.f32.mrb[0].mxu0
          %v508 = vadd.f32 0.0, %v507
          %v509 = vpop.f32.mrb[0].mxu0
          %v510 = vadd.f32 0.0, %v509
          %511 = vmatprep.mubr.f32.mxu0 0.0
          %512 = vmatmul.mubr.f32.gmra.mrb[0].mxu0 %v378
          %v513 = vpop.f32.mrb[0].mxu0
          %v514 = vadd.f32 0.0, %v513
          %v515 = vpop.f32.mrb[0].mxu0
          %v516 = vadd.f32 0.0, %v515
          %517 = vmatprep.mubr.f32.mxu0 0.0
          %518 = vmatmul.mubr.f32.gmra.mrb[0].mxu0 %v379
          %v519 = vpop.f32.mrb[0].mxu0
          %v520 = vadd.f32 0.0, %v519
          %v521 = vpop.f32.mrb[0].mxu0
          %v522 = vadd.f32 0.0, %v521
          %523 = vmatprep.mubr.f32.mxu0 0.0
          %524 = vmatmul.mubr.f32.gmra.mrb[0].mxu0 %v380
          %v525 = vpop.f32.mrb[0].mxu0
          %v526 = vadd.f32 0.0, %v525
          %v527 = vpop.f32.mrb[0].mxu0
          %v528 = vadd.f32 0.0, %v527
          %529 = vmatprep.mubr.f32.mxu0 0.0
          %530 = vmatmul.mubr.f32.gmra.mrb[0].mxu0 %v381
          %v531 = vpop.f32.mrb[0].mxu0
          %v532 = vadd.f32 0.0, %v531
          %v533 = vpop.f32.mrb[0].mxu0
          %v534 = vadd.f32 0.0, %v533
          %535 = vmatprep.mubr.f32.mxu0 0.0
          %536 = vmatmul.mubr.f32.gmra.mrb[0].mxu0 %v382
          %v537 = vpop.f32.mrb[0].mxu0
          %v538 = vadd.f32 0.0, %v537
          %v539 = vpop.f32.mrb[0].mxu0
          %v540 = vadd.f32 0.0, %v539
          %541 = vmatprep.mubr.f32.mxu0 0.0
          %542 = vmatmul.mubr.f32.gmra.mrb[0].mxu0 %v383
          %v543 = vpop.f32.mrb[0].mxu0
          %v544 = vadd.f32 0.0, %v543
          %v545 = vpop.f32.mrb[0].mxu0
          %v546 = vadd.f32 0.0, %v545
          %547 = vmatprep.mubr.f32.mxu0 0.0
          %548 = vmatmul.mubr.f32.gmra.mrb[0].mxu0 %v384
          %v549 = vpop.f32.mrb[0].mxu0
          %v550 = vadd.f32 0.0, %v549
          %v551 = vpop.f32.mrb[0].mxu0
          %v552 = vadd.f32 0.0, %v551
          %553 = vmatprep.mubr.f32.mxu0 0.0
          %554 = vmatmul.mubr.f32.gmra.mrb[0].mxu0 %v385
          %v555 = vpop.f32.mrb[0].mxu0
          %v556 = vadd.f32 0.0, %v555
          %v557 = vpop.f32.mrb[0].mxu0
          %v558 = vadd.f32 0.0, %v557
          %559 = vmatprep.mubr.f32.mxu0 0.0
          %560 = vmatmul.mubr.f32.gmra.mrb[0].mxu0 %v386
          %v561 = vpop.f32.mrb[0].mxu0
          %v562 = vadd.f32 0.0, %v561
          %v563 = vpop.f32.mrb[0].mxu0
          %v564 = vadd.f32 0.0, %v563
          %565 = vmatprep.mubr.f32.mxu0 0.0
          %566 = vmatmul.mubr.f32.gmra.mrb[0].mxu0 %v387
          %v567 = vpop.f32.mrb[0].mxu0
          %v568 = vadd.f32 0.0, %v567
          %v569 = vpop.f32.mrb[0].mxu0
          %v570 = vadd.f32 0.0, %v569
          %571 = vmatprep.mubr.f32.mxu0 0.0
          %572 = vmatmul.mubr.f32.gmra.mrb[0].mxu0 %v388
          %v573 = vpop.f32.mrb[0].mxu0
          %v574 = vadd.f32 0.0, %v573
          %v575 = vpop.f32.mrb[0].mxu0
          %v576 = vadd.f32 0.0, %v575
          %577 = vmatprep.mubr.f32.mxu0 0.0
          %578 = vmatmul.mubr.f32.gmra.mrb[0].mxu0 %v389
          %v579 = vpop.f32.mrb[0].mxu0
          %v580 = vadd.f32 0.0, %v579
          %v581 = vpop.f32.mrb[0].mxu0
          %v582 = vadd.f32 0.0, %v581
          %583 = vmatprep.mubr.f32.mxu0 0.0
          %584 = vmatmul.mubr.f32.gmra.mrb[0].mxu0 %v390
          %v585 = vpop.f32.mrb[0].mxu0
          %v586 = vadd.f32 0.0, %v585
          %v587 = vpop.f32.mrb[0].mxu0
          %v588 = vadd.f32 0.0, %v587
          %589 = vmatprep.mubr.f32.mxu0 0.0
          %590 = vmatmul.mubr.f32.gmra.mrb[0].mxu0 %v391
          %v591 = vpop.f32.mrb[0].mxu0
          %v592 = vadd.f32 0.0, %v591
          %v593 = vpop.f32.mrb[0].mxu0
          %v594 = vadd.f32 0.0, %v593
          %595 = vmatprep.mubr.f32.mxu0 0.0
          %596 = vmatmul.mubr.f32.gmra.mrb[0].mxu0 %v392
          %v597 = vpop.f32.mrb[0].mxu0
          %v598 = vadd.f32 0.0, %v597
          %v599 = vpop.f32.mrb[0].mxu0
          %v600 = vadd.f32 0.0, %v599
          %601 = vmatprep.mubr.f32.mxu0 0.0
          %602 = vmatmul.mubr.f32.gmra.mrb[0].mxu0 %v393
          %v603 = vpop.f32.mrb[0].mxu0
          %v604 = vadd.f32 0.0, %v603
          %v605 = vpop.f32.mrb[0].mxu0
          %v606 = vadd.f32 0.0, %v605
          %607 = vmatprep.mubr.f32.mxu0 0.0
          %608 = vmatmul.mubr.f32.gmra.mrb[0].mxu0 %v394
          %v609 = vpop.f32.mrb[0].mxu0
          %v610 = vadd.f32 0.0, %v609
          %v611 = vpop.f32.mrb[0].mxu0
          %v612 = vadd.f32 0.0, %v611
          %613 = vmatprep.mubr.f32.mxu0 0.0
          %614 = vmatmul.mubr.f32.gmra.mrb[0].mxu0 %v395
          %v615 = vpop.f32.mrb[0].mxu0
          %v616 = vadd.f32 0.0, %v615
          %v617 = vpop.f32.mrb[0].mxu0
          %v618 = vadd.f32 0.0, %v617
          %619 = vmatprep.mubr.f32.mxu0 0.0
          %620 = vmatmul.mubr.f32.gmra.mrb[0].mxu0 %v396
          %v621 = vpop.f32.mrb[0].mxu0
          %v622 = vadd.f32 0.0, %v621
          %v623 = vpop.f32.mrb[0].mxu0
          %v624 = vadd.f32 0.0, %v623
          %625 = vmatprep.mubr.f32.mxu0 0.0
          %626 = vmatmul.mubr.f32.gmra.mrb[0].mxu0 %v397
          %v627 = vpop.f32.mrb[0].mxu0
          %v628 = vadd.f32 0.0, %v627
          %v629 = vpop.f32.mrb[0].mxu0
          %v630 = vadd.f32 0.0, %v629
          %631 = vmatprep.mubr.f32.mxu0 0.0
          %632 = vmatmul.mubr.f32.gmra.mrb[0].mxu0 %v398
          %v633 = vpop.f32.mrb[0].mxu0
          %v634 = vadd.f32 0.0, %v633
          %v635 = vpop.f32.mrb[0].mxu0
          %v636 = vadd.f32 0.0, %v635
          %637 = vmatprep.mubr.f32.mxu0 0.0
          %638 = vmatmul.mubr.f32.gmra.mrb[0].mxu0 %v399
          %v639 = vpop.f32.mrb[0].mxu0
          %v640 = vadd.f32 0.0, %v639
          %v641 = vpop.f32.mrb[0].mxu0
          %v642 = vadd.f32 0.0, %v641
          %643 = vmatprep.mubr.f32.mxu0 0.0
          %644 = vmatmul.mubr.f32.gmra.mrb[0].mxu0 %v400
          %v645 = vpop.f32.mrb[0].mxu0
          %v646 = vadd.f32 0.0, %v645
          %v647 = vpop.f32.mrb[0].mxu0
          %v648 = vadd.f32 0.0, %v647
          %649 = vmatprep.mubr.f32.mxu0 0.0
          %650 = vmatmul.mubr.f32.gmra.mrb[0].mxu0 %v401
          %v651 = vpop.f32.mrb[0].mxu0
          %v652 = vadd.f32 0.0, %v651
          %v653 = vpop.f32.mrb[0].mxu0
          %v654 = vadd.f32 0.0, %v653
          %655 = vmatprep.mubr.f32.mxu0 0.0
          %656 = vmatmul.mubr.f32.gmra.mrb[0].mxu0 %v402
          %v657 = vpop.f32.mrb[0].mxu0
          %v658 = vadd.f32 0.0, %v657
          %v659 = vpop.f32.mrb[0].mxu0
          %v660 = vadd.f32 0.0, %v659
          %661 = vmatprep.mubr.f32.mxu0 0.0
          %662 = vmatmul.mubr.f32.gmra.mrb[0].mxu0 %v403
          %v663 = vpop.f32.mrb[0].mxu0
          %v664 = vadd.f32 0.0, %v663
          %v665 = vpop.f32.mrb[0].mxu0
          %v666 = vadd.f32 0.0, %v665
          %667 = vmatprep.mubr.f32.mxu0 0.0
          %668 = vmatmul.mubr.f32.gmra.mrb[0].mxu0 %v404
          %v669 = vpop.f32.mrb[0].mxu0
          %v670 = vadd.f32 0.0, %v669
          %v671 = vpop.f32.mrb[0].mxu0
          %v672 = vadd.f32 0.0, %v671
          %673 = vmatprep.mubr.f32.mxu0 0.0
          %674 = vmatmul.mubr.f32.gmra.mrb[0].mxu0 %v405
          %v675 = vpop.f32.mrb[0].mxu0
          %v676 = vadd.f32 0.0, %v675
          %v677 = vpop.f32.mrb[0].mxu0
          %v678 = vadd.f32 0.0, %v677
          %679 = vmatprep.mubr.f32.mxu0 0.0
          %680 = vmatmul.mubr.f32.gmra.mrb[0].mxu0 %v406
          %v681 = vpop.f32.mrb[0].mxu0
          %v682 = vadd.f32 0.0, %v681
          %v683 = vpop.f32.mrb[0].mxu0
          %v684 = vadd.f32 0.0, %v683
          %685 = vmatprep.mubr.f32.mxu0 0.0
          %686 = vmatmul.mubr.f32.gmra.mrb[0].mxu0 %v407
          %v687 = vpop.f32.mrb[0].mxu0
          %v688 = vadd.f32 0.0, %v687
          %v689 = vpop.f32.mrb[0].mxu0
          %v690 = vadd.f32 0.0, %v689
          %691 = vmatprep.mubr.f32.mxu0 0.0
          %692 = vmatmul.mubr.f32.gmra.mrb[0].mxu0 %v408
          %v693 = vpop.f32.mrb[0].mxu0
          %v694 = vadd.f32 0.0, %v693
          %v695 = vpop.f32.mrb[0].mxu0
          %v696 = vadd.f32 0.0, %v695
          %697 = vdwg.mxu0
          %698 = vst [vmem:[#allocation2] sm:$0xff] %v508
          %699 = vst [vmem:[#allocation2 + $0x8] sm:$0xff] %v510
          %700 = vst [vmem:[#allocation2 + $0x10] sm:$0xff] %v514
          %701 = vst [vmem:[#allocation2 + $0x18] sm:$0xff] %v516
          %702 = vst [vmem:[#allocation2 + $0x20] sm:$0xff] %v520
          %703 = vst [vmem:[#allocation2 + $0x28] sm:$0xff] %v522
          %704 = vst [vmem:[#allocation2 + $0x30] sm:$0xff] %v526
          %705 = vst [vmem:[#allocation2 + $0x38] sm:$0xff] %v528
          %706 = vst [vmem:[#allocation2 + $0x40] sm:$0xff] %v532
          %707 = vst [vmem:[#allocation2 + $0x48] sm:$0xff] %v534
          %708 = vst [vmem:[#allocation2 + $0x50] sm:$0xff] %v538
          %709 = vst [vmem:[#allocation2 + $0x58] sm:$0xff] %v540
          %710 = vst [vmem:[#allocation2 + $0x60] sm:$0xff] %v544
          %711 = vst [vmem:[#allocation2 + $0x68] sm:$0xff] %v546
          %712 = vst [vmem:[#allocation2 + $0x70] sm:$0xff] %v550
          %713 = vst [vmem:[#allocation2 + $0x78] sm:$0xff] %v552
          %714 = vst [vmem:[#allocation2 + $0x80] sm:$0xff] %v556
          %715 = vst [vmem:[#allocation2 + $0x88] sm:$0xff] %v558
          %716 = vst [vmem:[#allocation2 + $0x90] sm:$0xff] %v562
          %717 = vst [vmem:[#allocation2 + $0x98] sm:$0xff] %v564
          %718 = vst [vmem:[#allocation2 + $0xa0] sm:$0xff] %v568
          %719 = vst [vmem:[#allocation2 + $0xa8] sm:$0xff] %v570
          %720 = vst [vmem:[#allocation2 + $0xb0] sm:$0xff] %v574
          %721 = vst [vmem:[#allocation2 + $0xb8] sm:$0xff] %v576
          %722 = vst [vmem:[#allocation2 + $0xc0] sm:$0xff] %v580
          %723 = vst [vmem:[#allocation2 + $0xc8] sm:$0xff] %v582
          %724 = vst [vmem:[#allocation2 + $0xd0] sm:$0xff] %v586
          %725 = vst [vmem:[#allocation2 + $0xd8] sm:$0xff] %v588
          %726 = vst [vmem:[#allocation2 + $0xe0] sm:$0xff] %v592
          %727 = vst [vmem:[#allocation2 + $0xe8] sm:$0xff] %v594
          %728 = vst [vmem:[#allocation2 + $0xf0] sm:$0xff] %v598
          %729 = vst [vmem:[#allocation2 + $0xf8] sm:$0xff] %v600
          %730 = vst [vmem:[#allocation2 + $0x100] sm:$0xff] %v604
          %731 = vst [vmem:[#allocation2 + $0x108] sm:$0xff] %v606
          %732 = vst [vmem:[#allocation2 + $0x110] sm:$0xff] %v610
          %733 = vst [vmem:[#allocation2 + $0x118] sm:$0xff] %v612
          %734 = vst [vmem:[#allocation2 + $0x120] sm:$0xff] %v616
          %735 = vst [vmem:[#allocation2 + $0x128] sm:$0xff] %v618
          %736 = vst [vmem:[#allocation2 + $0x130] sm:$0xff] %v622
          %737 = vst [vmem:[#allocation2 + $0x138] sm:$0xff] %v624
          %738 = vst [vmem:[#allocation2 + $0x140] sm:$0xff] %v628
          %739 = vst [vmem:[#allocation2 + $0x148] sm:$0xff] %v630
          %740 = vst [vmem:[#allocation2 + $0x150] sm:$0xff] %v634
          %741 = vst [vmem:[#allocation2 + $0x158] sm:$0xff] %v636
          %742 = vst [vmem:[#allocation2 + $0x160] sm:$0xff] %v640
          %743 = vst [vmem:[#allocation2 + $0x168] sm:$0xff] %v642
          %744 = vst [vmem:[#allocation2 + $0x170] sm:$0xff] %v646
          %745 = vst [vmem:[#allocation2 + $0x178] sm:$0xff] %v648
          %746 = vst [vmem:[#allocation2 + $0x180] sm:$0xff] %v652
          %747 = vst [vmem:[#allocation2 + $0x188] sm:$0xff] %v654
          %748 = vst [vmem:[#allocation2 + $0x190] sm:$0xff] %v658
          %749 = vst [vmem:[#allocation2 + $0x198] sm:$0xff] %v660
          %750 = vst [vmem:[#allocation2 + $0x1a0] sm:$0xff] %v664
          %751 = vst [vmem:[#allocation2 + $0x1a8] sm:$0xff] %v666
          %752 = vst [vmem:[#allocation2 + $0x1b0] sm:$0xff] %v670
          %753 = vst [vmem:[#allocation2 + $0x1b8] sm:$0xff] %v672
          %754 = vst [vmem:[#allocation2 + $0x1c0] sm:$0xff] %v676
          %755 = vst [vmem:[#allocation2 + $0x1c8] sm:$0xff] %v678
          %756 = vst [vmem:[#allocation2 + $0x1d0] sm:$0xff] %v682
          %757 = vst [vmem:[#allocation2 + $0x1d8] sm:$0xff] %v684
          %758 = vst [vmem:[#allocation2 + $0x1e0] sm:$0xff] %v688
          %759 = vst [vmem:[#allocation2 + $0x1e8] sm:$0xff] %v690
          %760 = vst [vmem:[#allocation2 + $0x1f0] sm:$0xff] %v694
          %761 = vst [vmem:[#allocation2 + $0x1f8] sm:$0xff] %v696
        $region68: #{attention_forward.1} parent=43 // pred_fallthru
          _
        %v762 = vld [vmem:[%s325] sm:$0xff]
        %v763 = vld [vmem:[%s325 + $0x8] sm:$0xff]
        %v764 = vld [vmem:[%s325 + $0x10] sm:$0xff]
        %v765 = vld [vmem:[%s325 + $0x18] sm:$0xff]
        %v766 = vld [vmem:[%s325 + $0x20] sm:$0xff]
        %v767 = vld [vmem:[%s325 + $0x28] sm:$0xff]
        %v768 = vld [vmem:[%s325 + $0x30] sm:$0xff]
        %v769 = vld [vmem:[%s325 + $0x38] sm:$0xff]
        %v770 = vld [vmem:[%s325 + $0x40] sm:$0xff]
        %v771 = vld [vmem:[%s325 + $0x48] sm:$0xff]
        %v772 = vld [vmem:[%s325 + $0x50] sm:$0xff]
        %v773 = vld [vmem:[%s325 + $0x58] sm:$0xff]
        %v774 = vld [vmem:[%s325 + $0x60] sm:$0xff]
        %v775 = vld [vmem:[%s325 + $0x68] sm:$0xff]
        %v776 = vld [vmem:[%s325 + $0x70] sm:$0xff]
        %v777 = vld [vmem:[%s325 + $0x78] sm:$0xff]
        %v778 = vld [vmem:[#allocation8] sm:$0xff]
        %v779 = vld [vmem:[#allocation8 + $0x8] sm:$0xff]
        %v780 = vld [vmem:[#allocation8 + $0x10] sm:$0xff]
        %v781 = vld [vmem:[#allocation8 + $0x18] sm:$0xff]
        %v782 = vld [vmem:[#allocation8 + $0x20] sm:$0xff]
        %v783 = vld [vmem:[#allocation8 + $0x28] sm:$0xff]
        %v784 = vld [vmem:[#allocation8 + $0x30] sm:$0xff]
        %v785 = vld [vmem:[#allocation8 + $0x38] sm:$0xff]
        %v786 = vld [vmem:[#allocation8 + $0x40] sm:$0xff]
        %v787 = vld [vmem:[#allocation8 + $0x48] sm:$0xff]
        %v788 = vld [vmem:[#allocation8 + $0x50] sm:$0xff]
        %v789 = vld [vmem:[#allocation8 + $0x58] sm:$0xff]
        %v790 = vld [vmem:[#allocation8 + $0x60] sm:$0xff]
        %v791 = vld [vmem:[#allocation8 + $0x68] sm:$0xff]
        %v792 = vld [vmem:[#allocation8 + $0x70] sm:$0xff]
        %v793 = vld [vmem:[#allocation8 + $0x78] sm:$0xff]
        %794 = vmatprep.subr.mxu0 0.0
        %795 = vmatpush1.msra.mxu0 %v778
        %796 = vmatprep.subr.mxu0 0.0
        %797 = vmatpush1.msra.mxu0 %v779
        %798 = vmatprep.subr.mxu0 0.0
        %799 = vmatpush1.msra.mxu0 %v780
        %800 = vmatprep.subr.mxu0 0.0
        %801 = vmatpush1.msra.mxu0 %v781
        %802 = vmatprep.subr.mxu0 0.0
        %803 = vmatpush1.msra.mxu0 %v782
        %804 = vmatprep.subr.mxu0 0.0
        %805 = vmatpush1.msra.mxu0 %v783
        %806 = vmatprep.subr.mxu0 0.0
        %807 = vmatpush1.msra.mxu0 %v784
        %808 = vmatprep.subr.mxu0 0.0
        %809 = vmatpush1.msra.mxu0 %v785
        %810 = vmatprep.subr.mxu0 0.0
        %811 = vmatpush1.msra.mxu0 %v786
        %812 = vmatprep.subr.mxu0 0.0
        %813 = vmatpush1.msra.mxu0 %v787
        %814 = vmatprep.subr.mxu0 0.0
        %815 = vmatpush1.msra.mxu0 %v788
        %816 = vmatprep.subr.mxu0 0.0
        %817 = vmatpush1.msra.mxu0 %v789
        %818 = vmatprep.subr.mxu0 0.0
        %819 = vmatpush1.msra.mxu0 %v790
        %820 = vmatprep.subr.mxu0 0.0
        %821 = vmatpush1.msra.mxu0 %v791
        %822 = vmatprep.subr.mxu0 0.0
        %823 = vmatpush1.msra.mxu0 %v792
        %824 = vmatprep.subr.mxu0 0.0
        %825 = vmatpush1.msra.mxu0 %v793
        %826 = vmatprep.subr.mxu0 0.0
        %827 = vmatpush1.msra.mxu0 0.0
        %828 = vmatprep.subr.mxu0 0.0
        %829 = vmatpush1.msra.mxu0 0.0
        %830 = vmatprep.subr.mxu0 0.0
        %831 = vmatpush1.msra.mxu0 0.0
        %832 = vmatprep.subr.mxu0 0.0
        %833 = vmatpush1.msra.mxu0 0.0
        %834 = vmatprep.subr.mxu0 0.0
        %835 = vmatpush1.msra.mxu0 0.0
        %836 = vmatprep.subr.mxu0 0.0
        %837 = vmatpush1.msra.mxu0 0.0
        %838 = vmatprep.subr.mxu0 0.0
        %839 = vmatpush1.msra.mxu0 0.0
        %840 = vmatprep.subr.mxu0 0.0
        %841 = vmatpush1.msra.mxu0 0.0
        %842 = vmatprep.subr.mxu0 0.0
        %843 = vmatpush1.msra.mxu0 0.0
        %844 = vmatprep.subr.mxu0 0.0
        %845 = vmatpush1.msra.mxu0 0.0
        %846 = vmatprep.subr.mxu0 0.0
        %847 = vmatpush1.msra.mxu0 0.0
        %848 = vmatprep.subr.mxu0 0.0
        %849 = vmatpush1.msra.mxu0 0.0
        %850 = vmatprep.subr.mxu0 0.0
        %851 = vmatpush1.msra.mxu0 0.0
        %852 = vmatprep.subr.mxu0 0.0
        %853 = vmatpush1.msra.mxu0 0.0
        %854 = vmatprep.subr.mxu0 0.0
        %855 = vmatpush1.msra.mxu0 0.0
        %856 = vmatprep.subr.mxu0 0.0
        %857 = vmatpush1.msra.mxu0 0.0
        %858 = vmatprep.mubr.f32.mxu0 0.0
        %859 = vmatmul.mubr.f32.gmra.mrb[0].mxu0 %v762
        %v860 = vpop.f32.mrb[0].mxu0
        %v861 = vadd.f32 0.0, %v860
        %v862 = vpop.f32.mrb[0].mxu0
        %863 = vmatprep.mubr.f32.mxu0 0.0
        %864 = vmatmul.mubr.f32.gmra.mrb[0].mxu0 %v763
        %v865 = vpop.f32.mrb[0].mxu0
        %v866 = vadd.f32 0.0, %v865
        %v867 = vpop.f32.mrb[0].mxu0
        %868 = vmatprep.mubr.f32.mxu0 0.0
        %869 = vmatmul.mubr.f32.gmra.mrb[0].mxu0 %v764
        %v870 = vpop.f32.mrb[0].mxu0
        %v871 = vadd.f32 0.0, %v870
        %v872 = vpop.f32.mrb[0].mxu0
        %873 = vmatprep.mubr.f32.mxu0 0.0
        %874 = vmatmul.mubr.f32.gmra.mrb[0].mxu0 %v765
        %v875 = vpop.f32.mrb[0].mxu0
        %v876 = vadd.f32 0.0, %v875
        %v877 = vpop.f32.mrb[0].mxu0
        %878 = vmatprep.mubr.f32.mxu0 0.0
        %879 = vmatmul.mubr.f32.gmra.mrb[0].mxu0 %v766
        %v880 = vpop.f32.mrb[0].mxu0
        %v881 = vadd.f32 0.0, %v880
        %v882 = vpop.f32.mrb[0].mxu0
        %883 = vmatprep.mubr.f32.mxu0 0.0
        %884 = vmatmul.mubr.f32.gmra.mrb[0].mxu0 %v767
        %v885 = vpop.f32.mrb[0].mxu0
        %v886 = vadd.f32 0.0, %v885
        %v887 = vpop.f32.mrb[0].mxu0
        %888 = vmatprep.mubr.f32.mxu0 0.0
        %889 = vmatmul.mubr.f32.gmra.mrb[0].mxu0 %v768
        %v890 = vpop.f32.mrb[0].mxu0
        %v891 = vadd.f32 0.0, %v890
        %v892 = vpop.f32.mrb[0].mxu0
        %893 = vmatprep.mubr.f32.mxu0 0.0
        %894 = vmatmul.mubr.f32.gmra.mrb[0].mxu0 %v769
        %v895 = vpop.f32.mrb[0].mxu0
        %v896 = vadd.f32 0.0, %v895
        %v897 = vpop.f32.mrb[0].mxu0
        %898 = vmatprep.mubr.f32.mxu0 0.0
        %899 = vmatmul.mubr.f32.gmra.mrb[0].mxu0 %v770
        %v900 = vpop.f32.mrb[0].mxu0
        %v901 = vadd.f32 0.0, %v900
        %v902 = vpop.f32.mrb[0].mxu0
        %903 = vmatprep.mubr.f32.mxu0 0.0
        %904 = vmatmul.mubr.f32.gmra.mrb[0].mxu0 %v771
        %v905 = vpop.f32.mrb[0].mxu0
        %v906 = vadd.f32 0.0, %v905
        %v907 = vpop.f32.mrb[0].mxu0
        %908 = vmatprep.mubr.f32.mxu0 0.0
        %909 = vmatmul.mubr.f32.gmra.mrb[0].mxu0 %v772
        %v910 = vpop.f32.mrb[0].mxu0
        %v911 = vadd.f32 0.0, %v910
        %v912 = vpop.f32.mrb[0].mxu0
        %913 = vmatprep.mubr.f32.mxu0 0.0
        %914 = vmatmul.mubr.f32.gmra.mrb[0].mxu0 %v773
        %v915 = vpop.f32.mrb[0].mxu0
        %v916 = vadd.f32 0.0, %v915
        %v917 = vpop.f32.mrb[0].mxu0
        %918 = vmatprep.mubr.f32.mxu0 0.0
        %919 = vmatmul.mubr.f32.gmra.mrb[0].mxu0 %v774
        %v920 = vpop.f32.mrb[0].mxu0
        %v921 = vadd.f32 0.0, %v920
        %v922 = vpop.f32.mrb[0].mxu0
        %923 = vmatprep.mubr.f32.mxu0 0.0
        %924 = vmatmul.mubr.f32.gmra.mrb[0].mxu0 %v775
        %v925 = vpop.f32.mrb[0].mxu0
        %v926 = vadd.f32 0.0, %v925
        %v927 = vpop.f32.mrb[0].mxu0
        %928 = vmatprep.mubr.f32.mxu0 0.0
        %929 = vmatmul.mubr.f32.gmra.mrb[0].mxu0 %v776
        %v930 = vpop.f32.mrb[0].mxu0
        %v931 = vadd.f32 0.0, %v930
        %v932 = vpop.f32.mrb[0].mxu0
        %933 = vmatprep.mubr.f32.mxu0 0.0
        %934 = vmatmul.mubr.f32.gmra.mrb[0].mxu0 %v777
        %v935 = vpop.f32.mrb[0].mxu0
        %v936 = vadd.f32 0.0, %v935
        %v937 = vpop.f32.mrb[0].mxu0
        %938 = vdwg.mxu0
        %v939 = vmul.f32 %v861, 0.25
        %v940 = vmul.f32 %v866, 0.25
        %v941 = vmul.f32 %v871, 0.25
        %v942 = vmul.f32 %v876, 0.25
        %v943 = vmul.f32 %v881, 0.25
        %v944 = vmul.f32 %v886, 0.25
        %v945 = vmul.f32 %v891, 0.25
        %v946 = vmul.f32 %v896, 0.25
        %v947 = vmul.f32 %v901, 0.25
        %v948 = vmul.f32 %v906, 0.25
        %v949 = vmul.f32 %v911, 0.25
        %v950 = vmul.f32 %v916, 0.25
        %v951 = vmul.f32 %v921, 0.25
        %v952 = vmul.f32 %v926, 0.25
        %v953 = vmul.f32 %v931, 0.25
        %v954 = vmul.f32 %v936, 0.25
        %v955 = vld [vmem:[#allocation2] sm:$0xff]
        %v956 = vld [vmem:[#allocation2 + $0x10] sm:$0xff]
        %v957 = vld [vmem:[#allocation2 + $0x20] sm:$0xff]
        %v958 = vld [vmem:[#allocation2 + $0x30] sm:$0xff]
        %v959 = vld [vmem:[#allocation2 + $0x40] sm:$0xff]
        %v960 = vld [vmem:[#allocation2 + $0x50] sm:$0xff]
        %v961 = vld [vmem:[#allocation2 + $0x60] sm:$0xff]
        %v962 = vld [vmem:[#allocation2 + $0x70] sm:$0xff]
        %v963 = vld [vmem:[#allocation2 + $0x80] sm:$0xff]
        %v964 = vld [vmem:[#allocation2 + $0x90] sm:$0xff]
        %v965 = vld [vmem:[#allocation2 + $0xa0] sm:$0xff]
        %v966 = vld [vmem:[#allocation2 + $0xb0] sm:$0xff]
        %v967 = vld [vmem:[#allocation2 + $0xc0] sm:$0xff]
        %v968 = vld [vmem:[#allocation2 + $0xd0] sm:$0xff]
        %v969 = vld [vmem:[#allocation2 + $0xe0] sm:$0xff]
        %v970 = vld [vmem:[#allocation2 + $0xf0] sm:$0xff]
        %v971 = vld [vmem:[#allocation2 + $0x100] sm:$0xff]
        %v972 = vld [vmem:[#allocation2 + $0x110] sm:$0xff]
        %v973 = vld [vmem:[#allocation2 + $0x120] sm:$0xff]
        %v974 = vld [vmem:[#allocation2 + $0x130] sm:$0xff]
        %v975 = vld [vmem:[#allocation2 + $0x140] sm:$0xff]
        %v976 = vld [vmem:[#allocation2 + $0x150] sm:$0xff]
        %v977 = vld [vmem:[#allocation2 + $0x160] sm:$0xff]
        %v978 = vld [vmem:[#allocation2 + $0x170] sm:$0xff]
        %v979 = vld [vmem:[#allocation2 + $0x180] sm:$0xff]
        %v980 = vld [vmem:[#allocation2 + $0x190] sm:$0xff]
        %v981 = vld [vmem:[#allocation2 + $0x1a0] sm:$0xff]
        %v982 = vld [vmem:[#allocation2 + $0x1b0] sm:$0xff]
        %v983 = vld [vmem:[#allocation2 + $0x1c0] sm:$0xff]
        %v984 = vld [vmem:[#allocation2 + $0x1d0] sm:$0xff]
        %v985 = vld [vmem:[#allocation2 + $0x1e0] sm:$0xff]
        %v986 = vld [vmem:[#allocation2 + $0x1f0] sm:$0xff]
        %v987 = vld [vmem:[#allocation2 + $0x8] sm:$0xff]
        %v988 = vld [vmem:[#allocation2 + $0x18] sm:$0xff]
        %v989 = vld [vmem:[#allocation2 + $0x28] sm:$0xff]
        %v990 = vld [vmem:[#allocation2 + $0x38] sm:$0xff]
        %v991 = vld [vmem:[#allocation2 + $0x48] sm:$0xff]
        %v992 = vld [vmem:[#allocation2 + $0x58] sm:$0xff]
        %v993 = vld [vmem:[#allocation2 + $0x68] sm:$0xff]
        %v994 = vld [vmem:[#allocation2 + $0x78] sm:$0xff]
        %v995 = vld [vmem:[#allocation2 + $0x88] sm:$0xff]
        %v996 = vld [vmem:[#allocation2 + $0x98] sm:$0xff]
        %v997 = vld [vmem:[#allocation2 + $0xa8] sm:$0xff]
        %v998 = vld [vmem:[#allocation2 + $0xb8] sm:$0xff]
        %v999 = vld [vmem:[#allocation2 + $0xc8] sm:$0xff]
        %v1000 = vld [vmem:[#allocation2 + $0xd8] sm:$0xff]
        %v1001 = vld [vmem:[#allocation2 + $0xe8] sm:$0xff]
        %v1002 = vld [vmem:[#allocation2 + $0xf8] sm:$0xff]
        %v1003 = vld [vmem:[#allocation2 + $0x108] sm:$0xff]
        %v1004 = vld [vmem:[#allocation2 + $0x118] sm:$0xff]
        %v1005 = vld [vmem:[#allocation2 + $0x128] sm:$0xff]
        %v1006 = vld [vmem:[#allocation2 + $0x138] sm:$0xff]
        %v1007 = vld [vmem:[#allocation2 + $0x148] sm:$0xff]
        %v1008 = vld [vmem:[#allocation2 + $0x158] sm:$0xff]
        %v1009 = vld [vmem:[#allocation2 + $0x168] sm:$0xff]
        %v1010 = vld [vmem:[#allocation2 + $0x178] sm:$0xff]
        %v1011 = vld [vmem:[#allocation2 + $0x188] sm:$0xff]
        %v1012 = vld [vmem:[#allocation2 + $0x198] sm:$0xff]
        %v1013 = vld [vmem:[#allocation2 + $0x1a8] sm:$0xff]
        %v1014 = vld [vmem:[#allocation2 + $0x1b8] sm:$0xff]
        %v1015 = vld [vmem:[#allocation2 + $0x1c8] sm:$0xff]
        %v1016 = vld [vmem:[#allocation2 + $0x1d8] sm:$0xff]
        %v1017 = vld [vmem:[#allocation2 + $0x1e8] sm:$0xff]
        %v1018 = vld [vmem:[#allocation2 + $0x1f8] sm:$0xff]
        %vm1019 = vcmask 130048
        %v1021 = vsel %vm1019, %v939, 0
        %v1024 = vsel %vm1019, %v940, 0
        %v1027 = vsel %vm1019, %v941, 0
        %v1030 = vsel %vm1019, %v942, 0
        %v1033 = vsel %vm1019, %v943, 0
        %v1036 = vsel %vm1019, %v944, 0
        %v1039 = vsel %vm1019, %v945, 0
        %v1042 = vsel %vm1019, %v946, 0
        %v1045 = vsel %vm1019, %v947, 0
        %v1048 = vsel %vm1019, %v948, 0
        %v1051 = vsel %vm1019, %v949, 0
        %v1054 = vsel %vm1019, %v950, 0
        %v1057 = vsel %vm1019, %v951, 0
        %v1060 = vsel %vm1019, %v952, 0
        %v1063 = vsel %vm1019, %v953, 0
        %v1066 = vsel %vm1019, %v954, 0
        %v1069 = vsel %vm1019, %v955, 0
        %v1072 = vsel %vm1019, %v956, 0
        %v1075 = vsel %vm1019, %v957, 0
        %v1078 = vsel %vm1019, %v958, 0
        %v1081 = vsel %vm1019, %v959, 0
        %v1084 = vsel %vm1019, %v960, 0
        %v1087 = vsel %vm1019, %v961, 0
        %v1090 = vsel %vm1019, %v962, 0
        %v1093 = vsel %vm1019, %v963, 0
        %v1096 = vsel %vm1019, %v964, 0
        %v1099 = vsel %vm1019, %v965, 0
        %v1102 = vsel %vm1019, %v966, 0
        %v1105 = vsel %vm1019, %v967, 0
        %v1108 = vsel %vm1019, %v968, 0
        %v1111 = vsel %vm1019, %v969, 0
        %v1114 = vsel %vm1019, %v970, 0
        %v1117 = vsel %vm1019, %v971, 0
        %v1120 = vsel %vm1019, %v972, 0
        %v1123 = vsel %vm1019, %v973, 0
        %v1126 = vsel %vm1019, %v974, 0
        %v1129 = vsel %vm1019, %v975, 0
        %v1132 = vsel %vm1019, %v976, 0
        %v1135 = vsel %vm1019, %v977, 0
        %v1138 = vsel %vm1019, %v978, 0
        %v1141 = vsel %vm1019, %v979, 0
        %v1144 = vsel %vm1019, %v980, 0
        %v1147 = vsel %vm1019, %v981, 0
        %v1150 = vsel %vm1019, %v982, 0
        %v1153 = vsel %vm1019, %v983, 0
        %v1156 = vsel %vm1019, %v984, 0
        %v1159 = vsel %vm1019, %v985, 0
        %v1162 = vsel %vm1019, %v986, 0
        %1164 = vmatprep.subr.mxu0 0.0
        %1165 = vmatpush1.xpose.msra.mxu0 %v1069
        %1166 = vmatprep.subr.mxu0 0.0
        %1167 = vmatpush1.xpose.msra.mxu0 %v1072
        %1168 = vmatprep.subr.mxu0 0.0
        %1169 = vmatpush1.xpose.msra.mxu0 %v1075
        %1170 = vmatprep.subr.mxu0 0.0
        %1171 = vmatpush1.xpose.msra.mxu0 %v1078
        %1172 = vmatprep.subr.mxu0 0.0
        %1173 = vmatpush1.xpose.msra.mxu0 %v1081
        %1174 = vmatprep.subr.mxu0 0.0
        %1175 = vmatpush1.xpose.msra.mxu0 %v1084
        %1176 = vmatprep.subr.mxu0 0.0
        %1177 = vmatpush1.xpose.msra.mxu0 %v1087
        %1178 = vmatprep.subr.mxu0 0.0
        %1179 = vmatpush1.xpose.msra.mxu0 %v1090
        %1180 = vmatprep.subr.mxu0 0.0
        %1181 = vmatpush1.xpose.msra.mxu0 %v1093
        %1182 = vmatprep.subr.mxu0 0.0
        %1183 = vmatpush1.xpose.msra.mxu0 %v1096
        %1184 = vmatprep.subr.mxu0 0.0
        %1185 = vmatpush1.xpose.msra.mxu0 %v1099
        %1186 = vmatprep.subr.mxu0 0.0
        %1187 = vmatpush1.xpose.msra.mxu0 %v1102
        %1188 = vmatprep.subr.mxu0 0.0
        %1189 = vmatpush1.xpose.msra.mxu0 %v1105
        %1190 = vmatprep.subr.mxu0 0.0
        %1191 = vmatpush1.xpose.msra.mxu0 %v1108
        %1192 = vmatprep.subr.mxu0 0.0
        %1193 = vmatpush1.xpose.msra.mxu0 %v1111
        %1194 = vmatprep.subr.mxu0 0.0
        %1195 = vmatpush1.xpose.msra.mxu0 %v1114
        %1196 = vmatprep.subr.mxu0 0.0
        %1197 = vmatpush1.xpose.msra.mxu0 %v1117
        %1198 = vmatprep.subr.mxu0 0.0
        %1199 = vmatpush1.xpose.msra.mxu0 %v1120
        %1200 = vmatprep.subr.mxu0 0.0
        %1201 = vmatpush1.xpose.msra.mxu0 %v1123
        %1202 = vmatprep.subr.mxu0 0.0
        %1203 = vmatpush1.xpose.msra.mxu0 %v1126
        %1204 = vmatprep.subr.mxu0 0.0
        %1205 = vmatpush1.xpose.msra.mxu0 %v1129
        %1206 = vmatprep.subr.mxu0 0.0
        %1207 = vmatpush1.xpose.msra.mxu0 %v1132
        %1208 = vmatprep.subr.mxu0 0.0
        %1209 = vmatpush1.xpose.msra.mxu0 %v1135
        %1210 = vmatprep.subr.mxu0 0.0
        %1211 = vmatpush1.xpose.msra.mxu0 %v1138
        %1212 = vmatprep.subr.mxu0 0.0
        %1213 = vmatpush1.xpose.msra.mxu0 %v1141
        %1214 = vmatprep.subr.mxu0 0.0
        %1215 = vmatpush1.xpose.msra.mxu0 %v1144
        %1216 = vmatprep.subr.mxu0 0.0
        %1217 = vmatpush1.xpose.msra.mxu0 %v1147
        %1218 = vmatprep.subr.mxu0 0.0
        %1219 = vmatpush1.xpose.msra.mxu0 %v1150
        %1220 = vmatprep.subr.mxu0 0.0
        %1221 = vmatpush1.xpose.msra.mxu0 %v1153
        %1222 = vmatprep.subr.mxu0 0.0
        %1223 = vmatpush1.xpose.msra.mxu0 %v1156
        %1224 = vmatprep.subr.mxu0 0.0
        %1225 = vmatpush1.xpose.msra.mxu0 %v1159
        %1226 = vmatprep.subr.mxu0 0.0
        %1227 = vmatpush1.xpose.msra.mxu0 %v1162
        %1228 = vmatprep.mubr.f32.mxu0 0.0
        %1229 = vmatmul.mubr.f32.gmra.mrb[0].mxu0 %v1021
        %v1230 = vpop.f32.mrb[0].mxu0
        %v1231 = vadd.f32 0.0, %v1230
        %v1232 = vpop.f32.mrb[0].mxu0
        %v1233 = vadd.f32 0.0, %v1232
        %1234 = vmatprep.mubr.f32.mxu0 0.0
        %1235 = vmatmul.mubr.f32.gmra.mrb[0].mxu0 %v1024
        %v1236 = vpop.f32.mrb[0].mxu0
        %v1237 = vadd.f32 0.0, %v1236
        %v1238 = vpop.f32.mrb[0].mxu0
        %v1239 = vadd.f32 0.0, %v1238
        %1240 = vmatprep.mubr.f32.mxu0 0.0
        %1241 = vmatmul.mubr.f32.gmra.mrb[0].mxu0 %v1027
        %v1242 = vpop.f32.mrb[0].mxu0
        %v1243 = vadd.f32 0.0, %v1242
        %v1244 = vpop.f32.mrb[0].mxu0
        %v1245 = vadd.f32 0.0, %v1244
        %1246 = vmatprep.mubr.f32.mxu0 0.0
        %1247 = vmatmul.mubr.f32.gmra.mrb[0].mxu0 %v1030
        %v1248 = vpop.f32.mrb[0].mxu0
        %v1249 = vadd.f32 0.0, %v1248
        %v1250 = vpop.f32.mrb[0].mxu0
        %v1251 = vadd.f32 0.0, %v1250
        %1252 = vmatprep.mubr.f32.mxu0 0.0
        %1253 = vmatmul.mubr.f32.gmra.mrb[0].mxu0 %v1033
        %v1254 = vpop.f32.mrb[0].mxu0
        %v1255 = vadd.f32 0.0, %v1254
        %v1256 = vpop.f32.mrb[0].mxu0
        %v1257 = vadd.f32 0.0, %v1256
        %1258 = vmatprep.mubr.f32.mxu0 0.0
        %1259 = vmatmul.mubr.f32.gmra.mrb[0].mxu0 %v1036
        %v1260 = vpop.f32.mrb[0].mxu0
        %v1261 = vadd.f32 0.0, %v1260
        %v1262 = vpop.f32.mrb[0].mxu0
        %v1263 = vadd.f32 0.0, %v1262
        %1264 = vmatprep.mubr.f32.mxu0 0.0
        %1265 = vmatmul.mubr.f32.gmra.mrb[0].mxu0 %v1039
        %v1266 = vpop.f32.mrb[0].mxu0
        %v1267 = vadd.f32 0.0, %v1266
        %v1268 = vpop.f32.mrb[0].mxu0
        %v1269 = vadd.f32 0.0, %v1268
        %1270 = vmatprep.mubr.f32.mxu0 0.0
        %1271 = vmatmul.mubr.f32.gmra.mrb[0].mxu0 %v1042
        %v1272 = vpop.f32.mrb[0].mxu0
        %v1273 = vadd.f32 0.0, %v1272
        %v1274 = vpop.f32.mrb[0].mxu0
        %v1275 = vadd.f32 0.0, %v1274
        %1276 = vmatprep.mubr.f32.mxu0 0.0
        %1277 = vmatmul.mubr.f32.gmra.mrb[0].mxu0 %v1045
        %v1278 = vpop.f32.mrb[0].mxu0
        %v1279 = vadd.f32 0.0, %v1278
        %v1280 = vpop.f32.mrb[0].mxu0
        %v1281 = vadd.f32 0.0, %v1280
        %1282 = vmatprep.mubr.f32.mxu0 0.0
        %1283 = vmatmul.mubr.f32.gmra.mrb[0].mxu0 %v1048
        %v1284 = vpop.f32.mrb[0].mxu0
        %v1285 = vadd.f32 0.0, %v1284
        %v1286 = vpop.f32.mrb[0].mxu0
        %v1287 = vadd.f32 0.0, %v1286
        %1288 = vmatprep.mubr.f32.mxu0 0.0
        %1289 = vmatmul.mubr.f32.gmra.mrb[0].mxu0 %v1051
        %v1290 = vpop.f32.mrb[0].mxu0
        %v1291 = vadd.f32 0.0, %v1290
        %v1292 = vpop.f32.mrb[0].mxu0
        %v1293 = vadd.f32 0.0, %v1292
        %1294 = vmatprep.mubr.f32.mxu0 0.0
        %1295 = vmatmul.mubr.f32.gmra.mrb[0].mxu0 %v1054
        %v1296 = vpop.f32.mrb[0].mxu0
        %v1297 = vadd.f32 0.0, %v1296
        %v1298 = vpop.f32.mrb[0].mxu0
        %v1299 = vadd.f32 0.0, %v1298
        %1300 = vmatprep.mubr.f32.mxu0 0.0
        %1301 = vmatmul.mubr.f32.gmra.mrb[0].mxu0 %v1057
        %v1302 = vpop.f32.mrb[0].mxu0
        %v1303 = vadd.f32 0.0, %v1302
        %v1304 = vpop.f32.mrb[0].mxu0
        %v1305 = vadd.f32 0.0, %v1304
        %1306 = vmatprep.mubr.f32.mxu0 0.0
        %1307 = vmatmul.mubr.f32.gmra.mrb[0].mxu0 %v1060
        %v1308 = vpop.f32.mrb[0].mxu0
        %v1309 = vadd.f32 0.0, %v1308
        %v1310 = vpop.f32.mrb[0].mxu0
        %v1311 = vadd.f32 0.0, %v1310
        %1312 = vmatprep.mubr.f32.mxu0 0.0
        %1313 = vmatmul.mubr.f32.gmra.mrb[0].mxu0 %v1063
        %v1314 = vpop.f32.mrb[0].mxu0
        %v1315 = vadd.f32 0.0, %v1314
        %v1316 = vpop.f32.mrb[0].mxu0
        %v1317 = vadd.f32 0.0, %v1316
        %1318 = vmatprep.mubr.f32.mxu0 0.0
        %1319 = vmatmul.mubr.f32.gmra.mrb[0].mxu0 %v1066
        %v1320 = vpop.f32.mrb[0].mxu0
        %v1321 = vadd.f32 0.0, %v1320
        %v1322 = vpop.f32.mrb[0].mxu0
        %v1323 = vadd.f32 0.0, %v1322
        %1324 = vdwg.mxu0
        %v1325 = vmax.f32 %v1231, %v1233
        %1326 = vmax.xlane.f32.xlu0 %v1325
        %v1327 = vpop.xlane.xlu0 %1326
        %v1328 = vmax.f32 %v1237, %v1239
        %1329 = vmax.xlane.f32.xlu0 %v1328
        %v1330 = vpop.xlane.xlu0 %1329
        %v1331 = vmax.f32 %v1243, %v1245
        %1332 = vmax.xlane.f32.xlu0 %v1331
        %v1333 = vpop.xlane.xlu0 %1332
        %v1334 = vmax.f32 %v1249, %v1251
        %1335 = vmax.xlane.f32.xlu0 %v1334
        %v1336 = vpop.xlane.xlu0 %1335
        %v1337 = vmax.f32 %v1255, %v1257
        %1338 = vmax.xlane.f32.xlu0 %v1337
        %v1339 = vpop.xlane.xlu0 %1338
        %v1340 = vmax.f32 %v1261, %v1263
        %1341 = vmax.xlane.f32.xlu0 %v1340
        %v1342 = vpop.xlane.xlu0 %1341
        %v1343 = vmax.f32 %v1267, %v1269
        %1344 = vmax.xlane.f32.xlu0 %v1343
        %v1345 = vpop.xlane.xlu0 %1344
        %v1346 = vmax.f32 %v1273, %v1275
        %1347 = vmax.xlane.f32.xlu0 %v1346
        %v1348 = vpop.xlane.xlu0 %1347
        %v1349 = vmax.f32 %v1279, %v1281
        %1350 = vmax.xlane.f32.xlu0 %v1349
        %v1351 = vpop.xlane.xlu0 %1350
        %v1352 = vmax.f32 %v1285, %v1287
        %1353 = vmax.xlane.f32.xlu0 %v1352
        %v1354 = vpop.xlane.xlu0 %1353
        %v1355 = vmax.f32 %v1291, %v1293
        %1356 = vmax.xlane.f32.xlu0 %v1355
        %v1357 = vpop.xlane.xlu0 %1356
        %v1358 = vmax.f32 %v1297, %v1299
        %1359 = vmax.xlane.f32.xlu0 %v1358
        %v1360 = vpop.xlane.xlu0 %1359
        %v1361 = vmax.f32 %v1303, %v1305
        %1362 = vmax.xlane.f32.xlu0 %v1361
        %v1363 = vpop.xlane.xlu0 %1362
        %v1364 = vmax.f32 %v1309, %v1311
        %1365 = vmax.xlane.f32.xlu0 %v1364
        %v1366 = vpop.xlane.xlu0 %1365
        %v1367 = vmax.f32 %v1315, %v1317
        %1368 = vmax.xlane.f32.xlu0 %v1367
        %v1369 = vpop.xlane.xlu0 %1368
        %v1370 = vmax.f32 %v1321, %v1323
        %1371 = vmax.xlane.f32.xlu0 %v1370
        %v1372 = vpop.xlane.xlu0 %1371
        %v1373 = vsub.f32 %v1231, %v1327
        %v1374 = vsub.f32 %v1233, %v1327
        %v1375 = vsub.f32 %v1237, %v1330
        %v1376 = vsub.f32 %v1239, %v1330
        %v1377 = vsub.f32 %v1243, %v1333
        %v1378 = vsub.f32 %v1245, %v1333
        %v1379 = vsub.f32 %v1249, %v1336
        %v1380 = vsub.f32 %v1251, %v1336
        %v1381 = vsub.f32 %v1255, %v1339
        %v1382 = vsub.f32 %v1257, %v1339
        %v1383 = vsub.f32 %v1261, %v1342
        %v1384 = vsub.f32 %v1263, %v1342
        %v1385 = vsub.f32 %v1267, %v1345
        %v1386 = vsub.f32 %v1269, %v1345
        %v1387 = vsub.f32 %v1273, %v1348
        %v1388 = vsub.f32 %v1275, %v1348
        %v1389 = vsub.f32 %v1279, %v1351
        %v1390 = vsub.f32 %v1281, %v1351
        %v1391 = vsub.f32 %v1285, %v1354
        %v1392 = vsub.f32 %v1287, %v1354
        %v1393 = vsub.f32 %v1291, %v1357
        %v1394 = vsub.f32 %v1293, %v1357
        %v1395 = vsub.f32 %v1297, %v1360
        %v1396 = vsub.f32 %v1299, %v1360
        %v1397 = vsub.f32 %v1303, %v1363
        %v1398 = vsub.f32 %v1305, %v1363
        %v1399 = vsub.f32 %v1309, %v1366
        %v1400 = vsub.f32 %v1311, %v1366
        %v1401 = vsub.f32 %v1315, %v1369
        %v1402 = vsub.f32 %v1317, %v1369
        %v1403 = vsub.f32 %v1321, %v1372
        %v1404 = vsub.f32 %v1323, %v1372
        %v1405 = vmul.f32 %v1373, 1.442695
        %v1406 = vpow.pop %v1405
        %v1407 = vmul.f32 %v1374, 1.442695
        %v1408 = vpow.pop %v1407
        %v1409 = vmul.f32 %v1375, 1.442695
        %v1410 = vpow.pop %v1409
        %v1411 = vmul.f32 %v1376, 1.442695
        %v1412 = vpow.pop %v1411
        %v1413 = vmul.f32 %v1377, 1.442695
        %v1414 = vpow.pop %v1413
        %v1415 = vmul.f32 %v1378, 1.442695
        %v1416 = vpow.pop %v1415
        %v1417 = vmul.f32 %v1379, 1.442695
        %v1418 = vpow.pop %v1417
        %v1419 = vmul.f32 %v1380, 1.442695
        %v1420 = vpow.pop %v1419
        %v1421 = vmul.f32 %v1381, 1.442695
        %v1422 = vpow.pop %v1421
        %v1423 = vmul.f32 %v1382, 1.442695
        %v1424 = vpow.pop %v1423
        %v1425 = vmul.f32 %v1383, 1.442695
        %v1426 = vpow.pop %v1425
        %v1427 = vmul.f32 %v1384, 1.442695
        %v1428 = vpow.pop %v1427
        %v1429 = vmul.f32 %v1385, 1.442695
        %v1430 = vpow.pop %v1429
        %v1431 = vmul.f32 %v1386, 1.442695
        %v1432 = vpow.pop %v1431
        %v1433 = vmul.f32 %v1387, 1.442695
        %v1434 = vpow.pop %v1433
        %v1435 = vmul.f32 %v1388, 1.442695
        %v1436 = vpow.pop %v1435
        %v1437 = vmul.f32 %v1389, 1.442695
        %v1438 = vpow.pop %v1437
        %v1439 = vmul.f32 %v1390, 1.442695
        %v1440 = vpow.pop %v1439
        %v1441 = vmul.f32 %v1391, 1.442695
        %v1442 = vpow.pop %v1441
        %v1443 = vmul.f32 %v1392, 1.442695
        %v1444 = vpow.pop %v1443
        %v1445 = vmul.f32 %v1393, 1.442695
        %v1446 = vpow.pop %v1445
        %v1447 = vmul.f32 %v1394, 1.442695
        %v1448 = vpow.pop %v1447
        %v1449 = vmul.f32 %v1395, 1.442695
        %v1450 = vpow.pop %v1449
        %v1451 = vmul.f32 %v1396, 1.442695
        %v1452 = vpow.pop %v1451
        %v1453 = vmul.f32 %v1397, 1.442695
        %v1454 = vpow.pop %v1453
        %v1455 = vmul.f32 %v1398, 1.442695
        %v1456 = vpow.pop %v1455
        %v1457 = vmul.f32 %v1399, 1.442695
        %v1458 = vpow.pop %v1457
        %v1459 = vmul.f32 %v1400, 1.442695
        %v1460 = vpow.pop %v1459
        %v1461 = vmul.f32 %v1401, 1.442695
        %v1462 = vpow.pop %v1461
        %v1463 = vmul.f32 %v1402, 1.442695
        %v1464 = vpow.pop %v1463
        %v1465 = vmul.f32 %v1403, 1.442695
        %v1466 = vpow.pop %v1465
        %v1467 = vmul.f32 %v1404, 1.442695
        %v1468 = vpow.pop %v1467
        %v1469 = vadd.f32 %v1406, %v1408
        %1470 = vadd.xlane.f32.xlu0 %v1469
        %v1471 = vpop.xlane.xlu0 %1470
        %v1472 = vadd.f32 %v1410, %v1412
        %1473 = vadd.xlane.f32.xlu0 %v1472
        %v1474 = vpop.xlane.xlu0 %1473
        %v1475 = vadd.f32 %v1414, %v1416
        %1476 = vadd.xlane.f32.xlu0 %v1475
        %v1477 = vpop.xlane.xlu0 %1476
        %v1478 = vadd.f32 %v1418, %v1420
        %1479 = vadd.xlane.f32.xlu0 %v1478
        %v1480 = vpop.xlane.xlu0 %1479
        %v1481 = vadd.f32 %v1422, %v1424
        %1482 = vadd.xlane.f32.xlu0 %v1481
        %v1483 = vpop.xlane.xlu0 %1482
        %v1484 = vadd.f32 %v1426, %v1428
        %1485 = vadd.xlane.f32.xlu0 %v1484
        %v1486 = vpop.xlane.xlu0 %1485
        %v1487 = vadd.f32 %v1430, %v1432
        %1488 = vadd.xlane.f32.xlu0 %v1487
        %v1489 = vpop.xlane.xlu0 %1488
        %v1490 = vadd.f32 %v1434, %v1436
        %1491 = vadd.xlane.f32.xlu0 %v1490
        %v1492 = vpop.xlane.xlu0 %1491
        %v1493 = vadd.f32 %v1438, %v1440
        %1494 = vadd.xlane.f32.xlu0 %v1493
        %v1495 = vpop.xlane.xlu0 %1494
        %v1496 = vadd.f32 %v1442, %v1444
        %1497 = vadd.xlane.f32.xlu0 %v1496
        %v1498 = vpop.xlane.xlu0 %1497
        %v1499 = vadd.f32 %v1446, %v1448
        %1500 = vadd.xlane.f32.xlu0 %v1499
        %v1501 = vpop.xlane.xlu0 %1500
        %v1502 = vadd.f32 %v1450, %v1452
        %1503 = vadd.xlane.f32.xlu0 %v1502
        %v1504 = vpop.xlane.xlu0 %1503
        %v1505 = vadd.f32 %v1454, %v1456
        %1506 = vadd.xlane.f32.xlu0 %v1505
        %v1507 = vpop.xlane.xlu0 %1506
        %v1508 = vadd.f32 %v1458, %v1460
        %1509 = vadd.xlane.f32.xlu0 %v1508
        %v1510 = vpop.xlane.xlu0 %1509
        %v1511 = vadd.f32 %v1462, %v1464
        %1512 = vadd.xlane.f32.xlu0 %v1511
        %v1513 = vpop.xlane.xlu0 %1512
        %v1514 = vadd.f32 %v1466, %v1468
        %1515 = vadd.xlane.f32.xlu0 %v1514
        %v1516 = vpop.xlane.xlu0 %1515
        %1517 = vmatprep.subr.mxu0 0.0
        %1518 = vmatpush1.msra.mxu0 %v987
        %1519 = vmatprep.subr.mxu0 0.0
        %1520 = vmatpush1.msra.mxu0 %v988
        %1521 = vmatprep.subr.mxu0 0.0
        %1522 = vmatpush1.msra.mxu0 %v989
        %1523 = vmatprep.subr.mxu0 0.0
        %1524 = vmatpush1.msra.mxu0 %v990
        %1525 = vmatprep.subr.mxu0 0.0
        %1526 = vmatpush1.msra.mxu0 %v991
        %1527 = vmatprep.subr.mxu0 0.0
        %1528 = vmatpush1.msra.mxu0 %v992
        %1529 = vmatprep.subr.mxu0 0.0
        %1530 = vmatpush1.msra.mxu0 %v993
        %1531 = vmatprep.subr.mxu0 0.0
        %1532 = vmatpush1.msra.mxu0 %v994
        %1533 = vmatprep.subr.mxu0 0.0
        %1534 = vmatpush1.msra.mxu0 %v995
        %1535 = vmatprep.subr.mxu0 0.0
        %1536 = vmatpush1.msra.mxu0 %v996
        %1537 = vmatprep.subr.mxu0 0.0
        %1538 = vmatpush1.msra.mxu0 %v997
        %1539 = vmatprep.subr.mxu0 0.0
        %1540 = vmatpush1.msra.mxu0 %v998
        %1541 = vmatprep.subr.mxu0 0.0
        %1542 = vmatpush1.msra.mxu0 %v999
        %1543 = vmatprep.subr.mxu0 0.0
        %1544 = vmatpush1.msra.mxu0 %v1000
        %1545 = vmatprep.subr.mxu0 0.0
        %1546 = vmatpush1.msra.mxu0 %v1001
        %1547 = vmatprep.subr.mxu0 0.0
        %1548 = vmatpush1.msra.mxu0 %v1002
        %1549 = vmatprep.subr.mxu0 0.0
        %1550 = vmatpush1.msra.mxu0 %v1003
        %1551 = vmatprep.subr.mxu0 0.0
        %1552 = vmatpush1.msra.mxu0 %v1004
        %1553 = vmatprep.subr.mxu0 0.0
        %1554 = vmatpush1.msra.mxu0 %v1005
        %1555 = vmatprep.subr.mxu0 0.0
        %1556 = vmatpush1.msra.mxu0 %v1006
        %1557 = vmatprep.subr.mxu0 0.0
        %1558 = vmatpush1.msra.mxu0 %v1007
        %1559 = vmatprep.subr.mxu0 0.0
        %1560 = vmatpush1.msra.mxu0 %v1008
        %1561 = vmatprep.subr.mxu0 0.0
        %1562 = vmatpush1.msra.mxu0 %v1009
        %1563 = vmatprep.subr.mxu0 0.0
        %1564 = vmatpush1.msra.mxu0 %v1010
        %1565 = vmatprep.subr.mxu0 0.0
        %1566 = vmatpush1.msra.mxu0 %v1011
        %1567 = vmatprep.subr.mxu0 0.0
        %1568 = vmatpush1.msra.mxu0 %v1012
        %1569 = vmatprep.subr.mxu0 0.0
        %1570 = vmatpush1.msra.mxu0 %v1013
        %1571 = vmatprep.subr.mxu0 0.0
        %1572 = vmatpush1.msra.mxu0 %v1014
        %1573 = vmatprep.subr.mxu0 0.0
        %1574 = vmatpush1.msra.mxu0 %v1015
        %1575 = vmatprep.subr.mxu0 0.0
        %1576 = vmatpush1.msra.mxu0 %v1016
        %1577 = vmatprep.subr.mxu0 0.0
        %1578 = vmatpush1.msra.mxu0 %v1017
        %1579 = vmatprep.subr.mxu0 0.0
        %1580 = vmatpush1.msra.mxu0 %v1018
        %1581 = vmatprep.mubr.f32.mxu0 %v1408
        %1582 = vmatmul.mubr.f32.gmra.mrb[0].mxu0 %v1406
        %v1583 = vpop.f32.mrb[0].mxu0
        %v1584 = vadd.f32 0.0, %v1583
        %v1585 = vpop.f32.mrb[0].mxu0
        %1586 = vmatprep.mubr.f32.mxu0 %v1412
        %1587 = vmatmul.mubr.f32.gmra.mrb[0].mxu0 %v1410
        %v1588 = vpop.f32.mrb[0].mxu0
        %v1589 = vadd.f32 0.0, %v1588
        %v1590 = vpop.f32.mrb[0].mxu0
        %1591 = vmatprep.mubr.f32.mxu0 %v1416
        %1592 = vmatmul.mubr.f32.gmra.mrb[0].mxu0 %v1414
        %v1593 = vpop.f32.mrb[0].mxu0
        %v1594 = vadd.f32 0.0, %v1593
        %v1595 = vpop.f32.mrb[0].mxu0
        %1596 = vmatprep.mubr.f32.mxu0 %v1420
        %1597 = vmatmul.mubr.f32.gmra.mrb[0].mxu0 %v1418
        %v1598 = vpop.f32.mrb[0].mxu0
        %v1599 = vadd.f32 0.0, %v1598
        %v1600 = vpop.f32.mrb[0].mxu0
        %1601 = vmatprep.mubr.f32.mxu0 %v1424
        %1602 = vmatmul.mubr.f32.gmra.mrb[0].mxu0 %v1422
        %v1603 = vpop.f32.mrb[0].mxu0
        %v1604 = vadd.f32 0.0, %v1603
        %v1605 = vpop.f32.mrb[0].mxu0
        %1606 = vmatprep.mubr.f32.mxu0 %v1428
        %1607 = vmatmul.mubr.f32.gmra.mrb[0].mxu0 %v1426
        %v1608 = vpop.f32.mrb[0].mxu0
        %v1609 = vadd.f32 0.0, %v1608
        %v1610 = vpop.f32.mrb[0].mxu0
        %1611 = vmatprep.mubr.f32.mxu0 %v1432
        %1612 = vmatmul.mubr.f32.gmra.mrb[0].mxu0 %v1430
        %v1613 = vpop.f32.mrb[0].mxu0
        %v1614 = vadd.f32 0.0, %v1613
        %v1615 = vpop.f32.mrb[0].mxu0
        %1616 = vmatprep.mubr.f32.mxu0 %v1436
        %1617 = vmatmul.mubr.f32.gmra.mrb[0].mxu0 %v1434
        %v1618 = vpop.f32.mrb[0].mxu0
        %v1619 = vadd.f32 0.0, %v1618
        %v1620 = vpop.f32.mrb[0].mxu0
        %1621 = vmatprep.mubr.f32.mxu0 %v1440
        %1622 = vmatmul.mubr.f32.gmra.mrb[0].mxu0 %v1438
        %v1623 = vpop.f32.mrb[0].mxu0
        %v1624 = vadd.f32 0.0, %v1623
        %v1625 = vpop.f32.mrb[0].mxu0
        %1626 = vmatprep.mubr.f32.mxu0 %v1444
        %1627 = vmatmul.mubr.f32.gmra.mrb[0].mxu0 %v1442
        %v1628 = vpop.f32.mrb[0].mxu0
        %v1629 = vadd.f32 0.0, %v1628
        %v1630 = vpop.f32.mrb[0].mxu0
        %1631 = vmatprep.mubr.f32.mxu0 %v1448
        %1632 = vmatmul.mubr.f32.gmra.mrb[0].mxu0 %v1446
        %v1633 = vpop.f32.mrb[0].mxu0
        %v1634 = vadd.f32 0.0, %v1633
        %v1635 = vpop.f32.mrb[0].mxu0
        %1636 = vmatprep.mubr.f32.mxu0 %v1452
        %1637 = vmatmul.mubr.f32.gmra.mrb[0].mxu0 %v1450
        %v1638 = vpop.f32.mrb[0].mxu0
        %v1639 = vadd.f32 0.0, %v1638
        %v1640 = vpop.f32.mrb[0].mxu0
        %1641 = vmatprep.mubr.f32.mxu0 %v1456
        %1642 = vmatmul.mubr.f32.gmra.mrb[0].mxu0 %v1454
        %v1643 = vpop.f32.mrb[0].mxu0
        %v1644 = vadd.f32 0.0, %v1643
        %v1645 = vpop.f32.mrb[0].mxu0
        %1646 = vmatprep.mubr.f32.mxu0 %v1460
        %1647 = vmatmul.mubr.f32.gmra.mrb[0].mxu0 %v1458
        %v1648 = vpop.f32.mrb[0].mxu0
        %v1649 = vadd.f32 0.0, %v1648
        %v1650 = vpop.f32.mrb[0].mxu0
        %1651 = vmatprep.mubr.f32.mxu0 %v1464
        %1652 = vmatmul.mubr.f32.gmra.mrb[0].mxu0 %v1462
        %v1653 = vpop.f32.mrb[0].mxu0
        %v1654 = vadd.f32 0.0, %v1653
        %v1655 = vpop.f32.mrb[0].mxu0
        %1656 = vmatprep.mubr.f32.mxu0 %v1468
        %1657 = vmatmul.mubr.f32.gmra.mrb[0].mxu0 %v1466
        %v1658 = vpop.f32.mrb[0].mxu0
        %v1659 = vadd.f32 0.0, %v1658
        %v1660 = vpop.f32.mrb[0].mxu0
        %1661 = vdwg.mxu0
        %v1662 = vrcp.pop %v1471
        %v1663 = vrcp.pop %v1474
        %v1664 = vrcp.pop %v1477
        %v1665 = vrcp.pop %v1480
        %v1666 = vrcp.pop %v1483
        %v1667 = vrcp.pop %v1486
        %v1668 = vrcp.pop %v1489
        %v1669 = vrcp.pop %v1492
        %v1670 = vrcp.pop %v1495
        %v1671 = vrcp.pop %v1498
        %v1672 = vrcp.pop %v1501
        %v1673 = vrcp.pop %v1504
        %v1674 = vrcp.pop %v1507
        %v1675 = vrcp.pop %v1510
        %v1676 = vrcp.pop %v1513
        %v1677 = vrcp.pop %v1516
        %v1678 = vmul.f32 %v1584, %v1662
        %v1679 = vmul.f32 %v1589, %v1663
        %v1680 = vmul.f32 %v1594, %v1664
        %v1681 = vmul.f32 %v1599, %v1665
        %v1682 = vmul.f32 %v1604, %v1666
        %v1683 = vmul.f32 %v1609, %v1667
        %v1684 = vmul.f32 %v1614, %v1668
        %v1685 = vmul.f32 %v1619, %v1669
        %v1686 = vmul.f32 %v1624, %v1670
        %v1687 = vmul.f32 %v1629, %v1671
        %v1688 = vmul.f32 %v1634, %v1672
        %v1689 = vmul.f32 %v1639, %v1673
        %v1690 = vmul.f32 %v1644, %v1674
        %v1691 = vmul.f32 %v1649, %v1675
        %v1692 = vmul.f32 %v1654, %v1676
        %v1693 = vmul.f32 %v1659, %v1677
        %1694 = vrot.lane.b32.xlu0 %v939, 112
        %v1695 = vpop.permute.xlu0 %1694
        %1696 = vrot.lane.b32.xlu0 %v940, 112
        %v1697 = vpop.permute.xlu0 %1696
        %1698 = vrot.lane.b32.xlu0 %v941, 112
        %v1699 = vpop.permute.xlu0 %1698
        %1700 = vrot.lane.b32.xlu0 %v942, 112
        %v1701 = vpop.permute.xlu0 %1700
        %1702 = vrot.lane.b32.xlu0 %v943, 112
        %v1703 = vpop.permute.xlu0 %1702
        %1704 = vrot.lane.b32.xlu0 %v944, 112
        %v1705 = vpop.permute.xlu0 %1704
        %1706 = vrot.lane.b32.xlu0 %v945, 112
        %v1707 = vpop.permute.xlu0 %1706
        %1708 = vrot.lane.b32.xlu0 %v946, 112
        %v1709 = vpop.permute.xlu0 %1708
        %1710 = vrot.lane.b32.xlu0 %v947, 112
        %v1711 = vpop.permute.xlu0 %1710
        %1712 = vrot.lane.b32.xlu0 %v948, 112
        %v1713 = vpop.permute.xlu0 %1712
        %1714 = vrot.lane.b32.xlu0 %v949, 112
        %v1715 = vpop.permute.xlu0 %1714
        %1716 = vrot.lane.b32.xlu0 %v950, 112
        %v1717 = vpop.permute.xlu0 %1716
        %1718 = vrot.lane.b32.xlu0 %v951, 112
        %v1719 = vpop.permute.xlu0 %1718
        %1720 = vrot.lane.b32.xlu0 %v952, 112
        %v1721 = vpop.permute.xlu0 %1720
        %1722 = vrot.lane.b32.xlu0 %v953, 112
        %v1723 = vpop.permute.xlu0 %1722
        %1724 = vrot.lane.b32.xlu0 %v954, 112
        %v1725 = vpop.permute.xlu0 %1724
        %1726 = vrot.lane.b32.xlu0 %v955, 112
        %v1727 = vpop.permute.xlu0 %1726
        %1728 = vrot.lane.b32.xlu0 %v956, 112
        %v1729 = vpop.permute.xlu0 %1728
        %1730 = vrot.lane.b32.xlu0 %v957, 112
        %v1731 = vpop.permute.xlu0 %1730
        %1732 = vrot.lane.b32.xlu0 %v958, 112
        %v1733 = vpop.permute.xlu0 %1732
        %1734 = vrot.lane.b32.xlu0 %v959, 112
        %v1735 = vpop.permute.xlu0 %1734
        %1736 = vrot.lane.b32.xlu0 %v960, 112
        %v1737 = vpop.permute.xlu0 %1736
        %1738 = vrot.lane.b32.xlu0 %v961, 112
        %v1739 = vpop.permute.xlu0 %1738
        %1740 = vrot.lane.b32.xlu0 %v962, 112
        %v1741 = vpop.permute.xlu0 %1740
        %1742 = vrot.lane.b32.xlu0 %v963, 112
        %v1743 = vpop.permute.xlu0 %1742
        %1744 = vrot.lane.b32.xlu0 %v964, 112
        %v1745 = vpop.permute.xlu0 %1744
        %1746 = vrot.lane.b32.xlu0 %v965, 112
        %v1747 = vpop.permute.xlu0 %1746
        %1748 = vrot.lane.b32.xlu0 %v966, 112
        %v1749 = vpop.permute.xlu0 %1748
        %1750 = vrot.lane.b32.xlu0 %v967, 112
        %v1751 = vpop.permute.xlu0 %1750
        %1752 = vrot.lane.b32.xlu0 %v968, 112
        %v1753 = vpop.permute.xlu0 %1752
        %1754 = vrot.lane.b32.xlu0 %v969, 112
        %v1755 = vpop.permute.xlu0 %1754
        %1756 = vrot.lane.b32.xlu0 %v970, 112
        %v1757 = vpop.permute.xlu0 %1756
        %1758 = vrot.lane.b32.xlu0 %v971, 112
        %v1759 = vpop.permute.xlu0 %1758
        %1760 = vrot.lane.b32.xlu0 %v972, 112
        %v1761 = vpop.permute.xlu0 %1760
        %1762 = vrot.lane.b32.xlu0 %v973, 112
        %v1763 = vpop.permute.xlu0 %1762
        %1764 = vrot.lane.b32.xlu0 %v974, 112
        %v1765 = vpop.permute.xlu0 %1764
        %1766 = vrot.lane.b32.xlu0 %v975, 112
        %v1767 = vpop.permute.xlu0 %1766
        %1768 = vrot.lane.b32.xlu0 %v976, 112
        %v1769 = vpop.permute.xlu0 %1768
        %1770 = vrot.lane.b32.xlu0 %v977, 112
        %v1771 = vpop.permute.xlu0 %1770
        %1772 = vrot.lane.b32.xlu0 %v978, 112
        %v1773 = vpop.permute.xlu0 %1772
        %1774 = vrot.lane.b32.xlu0 %v979, 112
        %v1775 = vpop.permute.xlu0 %1774
        %1776 = vrot.lane.b32.xlu0 %v980, 112
        %v1777 = vpop.permute.xlu0 %1776
        %1778 = vrot.lane.b32.xlu0 %v981, 112
        %v1779 = vpop.permute.xlu0 %1778
        %1780 = vrot.lane.b32.xlu0 %v982, 112
        %v1781 = vpop.permute.xlu0 %1780
        %1782 = vrot.lane.b32.xlu0 %v983, 112
        %v1783 = vpop.permute.xlu0 %1782
        %1784 = vrot.lane.b32.xlu0 %v984, 112
        %v1785 = vpop.permute.xlu0 %1784
        %1786 = vrot.lane.b32.xlu0 %v985, 112
        %v1787 = vpop.permute.xlu0 %1786
        %1788 = vrot.lane.b32.xlu0 %v986, 112
        %v1789 = vpop.permute.xlu0 %1788
        %v1790 = vsel %vm1019, %v1695, 0
        %v1792 = vsel %vm1019, %v1697, 0
        %v1794 = vsel %vm1019, %v1699, 0
        %v1796 = vsel %vm1019, %v1701, 0
        %v1798 = vsel %vm1019, %v1703, 0
        %v1800 = vsel %vm1019, %v1705, 0
        %v1802 = vsel %vm1019, %v1707, 0
        %v1804 = vsel %vm1019, %v1709, 0
        %v1806 = vsel %vm1019, %v1711, 0
        %v1808 = vsel %vm1019, %v1713, 0
        %v1810 = vsel %vm1019, %v1715, 0
        %v1812 = vsel %vm1019, %v1717, 0
        %v1814 = vsel %vm1019, %v1719, 0
        %v1816 = vsel %vm1019, %v1721, 0
        %v1818 = vsel %vm1019, %v1723, 0
        %v1820 = vsel %vm1019, %v1725, 0
        %v1822 = vsel %vm1019, %v1727, 0
        %v1824 = vsel %vm1019, %v1729, 0
        %v1826 = vsel %vm1019, %v1731, 0
        %v1828 = vsel %vm1019, %v1733, 0
        %v1830 = vsel %vm1019, %v1735, 0
        %v1832 = vsel %vm1019, %v1737, 0
        %v1834 = vsel %vm1019, %v1739, 0
        %v1836 = vsel %vm1019, %v1741, 0
        %v1838 = vsel %vm1019, %v1743, 0
        %v1840 = vsel %vm1019, %v1745, 0
        %v1842 = vsel %vm1019, %v1747, 0
        %v1844 = vsel %vm1019, %v1749, 0
        %v1846 = vsel %vm1019, %v1751, 0
        %v1848 = vsel %vm1019, %v1753, 0
        %v1850 = vsel %vm1019, %v1755, 0
        %v1852 = vsel %vm1019, %v1757, 0
        %v1854 = vsel %vm1019, %v1759, 0
        %v1856 = vsel %vm1019, %v1761, 0
        %v1858 = vsel %vm1019, %v1763, 0
        %v1860 = vsel %vm1019, %v1765, 0
        %v1862 = vsel %vm1019, %v1767, 0
        %v1864 = vsel %vm1019, %v1769, 0
        %v1866 = vsel %vm1019, %v1771, 0
        %v1868 = vsel %vm1019, %v1773, 0
        %v1870 = vsel %vm1019, %v1775, 0
        %v1872 = vsel %vm1019, %v1777, 0
        %v1874 = vsel %vm1019, %v1779, 0
        %v1876 = vsel %vm1019, %v1781, 0
        %v1878 = vsel %vm1019, %v1783, 0
        %v1880 = vsel %vm1019, %v1785, 0
        %v1882 = vsel %vm1019, %v1787, 0
        %v1884 = vsel %vm1019, %v1789, 0
        %1886 = vmatprep.subr.mxu0 0.0
        %1887 = vmatpush1.xpose.msra.mxu0 %v1822
        %1888 = vmatprep.subr.mxu0 0.0
        %1889 = vmatpush1.xpose.msra.mxu0 %v1824
        %1890 = vmatprep.subr.mxu0 0.0
        %1891 = vmatpush1.xpose.msra.mxu0 %v1826
        %1892 = vmatprep.subr.mxu0 0.0
        %1893 = vmatpush1.xpose.msra.mxu0 %v1828
        %1894 = vmatprep.subr.mxu0 0.0
        %1895 = vmatpush1.xpose.msra.mxu0 %v1830
        %1896 = vmatprep.subr.mxu0 0.0
        %1897 = vmatpush1.xpose.msra.mxu0 %v1832
        %1898 = vmatprep.subr.mxu0 0.0
        %1899 = vmatpush1.xpose.msra.mxu0 %v1834
        %1900 = vmatprep.subr.mxu0 0.0
        %1901 = vmatpush1.xpose.msra.mxu0 %v1836
        %1902 = vmatprep.subr.mxu0 0.0
        %1903 = vmatpush1.xpose.msra.mxu0 %v1838
        %1904 = vmatprep.subr.mxu0 0.0
        %1905 = vmatpush1.xpose.msra.mxu0 %v1840
        %1906 = vmatprep.subr.mxu0 0.0
        %1907 = vmatpush1.xpose.msra.mxu0 %v1842
        %1908 = vmatprep.subr.mxu0 0.0
        %1909 = vmatpush1.xpose.msra.mxu0 %v1844
        %1910 = vmatprep.subr.mxu0 0.0
        %1911 = vmatpush1.xpose.msra.mxu0 %v1846
        %1912 = vmatprep.subr.mxu0 0.0
        %1913 = vmatpush1.xpose.msra.mxu0 %v1848
        %1914 = vmatprep.subr.mxu0 0.0
        %1915 = vmatpush1.xpose.msra.mxu0 %v1850
        %1916 = vmatprep.subr.mxu0 0.0
        %1917 = vmatpush1.xpose.msra.mxu0 %v1852
        %1918 = vmatprep.subr.mxu0 0.0
        %1919 = vmatpush1.xpose.msra.mxu0 %v1854
        %1920 = vmatprep.subr.mxu0 0.0
        %1921 = vmatpush1.xpose.msra.mxu0 %v1856
        %1922 = vmatprep.subr.mxu0 0.0
        %1923 = vmatpush1.xpose.msra.mxu0 %v1858
        %1924 = vmatprep.subr.mxu0 0.0
        %1925 = vmatpush1.xpose.msra.mxu0 %v1860
        %1926 = vmatprep.subr.mxu0 0.0
        %1927 = vmatpush1.xpose.msra.mxu0 %v1862
        %1928 = vmatprep.subr.mxu0 0.0
        %1929 = vmatpush1.xpose.msra.mxu0 %v1864
        %1930 = vmatprep.subr.mxu0 0.0
        %1931 = vmatpush1.xpose.msra.mxu0 %v1866
        %1932 = vmatprep.subr.mxu0 0.0
        %1933 = vmatpush1.xpose.msra.mxu0 %v1868
        %1934 = vmatprep.subr.mxu0 0.0
        %1935 = vmatpush1.xpose.msra.mxu0 %v1870
        %1936 = vmatprep.subr.mxu0 0.0
        %1937 = vmatpush1.xpose.msra.mxu0 %v1872
        %1938 = vmatprep.subr.mxu0 0.0
        %1939 = vmatpush1.xpose.msra.mxu0 %v1874
        %1940 = vmatprep.subr.mxu0 0.0
        %1941 = vmatpush1.xpose.msra.mxu0 %v1876
        %1942 = vmatprep.subr.mxu0 0.0
        %1943 = vmatpush1.xpose.msra.mxu0 %v1878
        %1944 = vmatprep.subr.mxu0 0.0
        %1945 = vmatpush1.xpose.msra.mxu0 %v1880
        %1946 = vmatprep.subr.mxu0 0.0
        %1947 = vmatpush1.xpose.msra.mxu0 %v1882
        %1948 = vmatprep.subr.mxu0 0.0
        %1949 = vmatpush1.xpose.msra.mxu0 %v1884
        %1950 = vmatprep.mubr.f32.mxu0 0.0
        %1951 = vmatmul.mubr.f32.gmra.mrb[0].mxu0 %v1790
        %v1952 = vpop.f32.mrb[0].mxu0
        %v1953 = vadd.f32 0.0, %v1952
        %v1954 = vpop.f32.mrb[0].mxu0
        %v1955 = vadd.f32 0.0, %v1954
        %1956 = vmatprep.mubr.f32.mxu0 0.0
        %1957 = vmatmul.mubr.f32.gmra.mrb[0].mxu0 %v1792
        %v1958 = vpop.f32.mrb[0].mxu0
        %v1959 = vadd.f32 0.0, %v1958
        %v1960 = vpop.f32.mrb[0].mxu0
        %v1961 = vadd.f32 0.0, %v1960
        %1962 = vmatprep.mubr.f32.mxu0 0.0
        %1963 = vmatmul.mubr.f32.gmra.mrb[0].mxu0 %v1794
        %v1964 = vpop.f32.mrb[0].mxu0
        %v1965 = vadd.f32 0.0, %v1964
        %v1966 = vpop.f32.mrb[0].mxu0
        %v1967 = vadd.f32 0.0, %v1966
        %1968 = vmatprep.mubr.f32.mxu0 0.0
        %1969 = vmatmul.mubr.f32.gmra.mrb[0].mxu0 %v1796
        %v1970 = vpop.f32.mrb[0].mxu0
        %v1971 = vadd.f32 0.0, %v1970
        %v1972 = vpop.f32.mrb[0].mxu0
        %v1973 = vadd.f32 0.0, %v1972
        %1974 = vmatprep.mubr.f32.mxu0 0.0
        %1975 = vmatmul.mubr.f32.gmra.mrb[0].mxu0 %v1798
        %v1976 = vpop.f32.mrb[0].mxu0
        %v1977 = vadd.f32 0.0, %v1976
        %v1978 = vpop.f32.mrb[0].mxu0
        %v1979 = vadd.f32 0.0, %v1978
        %1980 = vmatprep.mubr.f32.mxu0 0.0
        %1981 = vmatmul.mubr.f32.gmra.mrb[0].mxu0 %v1800
        %v1982 = vpop.f32.mrb[0].mxu0
        %v1983 = vadd.f32 0.0, %v1982
        %v1984 = vpop.f32.mrb[0].mxu0
        %v1985 = vadd.f32 0.0, %v1984
        %1986 = vmatprep.mubr.f32.mxu0 0.0
        %1987 = vmatmul.mubr.f32.gmra.mrb[0].mxu0 %v1802
        %v1988 = vpop.f32.mrb[0].mxu0
        %v1989 = vadd.f32 0.0, %v1988
        %v1990 = vpop.f32.mrb[0].mxu0
        %v1991 = vadd.f32 0.0, %v1990
        %1992 = vmatprep.mubr.f32.mxu0 0.0
        %1993 = vmatmul.mubr.f32.gmra.mrb[0].mxu0 %v1804
        %v1994 = vpop.f32.mrb[0].mxu0
        %v1995 = vadd.f32 0.0, %v1994
        %v1996 = vpop.f32.mrb[0].mxu0
        %v1997 = vadd.f32 0.0, %v1996
        %1998 = vmatprep.mubr.f32.mxu0 0.0
        %1999 = vmatmul.mubr.f32.gmra.mrb[0].mxu0 %v1806
        %v2000 = vpop.f32.mrb[0].mxu0
        %v2001 = vadd.f32 0.0, %v2000
        %v2002 = vpop.f32.mrb[0].mxu0
        %v2003 = vadd.f32 0.0, %v2002
        %2004 = vmatprep.mubr.f32.mxu0 0.0
        %2005 = vmatmul.mubr.f32.gmra.mrb[0].mxu0 %v1808
        %v2006 = vpop.f32.mrb[0].mxu0
        %v2007 = vadd.f32 0.0, %v2006
        %v2008 = vpop.f32.mrb[0].mxu0
        %v2009 = vadd.f32 0.0, %v2008
        %2010 = vmatprep.mubr.f32.mxu0 0.0
        %2011 = vmatmul.mubr.f32.gmra.mrb[0].mxu0 %v1810
        %v2012 = vpop.f32.mrb[0].mxu0
        %v2013 = vadd.f32 0.0, %v2012
        %v2014 = vpop.f32.mrb[0].mxu0
        %v2015 = vadd.f32 0.0, %v2014
        %2016 = vmatprep.mubr.f32.mxu0 0.0
        %2017 = vmatmul.mubr.f32.gmra.mrb[0].mxu0 %v1812
        %v2018 = vpop.f32.mrb[0].mxu0
        %v2019 = vadd.f32 0.0, %v2018
        %v2020 = vpop.f32.mrb[0].mxu0
        %v2021 = vadd.f32 0.0, %v2020
        %2022 = vmatprep.mubr.f32.mxu0 0.0
        %2023 = vmatmul.mubr.f32.gmra.mrb[0].mxu0 %v1814
        %v2024 = vpop.f32.mrb[0].mxu0
        %v2025 = vadd.f32 0.0, %v2024
        %v2026 = vpop.f32.mrb[0].mxu0
        %v2027 = vadd.f32 0.0, %v2026
        %2028 = vmatprep.mubr.f32.mxu0 0.0
        %2029 = vmatmul.mubr.f32.gmra.mrb[0].mxu0 %v1816
        %v2030 = vpop.f32.mrb[0].mxu0
        %v2031 = vadd.f32 0.0, %v2030
        %v2032 = vpop.f32.mrb[0].mxu0
        %v2033 = vadd.f32 0.0, %v2032
        %2034 = vmatprep.mubr.f32.mxu0 0.0
        %2035 = vmatmul.mubr.f32.gmra.mrb[0].mxu0 %v1818
        %v2036 = vpop.f32.mrb[0].mxu0
        %v2037 = vadd.f32 0.0, %v2036
        %v2038 = vpop.f32.mrb[0].mxu0
        %v2039 = vadd.f32 0.0, %v2038
        %2040 = vmatprep.mubr.f32.mxu0 0.0
        %2041 = vmatmul.mubr.f32.gmra.mrb[0].mxu0 %v1820
        %v2042 = vpop.f32.mrb[0].mxu0
        %v2043 = vadd.f32 0.0, %v2042
        %v2044 = vpop.f32.mrb[0].mxu0
        %v2045 = vadd.f32 0.0, %v2044
        %2046 = vdwg.mxu0
        %v2047 = vmax.f32 %v1953, %v1955
        %2048 = vmax.xlane.f32.xlu0 %v2047
        %v2049 = vpop.xlane.xlu0 %2048
        %v2050 = vmax.f32 %v1959, %v1961
        %2051 = vmax.xlane.f32.xlu0 %v2050
        %v2052 = vpop.xlane.xlu0 %2051
        %v2053 = vmax.f32 %v1965, %v1967
        %2054 = vmax.xlane.f32.xlu0 %v2053
        %v2055 = vpop.xlane.xlu0 %2054
        %v2056 = vmax.f32 %v1971, %v1973
        %2057 = vmax.xlane.f32.xlu0 %v2056
        %v2058 = vpop.xlane.xlu0 %2057
        %v2059 = vmax.f32 %v1977, %v1979
        %2060 = vmax.xlane.f32.xlu0 %v2059
        %v2061 = vpop.xlane.xlu0 %2060
        %v2062 = vmax.f32 %v1983, %v1985
        %2063 = vmax.xlane.f32.xlu0 %v2062
        %v2064 = vpop.xlane.xlu0 %2063
        %v2065 = vmax.f32 %v1989, %v1991
        %2066 = vmax.xlane.f32.xlu0 %v2065
        %v2067 = vpop.xlane.xlu0 %2066
        %v2068 = vmax.f32 %v1995, %v1997
        %2069 = vmax.xlane.f32.xlu0 %v2068
        %v2070 = vpop.xlane.xlu0 %2069
        %v2071 = vmax.f32 %v2001, %v2003
        %2072 = vmax.xlane.f32.xlu0 %v2071
        %v2073 = vpop.xlane.xlu0 %2072
        %v2074 = vmax.f32 %v2007, %v2009
        %2075 = vmax.xlane.f32.xlu0 %v2074
        %v2076 = vpop.xlane.xlu0 %2075
        %v2077 = vmax.f32 %v2013, %v2015
        %2078 = vmax.xlane.f32.xlu0 %v2077
        %v2079 = vpop.xlane.xlu0 %2078
        %v2080 = vmax.f32 %v2019, %v2021
        %2081 = vmax.xlane.f32.xlu0 %v2080
        %v2082 = vpop.xlane.xlu0 %2081
        %v2083 = vmax.f32 %v2025, %v2027
        %2084 = vmax.xlane.f32.xlu0 %v2083
        %v2085 = vpop.xlane.xlu0 %2084
        %v2086 = vmax.f32 %v2031, %v2033
        %2087 = vmax.xlane.f32.xlu0 %v2086
        %v2088 = vpop.xlane.xlu0 %2087
        %v2089 = vmax.f32 %v2037, %v2039
        %2090 = vmax.xlane.f32.xlu0 %v2089
        %v2091 = vpop.xlane.xlu0 %2090
        %v2092 = vmax.f32 %v2043, %v2045
        %2093 = vmax.xlane.f32.xlu0 %v2092
        %v2094 = vpop.xlane.xlu0 %2093
        %v2095 = vsub.f32 %v1953, %v2049
        %v2096 = vsub.f32 %v1955, %v2049
        %v2097 = vsub.f32 %v1959, %v2052
        %v2098 = vsub.f32 %v1961, %v2052
        %v2099 = vsub.f32 %v1965, %v2055
        %v2100 = vsub.f32 %v1967, %v2055
        %v2101 = vsub.f32 %v1971, %v2058
        %v2102 = vsub.f32 %v1973, %v2058
        %v2103 = vsub.f32 %v1977, %v2061
        %v2104 = vsub.f32 %v1979, %v2061
        %v2105 = vsub.f32 %v1983, %v2064
        %v2106 = vsub.f32 %v1985, %v2064
        %v2107 = vsub.f32 %v1989, %v2067
        %v2108 = vsub.f32 %v1991, %v2067
        %v2109 = vsub.f32 %v1995, %v2070
        %v2110 = vsub.f32 %v1997, %v2070
        %v2111 = vsub.f32 %v2001, %v2073
        %v2112 = vsub.f32 %v2003, %v2073
        %v2113 = vsub.f32 %v2007, %v2076
        %v2114 = vsub.f32 %v2009, %v2076
        %v2115 = vsub.f32 %v2013, %v2079
        %v2116 = vsub.f32 %v2015, %v2079
        %v2117 = vsub.f32 %v2019, %v2082
        %v2118 = vsub.f32 %v2021, %v2082
        %v2119 = vsub.f32 %v2025, %v2085
        %v2120 = vsub.f32 %v2027, %v2085
        %v2121 = vsub.f32 %v2031, %v2088
        %v2122 = vsub.f32 %v2033, %v2088
        %v2123 = vsub.f32 %v2037, %v2091
        %v2124 = vsub.f32 %v2039, %v2091
        %v2125 = vsub.f32 %v2043, %v2094
        %v2126 = vsub.f32 %v2045, %v2094
        %v2127 = vmul.f32 %v2095, 1.442695
        %v2128 = vpow.pop %v2127
        %v2129 = vmul.f32 %v2096, 1.442695
        %v2130 = vpow.pop %v2129
        %v2131 = vmul.f32 %v2097, 1.442695
        %v2132 = vpow.pop %v2131
        %v2133 = vmul.f32 %v2098, 1.442695
        %v2134 = vpow.pop %v2133
        %v2135 = vmul.f32 %v2099, 1.442695
        %v2136 = vpow.pop %v2135
        %v2137 = vmul.f32 %v2100, 1.442695
        %v2138 = vpow.pop %v2137
        %v2139 = vmul.f32 %v2101, 1.442695
        %v2140 = vpow.pop %v2139
        %v2141 = vmul.f32 %v2102, 1.442695
        %v2142 = vpow.pop %v2141
        %v2143 = vmul.f32 %v2103, 1.442695
        %v2144 = vpow.pop %v2143
        %v2145 = vmul.f32 %v2104, 1.442695
        %v2146 = vpow.pop %v2145
        %v2147 = vmul.f32 %v2105, 1.442695
        %v2148 = vpow.pop %v2147
        %v2149 = vmul.f32 %v2106, 1.442695
        %v2150 = vpow.pop %v2149
        %v2151 = vmul.f32 %v2107, 1.442695
        %v2152 = vpow.pop %v2151
        %v2153 = vmul.f32 %v2108, 1.442695
        %v2154 = vpow.pop %v2153
        %v2155 = vmul.f32 %v2109, 1.442695
        %v2156 = vpow.pop %v2155
        %v2157 = vmul.f32 %v2110, 1.442695
        %v2158 = vpow.pop %v2157
        %v2159 = vmul.f32 %v2111, 1.442695
        %v2160 = vpow.pop %v2159
        %v2161 = vmul.f32 %v2112, 1.442695
        %v2162 = vpow.pop %v2161
        %v2163 = vmul.f32 %v2113, 1.442695
        %v2164 = vpow.pop %v2163
        %v2165 = vmul.f32 %v2114, 1.442695
        %v2166 = vpow.pop %v2165
        %v2167 = vmul.f32 %v2115, 1.442695
        %v2168 = vpow.pop %v2167
        %v2169 = vmul.f32 %v2116, 1.442695
        %v2170 = vpow.pop %v2169
        %v2171 = vmul.f32 %v2117, 1.442695
        %v2172 = vpow.pop %v2171
        %v2173 = vmul.f32 %v2118, 1.442695
        %v2174 = vpow.pop %v2173
        %v2175 = vmul.f32 %v2119, 1.442695
        %v2176 = vpow.pop %v2175
        %v2177 = vmul.f32 %v2120, 1.442695
        %v2178 = vpow.pop %v2177
        %v2179 = vmul.f32 %v2121, 1.442695
        %v2180 = vpow.pop %v2179
        %v2181 = vmul.f32 %v2122, 1.442695
        %v2182 = vpow.pop %v2181
        %v2183 = vmul.f32 %v2123, 1.442695
        %v2184 = vpow.pop %v2183
        %v2185 = vmul.f32 %v2124, 1.442695
        %v2186 = vpow.pop %v2185
        %v2187 = vmul.f32 %v2125, 1.442695
        %v2188 = vpow.pop %v2187
        %v2189 = vmul.f32 %v2126, 1.442695
        %v2190 = vpow.pop %v2189
        %v2191 = vadd.f32 %v2128, %v2130
        %2192 = vadd.xlane.f32.xlu0 %v2191
        %v2193 = vpop.xlane.xlu0 %2192
        %v2194 = vadd.f32 %v2132, %v2134
        %2195 = vadd.xlane.f32.xlu0 %v2194
        %v2196 = vpop.xlane.xlu0 %2195
        %v2197 = vadd.f32 %v2136, %v2138
        %2198 = vadd.xlane.f32.xlu0 %v2197
        %v2199 = vpop.xlane.xlu0 %2198
        %v2200 = vadd.f32 %v2140, %v2142
        %2201 = vadd.xlane.f32.xlu0 %v2200
        %v2202 = vpop.xlane.xlu0 %2201
        %v2203 = vadd.f32 %v2144, %v2146
        %2204 = vadd.xlane.f32.xlu0 %v2203
        %v2205 = vpop.xlane.xlu0 %2204
        %v2206 = vadd.f32 %v2148, %v2150
        %2207 = vadd.xlane.f32.xlu0 %v2206
        %v2208 = vpop.xlane.xlu0 %2207
        %v2209 = vadd.f32 %v2152, %v2154
        %2210 = vadd.xlane.f32.xlu0 %v2209
        %v2211 = vpop.xlane.xlu0 %2210
        %v2212 = vadd.f32 %v2156, %v2158
        %2213 = vadd.xlane.f32.xlu0 %v2212
        %v2214 = vpop.xlane.xlu0 %2213
        %v2215 = vadd.f32 %v2160, %v2162
        %2216 = vadd.xlane.f32.xlu0 %v2215
        %v2217 = vpop.xlane.xlu0 %2216
        %v2218 = vadd.f32 %v2164, %v2166
        %2219 = vadd.xlane.f32.xlu0 %v2218
        %v2220 = vpop.xlane.xlu0 %2219
        %v2221 = vadd.f32 %v2168, %v2170
        %2222 = vadd.xlane.f32.xlu0 %v2221
        %v2223 = vpop.xlane.xlu0 %2222
        %v2224 = vadd.f32 %v2172, %v2174
        %2225 = vadd.xlane.f32.xlu0 %v2224
        %v2226 = vpop.xlane.xlu0 %2225
        %v2227 = vadd.f32 %v2176, %v2178
        %2228 = vadd.xlane.f32.xlu0 %v2227
        %v2229 = vpop.xlane.xlu0 %2228
        %v2230 = vadd.f32 %v2180, %v2182
        %2231 = vadd.xlane.f32.xlu0 %v2230
        %v2232 = vpop.xlane.xlu0 %2231
        %v2233 = vadd.f32 %v2184, %v2186
        %2234 = vadd.xlane.f32.xlu0 %v2233
        %v2235 = vpop.xlane.xlu0 %2234
        %v2236 = vadd.f32 %v2188, %v2190
        %2237 = vadd.xlane.f32.xlu0 %v2236
        %v2238 = vpop.xlane.xlu0 %2237
        %2271 = vrot.lane.b32.xlu0 %v987, 112
        %v2272 = vpop.permute.xlu0 %2271
        %2273 = vrot.lane.b32.xlu0 %v988, 112
        %v2274 = vpop.permute.xlu0 %2273
        %2275 = vrot.lane.b32.xlu0 %v989, 112
        %v2276 = vpop.permute.xlu0 %2275
        %2277 = vrot.lane.b32.xlu0 %v990, 112
        %v2278 = vpop.permute.xlu0 %2277
        %2279 = vrot.lane.b32.xlu0 %v991, 112
        %v2280 = vpop.permute.xlu0 %2279
        %2281 = vrot.lane.b32.xlu0 %v992, 112
        %v2282 = vpop.permute.xlu0 %2281
        %2283 = vrot.lane.b32.xlu0 %v993, 112
        %v2284 = vpop.permute.xlu0 %2283
        %2285 = vrot.lane.b32.xlu0 %v994, 112
        %v2286 = vpop.permute.xlu0 %2285
        %2287 = vrot.lane.b32.xlu0 %v995, 112
        %v2288 = vpop.permute.xlu0 %2287
        %2289 = vrot.lane.b32.xlu0 %v996, 112
        %v2290 = vpop.permute.xlu0 %2289
        %2291 = vrot.lane.b32.xlu0 %v997, 112
        %v2292 = vpop.permute.xlu0 %2291
        %2293 = vrot.lane.b32.xlu0 %v998, 112
        %v2294 = vpop.permute.xlu0 %2293
        %2295 = vrot.lane.b32.xlu0 %v999, 112
        %v2296 = vpop.permute.xlu0 %2295
        %2297 = vrot.lane.b32.xlu0 %v1000, 112
        %v2298 = vpop.permute.xlu0 %2297
        %2299 = vrot.lane.b32.xlu0 %v1001, 112
        %v2300 = vpop.permute.xlu0 %2299
        %2301 = vrot.lane.b32.xlu0 %v1002, 112
        %v2302 = vpop.permute.xlu0 %2301
        %2303 = vrot.lane.b32.xlu0 %v1003, 112
        %v2304 = vpop.permute.xlu0 %2303
        %2305 = vrot.lane.b32.xlu0 %v1004, 112
        %v2306 = vpop.permute.xlu0 %2305
        %2307 = vrot.lane.b32.xlu0 %v1005, 112
        %v2308 = vpop.permute.xlu0 %2307
        %2309 = vrot.lane.b32.xlu0 %v1006, 112
        %v2310 = vpop.permute.xlu0 %2309
        %2311 = vrot.lane.b32.xlu0 %v1007, 112
        %v2312 = vpop.permute.xlu0 %2311
        %2313 = vrot.lane.b32.xlu0 %v1008, 112
        %v2314 = vpop.permute.xlu0 %2313
        %2315 = vrot.lane.b32.xlu0 %v1009, 112
        %v2316 = vpop.permute.xlu0 %2315
        %2317 = vrot.lane.b32.xlu0 %v1010, 112
        %v2318 = vpop.permute.xlu0 %2317
        %2319 = vrot.lane.b32.xlu0 %v1011, 112
        %v2320 = vpop.permute.xlu0 %2319
        %2321 = vrot.lane.b32.xlu0 %v1012, 112
        %v2322 = vpop.permute.xlu0 %2321
        %2323 = vrot.lane.b32.xlu0 %v1013, 112
        %v2324 = vpop.permute.xlu0 %2323
        %2325 = vrot.lane.b32.xlu0 %v1014, 112
        %v2326 = vpop.permute.xlu0 %2325
        %2327 = vrot.lane.b32.xlu0 %v1015, 112
        %v2328 = vpop.permute.xlu0 %2327
        %2329 = vrot.lane.b32.xlu0 %v1016, 112
        %v2330 = vpop.permute.xlu0 %2329
        %2331 = vrot.lane.b32.xlu0 %v1017, 112
        %v2332 = vpop.permute.xlu0 %2331
        %2333 = vrot.lane.b32.xlu0 %v1018, 112
        %v2334 = vpop.permute.xlu0 %2333
        %2367 = vmatprep.subr.mxu0 0.0
        %2368 = vmatpush1.msra.mxu0 %v2272
        %2369 = vmatprep.subr.mxu0 0.0
        %2370 = vmatpush1.msra.mxu0 %v2274
        %2371 = vmatprep.subr.mxu0 0.0
        %2372 = vmatpush1.msra.mxu0 %v2276
        %2373 = vmatprep.subr.mxu0 0.0
        %2374 = vmatpush1.msra.mxu0 %v2278
        %2375 = vmatprep.subr.mxu0 0.0
        %2376 = vmatpush1.msra.mxu0 %v2280
        %2377 = vmatprep.subr.mxu0 0.0
        %2378 = vmatpush1.msra.mxu0 %v2282
        %2379 = vmatprep.subr.mxu0 0.0
        %2380 = vmatpush1.msra.mxu0 %v2284
        %2381 = vmatprep.subr.mxu0 0.0
        %2382 = vmatpush1.msra.mxu0 %v2286
        %2383 = vmatprep.subr.mxu0 0.0
        %2384 = vmatpush1.msra.mxu0 %v2288
        %2385 = vmatprep.subr.mxu0 0.0
        %2386 = vmatpush1.msra.mxu0 %v2290
        %2387 = vmatprep.subr.mxu0 0.0
        %2388 = vmatpush1.msra.mxu0 %v2292
        %2389 = vmatprep.subr.mxu0 0.0
        %2390 = vmatpush1.msra.mxu0 %v2294
        %2391 = vmatprep.subr.mxu0 0.0
        %2392 = vmatpush1.msra.mxu0 %v2296
        %2393 = vmatprep.subr.mxu0 0.0
        %2394 = vmatpush1.msra.mxu0 %v2298
        %2395 = vmatprep.subr.mxu0 0.0
        %2396 = vmatpush1.msra.mxu0 %v2300
        %2397 = vmatprep.subr.mxu0 0.0
        %2398 = vmatpush1.msra.mxu0 %v2302
        %2399 = vmatprep.subr.mxu0 0.0
        %2400 = vmatpush1.msra.mxu0 %v2304
        %2401 = vmatprep.subr.mxu0 0.0
        %2402 = vmatpush1.msra.mxu0 %v2306
        %2403 = vmatprep.subr.mxu0 0.0
        %2404 = vmatpush1.msra.mxu0 %v2308
        %2405 = vmatprep.subr.mxu0 0.0
        %2406 = vmatpush1.msra.mxu0 %v2310
        %2407 = vmatprep.subr.mxu0 0.0
        %2408 = vmatpush1.msra.mxu0 %v2312
        %2409 = vmatprep.subr.mxu0 0.0
        %2410 = vmatpush1.msra.mxu0 %v2314
        %2411 = vmatprep.subr.mxu0 0.0
        %2412 = vmatpush1.msra.mxu0 %v2316
        %2413 = vmatprep.subr.mxu0 0.0
        %2414 = vmatpush1.msra.mxu0 %v2318
        %2415 = vmatprep.subr.mxu0 0.0
        %2416 = vmatpush1.msra.mxu0 %v2320
        %2417 = vmatprep.subr.mxu0 0.0
        %2418 = vmatpush1.msra.mxu0 %v2322
        %2419 = vmatprep.subr.mxu0 0.0
        %2420 = vmatpush1.msra.mxu0 %v2324
        %2421 = vmatprep.subr.mxu0 0.0
        %2422 = vmatpush1.msra.mxu0 %v2326
        %2423 = vmatprep.subr.mxu0 0.0
        %2424 = vmatpush1.msra.mxu0 %v2328
        %2425 = vmatprep.subr.mxu0 0.0
        %2426 = vmatpush1.msra.mxu0 %v2330
        %2427 = vmatprep.subr.mxu0 0.0
        %2428 = vmatpush1.msra.mxu0 %v2332
        %2429 = vmatprep.subr.mxu0 0.0
        %2430 = vmatpush1.msra.mxu0 %v2334
        %2431 = vmatprep.mubr.f32.mxu0 %v2130
        %2432 = vmatmul.mubr.f32.gmra.mrb[0].mxu0 %v2128
        %v2433 = vpop.f32.mrb[0].mxu0
        %v2434 = vadd.f32 0.0, %v2433
        %v2435 = vpop.f32.mrb[0].mxu0
        %2436 = vmatprep.mubr.f32.mxu0 %v2134
        %2437 = vmatmul.mubr.f32.gmra.mrb[0].mxu0 %v2132
        %v2438 = vpop.f32.mrb[0].mxu0
        %v2439 = vadd.f32 0.0, %v2438
        %v2440 = vpop.f32.mrb[0].mxu0
        %2441 = vmatprep.mubr.f32.mxu0 %v2138
        %2442 = vmatmul.mubr.f32.gmra.mrb[0].mxu0 %v2136
        %v2443 = vpop.f32.mrb[0].mxu0
        %v2444 = vadd.f32 0.0, %v2443
        %v2445 = vpop.f32.mrb[0].mxu0
        %2446 = vmatprep.mubr.f32.mxu0 %v2142
        %2447 = vmatmul.mubr.f32.gmra.mrb[0].mxu0 %v2140
        %v2448 = vpop.f32.mrb[0].mxu0
        %v2449 = vadd.f32 0.0, %v2448
        %v2450 = vpop.f32.mrb[0].mxu0
        %2451 = vmatprep.mubr.f32.mxu0 %v2146
        %2452 = vmatmul.mubr.f32.gmra.mrb[0].mxu0 %v2144
        %v2453 = vpop.f32.mrb[0].mxu0
        %v2454 = vadd.f32 0.0, %v2453
        %v2455 = vpop.f32.mrb[0].mxu0
        %2456 = vmatprep.mubr.f32.mxu0 %v2150
        %2457 = vmatmul.mubr.f32.gmra.mrb[0].mxu0 %v2148
        %v2458 = vpop.f32.mrb[0].mxu0
        %v2459 = vadd.f32 0.0, %v2458
        %v2460 = vpop.f32.mrb[0].mxu0
        %2461 = vmatprep.mubr.f32.mxu0 %v2154
        %2462 = vmatmul.mubr.f32.gmra.mrb[0].mxu0 %v2152
        %v2463 = vpop.f32.mrb[0].mxu0
        %v2464 = vadd.f32 0.0, %v2463
        %v2465 = vpop.f32.mrb[0].mxu0
        %2466 = vmatprep.mubr.f32.mxu0 %v2158
        %2467 = vmatmul.mubr.f32.gmra.mrb[0].mxu0 %v2156
        %v2468 = vpop.f32.mrb[0].mxu0
        %v2469 = vadd.f32 0.0, %v2468
        %v2470 = vpop.f32.mrb[0].mxu0
        %2471 = vmatprep.mubr.f32.mxu0 %v2162
        %2472 = vmatmul.mubr.f32.gmra.mrb[0].mxu0 %v2160
        %v2473 = vpop.f32.mrb[0].mxu0
        %v2474 = vadd.f32 0.0, %v2473
        %v2475 = vpop.f32.mrb[0].mxu0
        %2476 = vmatprep.mubr.f32.mxu0 %v2166
        %2477 = vmatmul.mubr.f32.gmra.mrb[0].mxu0 %v2164
        %v2478 = vpop.f32.mrb[0].mxu0
        %v2479 = vadd.f32 0.0, %v2478
        %v2480 = vpop.f32.mrb[0].mxu0
        %2481 = vmatprep.mubr.f32.mxu0 %v2170
        %2482 = vmatmul.mubr.f32.gmra.mrb[0].mxu0 %v2168
        %v2483 = vpop.f32.mrb[0].mxu0
        %v2484 = vadd.f32 0.0, %v2483
        %v2485 = vpop.f32.mrb[0].mxu0
        %2486 = vmatprep.mubr.f32.mxu0 %v2174
        %2487 = vmatmul.mubr.f32.gmra.mrb[0].mxu0 %v2172
        %v2488 = vpop.f32.mrb[0].mxu0
        %v2489 = vadd.f32 0.0, %v2488
        %v2490 = vpop.f32.mrb[0].mxu0
        %2491 = vmatprep.mubr.f32.mxu0 %v2178
        %2492 = vmatmul.mubr.f32.gmra.mrb[0].mxu0 %v2176
        %v2493 = vpop.f32.mrb[0].mxu0
        %v2494 = vadd.f32 0.0, %v2493
        %v2495 = vpop.f32.mrb[0].mxu0
        %2496 = vmatprep.mubr.f32.mxu0 %v2182
        %2497 = vmatmul.mubr.f32.gmra.mrb[0].mxu0 %v2180
        %v2498 = vpop.f32.mrb[0].mxu0
        %v2499 = vadd.f32 0.0, %v2498
        %v2500 = vpop.f32.mrb[0].mxu0
        %2501 = vmatprep.mubr.f32.mxu0 %v2186
        %2502 = vmatmul.mubr.f32.gmra.mrb[0].mxu0 %v2184
        %v2503 = vpop.f32.mrb[0].mxu0
        %v2504 = vadd.f32 0.0, %v2503
        %v2505 = vpop.f32.mrb[0].mxu0
        %2506 = vmatprep.mubr.f32.mxu0 %v2190
        %2507 = vmatmul.mubr.f32.gmra.mrb[0].mxu0 %v2188
        %v2508 = vpop.f32.mrb[0].mxu0
        %v2509 = vadd.f32 0.0, %v2508
        %v2510 = vpop.f32.mrb[0].mxu0
        %2511 = vdwg.mxu0
        %v2512 = vrcp.pop %v2193
        %v2513 = vrcp.pop %v2196
        %v2514 = vrcp.pop %v2199
        %v2515 = vrcp.pop %v2202
        %v2516 = vrcp.pop %v2205
        %v2517 = vrcp.pop %v2208
        %v2518 = vrcp.pop %v2211
        %v2519 = vrcp.pop %v2214
        %v2520 = vrcp.pop %v2217
        %v2521 = vrcp.pop %v2220
        %v2522 = vrcp.pop %v2223
        %v2523 = vrcp.pop %v2226
        %v2524 = vrcp.pop %v2229
        %v2525 = vrcp.pop %v2232
        %v2526 = vrcp.pop %v2235
        %v2527 = vrcp.pop %v2238
        %v2528 = vmul.f32 %v2434, %v2512
        %v2529 = vmul.f32 %v2439, %v2513
        %v2530 = vmul.f32 %v2444, %v2514
        %v2531 = vmul.f32 %v2449, %v2515
        %v2532 = vmul.f32 %v2454, %v2516
        %v2533 = vmul.f32 %v2459, %v2517
        %v2534 = vmul.f32 %v2464, %v2518
        %v2535 = vmul.f32 %v2469, %v2519
        %v2536 = vmul.f32 %v2474, %v2520
        %v2537 = vmul.f32 %v2479, %v2521
        %v2538 = vmul.f32 %v2484, %v2522
        %v2539 = vmul.f32 %v2489, %v2523
        %v2540 = vmul.f32 %v2494, %v2524
        %v2541 = vmul.f32 %v2499, %v2525
        %v2542 = vmul.f32 %v2504, %v2526
        %v2543 = vmul.f32 %v2509, %v2527
        %2544 = vrot.lane.b32.xlu0 %v939, 96
        %v2545 = vpop.permute.xlu0 %2544
        %2546 = vrot.lane.b32.xlu0 %v940, 96
        %v2547 = vpop.permute.xlu0 %2546
        %2548 = vrot.lane.b32.xlu0 %v941, 96
        %v2549 = vpop.permute.xlu0 %2548
        %2550 = vrot.lane.b32.xlu0 %v942, 96
        %v2551 = vpop.permute.xlu0 %2550
        %2552 = vrot.lane.b32.xlu0 %v943, 96
        %v2553 = vpop.permute.xlu0 %2552
        %2554 = vrot.lane.b32.xlu0 %v944, 96
        %v2555 = vpop.permute.xlu0 %2554
        %2556 = vrot.lane.b32.xlu0 %v945, 96
        %v2557 = vpop.permute.xlu0 %2556
        %2558 = vrot.lane.b32.xlu0 %v946, 96
        %v2559 = vpop.permute.xlu0 %2558
        %2560 = vrot.lane.b32.xlu0 %v947, 96
        %v2561 = vpop.permute.xlu0 %2560
        %2562 = vrot.lane.b32.xlu0 %v948, 96
        %v2563 = vpop.permute.xlu0 %2562
        %2564 = vrot.lane.b32.xlu0 %v949, 96
        %v2565 = vpop.permute.xlu0 %2564
        %2566 = vrot.lane.b32.xlu0 %v950, 96
        %v2567 = vpop.permute.xlu0 %2566
        %2568 = vrot.lane.b32.xlu0 %v951, 96
        %v2569 = vpop.permute.xlu0 %2568
        %2570 = vrot.lane.b32.xlu0 %v952, 96
        %v2571 = vpop.permute.xlu0 %2570
        %2572 = vrot.lane.b32.xlu0 %v953, 96
        %v2573 = vpop.permute.xlu0 %2572
        %2574 = vrot.lane.b32.xlu0 %v954, 96
        %v2575 = vpop.permute.xlu0 %2574
        %2576 = vrot.lane.b32.xlu0 %v955, 96
        %v2577 = vpop.permute.xlu0 %2576
        %2578 = vrot.lane.b32.xlu0 %v956, 96
        %v2579 = vpop.permute.xlu0 %2578
        %2580 = vrot.lane.b32.xlu0 %v957, 96
        %v2581 = vpop.permute.xlu0 %2580
        %2582 = vrot.lane.b32.xlu0 %v958, 96
        %v2583 = vpop.permute.xlu0 %2582
        %2584 = vrot.lane.b32.xlu0 %v959, 96
        %v2585 = vpop.permute.xlu0 %2584
        %2586 = vrot.lane.b32.xlu0 %v960, 96
        %v2587 = vpop.permute.xlu0 %2586
        %2588 = vrot.lane.b32.xlu0 %v961, 96
        %v2589 = vpop.permute.xlu0 %2588
        %2590 = vrot.lane.b32.xlu0 %v962, 96
        %v2591 = vpop.permute.xlu0 %2590
        %2592 = vrot.lane.b32.xlu0 %v963, 96
        %v2593 = vpop.permute.xlu0 %2592
        %2594 = vrot.lane.b32.xlu0 %v964, 96
        %v2595 = vpop.permute.xlu0 %2594
        %2596 = vrot.lane.b32.xlu0 %v965, 96
        %v2597 = vpop.permute.xlu0 %2596
        %2598 = vrot.lane.b32.xlu0 %v966, 96
        %v2599 = vpop.permute.xlu0 %2598
        %2600 = vrot.lane.b32.xlu0 %v967, 96
        %v2601 = vpop.permute.xlu0 %2600
        %2602 = vrot.lane.b32.xlu0 %v968, 96
        %v2603 = vpop.permute.xlu0 %2602
        %2604 = vrot.lane.b32.xlu0 %v969, 96
        %v2605 = vpop.permute.xlu0 %2604
        %2606 = vrot.lane.b32.xlu0 %v970, 96
        %v2607 = vpop.permute.xlu0 %2606
        %2608 = vrot.lane.b32.xlu0 %v971, 96
        %v2609 = vpop.permute.xlu0 %2608
        %2610 = vrot.lane.b32.xlu0 %v972, 96
        %v2611 = vpop.permute.xlu0 %2610
        %2612 = vrot.lane.b32.xlu0 %v973, 96
        %v2613 = vpop.permute.xlu0 %2612
        %2614 = vrot.lane.b32.xlu0 %v974, 96
        %v2615 = vpop.permute.xlu0 %2614
        %2616 = vrot.lane.b32.xlu0 %v975, 96
        %v2617 = vpop.permute.xlu0 %2616
        %2618 = vrot.lane.b32.xlu0 %v976, 96
        %v2619 = vpop.permute.xlu0 %2618
        %2620 = vrot.lane.b32.xlu0 %v977, 96
        %v2621 = vpop.permute.xlu0 %2620
        %2622 = vrot.lane.b32.xlu0 %v978, 96
        %v2623 = vpop.permute.xlu0 %2622
        %2624 = vrot.lane.b32.xlu0 %v979, 96
        %v2625 = vpop.permute.xlu0 %2624
        %2626 = vrot.lane.b32.xlu0 %v980, 96
        %v2627 = vpop.permute.xlu0 %2626
        %2628 = vrot.lane.b32.xlu0 %v981, 96
        %v2629 = vpop.permute.xlu0 %2628
        %2630 = vrot.lane.b32.xlu0 %v982, 96
        %v2631 = vpop.permute.xlu0 %2630
        %2632 = vrot.lane.b32.xlu0 %v983, 96
        %v2633 = vpop.permute.xlu0 %2632
        %2634 = vrot.lane.b32.xlu0 %v984, 96
        %v2635 = vpop.permute.xlu0 %2634
        %2636 = vrot.lane.b32.xlu0 %v985, 96
        %v2637 = vpop.permute.xlu0 %2636
        %2638 = vrot.lane.b32.xlu0 %v986, 96
        %v2639 = vpop.permute.xlu0 %2638
        %v2640 = vsel %vm1019, %v2545, 0
        %v2642 = vsel %vm1019, %v2547, 0
        %v2644 = vsel %vm1019, %v2549, 0
        %v2646 = vsel %vm1019, %v2551, 0
        %v2648 = vsel %vm1019, %v2553, 0
        %v2650 = vsel %vm1019, %v2555, 0
        %v2652 = vsel %vm1019, %v2557, 0
        %v2654 = vsel %vm1019, %v2559, 0
        %v2656 = vsel %vm1019, %v2561, 0
        %v2658 = vsel %vm1019, %v2563, 0
        %v2660 = vsel %vm1019, %v2565, 0
        %v2662 = vsel %vm1019, %v2567, 0
        %v2664 = vsel %vm1019, %v2569, 0
        %v2666 = vsel %vm1019, %v2571, 0
        %v2668 = vsel %vm1019, %v2573, 0
        %v2670 = vsel %vm1019, %v2575, 0
        %v2672 = vsel %vm1019, %v2577, 0
        %v2674 = vsel %vm1019, %v2579, 0
        %v2676 = vsel %vm1019, %v2581, 0
        %v2678 = vsel %vm1019, %v2583, 0
        %v2680 = vsel %vm1019, %v2585, 0
        %v2682 = vsel %vm1019, %v2587, 0
        %v2684 = vsel %vm1019, %v2589, 0
        %v2686 = vsel %vm1019, %v2591, 0
        %v2688 = vsel %vm1019, %v2593, 0
        %v2690 = vsel %vm1019, %v2595, 0
        %v2692 = vsel %vm1019, %v2597, 0
        %v2694 = vsel %vm1019, %v2599, 0
        %v2696 = vsel %vm1019, %v2601, 0
        %v2698 = vsel %vm1019, %v2603, 0
        %v2700 = vsel %vm1019, %v2605, 0
        %v2702 = vsel %vm1019, %v2607, 0
        %v2704 = vsel %vm1019, %v2609, 0
        %v2706 = vsel %vm1019, %v2611, 0
        %v2708 = vsel %vm1019, %v2613, 0
        %v2710 = vsel %vm1019, %v2615, 0
        %v2712 = vsel %vm1019, %v2617, 0
        %v2714 = vsel %vm1019, %v2619, 0
        %v2716 = vsel %vm1019, %v2621, 0
        %v2718 = vsel %vm1019, %v2623, 0
        %v2720 = vsel %vm1019, %v2625, 0
        %v2722 = vsel %vm1019, %v2627, 0
        %v2724 = vsel %vm1019, %v2629, 0
        %v2726 = vsel %vm1019, %v2631, 0
        %v2728 = vsel %vm1019, %v2633, 0
        %v2730 = vsel %vm1019, %v2635, 0
        %v2732 = vsel %vm1019, %v2637, 0
        %v2734 = vsel %vm1019, %v2639, 0
        %2736 = vmatprep.subr.mxu0 0.0
        %2737 = vmatpush1.xpose.msra.mxu0 %v2672
        %2738 = vmatprep.subr.mxu0 0.0
        %2739 = vmatpush1.xpose.msra.mxu0 %v2674
        %2740 = vmatprep.subr.mxu0 0.0
        %2741 = vmatpush1.xpose.msra.mxu0 %v2676
        %2742 = vmatprep.subr.mxu0 0.0
        %2743 = vmatpush1.xpose.msra.mxu0 %v2678
        %2744 = vmatprep.subr.mxu0 0.0
        %2745 = vmatpush1.xpose.msra.mxu0 %v2680
        %2746 = vmatprep.subr.mxu0 0.0
        %2747 = vmatpush1.xpose.msra.mxu0 %v2682
        %2748 = vmatprep.subr.mxu0 0.0
        %2749 = vmatpush1.xpose.msra.mxu0 %v2684
        %2750 = vmatprep.subr.mxu0 0.0
        %2751 = vmatpush1.xpose.msra.mxu0 %v2686
        %2752 = vmatprep.subr.mxu0 0.0
        %2753 = vmatpush1.xpose.msra.mxu0 %v2688
        %2754 = vmatprep.subr.mxu0 0.0
        %2755 = vmatpush1.xpose.msra.mxu0 %v2690
        %2756 = vmatprep.subr.mxu0 0.0
        %2757 = vmatpush1.xpose.msra.mxu0 %v2692
        %2758 = vmatprep.subr.mxu0 0.0
        %2759 = vmatpush1.xpose.msra.mxu0 %v2694
        %2760 = vmatprep.subr.mxu0 0.0
        %2761 = vmatpush1.xpose.msra.mxu0 %v2696
        %2762 = vmatprep.subr.mxu0 0.0
        %2763 = vmatpush1.xpose.msra.mxu0 %v2698
        %2764 = vmatprep.subr.mxu0 0.0
        %2765 = vmatpush1.xpose.msra.mxu0 %v2700
        %2766 = vmatprep.subr.mxu0 0.0
        %2767 = vmatpush1.xpose.msra.mxu0 %v2702
        %2768 = vmatprep.subr.mxu0 0.0
        %2769 = vmatpush1.xpose.msra.mxu0 %v2704
        %2770 = vmatprep.subr.mxu0 0.0
        %2771 = vmatpush1.xpose.msra.mxu0 %v2706
        %2772 = vmatprep.subr.mxu0 0.0
        %2773 = vmatpush1.xpose.msra.mxu0 %v2708
        %2774 = vmatprep.subr.mxu0 0.0
        %2775 = vmatpush1.xpose.msra.mxu0 %v2710
        %2776 = vmatprep.subr.mxu0 0.0
        %2777 = vmatpush1.xpose.msra.mxu0 %v2712
        %2778 = vmatprep.subr.mxu0 0.0
        %2779 = vmatpush1.xpose.msra.mxu0 %v2714
        %2780 = vmatprep.subr.mxu0 0.0
        %2781 = vmatpush1.xpose.msra.mxu0 %v2716
        %2782 = vmatprep.subr.mxu0 0.0
        %2783 = vmatpush1.xpose.msra.mxu0 %v2718
        %2784 = vmatprep.subr.mxu0 0.0
        %2785 = vmatpush1.xpose.msra.mxu0 %v2720
        %2786 = vmatprep.subr.mxu0 0.0
        %2787 = vmatpush1.xpose.msra.mxu0 %v2722
        %2788 = vmatprep.subr.mxu0 0.0
        %2789 = vmatpush1.xpose.msra.mxu0 %v2724
        %2790 = vmatprep.subr.mxu0 0.0
        %2791 = vmatpush1.xpose.msra.mxu0 %v2726
        %2792 = vmatprep.subr.mxu0 0.0
        %2793 = vmatpush1.xpose.msra.mxu0 %v2728
        %2794 = vmatprep.subr.mxu0 0.0
        %2795 = vmatpush1.xpose.msra.mxu0 %v2730
        %2796 = vmatprep.subr.mxu0 0.0
        %2797 = vmatpush1.xpose.msra.mxu0 %v2732
        %2798 = vmatprep.subr.mxu0 0.0
        %2799 = vmatpush1.xpose.msra.mxu0 %v2734
        %2800 = vmatprep.mubr.f32.mxu0 0.0
        %2801 = vmatmul.mubr.f32.gmra.mrb[0].mxu0 %v2640
        %v2802 = vpop.f32.mrb[0].mxu0
        %v2803 = vadd.f32 0.0, %v2802
        %v2804 = vpop.f32.mrb[0].mxu0
        %v2805 = vadd.f32 0.0, %v2804
        %2806 = vmatprep.mubr.f32.mxu0 0.0
        %2807 = vmatmul.mubr.f32.gmra.mrb[0].mxu0 %v2642
        %v2808 = vpop.f32.mrb[0].mxu0
        %v2809 = vadd.f32 0.0, %v2808
        %v2810 = vpop.f32.mrb[0].mxu0
        %v2811 = vadd.f32 0.0, %v2810
        %2812 = vmatprep.mubr.f32.mxu0 0.0
        %2813 = vmatmul.mubr.f32.gmra.mrb[0].mxu0 %v2644
        %v2814 = vpop.f32.mrb[0].mxu0
        %v2815 = vadd.f32 0.0, %v2814
        %v2816 = vpop.f32.mrb[0].mxu0
        %v2817 = vadd.f32 0.0, %v2816
        %2818 = vmatprep.mubr.f32.mxu0 0.0
        %2819 = vmatmul.mubr.f32.gmra.mrb[0].mxu0 %v2646
        %v2820 = vpop.f32.mrb[0].mxu0
        %v2821 = vadd.f32 0.0, %v2820
        %v2822 = vpop.f32.mrb[0].mxu0
        %v2823 = vadd.f32 0.0, %v2822
        %2824 = vmatprep.mubr.f32.mxu0 0.0
        %2825 = vmatmul.mubr.f32.gmra.mrb[0].mxu0 %v2648
        %v2826 = vpop.f32.mrb[0].mxu0
        %v2827 = vadd.f32 0.0, %v2826
        %v2828 = vpop.f32.mrb[0].mxu0
        %v2829 = vadd.f32 0.0, %v2828
        %2830 = vmatprep.mubr.f32.mxu0 0.0
        %2831 = vmatmul.mubr.f32.gmra.mrb[0].mxu0 %v2650
        %v2832 = vpop.f32.mrb[0].mxu0
        %v2833 = vadd.f32 0.0, %v2832
        %v2834 = vpop.f32.mrb[0].mxu0
        %v2835 = vadd.f32 0.0, %v2834
        %2836 = vmatprep.mubr.f32.mxu0 0.0
        %2837 = vmatmul.mubr.f32.gmra.mrb[0].mxu0 %v2652
        %v2838 = vpop.f32.mrb[0].mxu0
        %v2839 = vadd.f32 0.0, %v2838
        %v2840 = vpop.f32.mrb[0].mxu0
        %v2841 = vadd.f32 0.0, %v2840
        %2842 = vmatprep.mubr.f32.mxu0 0.0
        %2843 = vmatmul.mubr.f32.gmra.mrb[0].mxu0 %v2654
        %v2844 = vpop.f32.mrb[0].mxu0
        %v2845 = vadd.f32 0.0, %v2844
        %v2846 = vpop.f32.mrb[0].mxu0
        %v2847 = vadd.f32 0.0, %v2846
        %2848 = vmatprep.mubr.f32.mxu0 0.0
        %2849 = vmatmul.mubr.f32.gmra.mrb[0].mxu0 %v2656
        %v2850 = vpop.f32.mrb[0].mxu0
        %v2851 = vadd.f32 0.0, %v2850
        %v2852 = vpop.f32.mrb[0].mxu0
        %v2853 = vadd.f32 0.0, %v2852
        %2854 = vmatprep.mubr.f32.mxu0 0.0
        %2855 = vmatmul.mubr.f32.gmra.mrb[0].mxu0 %v2658
        %v2856 = vpop.f32.mrb[0].mxu0
        %v2857 = vadd.f32 0.0, %v2856
        %v2858 = vpop.f32.mrb[0].mxu0
        %v2859 = vadd.f32 0.0, %v2858
        %2860 = vmatprep.mubr.f32.mxu0 0.0
        %2861 = vmatmul.mubr.f32.gmra.mrb[0].mxu0 %v2660
        %v2862 = vpop.f32.mrb[0].mxu0
        %v2863 = vadd.f32 0.0, %v2862
        %v2864 = vpop.f32.mrb[0].mxu0
        %v2865 = vadd.f32 0.0, %v2864
        %2866 = vmatprep.mubr.f32.mxu0 0.0
        %2867 = vmatmul.mubr.f32.gmra.mrb[0].mxu0 %v2662
        %v2868 = vpop.f32.mrb[0].mxu0
        %v2869 = vadd.f32 0.0, %v2868
        %v2870 = vpop.f32.mrb[0].mxu0
        %v2871 = vadd.f32 0.0, %v2870
        %2872 = vmatprep.mubr.f32.mxu0 0.0
        %2873 = vmatmul.mubr.f32.gmra.mrb[0].mxu0 %v2664
        %v2874 = vpop.f32.mrb[0].mxu0
        %v2875 = vadd.f32 0.0, %v2874
        %v2876 = vpop.f32.mrb[0].mxu0
        %v2877 = vadd.f32 0.0, %v2876
        %2878 = vmatprep.mubr.f32.mxu0 0.0
        %2879 = vmatmul.mubr.f32.gmra.mrb[0].mxu0 %v2666
        %v2880 = vpop.f32.mrb[0].mxu0
        %v2881 = vadd.f32 0.0, %v2880
        %v2882 = vpop.f32.mrb[0].mxu0
        %v2883 = vadd.f32 0.0, %v2882
        %2884 = vmatprep.mubr.f32.mxu0 0.0
        %2885 = vmatmul.mubr.f32.gmra.mrb[0].mxu0 %v2668
        %v2886 = vpop.f32.mrb[0].mxu0
        %v2887 = vadd.f32 0.0, %v2886
        %v2888 = vpop.f32.mrb[0].mxu0
        %v2889 = vadd.f32 0.0, %v2888
        %2890 = vmatprep.mubr.f32.mxu0 0.0
        %2891 = vmatmul.mubr.f32.gmra.mrb[0].mxu0 %v2670
        %v2892 = vpop.f32.mrb[0].mxu0
        %v2893 = vadd.f32 0.0, %v2892
        %v2894 = vpop.f32.mrb[0].mxu0
        %v2895 = vadd.f32 0.0, %v2894
        %2896 = vdwg.mxu0
        %v2897 = vmax.f32 %v2803, %v2805
        %2898 = vmax.xlane.f32.xlu0 %v2897
        %v2899 = vpop.xlane.xlu0 %2898
        %v2900 = vmax.f32 %v2809, %v2811
        %2901 = vmax.xlane.f32.xlu0 %v2900
        %v2902 = vpop.xlane.xlu0 %2901
        %v2903 = vmax.f32 %v2815, %v2817
        %2904 = vmax.xlane.f32.xlu0 %v2903
        %v2905 = vpop.xlane.xlu0 %2904
        %v2906 = vmax.f32 %v2821, %v2823
        %2907 = vmax.xlane.f32.xlu0 %v2906
        %v2908 = vpop.xlane.xlu0 %2907
        %v2909 = vmax.f32 %v2827, %v2829
        %2910 = vmax.xlane.f32.xlu0 %v2909
        %v2911 = vpop.xlane.xlu0 %2910
        %v2912 = vmax.f32 %v2833, %v2835
        %2913 = vmax.xlane.f32.xlu0 %v2912
        %v2914 = vpop.xlane.xlu0 %2913
        %v2915 = vmax.f32 %v2839, %v2841
        %2916 = vmax.xlane.f32.xlu0 %v2915
        %v2917 = vpop.xlane.xlu0 %2916
        %v2918 = vmax.f32 %v2845, %v2847
        %2919 = vmax.xlane.f32.xlu0 %v2918
        %v2920 = vpop.xlane.xlu0 %2919
        %v2921 = vmax.f32 %v2851, %v2853
        %2922 = vmax.xlane.f32.xlu0 %v2921
        %v2923 = vpop.xlane.xlu0 %2922
        %v2924 = vmax.f32 %v2857, %v2859
        %2925 = vmax.xlane.f32.xlu0 %v2924
        %v2926 = vpop.xlane.xlu0 %2925
        %v2927 = vmax.f32 %v2863, %v2865
        %2928 = vmax.xlane.f32.xlu0 %v2927
        %v2929 = vpop.xlane.xlu0 %2928
        %v2930 = vmax.f32 %v2869, %v2871
        %2931 = vmax.xlane.f32.xlu0 %v2930
        %v2932 = vpop.xlane.xlu0 %2931
        %v2933 = vmax.f32 %v2875, %v2877
        %2934 = vmax.xlane.f32.xlu0 %v2933
        %v2935 = vpop.xlane.xlu0 %2934
        %v2936 = vmax.f32 %v2881, %v2883
        %2937 = vmax.xlane.f32.xlu0 %v2936
        %v2938 = vpop.xlane.xlu0 %2937
        %v2939 = vmax.f32 %v2887, %v2889
        %2940 = vmax.xlane.f32.xlu0 %v2939
        %v2941 = vpop.xlane.xlu0 %2940
        %v2942 = vmax.f32 %v2893, %v2895
        %2943 = vmax.xlane.f32.xlu0 %v2942
        %v2944 = vpop.xlane.xlu0 %2943
        %v2945 = vsub.f32 %v2803, %v2899
        %v2946 = vsub.f32 %v2805, %v2899
        %v2947 = vsub.f32 %v2809, %v2902
        %v2948 = vsub.f32 %v2811, %v2902
        %v2949 = vsub.f32 %v2815, %v2905
        %v2950 = vsub.f32 %v2817, %v2905
        %v2951 = vsub.f32 %v2821, %v2908
        %v2952 = vsub.f32 %v2823, %v2908
        %v2953 = vsub.f32 %v2827, %v2911
        %v2954 = vsub.f32 %v2829, %v2911
        %v2955 = vsub.f32 %v2833, %v2914
        %v2956 = vsub.f32 %v2835, %v2914
        %v2957 = vsub.f32 %v2839, %v2917
        %v2958 = vsub.f32 %v2841, %v2917
        %v2959 = vsub.f32 %v2845, %v2920
        %v2960 = vsub.f32 %v2847, %v2920
        %v2961 = vsub.f32 %v2851, %v2923
        %v2962 = vsub.f32 %v2853, %v2923
        %v2963 = vsub.f32 %v2857, %v2926
        %v2964 = vsub.f32 %v2859, %v2926
        %v2965 = vsub.f32 %v2863, %v2929
        %v2966 = vsub.f32 %v2865, %v2929
        %v2967 = vsub.f32 %v2869, %v2932
        %v2968 = vsub.f32 %v2871, %v2932
        %v2969 = vsub.f32 %v2875, %v2935
        %v2970 = vsub.f32 %v2877, %v2935
        %v2971 = vsub.f32 %v2881, %v2938
        %v2972 = vsub.f32 %v2883, %v2938
        %v2973 = vsub.f32 %v2887, %v2941
        %v2974 = vsub.f32 %v2889, %v2941
        %v2975 = vsub.f32 %v2893, %v2944
        %v2976 = vsub.f32 %v2895, %v2944
        %v2977 = vmul.f32 %v2945, 1.442695
        %v2978 = vpow.pop %v2977
        %v2979 = vmul.f32 %v2946, 1.442695
        %v2980 = vpow.pop %v2979
        %v2981 = vmul.f32 %v2947, 1.442695
        %v2982 = vpow.pop %v2981
        %v2983 = vmul.f32 %v2948, 1.442695
        %v2984 = vpow.pop %v2983
        %v2985 = vmul.f32 %v2949, 1.442695
        %v2986 = vpow.pop %v2985
        %v2987 = vmul.f32 %v2950, 1.442695
        %v2988 = vpow.pop %v2987
        %v2989 = vmul.f32 %v2951, 1.442695
        %v2990 = vpow.pop %v2989
        %v2991 = vmul.f32 %v2952, 1.442695
        %v2992 = vpow.pop %v2991
        %v2993 = vmul.f32 %v2953, 1.442695
        %v2994 = vpow.pop %v2993
        %v2995 = vmul.f32 %v2954, 1.442695
        %v2996 = vpow.pop %v2995
        %v2997 = vmul.f32 %v2955, 1.442695
        %v2998 = vpow.pop %v2997
        %v2999 = vmul.f32 %v2956, 1.442695
        %v3000 = vpow.pop %v2999
        %v3001 = vmul.f32 %v2957, 1.442695
        %v3002 = vpow.pop %v3001
        %v3003 = vmul.f32 %v2958, 1.442695
        %v3004 = vpow.pop %v3003
        %v3005 = vmul.f32 %v2959, 1.442695
        %v3006 = vpow.pop %v3005
        %v3007 = vmul.f32 %v2960, 1.442695
        %v3008 = vpow.pop %v3007
        %v3009 = vmul.f32 %v2961, 1.442695
        %v3010 = vpow.pop %v3009
        %v3011 = vmul.f32 %v2962, 1.442695
        %v3012 = vpow.pop %v3011
        %v3013 = vmul.f32 %v2963, 1.442695
        %v3014 = vpow.pop %v3013
        %v3015 = vmul.f32 %v2964, 1.442695
        %v3016 = vpow.pop %v3015
        %v3017 = vmul.f32 %v2965, 1.442695
        %v3018 = vpow.pop %v3017
        %v3019 = vmul.f32 %v2966, 1.442695
        %v3020 = vpow.pop %v3019
        %v3021 = vmul.f32 %v2967, 1.442695
        %v3022 = vpow.pop %v3021
        %v3023 = vmul.f32 %v2968, 1.442695
        %v3024 = vpow.pop %v3023
        %v3025 = vmul.f32 %v2969, 1.442695
        %v3026 = vpow.pop %v3025
        %v3027 = vmul.f32 %v2970, 1.442695
        %v3028 = vpow.pop %v3027
        %v3029 = vmul.f32 %v2971, 1.442695
        %v3030 = vpow.pop %v3029
        %v3031 = vmul.f32 %v2972, 1.442695
        %v3032 = vpow.pop %v3031
        %v3033 = vmul.f32 %v2973, 1.442695
        %v3034 = vpow.pop %v3033
        %v3035 = vmul.f32 %v2974, 1.442695
        %v3036 = vpow.pop %v3035
        %v3037 = vmul.f32 %v2975, 1.442695
        %v3038 = vpow.pop %v3037
        %v3039 = vmul.f32 %v2976, 1.442695
        %v3040 = vpow.pop %v3039
        %v3041 = vadd.f32 %v2978, %v2980
        %3042 = vadd.xlane.f32.xlu0 %v3041
        %v3043 = vpop.xlane.xlu0 %3042
        %v3044 = vadd.f32 %v2982, %v2984
        %3045 = vadd.xlane.f32.xlu0 %v3044
        %v3046 = vpop.xlane.xlu0 %3045
        %v3047 = vadd.f32 %v2986, %v2988
        %3048 = vadd.xlane.f32.xlu0 %v3047
        %v3049 = vpop.xlane.xlu0 %3048
        %v3050 = vadd.f32 %v2990, %v2992
        %3051 = vadd.xlane.f32.xlu0 %v3050
        %v3052 = vpop.xlane.xlu0 %3051
        %v3053 = vadd.f32 %v2994, %v2996
        %3054 = vadd.xlane.f32.xlu0 %v3053
        %v3055 = vpop.xlane.xlu0 %3054
        %v3056 = vadd.f32 %v2998, %v3000
        %3057 = vadd.xlane.f32.xlu0 %v3056
        %v3058 = vpop.xlane.xlu0 %3057
        %v3059 = vadd.f32 %v3002, %v3004
        %3060 = vadd.xlane.f32.xlu0 %v3059
        %v3061 = vpop.xlane.xlu0 %3060
        %v3062 = vadd.f32 %v3006, %v3008
        %3063 = vadd.xlane.f32.xlu0 %v3062
        %v3064 = vpop.xlane.xlu0 %3063
        %v3065 = vadd.f32 %v3010, %v3012
        %3066 = vadd.xlane.f32.xlu0 %v3065
        %v3067 = vpop.xlane.xlu0 %3066
        %v3068 = vadd.f32 %v3014, %v3016
        %3069 = vadd.xlane.f32.xlu0 %v3068
        %v3070 = vpop.xlane.xlu0 %3069
        %v3071 = vadd.f32 %v3018, %v3020
        %3072 = vadd.xlane.f32.xlu0 %v3071
        %v3073 = vpop.xlane.xlu0 %3072
        %v3074 = vadd.f32 %v3022, %v3024
        %3075 = vadd.xlane.f32.xlu0 %v3074
        %v3076 = vpop.xlane.xlu0 %3075
        %v3077 = vadd.f32 %v3026, %v3028
        %3078 = vadd.xlane.f32.xlu0 %v3077
        %v3079 = vpop.xlane.xlu0 %3078
        %v3080 = vadd.f32 %v3030, %v3032
        %3081 = vadd.xlane.f32.xlu0 %v3080
        %v3082 = vpop.xlane.xlu0 %3081
        %v3083 = vadd.f32 %v3034, %v3036
        %3084 = vadd.xlane.f32.xlu0 %v3083
        %v3085 = vpop.xlane.xlu0 %3084
        %v3086 = vadd.f32 %v3038, %v3040
        %3087 = vadd.xlane.f32.xlu0 %v3086
        %v3088 = vpop.xlane.xlu0 %3087
        %3089 = vrot.lane.b32.xlu0 %v987, 96
        %v3090 = vpop.permute.xlu0 %3089
        %3091 = vrot.lane.b32.xlu0 %v988, 96
        %v3092 = vpop.permute.xlu0 %3091
        %3093 = vrot.lane.b32.xlu0 %v989, 96
        %v3094 = vpop.permute.xlu0 %3093
        %3095 = vrot.lane.b32.xlu0 %v990, 96
        %v3096 = vpop.permute.xlu0 %3095
        %3097 = vrot.lane.b32.xlu0 %v991, 96
        %v3098 = vpop.permute.xlu0 %3097
        %3099 = vrot.lane.b32.xlu0 %v992, 96
        %v3100 = vpop.permute.xlu0 %3099
        %3101 = vrot.lane.b32.xlu0 %v993, 96
        %v3102 = vpop.permute.xlu0 %3101
        %3103 = vrot.lane.b32.xlu0 %v994, 96
        %v3104 = vpop.permute.xlu0 %3103
        %3105 = vrot.lane.b32.xlu0 %v995, 96
        %v3106 = vpop.permute.xlu0 %3105
        %3107 = vrot.lane.b32.xlu0 %v996, 96
        %v3108 = vpop.permute.xlu0 %3107
        %3109 = vrot.lane.b32.xlu0 %v997, 96
        %v3110 = vpop.permute.xlu0 %3109
        %3111 = vrot.lane.b32.xlu0 %v998, 96
        %v3112 = vpop.permute.xlu0 %3111
        %3113 = vrot.lane.b32.xlu0 %v999, 96
        %v3114 = vpop.permute.xlu0 %3113
        %3115 = vrot.lane.b32.xlu0 %v1000, 96
        %v3116 = vpop.permute.xlu0 %3115
        %3117 = vrot.lane.b32.xlu0 %v1001, 96
        %v3118 = vpop.permute.xlu0 %3117
        %3119 = vrot.lane.b32.xlu0 %v1002, 96
        %v3120 = vpop.permute.xlu0 %3119
        %3121 = vrot.lane.b32.xlu0 %v1003, 96
        %v3122 = vpop.permute.xlu0 %3121
        %3123 = vrot.lane.b32.xlu0 %v1004, 96
        %v3124 = vpop.permute.xlu0 %3123
        %3125 = vrot.lane.b32.xlu0 %v1005, 96
        %v3126 = vpop.permute.xlu0 %3125
        %3127 = vrot.lane.b32.xlu0 %v1006, 96
        %v3128 = vpop.permute.xlu0 %3127
        %3129 = vrot.lane.b32.xlu0 %v1007, 96
        %v3130 = vpop.permute.xlu0 %3129
        %3131 = vrot.lane.b32.xlu0 %v1008, 96
        %v3132 = vpop.permute.xlu0 %3131
        %3133 = vrot.lane.b32.xlu0 %v1009, 96
        %v3134 = vpop.permute.xlu0 %3133
        %3135 = vrot.lane.b32.xlu0 %v1010, 96
        %v3136 = vpop.permute.xlu0 %3135
        %3137 = vrot.lane.b32.xlu0 %v1011, 96
        %v3138 = vpop.permute.xlu0 %3137
        %3139 = vrot.lane.b32.xlu0 %v1012, 96
        %v3140 = vpop.permute.xlu0 %3139
        %3141 = vrot.lane.b32.xlu0 %v1013, 96
        %v3142 = vpop.permute.xlu0 %3141
        %3143 = vrot.lane.b32.xlu0 %v1014, 96
        %v3144 = vpop.permute.xlu0 %3143
        %3145 = vrot.lane.b32.xlu0 %v1015, 96
        %v3146 = vpop.permute.xlu0 %3145
        %3147 = vrot.lane.b32.xlu0 %v1016, 96
        %v3148 = vpop.permute.xlu0 %3147
        %3149 = vrot.lane.b32.xlu0 %v1017, 96
        %v3150 = vpop.permute.xlu0 %3149
        %3151 = vrot.lane.b32.xlu0 %v1018, 96
        %v3152 = vpop.permute.xlu0 %3151
        %3185 = vmatprep.subr.mxu0 0.0
        %3186 = vmatpush1.msra.mxu0 %v3090
        %3187 = vmatprep.subr.mxu0 0.0
        %3188 = vmatpush1.msra.mxu0 %v3092
        %3189 = vmatprep.subr.mxu0 0.0
        %3190 = vmatpush1.msra.mxu0 %v3094
        %3191 = vmatprep.subr.mxu0 0.0
        %3192 = vmatpush1.msra.mxu0 %v3096
        %3193 = vmatprep.subr.mxu0 0.0
        %3194 = vmatpush1.msra.mxu0 %v3098
        %3195 = vmatprep.subr.mxu0 0.0
        %3196 = vmatpush1.msra.mxu0 %v3100
        %3197 = vmatprep.subr.mxu0 0.0
        %3198 = vmatpush1.msra.mxu0 %v3102
        %3199 = vmatprep.subr.mxu0 0.0
        %3200 = vmatpush1.msra.mxu0 %v3104
        %3201 = vmatprep.subr.mxu0 0.0
        %3202 = vmatpush1.msra.mxu0 %v3106
        %3203 = vmatprep.subr.mxu0 0.0
        %3204 = vmatpush1.msra.mxu0 %v3108
        %3205 = vmatprep.subr.mxu0 0.0
        %3206 = vmatpush1.msra.mxu0 %v3110
        %3207 = vmatprep.subr.mxu0 0.0
        %3208 = vmatpush1.msra.mxu0 %v3112
        %3209 = vmatprep.subr.mxu0 0.0
        %3210 = vmatpush1.msra.mxu0 %v3114
        %3211 = vmatprep.subr.mxu0 0.0
        %3212 = vmatpush1.msra.mxu0 %v3116
        %3213 = vmatprep.subr.mxu0 0.0
        %3214 = vmatpush1.msra.mxu0 %v3118
        %3215 = vmatprep.subr.mxu0 0.0
        %3216 = vmatpush1.msra.mxu0 %v3120
        %3217 = vmatprep.subr.mxu0 0.0
        %3218 = vmatpush1.msra.mxu0 %v3122
        %3219 = vmatprep.subr.mxu0 0.0
        %3220 = vmatpush1.msra.mxu0 %v3124
        %3221 = vmatprep.subr.mxu0 0.0
        %3222 = vmatpush1.msra.mxu0 %v3126
        %3223 = vmatprep.subr.mxu0 0.0
        %3224 = vmatpush1.msra.mxu0 %v3128
        %3225 = vmatprep.subr.mxu0 0.0
        %3226 = vmatpush1.msra.mxu0 %v3130
        %3227 = vmatprep.subr.mxu0 0.0
        %3228 = vmatpush1.msra.mxu0 %v3132
        %3229 = vmatprep.subr.mxu0 0.0
        %3230 = vmatpush1.msra.mxu0 %v3134
        %3231 = vmatprep.subr.mxu0 0.0
        %3232 = vmatpush1.msra.mxu0 %v3136
        %3233 = vmatprep.subr.mxu0 0.0
        %3234 = vmatpush1.msra.mxu0 %v3138
        %3235 = vmatprep.subr.mxu0 0.0
        %3236 = vmatpush1.msra.mxu0 %v3140
        %3237 = vmatprep.subr.mxu0 0.0
        %3238 = vmatpush1.msra.mxu0 %v3142
        %3239 = vmatprep.subr.mxu0 0.0
        %3240 = vmatpush1.msra.mxu0 %v3144
        %3241 = vmatprep.subr.mxu0 0.0
        %3242 = vmatpush1.msra.mxu0 %v3146
        %3243 = vmatprep.subr.mxu0 0.0
        %3244 = vmatpush1.msra.mxu0 %v3148
        %3245 = vmatprep.subr.mxu0 0.0
        %3246 = vmatpush1.msra.mxu0 %v3150
        %3247 = vmatprep.subr.mxu0 0.0
        %3248 = vmatpush1.msra.mxu0 %v3152
        %3249 = vmatprep.mubr.f32.mxu0 %v2980
        %3250 = vmatmul.mubr.f32.gmra.mrb[0].mxu0 %v2978
        %v3251 = vpop.f32.mrb[0].mxu0
        %v3252 = vadd.f32 0.0, %v3251
        %v3253 = vpop.f32.mrb[0].mxu0
        %3254 = vmatprep.mubr.f32.mxu0 %v2984
        %3255 = vmatmul.mubr.f32.gmra.mrb[0].mxu0 %v2982
        %v3256 = vpop.f32.mrb[0].mxu0
        %v3257 = vadd.f32 0.0, %v3256
        %v3258 = vpop.f32.mrb[0].mxu0
        %3259 = vmatprep.mubr.f32.mxu0 %v2988
        %3260 = vmatmul.mubr.f32.gmra.mrb[0].mxu0 %v2986
        %v3261 = vpop.f32.mrb[0].mxu0
        %v3262 = vadd.f32 0.0, %v3261
        %v3263 = vpop.f32.mrb[0].mxu0
        %3264 = vmatprep.mubr.f32.mxu0 %v2992
        %3265 = vmatmul.mubr.f32.gmra.mrb[0].mxu0 %v2990
        %v3266 = vpop.f32.mrb[0].mxu0
        %v3267 = vadd.f32 0.0, %v3266
        %v3268 = vpop.f32.mrb[0].mxu0
        %3269 = vmatprep.mubr.f32.mxu0 %v2996
        %3270 = vmatmul.mubr.f32.gmra.mrb[0].mxu0 %v2994
        %v3271 = vpop.f32.mrb[0].mxu0
        %v3272 = vadd.f32 0.0, %v3271
        %v3273 = vpop.f32.mrb[0].mxu0
        %3274 = vmatprep.mubr.f32.mxu0 %v3000
        %3275 = vmatmul.mubr.f32.gmra.mrb[0].mxu0 %v2998
        %v3276 = vpop.f32.mrb[0].mxu0
        %v3277 = vadd.f32 0.0, %v3276
        %v3278 = vpop.f32.mrb[0].mxu0
        %3279 = vmatprep.mubr.f32.mxu0 %v3004
        %3280 = vmatmul.mubr.f32.gmra.mrb[0].mxu0 %v3002
        %v3281 = vpop.f32.mrb[0].mxu0
        %v3282 = vadd.f32 0.0, %v3281
        %v3283 = vpop.f32.mrb[0].mxu0
        %3284 = vmatprep.mubr.f32.mxu0 %v3008
        %3285 = vmatmul.mubr.f32.gmra.mrb[0].mxu0 %v3006
        %v3286 = vpop.f32.mrb[0].mxu0
        %v3287 = vadd.f32 0.0, %v3286
        %v3288 = vpop.f32.mrb[0].mxu0
        %3289 = vmatprep.mubr.f32.mxu0 %v3012
        %3290 = vmatmul.mubr.f32.gmra.mrb[0].mxu0 %v3010
        %v3291 = vpop.f32.mrb[0].mxu0
        %v3292 = vadd.f32 0.0, %v3291
        %v3293 = vpop.f32.mrb[0].mxu0
        %3294 = vmatprep.mubr.f32.mxu0 %v3016
        %3295 = vmatmul.mubr.f32.gmra.mrb[0].mxu0 %v3014
        %v3296 = vpop.f32.mrb[0].mxu0
        %v3297 = vadd.f32 0.0, %v3296
        %v3298 = vpop.f32.mrb[0].mxu0
        %3299 = vmatprep.mubr.f32.mxu0 %v3020
        %3300 = vmatmul.mubr.f32.gmra.mrb[0].mxu0 %v3018
        %v3301 = vpop.f32.mrb[0].mxu0
        %v3302 = vadd.f32 0.0, %v3301
        %v3303 = vpop.f32.mrb[0].mxu0
        %3304 = vmatprep.mubr.f32.mxu0 %v3024
        %3305 = vmatmul.mubr.f32.gmra.mrb[0].mxu0 %v3022
        %v3306 = vpop.f32.mrb[0].mxu0
        %v3307 = vadd.f32 0.0, %v3306
        %v3308 = vpop.f32.mrb[0].mxu0
        %3309 = vmatprep.mubr.f32.mxu0 %v3028
        %3310 = vmatmul.mubr.f32.gmra.mrb[0].mxu0 %v3026
        %v3311 = vpop.f32.mrb[0].mxu0
        %v3312 = vadd.f32 0.0, %v3311
        %v3313 = vpop.f32.mrb[0].mxu0
        %3314 = vmatprep.mubr.f32.mxu0 %v3032
        %3315 = vmatmul.mubr.f32.gmra.mrb[0].mxu0 %v3030
        %v3316 = vpop.f32.mrb[0].mxu0
        %v3317 = vadd.f32 0.0, %v3316
        %v3318 = vpop.f32.mrb[0].mxu0
        %3319 = vmatprep.mubr.f32.mxu0 %v3036
        %3320 = vmatmul.mubr.f32.gmra.mrb[0].mxu0 %v3034
        %v3321 = vpop.f32.mrb[0].mxu0
        %v3322 = vadd.f32 0.0, %v3321
        %v3323 = vpop.f32.mrb[0].mxu0
        %3324 = vmatprep.mubr.f32.mxu0 %v3040
        %3325 = vmatmul.mubr.f32.gmra.mrb[0].mxu0 %v3038
        %v3326 = vpop.f32.mrb[0].mxu0
        %v3327 = vadd.f32 0.0, %v3326
        %v3328 = vpop.f32.mrb[0].mxu0
        %3329 = vdwg.mxu0
        %v3330 = vrcp.pop %v3043
        %v3331 = vrcp.pop %v3046
        %v3332 = vrcp.pop %v3049
        %v3333 = vrcp.pop %v3052
        %v3334 = vrcp.pop %v3055
        %v3335 = vrcp.pop %v3058
        %v3336 = vrcp.pop %v3061
        %v3337 = vrcp.pop %v3064
        %v3338 = vrcp.pop %v3067
        %v3339 = vrcp.pop %v3070
        %v3340 = vrcp.pop %v3073
        %v3341 = vrcp.pop %v3076
        %v3342 = vrcp.pop %v3079
        %v3343 = vrcp.pop %v3082
        %v3344 = vrcp.pop %v3085
        %v3345 = vrcp.pop %v3088
        %v3346 = vmul.f32 %v3252, %v3330
        %v3347 = vmul.f32 %v3257, %v3331
        %v3348 = vmul.f32 %v3262, %v3332
        %v3349 = vmul.f32 %v3267, %v3333
        %v3350 = vmul.f32 %v3272, %v3334
        %v3351 = vmul.f32 %v3277, %v3335
        %v3352 = vmul.f32 %v3282, %v3336
        %v3353 = vmul.f32 %v3287, %v3337
        %v3354 = vmul.f32 %v3292, %v3338
        %v3355 = vmul.f32 %v3297, %v3339
        %v3356 = vmul.f32 %v3302, %v3340
        %v3357 = vmul.f32 %v3307, %v3341
        %v3358 = vmul.f32 %v3312, %v3342
        %v3359 = vmul.f32 %v3317, %v3343
        %v3360 = vmul.f32 %v3322, %v3344
        %v3361 = vmul.f32 %v3327, %v3345
        %3362 = vrot.lane.b32.xlu0 %v939, 80
        %v3363 = vpop.permute.xlu0 %3362
        %3364 = vrot.lane.b32.xlu0 %v940, 80
        %v3365 = vpop.permute.xlu0 %3364
        %3366 = vrot.lane.b32.xlu0 %v941, 80
        %v3367 = vpop.permute.xlu0 %3366
        %3368 = vrot.lane.b32.xlu0 %v942, 80
        %v3369 = vpop.permute.xlu0 %3368
        %3370 = vrot.lane.b32.xlu0 %v943, 80
        %v3371 = vpop.permute.xlu0 %3370
        %3372 = vrot.lane.b32.xlu0 %v944, 80
        %v3373 = vpop.permute.xlu0 %3372
        %3374 = vrot.lane.b32.xlu0 %v945, 80
        %v3375 = vpop.permute.xlu0 %3374
        %3376 = vrot.lane.b32.xlu0 %v946, 80
        %v3377 = vpop.permute.xlu0 %3376
        %3378 = vrot.lane.b32.xlu0 %v947, 80
        %v3379 = vpop.permute.xlu0 %3378
        %3380 = vrot.lane.b32.xlu0 %v948, 80
        %v3381 = vpop.permute.xlu0 %3380
        %3382 = vrot.lane.b32.xlu0 %v949, 80
        %v3383 = vpop.permute.xlu0 %3382
        %3384 = vrot.lane.b32.xlu0 %v950, 80
        %v3385 = vpop.permute.xlu0 %3384
        %3386 = vrot.lane.b32.xlu0 %v951, 80
        %v3387 = vpop.permute.xlu0 %3386
        %3388 = vrot.lane.b32.xlu0 %v952, 80
        %v3389 = vpop.permute.xlu0 %3388
        %3390 = vrot.lane.b32.xlu0 %v953, 80
        %v3391 = vpop.permute.xlu0 %3390
        %3392 = vrot.lane.b32.xlu0 %v954, 80
        %v3393 = vpop.permute.xlu0 %3392
        %3394 = vrot.lane.b32.xlu0 %v955, 80
        %v3395 = vpop.permute.xlu0 %3394
        %3396 = vrot.lane.b32.xlu0 %v956, 80
        %v3397 = vpop.permute.xlu0 %3396
        %3398 = vrot.lane.b32.xlu0 %v957, 80
        %v3399 = vpop.permute.xlu0 %3398
        %3400 = vrot.lane.b32.xlu0 %v958, 80
        %v3401 = vpop.permute.xlu0 %3400
        %3402 = vrot.lane.b32.xlu0 %v959, 80
        %v3403 = vpop.permute.xlu0 %3402
        %3404 = vrot.lane.b32.xlu0 %v960, 80
        %v3405 = vpop.permute.xlu0 %3404
        %3406 = vrot.lane.b32.xlu0 %v961, 80
        %v3407 = vpop.permute.xlu0 %3406
        %3408 = vrot.lane.b32.xlu0 %v962, 80
        %v3409 = vpop.permute.xlu0 %3408
        %3410 = vrot.lane.b32.xlu0 %v963, 80
        %v3411 = vpop.permute.xlu0 %3410
        %3412 = vrot.lane.b32.xlu0 %v964, 80
        %v3413 = vpop.permute.xlu0 %3412
        %3414 = vrot.lane.b32.xlu0 %v965, 80
        %v3415 = vpop.permute.xlu0 %3414
        %3416 = vrot.lane.b32.xlu0 %v966, 80
        %v3417 = vpop.permute.xlu0 %3416
        %3418 = vrot.lane.b32.xlu0 %v967, 80
        %v3419 = vpop.permute.xlu0 %3418
        %3420 = vrot.lane.b32.xlu0 %v968, 80
        %v3421 = vpop.permute.xlu0 %3420
        %3422 = vrot.lane.b32.xlu0 %v969, 80
        %v3423 = vpop.permute.xlu0 %3422
        %3424 = vrot.lane.b32.xlu0 %v970, 80
        %v3425 = vpop.permute.xlu0 %3424
        %3426 = vrot.lane.b32.xlu0 %v971, 80
        %v3427 = vpop.permute.xlu0 %3426
        %3428 = vrot.lane.b32.xlu0 %v972, 80
        %v3429 = vpop.permute.xlu0 %3428
        %3430 = vrot.lane.b32.xlu0 %v973, 80
        %v3431 = vpop.permute.xlu0 %3430
        %3432 = vrot.lane.b32.xlu0 %v974, 80
        %v3433 = vpop.permute.xlu0 %3432
        %3434 = vrot.lane.b32.xlu0 %v975, 80
        %v3435 = vpop.permute.xlu0 %3434
        %3436 = vrot.lane.b32.xlu0 %v976, 80
        %v3437 = vpop.permute.xlu0 %3436
        %3438 = vrot.lane.b32.xlu0 %v977, 80
        %v3439 = vpop.permute.xlu0 %3438
        %3440 = vrot.lane.b32.xlu0 %v978, 80
        %v3441 = vpop.permute.xlu0 %3440
        %3442 = vrot.lane.b32.xlu0 %v979, 80
        %v3443 = vpop.permute.xlu0 %3442
        %3444 = vrot.lane.b32.xlu0 %v980, 80
        %v3445 = vpop.permute.xlu0 %3444
        %3446 = vrot.lane.b32.xlu0 %v981, 80
        %v3447 = vpop.permute.xlu0 %3446
        %3448 = vrot.lane.b32.xlu0 %v982, 80
        %v3449 = vpop.permute.xlu0 %3448
        %3450 = vrot.lane.b32.xlu0 %v983, 80
        %v3451 = vpop.permute.xlu0 %3450
        %3452 = vrot.lane.b32.xlu0 %v984, 80
        %v3453 = vpop.permute.xlu0 %3452
        %3454 = vrot.lane.b32.xlu0 %v985, 80
        %v3455 = vpop.permute.xlu0 %3454
        %3456 = vrot.lane.b32.xlu0 %v986, 80
        %v3457 = vpop.permute.xlu0 %3456
        %v3458 = vsel %vm1019, %v3363, 0
        %v3460 = vsel %vm1019, %v3365, 0
        %v3462 = vsel %vm1019, %v3367, 0
        %v3464 = vsel %vm1019, %v3369, 0
        %v3466 = vsel %vm1019, %v3371, 0
        %v3468 = vsel %vm1019, %v3373, 0
        %v3470 = vsel %vm1019, %v3375, 0
        %v3472 = vsel %vm1019, %v3377, 0
        %v3474 = vsel %vm1019, %v3379, 0
        %v3476 = vsel %vm1019, %v3381, 0
        %v3478 = vsel %vm1019, %v3383, 0
        %v3480 = vsel %vm1019, %v3385, 0
        %v3482 = vsel %vm1019, %v3387, 0
        %v3484 = vsel %vm1019, %v3389, 0
        %v3486 = vsel %vm1019, %v3391, 0
        %v3488 = vsel %vm1019, %v3393, 0
        %v3490 = vsel %vm1019, %v3395, 0
        %v3492 = vsel %vm1019, %v3397, 0
        %v3494 = vsel %vm1019, %v3399, 0
        %v3496 = vsel %vm1019, %v3401, 0
        %v3498 = vsel %vm1019, %v3403, 0
        %v3500 = vsel %vm1019, %v3405, 0
        %v3502 = vsel %vm1019, %v3407, 0
        %v3504 = vsel %vm1019, %v3409, 0
        %v3506 = vsel %vm1019, %v3411, 0
        %v3508 = vsel %vm1019, %v3413, 0
        %v3510 = vsel %vm1019, %v3415, 0
        %v3512 = vsel %vm1019, %v3417, 0
        %v3514 = vsel %vm1019, %v3419, 0
        %v3516 = vsel %vm1019, %v3421, 0
        %v3518 = vsel %vm1019, %v3423, 0
        %v3520 = vsel %vm1019, %v3425, 0
        %v3522 = vsel %vm1019, %v3427, 0
        %v3524 = vsel %vm1019, %v3429, 0
        %v3526 = vsel %vm1019, %v3431, 0
        %v3528 = vsel %vm1019, %v3433, 0
        %v3530 = vsel %vm1019, %v3435, 0
        %v3532 = vsel %vm1019, %v3437, 0
        %v3534 = vsel %vm1019, %v3439, 0
        %v3536 = vsel %vm1019, %v3441, 0
        %v3538 = vsel %vm1019, %v3443, 0
        %v3540 = vsel %vm1019, %v3445, 0
        %v3542 = vsel %vm1019, %v3447, 0
        %v3544 = vsel %vm1019, %v3449, 0
        %v3546 = vsel %vm1019, %v3451, 0
        %v3548 = vsel %vm1019, %v3453, 0
        %v3550 = vsel %vm1019, %v3455, 0
        %v3552 = vsel %vm1019, %v3457, 0
        %3554 = vmatprep.subr.mxu0 0.0
        %3555 = vmatpush1.xpose.msra.mxu0 %v3490
        %3556 = vmatprep.subr.mxu0 0.0
        %3557 = vmatpush1.xpose.msra.mxu0 %v3492
        %3558 = vmatprep.subr.mxu0 0.0
        %3559 = vmatpush1.xpose.msra.mxu0 %v3494
        %3560 = vmatprep.subr.mxu0 0.0
        %3561 = vmatpush1.xpose.msra.mxu0 %v3496
        %3562 = vmatprep.subr.mxu0 0.0
        %3563 = vmatpush1.xpose.msra.mxu0 %v3498
        %3564 = vmatprep.subr.mxu0 0.0
        %3565 = vmatpush1.xpose.msra.mxu0 %v3500
        %3566 = vmatprep.subr.mxu0 0.0
        %3567 = vmatpush1.xpose.msra.mxu0 %v3502
        %3568 = vmatprep.subr.mxu0 0.0
        %3569 = vmatpush1.xpose.msra.mxu0 %v3504
        %3570 = vmatprep.subr.mxu0 0.0
        %3571 = vmatpush1.xpose.msra.mxu0 %v3506
        %3572 = vmatprep.subr.mxu0 0.0
        %3573 = vmatpush1.xpose.msra.mxu0 %v3508
        %3574 = vmatprep.subr.mxu0 0.0
        %3575 = vmatpush1.xpose.msra.mxu0 %v3510
        %3576 = vmatprep.subr.mxu0 0.0
        %3577 = vmatpush1.xpose.msra.mxu0 %v3512
        %3578 = vmatprep.subr.mxu0 0.0
        %3579 = vmatpush1.xpose.msra.mxu0 %v3514
        %3580 = vmatprep.subr.mxu0 0.0
        %3581 = vmatpush1.xpose.msra.mxu0 %v3516
        %3582 = vmatprep.subr.mxu0 0.0
        %3583 = vmatpush1.xpose.msra.mxu0 %v3518
        %3584 = vmatprep.subr.mxu0 0.0
        %3585 = vmatpush1.xpose.msra.mxu0 %v3520
        %3586 = vmatprep.subr.mxu0 0.0
        %3587 = vmatpush1.xpose.msra.mxu0 %v3522
        %3588 = vmatprep.subr.mxu0 0.0
        %3589 = vmatpush1.xpose.msra.mxu0 %v3524
        %3590 = vmatprep.subr.mxu0 0.0
        %3591 = vmatpush1.xpose.msra.mxu0 %v3526
        %3592 = vmatprep.subr.mxu0 0.0
        %3593 = vmatpush1.xpose.msra.mxu0 %v3528
        %3594 = vmatprep.subr.mxu0 0.0
        %3595 = vmatpush1.xpose.msra.mxu0 %v3530
        %3596 = vmatprep.subr.mxu0 0.0
        %3597 = vmatpush1.xpose.msra.mxu0 %v3532
        %3598 = vmatprep.subr.mxu0 0.0
        %3599 = vmatpush1.xpose.msra.mxu0 %v3534
        %3600 = vmatprep.subr.mxu0 0.0
        %3601 = vmatpush1.xpose.msra.mxu0 %v3536
        %3602 = vmatprep.subr.mxu0 0.0
        %3603 = vmatpush1.xpose.msra.mxu0 %v3538
        %3604 = vmatprep.subr.mxu0 0.0
        %3605 = vmatpush1.xpose.msra.mxu0 %v3540
        %3606 = vmatprep.subr.mxu0 0.0
        %3607 = vmatpush1.xpose.msra.mxu0 %v3542
        %3608 = vmatprep.subr.mxu0 0.0
        %3609 = vmatpush1.xpose.msra.mxu0 %v3544
        %3610 = vmatprep.subr.mxu0 0.0
        %3611 = vmatpush1.xpose.msra.mxu0 %v3546
        %3612 = vmatprep.subr.mxu0 0.0
        %3613 = vmatpush1.xpose.msra.mxu0 %v3548
        %3614 = vmatprep.subr.mxu0 0.0
        %3615 = vmatpush1.xpose.msra.mxu0 %v3550
        %3616 = vmatprep.subr.mxu0 0.0
        %3617 = vmatpush1.xpose.msra.mxu0 %v3552
        %3618 = vmatprep.mubr.f32.mxu0 0.0
        %3619 = vmatmul.mubr.f32.gmra.mrb[0].mxu0 %v3458
        %v3620 = vpop.f32.mrb[0].mxu0
        %v3621 = vadd.f32 0.0, %v3620
        %v3622 = vpop.f32.mrb[0].mxu0
        %v3623 = vadd.f32 0.0, %v3622
        %3624 = vmatprep.mubr.f32.mxu0 0.0
        %3625 = vmatmul.mubr.f32.gmra.mrb[0].mxu0 %v3460
        %v3626 = vpop.f32.mrb[0].mxu0
        %v3627 = vadd.f32 0.0, %v3626
        %v3628 = vpop.f32.mrb[0].mxu0
        %v3629 = vadd.f32 0.0, %v3628
        %3630 = vmatprep.mubr.f32.mxu0 0.0
        %3631 = vmatmul.mubr.f32.gmra.mrb[0].mxu0 %v3462
        %v3632 = vpop.f32.mrb[0].mxu0
        %v3633 = vadd.f32 0.0, %v3632
        %v3634 = vpop.f32.mrb[0].mxu0
        %v3635 = vadd.f32 0.0, %v3634
        %3636 = vmatprep.mubr.f32.mxu0 0.0
        %3637 = vmatmul.mubr.f32.gmra.mrb[0].mxu0 %v3464
        %v3638 = vpop.f32.mrb[0].mxu0
        %v3639 = vadd.f32 0.0, %v3638
        %v3640 = vpop.f32.mrb[0].mxu0
        %v3641 = vadd.f32 0.0, %v3640
        %3642 = vmatprep.mubr.f32.mxu0 0.0
        %3643 = vmatmul.mubr.f32.gmra.mrb[0].mxu0 %v3466
        %v3644 = vpop.f32.mrb[0].mxu0
        %v3645 = vadd.f32 0.0, %v3644
        %v3646 = vpop.f32.mrb[0].mxu0
        %v3647 = vadd.f32 0.0, %v3646
        %3648 = vmatprep.mubr.f32.mxu0 0.0
        %3649 = vmatmul.mubr.f32.gmra.mrb[0].mxu0 %v3468
        %v3650 = vpop.f32.mrb[0].mxu0
        %v3651 = vadd.f32 0.0, %v3650
        %v3652 = vpop.f32.mrb[0].mxu0
        %v3653 = vadd.f32 0.0, %v3652
        %3654 = vmatprep.mubr.f32.mxu0 0.0
        %3655 = vmatmul.mubr.f32.gmra.mrb[0].mxu0 %v3470
        %v3656 = vpop.f32.mrb[0].mxu0
        %v3657 = vadd.f32 0.0, %v3656
        %v3658 = vpop.f32.mrb[0].mxu0
        %v3659 = vadd.f32 0.0, %v3658
        %3660 = vmatprep.mubr.f32.mxu0 0.0
        %3661 = vmatmul.mubr.f32.gmra.mrb[0].mxu0 %v3472
        %v3662 = vpop.f32.mrb[0].mxu0
        %v3663 = vadd.f32 0.0, %v3662
        %v3664 = vpop.f32.mrb[0].mxu0
        %v3665 = vadd.f32 0.0, %v3664
        %3666 = vmatprep.mubr.f32.mxu0 0.0
        %3667 = vmatmul.mubr.f32.gmra.mrb[0].mxu0 %v3474
        %v3668 = vpop.f32.mrb[0].mxu0
        %v3669 = vadd.f32 0.0, %v3668
        %v3670 = vpop.f32.mrb[0].mxu0
        %v3671 = vadd.f32 0.0, %v3670
        %3672 = vmatprep.mubr.f32.mxu0 0.0
        %3673 = vmatmul.mubr.f32.gmra.mrb[0].mxu0 %v3476
        %v3674 = vpop.f32.mrb[0].mxu0
        %v3675 = vadd.f32 0.0, %v3674
        %v3676 = vpop.f32.mrb[0].mxu0
        %v3677 = vadd.f32 0.0, %v3676
        %3678 = vmatprep.mubr.f32.mxu0 0.0
        %3679 = vmatmul.mubr.f32.gmra.mrb[0].mxu0 %v3478
        %v3680 = vpop.f32.mrb[0].mxu0
        %v3681 = vadd.f32 0.0, %v3680
        %v3682 = vpop.f32.mrb[0].mxu0
        %v3683 = vadd.f32 0.0, %v3682
        %3684 = vmatprep.mubr.f32.mxu0 0.0
        %3685 = vmatmul.mubr.f32.gmra.mrb[0].mxu0 %v3480
        %v3686 = vpop.f32.mrb[0].mxu0
        %v3687 = vadd.f32 0.0, %v3686
        %v3688 = vpop.f32.mrb[0].mxu0
        %v3689 = vadd.f32 0.0, %v3688
        %3690 = vmatprep.mubr.f32.mxu0 0.0
        %3691 = vmatmul.mubr.f32.gmra.mrb[0].mxu0 %v3482
        %v3692 = vpop.f32.mrb[0].mxu0
        %v3693 = vadd.f32 0.0, %v3692
        %v3694 = vpop.f32.mrb[0].mxu0
        %v3695 = vadd.f32 0.0, %v3694
        %3696 = vmatprep.mubr.f32.mxu0 0.0
        %3697 = vmatmul.mubr.f32.gmra.mrb[0].mxu0 %v3484
        %v3698 = vpop.f32.mrb[0].mxu0
        %v3699 = vadd.f32 0.0, %v3698
        %v3700 = vpop.f32.mrb[0].mxu0
        %v3701 = vadd.f32 0.0, %v3700
        %3702 = vmatprep.mubr.f32.mxu0 0.0
        %3703 = vmatmul.mubr.f32.gmra.mrb[0].mxu0 %v3486
        %v3704 = vpop.f32.mrb[0].mxu0
        %v3705 = vadd.f32 0.0, %v3704
        %v3706 = vpop.f32.mrb[0].mxu0
        %v3707 = vadd.f32 0.0, %v3706
        %3708 = vmatprep.mubr.f32.mxu0 0.0
        %3709 = vmatmul.mubr.f32.gmra.mrb[0].mxu0 %v3488
        %v3710 = vpop.f32.mrb[0].mxu0
        %v3711 = vadd.f32 0.0, %v3710
        %v3712 = vpop.f32.mrb[0].mxu0
        %v3713 = vadd.f32 0.0, %v3712
        %3714 = vdwg.mxu0
        %v3715 = vmax.f32 %v3621, %v3623
        %3716 = vmax.xlane.f32.xlu0 %v3715
        %v3717 = vpop.xlane.xlu0 %3716
        %v3718 = vmax.f32 %v3627, %v3629
        %3719 = vmax.xlane.f32.xlu0 %v3718
        %v3720 = vpop.xlane.xlu0 %3719
        %v3721 = vmax.f32 %v3633, %v3635
        %3722 = vmax.xlane.f32.xlu0 %v3721
        %v3723 = vpop.xlane.xlu0 %3722
        %v3724 = vmax.f32 %v3639, %v3641
        %3725 = vmax.xlane.f32.xlu0 %v3724
        %v3726 = vpop.xlane.xlu0 %3725
        %v3727 = vmax.f32 %v3645, %v3647
        %3728 = vmax.xlane.f32.xlu0 %v3727
        %v3729 = vpop.xlane.xlu0 %3728
        %v3730 = vmax.f32 %v3651, %v3653
        %3731 = vmax.xlane.f32.xlu0 %v3730
        %v3732 = vpop.xlane.xlu0 %3731
        %v3733 = vmax.f32 %v3657, %v3659
        %3734 = vmax.xlane.f32.xlu0 %v3733
        %v3735 = vpop.xlane.xlu0 %3734
        %v3736 = vmax.f32 %v3663, %v3665
        %3737 = vmax.xlane.f32.xlu0 %v3736
        %v3738 = vpop.xlane.xlu0 %3737
        %v3739 = vmax.f32 %v3669, %v3671
        %3740 = vmax.xlane.f32.xlu0 %v3739
        %v3741 = vpop.xlane.xlu0 %3740
        %v3742 = vmax.f32 %v3675, %v3677
        %3743 = vmax.xlane.f32.xlu0 %v3742
        %v3744 = vpop.xlane.xlu0 %3743
        %v3745 = vmax.f32 %v3681, %v3683
        %3746 = vmax.xlane.f32.xlu0 %v3745
        %v3747 = vpop.xlane.xlu0 %3746
        %v3748 = vmax.f32 %v3687, %v3689
        %3749 = vmax.xlane.f32.xlu0 %v3748
        %v3750 = vpop.xlane.xlu0 %3749
        %v3751 = vmax.f32 %v3693, %v3695
        %3752 = vmax.xlane.f32.xlu0 %v3751
        %v3753 = vpop.xlane.xlu0 %3752
        %v3754 = vmax.f32 %v3699, %v3701
        %3755 = vmax.xlane.f32.xlu0 %v3754
        %v3756 = vpop.xlane.xlu0 %3755
        %v3757 = vmax.f32 %v3705, %v3707
        %3758 = vmax.xlane.f32.xlu0 %v3757
        %v3759 = vpop.xlane.xlu0 %3758
        %v3760 = vmax.f32 %v3711, %v3713
        %3761 = vmax.xlane.f32.xlu0 %v3760
        %v3762 = vpop.xlane.xlu0 %3761
        %v3763 = vsub.f32 %v3621, %v3717
        %v3764 = vsub.f32 %v3623, %v3717
        %v3765 = vsub.f32 %v3627, %v3720
        %v3766 = vsub.f32 %v3629, %v3720
        %v3767 = vsub.f32 %v3633, %v3723
        %v3768 = vsub.f32 %v3635, %v3723
        %v3769 = vsub.f32 %v3639, %v3726
        %v3770 = vsub.f32 %v3641, %v3726
        %v3771 = vsub.f32 %v3645, %v3729
        %v3772 = vsub.f32 %v3647, %v3729
        %v3773 = vsub.f32 %v3651, %v3732
        %v3774 = vsub.f32 %v3653, %v3732
        %v3775 = vsub.f32 %v3657, %v3735
        %v3776 = vsub.f32 %v3659, %v3735
        %v3777 = vsub.f32 %v3663, %v3738
        %v3778 = vsub.f32 %v3665, %v3738
        %v3779 = vsub.f32 %v3669, %v3741
        %v3780 = vsub.f32 %v3671, %v3741
        %v3781 = vsub.f32 %v3675, %v3744
        %v3782 = vsub.f32 %v3677, %v3744
        %v3783 = vsub.f32 %v3681, %v3747
        %v3784 = vsub.f32 %v3683, %v3747
        %v3785 = vsub.f32 %v3687, %v3750
        %v3786 = vsub.f32 %v3689, %v3750
        %v3787 = vsub.f32 %v3693, %v3753
        %v3788 = vsub.f32 %v3695, %v3753
        %v3789 = vsub.f32 %v3699, %v3756
        %v3790 = vsub.f32 %v3701, %v3756
        %v3791 = vsub.f32 %v3705, %v3759
        %v3792 = vsub.f32 %v3707, %v3759
        %v3793 = vsub.f32 %v3711, %v3762
        %v3794 = vsub.f32 %v3713, %v3762
        %v3795 = vmul.f32 %v3763, 1.442695
        %v3796 = vpow.pop %v3795
        %v3797 = vmul.f32 %v3764, 1.442695
        %v3798 = vpow.pop %v3797
        %v3799 = vmul.f32 %v3765, 1.442695
        %v3800 = vpow.pop %v3799
        %v3801 = vmul.f32 %v3766, 1.442695
        %v3802 = vpow.pop %v3801
        %v3803 = vmul.f32 %v3767, 1.442695
        %v3804 = vpow.pop %v3803
        %v3805 = vmul.f32 %v3768, 1.442695
        %v3806 = vpow.pop %v3805
        %v3807 = vmul.f32 %v3769, 1.442695
        %v3808 = vpow.pop %v3807
        %v3809 = vmul.f32 %v3770, 1.442695
        %v3810 = vpow.pop %v3809
        %v3811 = vmul.f32 %v3771, 1.442695
        %v3812 = vpow.pop %v3811
        %v3813 = vmul.f32 %v3772, 1.442695
        %v3814 = vpow.pop %v3813
        %v3815 = vmul.f32 %v3773, 1.442695
        %v3816 = vpow.pop %v3815
        %v3817 = vmul.f32 %v3774, 1.442695
        %v3818 = vpow.pop %v3817
        %v3819 = vmul.f32 %v3775, 1.442695
        %v3820 = vpow.pop %v3819
        %v3821 = vmul.f32 %v3776, 1.442695
        %v3822 = vpow.pop %v3821
        %v3823 = vmul.f32 %v3777, 1.442695
        %v3824 = vpow.pop %v3823
        %v3825 = vmul.f32 %v3778, 1.442695
        %v3826 = vpow.pop %v3825
        %v3827 = vmul.f32 %v3779, 1.442695
        %v3828 = vpow.pop %v3827
        %v3829 = vmul.f32 %v3780, 1.442695
        %v3830 = vpow.pop %v3829
        %v3831 = vmul.f32 %v3781, 1.442695
        %v3832 = vpow.pop %v3831
        %v3833 = vmul.f32 %v3782, 1.442695
        %v3834 = vpow.pop %v3833
        %v3835 = vmul.f32 %v3783, 1.442695
        %v3836 = vpow.pop %v3835
        %v3837 = vmul.f32 %v3784, 1.442695
        %v3838 = vpow.pop %v3837
        %v3839 = vmul.f32 %v3785, 1.442695
        %v3840 = vpow.pop %v3839
        %v3841 = vmul.f32 %v3786, 1.442695
        %v3842 = vpow.pop %v3841
        %v3843 = vmul.f32 %v3787, 1.442695
        %v3844 = vpow.pop %v3843
        %v3845 = vmul.f32 %v3788, 1.442695
        %v3846 = vpow.pop %v3845
        %v3847 = vmul.f32 %v3789, 1.442695
        %v3848 = vpow.pop %v3847
        %v3849 = vmul.f32 %v3790, 1.442695
        %v3850 = vpow.pop %v3849
        %v3851 = vmul.f32 %v3791, 1.442695
        %v3852 = vpow.pop %v3851
        %v3853 = vmul.f32 %v3792, 1.442695
        %v3854 = vpow.pop %v3853
        %v3855 = vmul.f32 %v3793, 1.442695
        %v3856 = vpow.pop %v3855
        %v3857 = vmul.f32 %v3794, 1.442695
        %v3858 = vpow.pop %v3857
        %v3859 = vadd.f32 %v3796, %v3798
        %3860 = vadd.xlane.f32.xlu0 %v3859
        %v3861 = vpop.xlane.xlu0 %3860
        %v3862 = vadd.f32 %v3800, %v3802
        %3863 = vadd.xlane.f32.xlu0 %v3862
        %v3864 = vpop.xlane.xlu0 %3863
        %v3865 = vadd.f32 %v3804, %v3806
        %3866 = vadd.xlane.f32.xlu0 %v3865
        %v3867 = vpop.xlane.xlu0 %3866
        %v3868 = vadd.f32 %v3808, %v3810
        %3869 = vadd.xlane.f32.xlu0 %v3868
        %v3870 = vpop.xlane.xlu0 %3869
        %v3871 = vadd.f32 %v3812, %v3814
        %3872 = vadd.xlane.f32.xlu0 %v3871
        %v3873 = vpop.xlane.xlu0 %3872
        %v3874 = vadd.f32 %v3816, %v3818
        %3875 = vadd.xlane.f32.xlu0 %v3874
        %v3876 = vpop.xlane.xlu0 %3875
        %v3877 = vadd.f32 %v3820, %v3822
        %3878 = vadd.xlane.f32.xlu0 %v3877
        %v3879 = vpop.xlane.xlu0 %3878
        %v3880 = vadd.f32 %v3824, %v3826
        %3881 = vadd.xlane.f32.xlu0 %v3880
        %v3882 = vpop.xlane.xlu0 %3881
        %v3883 = vadd.f32 %v3828, %v3830
        %3884 = vadd.xlane.f32.xlu0 %v3883
        %v3885 = vpop.xlane.xlu0 %3884
        %v3886 = vadd.f32 %v3832, %v3834
        %3887 = vadd.xlane.f32.xlu0 %v3886
        %v3888 = vpop.xlane.xlu0 %3887
        %v3889 = vadd.f32 %v3836, %v3838
        %3890 = vadd.xlane.f32.xlu0 %v3889
        %v3891 = vpop.xlane.xlu0 %3890
        %v3892 = vadd.f32 %v3840, %v3842
        %3893 = vadd.xlane.f32.xlu0 %v3892
        %v3894 = vpop.xlane.xlu0 %3893
        %v3895 = vadd.f32 %v3844, %v3846
        %3896 = vadd.xlane.f32.xlu0 %v3895
        %v3897 = vpop.xlane.xlu0 %3896
        %v3898 = vadd.f32 %v3848, %v3850
        %3899 = vadd.xlane.f32.xlu0 %v3898
        %v3900 = vpop.xlane.xlu0 %3899
        %v3901 = vadd.f32 %v3852, %v3854
        %3902 = vadd.xlane.f32.xlu0 %v3901
        %v3903 = vpop.xlane.xlu0 %3902
        %v3904 = vadd.f32 %v3856, %v3858
        %3905 = vadd.xlane.f32.xlu0 %v3904
        %v3906 = vpop.xlane.xlu0 %3905
        %3907 = vrot.lane.b32.xlu0 %v987, 80
        %v3908 = vpop.permute.xlu0 %3907
        %3909 = vrot.lane.b32.xlu0 %v988, 80
        %v3910 = vpop.permute.xlu0 %3909
        %3911 = vrot.lane.b32.xlu0 %v989, 80
        %v3912 = vpop.permute.xlu0 %3911
        %3913 = vrot.lane.b32.xlu0 %v990, 80
        %v3914 = vpop.permute.xlu0 %3913
        %3915 = vrot.lane.b32.xlu0 %v991, 80
        %v3916 = vpop.permute.xlu0 %3915
        %3917 = vrot.lane.b32.xlu0 %v992, 80
        %v3918 = vpop.permute.xlu0 %3917
        %3919 = vrot.lane.b32.xlu0 %v993, 80
        %v3920 = vpop.permute.xlu0 %3919
        %3921 = vrot.lane.b32.xlu0 %v994, 80
        %v3922 = vpop.permute.xlu0 %3921
        %3923 = vrot.lane.b32.xlu0 %v995, 80
        %v3924 = vpop.permute.xlu0 %3923
        %3925 = vrot.lane.b32.xlu0 %v996, 80
        %v3926 = vpop.permute.xlu0 %3925
        %3927 = vrot.lane.b32.xlu0 %v997, 80
        %v3928 = vpop.permute.xlu0 %3927
        %3929 = vrot.lane.b32.xlu0 %v998, 80
        %v3930 = vpop.permute.xlu0 %3929
        %3931 = vrot.lane.b32.xlu0 %v999, 80
        %v3932 = vpop.permute.xlu0 %3931
        %3933 = vrot.lane.b32.xlu0 %v1000, 80
        %v3934 = vpop.permute.xlu0 %3933
        %3935 = vrot.lane.b32.xlu0 %v1001, 80
        %v3936 = vpop.permute.xlu0 %3935
        %3937 = vrot.lane.b32.xlu0 %v1002, 80
        %v3938 = vpop.permute.xlu0 %3937
        %3939 = vrot.lane.b32.xlu0 %v1003, 80
        %v3940 = vpop.permute.xlu0 %3939
        %3941 = vrot.lane.b32.xlu0 %v1004, 80
        %v3942 = vpop.permute.xlu0 %3941
        %3943 = vrot.lane.b32.xlu0 %v1005, 80
        %v3944 = vpop.permute.xlu0 %3943
        %3945 = vrot.lane.b32.xlu0 %v1006, 80
        %v3946 = vpop.permute.xlu0 %3945
        %3947 = vrot.lane.b32.xlu0 %v1007, 80
        %v3948 = vpop.permute.xlu0 %3947
        %3949 = vrot.lane.b32.xlu0 %v1008, 80
        %v3950 = vpop.permute.xlu0 %3949
        %3951 = vrot.lane.b32.xlu0 %v1009, 80
        %v3952 = vpop.permute.xlu0 %3951
        %3953 = vrot.lane.b32.xlu0 %v1010, 80
        %v3954 = vpop.permute.xlu0 %3953
        %3955 = vrot.lane.b32.xlu0 %v1011, 80
        %v3956 = vpop.permute.xlu0 %3955
        %3957 = vrot.lane.b32.xlu0 %v1012, 80
        %v3958 = vpop.permute.xlu0 %3957
        %3959 = vrot.lane.b32.xlu0 %v1013, 80
        %v3960 = vpop.permute.xlu0 %3959
        %3961 = vrot.lane.b32.xlu0 %v1014, 80
        %v3962 = vpop.permute.xlu0 %3961
        %3963 = vrot.lane.b32.xlu0 %v1015, 80
        %v3964 = vpop.permute.xlu0 %3963
        %3965 = vrot.lane.b32.xlu0 %v1016, 80
        %v3966 = vpop.permute.xlu0 %3965
        %3967 = vrot.lane.b32.xlu0 %v1017, 80
        %v3968 = vpop.permute.xlu0 %3967
        %3969 = vrot.lane.b32.xlu0 %v1018, 80
        %v3970 = vpop.permute.xlu0 %3969
        %4003 = vmatprep.subr.mxu0 0.0
        %4004 = vmatpush1.msra.mxu0 %v3908
        %4005 = vmatprep.subr.mxu0 0.0
        %4006 = vmatpush1.msra.mxu0 %v3910
        %4007 = vmatprep.subr.mxu0 0.0
        %4008 = vmatpush1.msra.mxu0 %v3912
        %4009 = vmatprep.subr.mxu0 0.0
        %4010 = vmatpush1.msra.mxu0 %v3914
        %4011 = vmatprep.subr.mxu0 0.0
        %4012 = vmatpush1.msra.mxu0 %v3916
        %4013 = vmatprep.subr.mxu0 0.0
        %4014 = vmatpush1.msra.mxu0 %v3918
        %4015 = vmatprep.subr.mxu0 0.0
        %4016 = vmatpush1.msra.mxu0 %v3920
        %4017 = vmatprep.subr.mxu0 0.0
        %4018 = vmatpush1.msra.mxu0 %v3922
        %4019 = vmatprep.subr.mxu0 0.0
        %4020 = vmatpush1.msra.mxu0 %v3924
        %4021 = vmatprep.subr.mxu0 0.0
        %4022 = vmatpush1.msra.mxu0 %v3926
        %4023 = vmatprep.subr.mxu0 0.0
        %4024 = vmatpush1.msra.mxu0 %v3928
        %4025 = vmatprep.subr.mxu0 0.0
        %4026 = vmatpush1.msra.mxu0 %v3930
        %4027 = vmatprep.subr.mxu0 0.0
        %4028 = vmatpush1.msra.mxu0 %v3932
        %4029 = vmatprep.subr.mxu0 0.0
        %4030 = vmatpush1.msra.mxu0 %v3934
        %4031 = vmatprep.subr.mxu0 0.0
        %4032 = vmatpush1.msra.mxu0 %v3936
        %4033 = vmatprep.subr.mxu0 0.0
        %4034 = vmatpush1.msra.mxu0 %v3938
        %4035 = vmatprep.subr.mxu0 0.0
        %4036 = vmatpush1.msra.mxu0 %v3940
        %4037 = vmatprep.subr.mxu0 0.0
        %4038 = vmatpush1.msra.mxu0 %v3942
        %4039 = vmatprep.subr.mxu0 0.0
        %4040 = vmatpush1.msra.mxu0 %v3944
        %4041 = vmatprep.subr.mxu0 0.0
        %4042 = vmatpush1.msra.mxu0 %v3946
        %4043 = vmatprep.subr.mxu0 0.0
        %4044 = vmatpush1.msra.mxu0 %v3948
        %4045 = vmatprep.subr.mxu0 0.0
        %4046 = vmatpush1.msra.mxu0 %v3950
        %4047 = vmatprep.subr.mxu0 0.0
        %4048 = vmatpush1.msra.mxu0 %v3952
        %4049 = vmatprep.subr.mxu0 0.0
        %4050 = vmatpush1.msra.mxu0 %v3954
        %4051 = vmatprep.subr.mxu0 0.0
        %4052 = vmatpush1.msra.mxu0 %v3956
        %4053 = vmatprep.subr.mxu0 0.0
        %4054 = vmatpush1.msra.mxu0 %v3958
        %4055 = vmatprep.subr.mxu0 0.0
        %4056 = vmatpush1.msra.mxu0 %v3960
        %4057 = vmatprep.subr.mxu0 0.0
        %4058 = vmatpush1.msra.mxu0 %v3962
        %4059 = vmatprep.subr.mxu0 0.0
        %4060 = vmatpush1.msra.mxu0 %v3964
        %4061 = vmatprep.subr.mxu0 0.0
        %4062 = vmatpush1.msra.mxu0 %v3966
        %4063 = vmatprep.subr.mxu0 0.0
        %4064 = vmatpush1.msra.mxu0 %v3968
        %4065 = vmatprep.subr.mxu0 0.0
        %4066 = vmatpush1.msra.mxu0 %v3970
        %4067 = vmatprep.mubr.f32.mxu0 %v3798
        %4068 = vmatmul.mubr.f32.gmra.mrb[0].mxu0 %v3796
        %v4069 = vpop.f32.mrb[0].mxu0
        %v4070 = vadd.f32 0.0, %v4069
        %v4071 = vpop.f32.mrb[0].mxu0
        %4072 = vmatprep.mubr.f32.mxu0 %v3802
        %4073 = vmatmul.mubr.f32.gmra.mrb[0].mxu0 %v3800
        %v4074 = vpop.f32.mrb[0].mxu0
        %v4075 = vadd.f32 0.0, %v4074
        %v4076 = vpop.f32.mrb[0].mxu0
        %4077 = vmatprep.mubr.f32.mxu0 %v3806
        %4078 = vmatmul.mubr.f32.gmra.mrb[0].mxu0 %v3804
        %v4079 = vpop.f32.mrb[0].mxu0
        %v4080 = vadd.f32 0.0, %v4079
        %v4081 = vpop.f32.mrb[0].mxu0
        %4082 = vmatprep.mubr.f32.mxu0 %v3810
        %4083 = vmatmul.mubr.f32.gmra.mrb[0].mxu0 %v3808
        %v4084 = vpop.f32.mrb[0].mxu0
        %v4085 = vadd.f32 0.0, %v4084
        %v4086 = vpop.f32.mrb[0].mxu0
        %4087 = vmatprep.mubr.f32.mxu0 %v3814
        %4088 = vmatmul.mubr.f32.gmra.mrb[0].mxu0 %v3812
        %v4089 = vpop.f32.mrb[0].mxu0
        %v4090 = vadd.f32 0.0, %v4089
        %v4091 = vpop.f32.mrb[0].mxu0
        %4092 = vmatprep.mubr.f32.mxu0 %v3818
        %4093 = vmatmul.mubr.f32.gmra.mrb[0].mxu0 %v3816
        %v4094 = vpop.f32.mrb[0].mxu0
        %v4095 = vadd.f32 0.0, %v4094
        %v4096 = vpop.f32.mrb[0].mxu0
        %4097 = vmatprep.mubr.f32.mxu0 %v3822
        %4098 = vmatmul.mubr.f32.gmra.mrb[0].mxu0 %v3820
        %v4099 = vpop.f32.mrb[0].mxu0
        %v4100 = vadd.f32 0.0, %v4099
        %v4101 = vpop.f32.mrb[0].mxu0
        %4102 = vmatprep.mubr.f32.mxu0 %v3826
        %4103 = vmatmul.mubr.f32.gmra.mrb[0].mxu0 %v3824
        %v4104 = vpop.f32.mrb[0].mxu0
        %v4105 = vadd.f32 0.0, %v4104
        %v4106 = vpop.f32.mrb[0].mxu0
        %4107 = vmatprep.mubr.f32.mxu0 %v3830
        %4108 = vmatmul.mubr.f32.gmra.mrb[0].mxu0 %v3828
        %v4109 = vpop.f32.mrb[0].mxu0
        %v4110 = vadd.f32 0.0, %v4109
        %v4111 = vpop.f32.mrb[0].mxu0
        %4112 = vmatprep.mubr.f32.mxu0 %v3834
        %4113 = vmatmul.mubr.f32.gmra.mrb[0].mxu0 %v3832
        %v4114 = vpop.f32.mrb[0].mxu0
        %v4115 = vadd.f32 0.0, %v4114
        %v4116 = vpop.f32.mrb[0].mxu0
        %4117 = vmatprep.mubr.f32.mxu0 %v3838
        %4118 = vmatmul.mubr.f32.gmra.mrb[0].mxu0 %v3836
        %v4119 = vpop.f32.mrb[0].mxu0
        %v4120 = vadd.f32 0.0, %v4119
        %v4121 = vpop.f32.mrb[0].mxu0
        %4122 = vmatprep.mubr.f32.mxu0 %v3842
        %4123 = vmatmul.mubr.f32.gmra.mrb[0].mxu0 %v3840
        %v4124 = vpop.f32.mrb[0].mxu0
        %v4125 = vadd.f32 0.0, %v4124
        %v4126 = vpop.f32.mrb[0].mxu0
        %4127 = vmatprep.mubr.f32.mxu0 %v3846
        %4128 = vmatmul.mubr.f32.gmra.mrb[0].mxu0 %v3844
        %v4129 = vpop.f32.mrb[0].mxu0
        %v4130 = vadd.f32 0.0, %v4129
        %v4131 = vpop.f32.mrb[0].mxu0
        %4132 = vmatprep.mubr.f32.mxu0 %v3850
        %4133 = vmatmul.mubr.f32.gmra.mrb[0].mxu0 %v3848
        %v4134 = vpop.f32.mrb[0].mxu0
        %v4135 = vadd.f32 0.0, %v4134
        %v4136 = vpop.f32.mrb[0].mxu0
        %4137 = vmatprep.mubr.f32.mxu0 %v3854
        %4138 = vmatmul.mubr.f32.gmra.mrb[0].mxu0 %v3852
        %v4139 = vpop.f32.mrb[0].mxu0
        %v4140 = vadd.f32 0.0, %v4139
        %v4141 = vpop.f32.mrb[0].mxu0
        %4142 = vmatprep.mubr.f32.mxu0 %v3858
        %4143 = vmatmul.mubr.f32.gmra.mrb[0].mxu0 %v3856
        %v4144 = vpop.f32.mrb[0].mxu0
        %v4145 = vadd.f32 0.0, %v4144
        %v4146 = vpop.f32.mrb[0].mxu0
        %4147 = vdwg.mxu0
        %v4148 = vrcp.pop %v3861
        %v4149 = vrcp.pop %v3864
        %v4150 = vrcp.pop %v3867
        %v4151 = vrcp.pop %v3870
        %v4152 = vrcp.pop %v3873
        %v4153 = vrcp.pop %v3876
        %v4154 = vrcp.pop %v3879
        %v4155 = vrcp.pop %v3882
        %v4156 = vrcp.pop %v3885
        %v4157 = vrcp.pop %v3888
        %v4158 = vrcp.pop %v3891
        %v4159 = vrcp.pop %v3894
        %v4160 = vrcp.pop %v3897
        %v4161 = vrcp.pop %v3900
        %v4162 = vrcp.pop %v3903
        %v4163 = vrcp.pop %v3906
        %v4164 = vmul.f32 %v4070, %v4148
        %v4165 = vmul.f32 %v4075, %v4149
        %v4166 = vmul.f32 %v4080, %v4150
        %v4167 = vmul.f32 %v4085, %v4151
        %v4168 = vmul.f32 %v4090, %v4152
        %v4169 = vmul.f32 %v4095, %v4153
        %v4170 = vmul.f32 %v4100, %v4154
        %v4171 = vmul.f32 %v4105, %v4155
        %v4172 = vmul.f32 %v4110, %v4156
        %v4173 = vmul.f32 %v4115, %v4157
        %v4174 = vmul.f32 %v4120, %v4158
        %v4175 = vmul.f32 %v4125, %v4159
        %v4176 = vmul.f32 %v4130, %v4160
        %v4177 = vmul.f32 %v4135, %v4161
        %v4178 = vmul.f32 %v4140, %v4162
        %v4179 = vmul.f32 %v4145, %v4163
        %4180 = vrot.lane.b32.xlu0 %v939, 64
        %v4181 = vpop.permute.xlu0 %4180
        %4182 = vrot.lane.b32.xlu0 %v940, 64
        %v4183 = vpop.permute.xlu0 %4182
        %4184 = vrot.lane.b32.xlu0 %v941, 64
        %v4185 = vpop.permute.xlu0 %4184
        %4186 = vrot.lane.b32.xlu0 %v942, 64
        %v4187 = vpop.permute.xlu0 %4186
        %4188 = vrot.lane.b32.xlu0 %v943, 64
        %v4189 = vpop.permute.xlu0 %4188
        %4190 = vrot.lane.b32.xlu0 %v944, 64
        %v4191 = vpop.permute.xlu0 %4190
        %4192 = vrot.lane.b32.xlu0 %v945, 64
        %v4193 = vpop.permute.xlu0 %4192
        %4194 = vrot.lane.b32.xlu0 %v946, 64
        %v4195 = vpop.permute.xlu0 %4194
        %4196 = vrot.lane.b32.xlu0 %v947, 64
        %v4197 = vpop.permute.xlu0 %4196
        %4198 = vrot.lane.b32.xlu0 %v948, 64
        %v4199 = vpop.permute.xlu0 %4198
        %4200 = vrot.lane.b32.xlu0 %v949, 64
        %v4201 = vpop.permute.xlu0 %4200
        %4202 = vrot.lane.b32.xlu0 %v950, 64
        %v4203 = vpop.permute.xlu0 %4202
        %4204 = vrot.lane.b32.xlu0 %v951, 64
        %v4205 = vpop.permute.xlu0 %4204
        %4206 = vrot.lane.b32.xlu0 %v952, 64
        %v4207 = vpop.permute.xlu0 %4206
        %4208 = vrot.lane.b32.xlu0 %v953, 64
        %v4209 = vpop.permute.xlu0 %4208
        %4210 = vrot.lane.b32.xlu0 %v954, 64
        %v4211 = vpop.permute.xlu0 %4210
        %4212 = vrot.lane.b32.xlu0 %v955, 64
        %v4213 = vpop.permute.xlu0 %4212
        %4214 = vrot.lane.b32.xlu0 %v956, 64
        %v4215 = vpop.permute.xlu0 %4214
        %4216 = vrot.lane.b32.xlu0 %v957, 64
        %v4217 = vpop.permute.xlu0 %4216
        %4218 = vrot.lane.b32.xlu0 %v958, 64
        %v4219 = vpop.permute.xlu0 %4218
        %4220 = vrot.lane.b32.xlu0 %v959, 64
        %v4221 = vpop.permute.xlu0 %4220
        %4222 = vrot.lane.b32.xlu0 %v960, 64
        %v4223 = vpop.permute.xlu0 %4222
        %4224 = vrot.lane.b32.xlu0 %v961, 64
        %v4225 = vpop.permute.xlu0 %4224
        %4226 = vrot.lane.b32.xlu0 %v962, 64
        %v4227 = vpop.permute.xlu0 %4226
        %4228 = vrot.lane.b32.xlu0 %v963, 64
        %v4229 = vpop.permute.xlu0 %4228
        %4230 = vrot.lane.b32.xlu0 %v964, 64
        %v4231 = vpop.permute.xlu0 %4230
        %4232 = vrot.lane.b32.xlu0 %v965, 64
        %v4233 = vpop.permute.xlu0 %4232
        %4234 = vrot.lane.b32.xlu0 %v966, 64
        %v4235 = vpop.permute.xlu0 %4234
        %4236 = vrot.lane.b32.xlu0 %v967, 64
        %v4237 = vpop.permute.xlu0 %4236
        %4238 = vrot.lane.b32.xlu0 %v968, 64
        %v4239 = vpop.permute.xlu0 %4238
        %4240 = vrot.lane.b32.xlu0 %v969, 64
        %v4241 = vpop.permute.xlu0 %4240
        %4242 = vrot.lane.b32.xlu0 %v970, 64
        %v4243 = vpop.permute.xlu0 %4242
        %4244 = vrot.lane.b32.xlu0 %v971, 64
        %v4245 = vpop.permute.xlu0 %4244
        %4246 = vrot.lane.b32.xlu0 %v972, 64
        %v4247 = vpop.permute.xlu0 %4246
        %4248 = vrot.lane.b32.xlu0 %v973, 64
        %v4249 = vpop.permute.xlu0 %4248
        %4250 = vrot.lane.b32.xlu0 %v974, 64
        %v4251 = vpop.permute.xlu0 %4250
        %4252 = vrot.lane.b32.xlu0 %v975, 64
        %v4253 = vpop.permute.xlu0 %4252
        %4254 = vrot.lane.b32.xlu0 %v976, 64
        %v4255 = vpop.permute.xlu0 %4254
        %4256 = vrot.lane.b32.xlu0 %v977, 64
        %v4257 = vpop.permute.xlu0 %4256
        %4258 = vrot.lane.b32.xlu0 %v978, 64
        %v4259 = vpop.permute.xlu0 %4258
        %4260 = vrot.lane.b32.xlu0 %v979, 64
        %v4261 = vpop.permute.xlu0 %4260
        %4262 = vrot.lane.b32.xlu0 %v980, 64
        %v4263 = vpop.permute.xlu0 %4262
        %4264 = vrot.lane.b32.xlu0 %v981, 64
        %v4265 = vpop.permute.xlu0 %4264
        %4266 = vrot.lane.b32.xlu0 %v982, 64
        %v4267 = vpop.permute.xlu0 %4266
        %4268 = vrot.lane.b32.xlu0 %v983, 64
        %v4269 = vpop.permute.xlu0 %4268
        %4270 = vrot.lane.b32.xlu0 %v984, 64
        %v4271 = vpop.permute.xlu0 %4270
        %4272 = vrot.lane.b32.xlu0 %v985, 64
        %v4273 = vpop.permute.xlu0 %4272
        %4274 = vrot.lane.b32.xlu0 %v986, 64
        %v4275 = vpop.permute.xlu0 %4274
        %v4276 = vsel %vm1019, %v4181, 0
        %v4278 = vsel %vm1019, %v4183, 0
        %v4280 = vsel %vm1019, %v4185, 0
        %v4282 = vsel %vm1019, %v4187, 0
        %v4284 = vsel %vm1019, %v4189, 0
        %v4286 = vsel %vm1019, %v4191, 0
        %v4288 = vsel %vm1019, %v4193, 0
        %v4290 = vsel %vm1019, %v4195, 0
        %v4292 = vsel %vm1019, %v4197, 0
        %v4294 = vsel %vm1019, %v4199, 0
        %v4296 = vsel %vm1019, %v4201, 0
        %v4298 = vsel %vm1019, %v4203, 0
        %v4300 = vsel %vm1019, %v4205, 0
        %v4302 = vsel %vm1019, %v4207, 0
        %v4304 = vsel %vm1019, %v4209, 0
        %v4306 = vsel %vm1019, %v4211, 0
        %v4308 = vsel %vm1019, %v4213, 0
        %v4310 = vsel %vm1019, %v4215, 0
        %v4312 = vsel %vm1019, %v4217, 0
        %v4314 = vsel %vm1019, %v4219, 0
        %v4316 = vsel %vm1019, %v4221, 0
        %v4318 = vsel %vm1019, %v4223, 0
        %v4320 = vsel %vm1019, %v4225, 0
        %v4322 = vsel %vm1019, %v4227, 0
        %v4324 = vsel %vm1019, %v4229, 0
        %v4326 = vsel %vm1019, %v4231, 0
        %v4328 = vsel %vm1019, %v4233, 0
        %v4330 = vsel %vm1019, %v4235, 0
        %v4332 = vsel %vm1019, %v4237, 0
        %v4334 = vsel %vm1019, %v4239, 0
        %v4336 = vsel %vm1019, %v4241, 0
        %v4338 = vsel %vm1019, %v4243, 0
        %v4340 = vsel %vm1019, %v4245, 0
        %v4342 = vsel %vm1019, %v4247, 0
        %v4344 = vsel %vm1019, %v4249, 0
        %v4346 = vsel %vm1019, %v4251, 0
        %v4348 = vsel %vm1019, %v4253, 0
        %v4350 = vsel %vm1019, %v4255, 0
        %v4352 = vsel %vm1019, %v4257, 0
        %v4354 = vsel %vm1019, %v4259, 0
        %v4356 = vsel %vm1019, %v4261, 0
        %v4358 = vsel %vm1019, %v4263, 0
        %v4360 = vsel %vm1019, %v4265, 0
        %v4362 = vsel %vm1019, %v4267, 0
        %v4364 = vsel %vm1019, %v4269, 0
        %v4366 = vsel %vm1019, %v4271, 0
        %v4368 = vsel %vm1019, %v4273, 0
        %v4370 = vsel %vm1019, %v4275, 0
        %4372 = vmatprep.subr.mxu0 0.0
        %4373 = vmatpush1.xpose.msra.mxu0 %v4308
        %4374 = vmatprep.subr.mxu0 0.0
        %4375 = vmatpush1.xpose.msra.mxu0 %v4310
        %4376 = vmatprep.subr.mxu0 0.0
        %4377 = vmatpush1.xpose.msra.mxu0 %v4312
        %4378 = vmatprep.subr.mxu0 0.0
        %4379 = vmatpush1.xpose.msra.mxu0 %v4314
        %4380 = vmatprep.subr.mxu0 0.0
        %4381 = vmatpush1.xpose.msra.mxu0 %v4316
        %4382 = vmatprep.subr.mxu0 0.0
        %4383 = vmatpush1.xpose.msra.mxu0 %v4318
        %4384 = vmatprep.subr.mxu0 0.0
        %4385 = vmatpush1.xpose.msra.mxu0 %v4320
        %4386 = vmatprep.subr.mxu0 0.0
        %4387 = vmatpush1.xpose.msra.mxu0 %v4322
        %4388 = vmatprep.subr.mxu0 0.0
        %4389 = vmatpush1.xpose.msra.mxu0 %v4324
        %4390 = vmatprep.subr.mxu0 0.0
        %4391 = vmatpush1.xpose.msra.mxu0 %v4326
        %4392 = vmatprep.subr.mxu0 0.0
        %4393 = vmatpush1.xpose.msra.mxu0 %v4328
        %4394 = vmatprep.subr.mxu0 0.0
        %4395 = vmatpush1.xpose.msra.mxu0 %v4330
        %4396 = vmatprep.subr.mxu0 0.0
        %4397 = vmatpush1.xpose.msra.mxu0 %v4332
        %4398 = vmatprep.subr.mxu0 0.0
        %4399 = vmatpush1.xpose.msra.mxu0 %v4334
        %4400 = vmatprep.subr.mxu0 0.0
        %4401 = vmatpush1.xpose.msra.mxu0 %v4336
        %4402 = vmatprep.subr.mxu0 0.0
        %4403 = vmatpush1.xpose.msra.mxu0 %v4338
        %4404 = vmatprep.subr.mxu0 0.0
        %4405 = vmatpush1.xpose.msra.mxu0 %v4340
        %4406 = vmatprep.subr.mxu0 0.0
        %4407 = vmatpush1.xpose.msra.mxu0 %v4342
        %4408 = vmatprep.subr.mxu0 0.0
        %4409 = vmatpush1.xpose.msra.mxu0 %v4344
        %4410 = vmatprep.subr.mxu0 0.0
        %4411 = vmatpush1.xpose.msra.mxu0 %v4346
        %4412 = vmatprep.subr.mxu0 0.0
        %4413 = vmatpush1.xpose.msra.mxu0 %v4348
        %4414 = vmatprep.subr.mxu0 0.0
        %4415 = vmatpush1.xpose.msra.mxu0 %v4350
        %4416 = vmatprep.subr.mxu0 0.0
        %4417 = vmatpush1.xpose.msra.mxu0 %v4352
        %4418 = vmatprep.subr.mxu0 0.0
        %4419 = vmatpush1.xpose.msra.mxu0 %v4354
        %4420 = vmatprep.subr.mxu0 0.0
        %4421 = vmatpush1.xpose.msra.mxu0 %v4356
        %4422 = vmatprep.subr.mxu0 0.0
        %4423 = vmatpush1.xpose.msra.mxu0 %v4358
        %4424 = vmatprep.subr.mxu0 0.0
        %4425 = vmatpush1.xpose.msra.mxu0 %v4360
        %4426 = vmatprep.subr.mxu0 0.0
        %4427 = vmatpush1.xpose.msra.mxu0 %v4362
        %4428 = vmatprep.subr.mxu0 0.0
        %4429 = vmatpush1.xpose.msra.mxu0 %v4364
        %4430 = vmatprep.subr.mxu0 0.0
        %4431 = vmatpush1.xpose.msra.mxu0 %v4366
        %4432 = vmatprep.subr.mxu0 0.0
        %4433 = vmatpush1.xpose.msra.mxu0 %v4368
        %4434 = vmatprep.subr.mxu0 0.0
        %4435 = vmatpush1.xpose.msra.mxu0 %v4370
        %4436 = vmatprep.mubr.f32.mxu0 0.0
        %4437 = vmatmul.mubr.f32.gmra.mrb[0].mxu0 %v4276
        %v4438 = vpop.f32.mrb[0].mxu0
        %v4439 = vadd.f32 0.0, %v4438
        %v4440 = vpop.f32.mrb[0].mxu0
        %v4441 = vadd.f32 0.0, %v4440
        %4442 = vmatprep.mubr.f32.mxu0 0.0
        %4443 = vmatmul.mubr.f32.gmra.mrb[0].mxu0 %v4278
        %v4444 = vpop.f32.mrb[0].mxu0
        %v4445 = vadd.f32 0.0, %v4444
        %v4446 = vpop.f32.mrb[0].mxu0
        %v4447 = vadd.f32 0.0, %v4446
        %4448 = vmatprep.mubr.f32.mxu0 0.0
        %4449 = vmatmul.mubr.f32.gmra.mrb[0].mxu0 %v4280
        %v4450 = vpop.f32.mrb[0].mxu0
        %v4451 = vadd.f32 0.0, %v4450
        %v4452 = vpop.f32.mrb[0].mxu0
        %v4453 = vadd.f32 0.0, %v4452
        %4454 = vmatprep.mubr.f32.mxu0 0.0
        %4455 = vmatmul.mubr.f32.gmra.mrb[0].mxu0 %v4282
        %v4456 = vpop.f32.mrb[0].mxu0
        %v4457 = vadd.f32 0.0, %v4456
        %v4458 = vpop.f32.mrb[0].mxu0
        %v4459 = vadd.f32 0.0, %v4458
        %4460 = vmatprep.mubr.f32.mxu0 0.0
        %4461 = vmatmul.mubr.f32.gmra.mrb[0].mxu0 %v4284
        %v4462 = vpop.f32.mrb[0].mxu0
        %v4463 = vadd.f32 0.0, %v4462
        %v4464 = vpop.f32.mrb[0].mxu0
        %v4465 = vadd.f32 0.0, %v4464
        %4466 = vmatprep.mubr.f32.mxu0 0.0
        %4467 = vmatmul.mubr.f32.gmra.mrb[0].mxu0 %v4286
        %v4468 = vpop.f32.mrb[0].mxu0
        %v4469 = vadd.f32 0.0, %v4468
        %v4470 = vpop.f32.mrb[0].mxu0
        %v4471 = vadd.f32 0.0, %v4470
        %4472 = vmatprep.mubr.f32.mxu0 0.0
        %4473 = vmatmul.mubr.f32.gmra.mrb[0].mxu0 %v4288
        %v4474 = vpop.f32.mrb[0].mxu0
        %v4475 = vadd.f32 0.0, %v4474
        %v4476 = vpop.f32.mrb[0].mxu0
        %v4477 = vadd.f32 0.0, %v4476
        %4478 = vmatprep.mubr.f32.mxu0 0.0
        %4479 = vmatmul.mubr.f32.gmra.mrb[0].mxu0 %v4290
        %v4480 = vpop.f32.mrb[0].mxu0
        %v4481 = vadd.f32 0.0, %v4480
        %v4482 = vpop.f32.mrb[0].mxu0
        %v4483 = vadd.f32 0.0, %v4482
        %4484 = vmatprep.mubr.f32.mxu0 0.0
        %4485 = vmatmul.mubr.f32.gmra.mrb[0].mxu0 %v4292
        %v4486 = vpop.f32.mrb[0].mxu0
        %v4487 = vadd.f32 0.0, %v4486
        %v4488 = vpop.f32.mrb[0].mxu0
        %v4489 = vadd.f32 0.0, %v4488
        %4490 = vmatprep.mubr.f32.mxu0 0.0
        %4491 = vmatmul.mubr.f32.gmra.mrb[0].mxu0 %v4294
        %v4492 = vpop.f32.mrb[0].mxu0
        %v4493 = vadd.f32 0.0, %v4492
        %v4494 = vpop.f32.mrb[0].mxu0
        %v4495 = vadd.f32 0.0, %v4494
        %4496 = vmatprep.mubr.f32.mxu0 0.0
        %4497 = vmatmul.mubr.f32.gmra.mrb[0].mxu0 %v4296
        %v4498 = vpop.f32.mrb[0].mxu0
        %v4499 = vadd.f32 0.0, %v4498
        %v4500 = vpop.f32.mrb[0].mxu0
        %v4501 = vadd.f32 0.0, %v4500
        %4502 = vmatprep.mubr.f32.mxu0 0.0
        %4503 = vmatmul.mubr.f32.gmra.mrb[0].mxu0 %v4298
        %v4504 = vpop.f32.mrb[0].mxu0
        %v4505 = vadd.f32 0.0, %v4504
        %v4506 = vpop.f32.mrb[0].mxu0
        %v4507 = vadd.f32 0.0, %v4506
        %4508 = vmatprep.mubr.f32.mxu0 0.0
        %4509 = vmatmul.mubr.f32.gmra.mrb[0].mxu0 %v4300
        %v4510 = vpop.f32.mrb[0].mxu0
        %v4511 = vadd.f32 0.0, %v4510
        %v4512 = vpop.f32.mrb[0].mxu0
        %v4513 = vadd.f32 0.0, %v4512
        %4514 = vmatprep.mubr.f32.mxu0 0.0
        %4515 = vmatmul.mubr.f32.gmra.mrb[0].mxu0 %v4302
        %v4516 = vpop.f32.mrb[0].mxu0
        %v4517 = vadd.f32 0.0, %v4516
        %v4518 = vpop.f32.mrb[0].mxu0
        %v4519 = vadd.f32 0.0, %v4518
        %4520 = vmatprep.mubr.f32.mxu0 0.0
        %4521 = vmatmul.mubr.f32.gmra.mrb[0].mxu0 %v4304
        %v4522 = vpop.f32.mrb[0].mxu0
        %v4523 = vadd.f32 0.0, %v4522
        %v4524 = vpop.f32.mrb[0].mxu0
        %v4525 = vadd.f32 0.0, %v4524
        %4526 = vmatprep.mubr.f32.mxu0 0.0
        %4527 = vmatmul.mubr.f32.gmra.mrb[0].mxu0 %v4306
        %v4528 = vpop.f32.mrb[0].mxu0
        %v4529 = vadd.f32 0.0, %v4528
        %v4530 = vpop.f32.mrb[0].mxu0
        %v4531 = vadd.f32 0.0, %v4530
        %4532 = vdwg.mxu0
        %v4533 = vmax.f32 %v4439, %v4441
        %4534 = vmax.xlane.f32.xlu0 %v4533
        %v4535 = vpop.xlane.xlu0 %4534
        %v4536 = vmax.f32 %v4445, %v4447
        %4537 = vmax.xlane.f32.xlu0 %v4536
        %v4538 = vpop.xlane.xlu0 %4537
        %v4539 = vmax.f32 %v4451, %v4453
        %4540 = vmax.xlane.f32.xlu0 %v4539
        %v4541 = vpop.xlane.xlu0 %4540
        %v4542 = vmax.f32 %v4457, %v4459
        %4543 = vmax.xlane.f32.xlu0 %v4542
        %v4544 = vpop.xlane.xlu0 %4543
        %v4545 = vmax.f32 %v4463, %v4465
        %4546 = vmax.xlane.f32.xlu0 %v4545
        %v4547 = vpop.xlane.xlu0 %4546
        %v4548 = vmax.f32 %v4469, %v4471
        %4549 = vmax.xlane.f32.xlu0 %v4548
        %v4550 = vpop.xlane.xlu0 %4549
        %v4551 = vmax.f32 %v4475, %v4477
        %4552 = vmax.xlane.f32.xlu0 %v4551
        %v4553 = vpop.xlane.xlu0 %4552
        %v4554 = vmax.f32 %v4481, %v4483
        %4555 = vmax.xlane.f32.xlu0 %v4554
        %v4556 = vpop.xlane.xlu0 %4555
        %v4557 = vmax.f32 %v4487, %v4489
        %4558 = vmax.xlane.f32.xlu0 %v4557
        %v4559 = vpop.xlane.xlu0 %4558
        %v4560 = vmax.f32 %v4493, %v4495
        %4561 = vmax.xlane.f32.xlu0 %v4560
        %v4562 = vpop.xlane.xlu0 %4561
        %v4563 = vmax.f32 %v4499, %v4501
        %4564 = vmax.xlane.f32.xlu0 %v4563
        %v4565 = vpop.xlane.xlu0 %4564
        %v4566 = vmax.f32 %v4505, %v4507
        %4567 = vmax.xlane.f32.xlu0 %v4566
        %v4568 = vpop.xlane.xlu0 %4567
        %v4569 = vmax.f32 %v4511, %v4513
        %4570 = vmax.xlane.f32.xlu0 %v4569
        %v4571 = vpop.xlane.xlu0 %4570
        %v4572 = vmax.f32 %v4517, %v4519
        %4573 = vmax.xlane.f32.xlu0 %v4572
        %v4574 = vpop.xlane.xlu0 %4573
        %v4575 = vmax.f32 %v4523, %v4525
        %4576 = vmax.xlane.f32.xlu0 %v4575
        %v4577 = vpop.xlane.xlu0 %4576
        %v4578 = vmax.f32 %v4529, %v4531
        %4579 = vmax.xlane.f32.xlu0 %v4578
        %v4580 = vpop.xlane.xlu0 %4579
        %v4581 = vsub.f32 %v4439, %v4535
        %v4582 = vsub.f32 %v4441, %v4535
        %v4583 = vsub.f32 %v4445, %v4538
        %v4584 = vsub.f32 %v4447, %v4538
        %v4585 = vsub.f32 %v4451, %v4541
        %v4586 = vsub.f32 %v4453, %v4541
        %v4587 = vsub.f32 %v4457, %v4544
        %v4588 = vsub.f32 %v4459, %v4544
        %v4589 = vsub.f32 %v4463, %v4547
        %v4590 = vsub.f32 %v4465, %v4547
        %v4591 = vsub.f32 %v4469, %v4550
        %v4592 = vsub.f32 %v4471, %v4550
        %v4593 = vsub.f32 %v4475, %v4553
        %v4594 = vsub.f32 %v4477, %v4553
        %v4595 = vsub.f32 %v4481, %v4556
        %v4596 = vsub.f32 %v4483, %v4556
        %v4597 = vsub.f32 %v4487, %v4559
        %v4598 = vsub.f32 %v4489, %v4559
        %v4599 = vsub.f32 %v4493, %v4562
        %v4600 = vsub.f32 %v4495, %v4562
        %v4601 = vsub.f32 %v4499, %v4565
        %v4602 = vsub.f32 %v4501, %v4565
        %v4603 = vsub.f32 %v4505, %v4568
        %v4604 = vsub.f32 %v4507, %v4568
        %v4605 = vsub.f32 %v4511, %v4571
        %v4606 = vsub.f32 %v4513, %v4571
        %v4607 = vsub.f32 %v4517, %v4574
        %v4608 = vsub.f32 %v4519, %v4574
        %v4609 = vsub.f32 %v4523, %v4577
        %v4610 = vsub.f32 %v4525, %v4577
        %v4611 = vsub.f32 %v4529, %v4580
        %v4612 = vsub.f32 %v4531, %v4580
        %v4613 = vmul.f32 %v4581, 1.442695
        %v4614 = vpow.pop %v4613
        %v4615 = vmul.f32 %v4582, 1.442695
        %v4616 = vpow.pop %v4615
        %v4617 = vmul.f32 %v4583, 1.442695
        %v4618 = vpow.pop %v4617
        %v4619 = vmul.f32 %v4584, 1.442695
        %v4620 = vpow.pop %v4619
        %v4621 = vmul.f32 %v4585, 1.442695
        %v4622 = vpow.pop %v4621
        %v4623 = vmul.f32 %v4586, 1.442695
        %v4624 = vpow.pop %v4623
        %v4625 = vmul.f32 %v4587, 1.442695
        %v4626 = vpow.pop %v4625
        %v4627 = vmul.f32 %v4588, 1.442695
        %v4628 = vpow.pop %v4627
        %v4629 = vmul.f32 %v4589, 1.442695
        %v4630 = vpow.pop %v4629
        %v4631 = vmul.f32 %v4590, 1.442695
        %v4632 = vpow.pop %v4631
        %v4633 = vmul.f32 %v4591, 1.442695
        %v4634 = vpow.pop %v4633
        %v4635 = vmul.f32 %v4592, 1.442695
        %v4636 = vpow.pop %v4635
        %v4637 = vmul.f32 %v4593, 1.442695
        %v4638 = vpow.pop %v4637
        %v4639 = vmul.f32 %v4594, 1.442695
        %v4640 = vpow.pop %v4639
        %v4641 = vmul.f32 %v4595, 1.442695
        %v4642 = vpow.pop %v4641
        %v4643 = vmul.f32 %v4596, 1.442695
        %v4644 = vpow.pop %v4643
        %v4645 = vmul.f32 %v4597, 1.442695
        %v4646 = vpow.pop %v4645
        %v4647 = vmul.f32 %v4598, 1.442695
        %v4648 = vpow.pop %v4647
        %v4649 = vmul.f32 %v4599, 1.442695
        %v4650 = vpow.pop %v4649
        %v4651 = vmul.f32 %v4600, 1.442695
        %v4652 = vpow.pop %v4651
        %v4653 = vmul.f32 %v4601, 1.442695
        %v4654 = vpow.pop %v4653
        %v4655 = vmul.f32 %v4602, 1.442695
        %v4656 = vpow.pop %v4655
        %v4657 = vmul.f32 %v4603, 1.442695
        %v4658 = vpow.pop %v4657
        %v4659 = vmul.f32 %v4604, 1.442695
        %v4660 = vpow.pop %v4659
        %v4661 = vmul.f32 %v4605, 1.442695
        %v4662 = vpow.pop %v4661
        %v4663 = vmul.f32 %v4606, 1.442695
        %v4664 = vpow.pop %v4663
        %v4665 = vmul.f32 %v4607, 1.442695
        %v4666 = vpow.pop %v4665
        %v4667 = vmul.f32 %v4608, 1.442695
        %v4668 = vpow.pop %v4667
        %v4669 = vmul.f32 %v4609, 1.442695
        %v4670 = vpow.pop %v4669
        %v4671 = vmul.f32 %v4610, 1.442695
        %v4672 = vpow.pop %v4671
        %v4673 = vmul.f32 %v4611, 1.442695
        %v4674 = vpow.pop %v4673
        %v4675 = vmul.f32 %v4612, 1.442695
        %v4676 = vpow.pop %v4675
        %v4677 = vadd.f32 %v4614, %v4616
        %4678 = vadd.xlane.f32.xlu0 %v4677
        %v4679 = vpop.xlane.xlu0 %4678
        %v4680 = vadd.f32 %v4618, %v4620
        %4681 = vadd.xlane.f32.xlu0 %v4680
        %v4682 = vpop.xlane.xlu0 %4681
        %v4683 = vadd.f32 %v4622, %v4624
        %4684 = vadd.xlane.f32.xlu0 %v4683
        %v4685 = vpop.xlane.xlu0 %4684
        %v4686 = vadd.f32 %v4626, %v4628
        %4687 = vadd.xlane.f32.xlu0 %v4686
        %v4688 = vpop.xlane.xlu0 %4687
        %v4689 = vadd.f32 %v4630, %v4632
        %4690 = vadd.xlane.f32.xlu0 %v4689
        %v4691 = vpop.xlane.xlu0 %4690
        %v4692 = vadd.f32 %v4634, %v4636
        %4693 = vadd.xlane.f32.xlu0 %v4692
        %v4694 = vpop.xlane.xlu0 %4693
        %v4695 = vadd.f32 %v4638, %v4640
        %4696 = vadd.xlane.f32.xlu0 %v4695
        %v4697 = vpop.xlane.xlu0 %4696
        %v4698 = vadd.f32 %v4642, %v4644
        %4699 = vadd.xlane.f32.xlu0 %v4698
        %v4700 = vpop.xlane.xlu0 %4699
        %v4701 = vadd.f32 %v4646, %v4648
        %4702 = vadd.xlane.f32.xlu0 %v4701
        %v4703 = vpop.xlane.xlu0 %4702
        %v4704 = vadd.f32 %v4650, %v4652
        %4705 = vadd.xlane.f32.xlu0 %v4704
        %v4706 = vpop.xlane.xlu0 %4705
        %v4707 = vadd.f32 %v4654, %v4656
        %4708 = vadd.xlane.f32.xlu0 %v4707
        %v4709 = vpop.xlane.xlu0 %4708
        %v4710 = vadd.f32 %v4658, %v4660
        %4711 = vadd.xlane.f32.xlu0 %v4710
        %v4712 = vpop.xlane.xlu0 %4711
        %v4713 = vadd.f32 %v4662, %v4664
        %4714 = vadd.xlane.f32.xlu0 %v4713
        %v4715 = vpop.xlane.xlu0 %4714
        %v4716 = vadd.f32 %v4666, %v4668
        %4717 = vadd.xlane.f32.xlu0 %v4716
        %v4718 = vpop.xlane.xlu0 %4717
        %v4719 = vadd.f32 %v4670, %v4672
        %4720 = vadd.xlane.f32.xlu0 %v4719
        %v4721 = vpop.xlane.xlu0 %4720
        %v4722 = vadd.f32 %v4674, %v4676
        %4723 = vadd.xlane.f32.xlu0 %v4722
        %v4724 = vpop.xlane.xlu0 %4723
        %4725 = vrot.lane.b32.xlu0 %v987, 64
        %v4726 = vpop.permute.xlu0 %4725
        %4727 = vrot.lane.b32.xlu0 %v988, 64
        %v4728 = vpop.permute.xlu0 %4727
        %4729 = vrot.lane.b32.xlu0 %v989, 64
        %v4730 = vpop.permute.xlu0 %4729
        %4731 = vrot.lane.b32.xlu0 %v990, 64
        %v4732 = vpop.permute.xlu0 %4731
        %4733 = vrot.lane.b32.xlu0 %v991, 64
        %v4734 = vpop.permute.xlu0 %4733
        %4735 = vrot.lane.b32.xlu0 %v992, 64
        %v4736 = vpop.permute.xlu0 %4735
        %4737 = vrot.lane.b32.xlu0 %v993, 64
        %v4738 = vpop.permute.xlu0 %4737
        %4739 = vrot.lane.b32.xlu0 %v994, 64
        %v4740 = vpop.permute.xlu0 %4739
        %4741 = vrot.lane.b32.xlu0 %v995, 64
        %v4742 = vpop.permute.xlu0 %4741
        %4743 = vrot.lane.b32.xlu0 %v996, 64
        %v4744 = vpop.permute.xlu0 %4743
        %4745 = vrot.lane.b32.xlu0 %v997, 64
        %v4746 = vpop.permute.xlu0 %4745
        %4747 = vrot.lane.b32.xlu0 %v998, 64
        %v4748 = vpop.permute.xlu0 %4747
        %4749 = vrot.lane.b32.xlu0 %v999, 64
        %v4750 = vpop.permute.xlu0 %4749
        %4751 = vrot.lane.b32.xlu0 %v1000, 64
        %v4752 = vpop.permute.xlu0 %4751
        %4753 = vrot.lane.b32.xlu0 %v1001, 64
        %v4754 = vpop.permute.xlu0 %4753
        %4755 = vrot.lane.b32.xlu0 %v1002, 64
        %v4756 = vpop.permute.xlu0 %4755
        %4757 = vrot.lane.b32.xlu0 %v1003, 64
        %v4758 = vpop.permute.xlu0 %4757
        %4759 = vrot.lane.b32.xlu0 %v1004, 64
        %v4760 = vpop.permute.xlu0 %4759
        %4761 = vrot.lane.b32.xlu0 %v1005, 64
        %v4762 = vpop.permute.xlu0 %4761
        %4763 = vrot.lane.b32.xlu0 %v1006, 64
        %v4764 = vpop.permute.xlu0 %4763
        %4765 = vrot.lane.b32.xlu0 %v1007, 64
        %v4766 = vpop.permute.xlu0 %4765
        %4767 = vrot.lane.b32.xlu0 %v1008, 64
        %v4768 = vpop.permute.xlu0 %4767
        %4769 = vrot.lane.b32.xlu0 %v1009, 64
        %v4770 = vpop.permute.xlu0 %4769
        %4771 = vrot.lane.b32.xlu0 %v1010, 64
        %v4772 = vpop.permute.xlu0 %4771
        %4773 = vrot.lane.b32.xlu0 %v1011, 64
        %v4774 = vpop.permute.xlu0 %4773
        %4775 = vrot.lane.b32.xlu0 %v1012, 64
        %v4776 = vpop.permute.xlu0 %4775
        %4777 = vrot.lane.b32.xlu0 %v1013, 64
        %v4778 = vpop.permute.xlu0 %4777
        %4779 = vrot.lane.b32.xlu0 %v1014, 64
        %v4780 = vpop.permute.xlu0 %4779
        %4781 = vrot.lane.b32.xlu0 %v1015, 64
        %v4782 = vpop.permute.xlu0 %4781
        %4783 = vrot.lane.b32.xlu0 %v1016, 64
        %v4784 = vpop.permute.xlu0 %4783
        %4785 = vrot.lane.b32.xlu0 %v1017, 64
        %v4786 = vpop.permute.xlu0 %4785
        %4787 = vrot.lane.b32.xlu0 %v1018, 64
        %v4788 = vpop.permute.xlu0 %4787
        %4821 = vmatprep.subr.mxu0 0.0
        %4822 = vmatpush1.msra.mxu0 %v4726
        %4823 = vmatprep.subr.mxu0 0.0
        %4824 = vmatpush1.msra.mxu0 %v4728
        %4825 = vmatprep.subr.mxu0 0.0
        %4826 = vmatpush1.msra.mxu0 %v4730
        %4827 = vmatprep.subr.mxu0 0.0
        %4828 = vmatpush1.msra.mxu0 %v4732
        %4829 = vmatprep.subr.mxu0 0.0
        %4830 = vmatpush1.msra.mxu0 %v4734
        %4831 = vmatprep.subr.mxu0 0.0
        %4832 = vmatpush1.msra.mxu0 %v4736
        %4833 = vmatprep.subr.mxu0 0.0
        %4834 = vmatpush1.msra.mxu0 %v4738
        %4835 = vmatprep.subr.mxu0 0.0
        %4836 = vmatpush1.msra.mxu0 %v4740
        %4837 = vmatprep.subr.mxu0 0.0
        %4838 = vmatpush1.msra.mxu0 %v4742
        %4839 = vmatprep.subr.mxu0 0.0
        %4840 = vmatpush1.msra.mxu0 %v4744
        %4841 = vmatprep.subr.mxu0 0.0
        %4842 = vmatpush1.msra.mxu0 %v4746
        %4843 = vmatprep.subr.mxu0 0.0
        %4844 = vmatpush1.msra.mxu0 %v4748
        %4845 = vmatprep.subr.mxu0 0.0
        %4846 = vmatpush1.msra.mxu0 %v4750
        %4847 = vmatprep.subr.mxu0 0.0
        %4848 = vmatpush1.msra.mxu0 %v4752
        %4849 = vmatprep.subr.mxu0 0.0
        %4850 = vmatpush1.msra.mxu0 %v4754
        %4851 = vmatprep.subr.mxu0 0.0
        %4852 = vmatpush1.msra.mxu0 %v4756
        %4853 = vmatprep.subr.mxu0 0.0
        %4854 = vmatpush1.msra.mxu0 %v4758
        %4855 = vmatprep.subr.mxu0 0.0
        %4856 = vmatpush1.msra.mxu0 %v4760
        %4857 = vmatprep.subr.mxu0 0.0
        %4858 = vmatpush1.msra.mxu0 %v4762
        %4859 = vmatprep.subr.mxu0 0.0
        %4860 = vmatpush1.msra.mxu0 %v4764
        %4861 = vmatprep.subr.mxu0 0.0
        %4862 = vmatpush1.msra.mxu0 %v4766
        %4863 = vmatprep.subr.mxu0 0.0
        %4864 = vmatpush1.msra.mxu0 %v4768
        %4865 = vmatprep.subr.mxu0 0.0
        %4866 = vmatpush1.msra.mxu0 %v4770
        %4867 = vmatprep.subr.mxu0 0.0
        %4868 = vmatpush1.msra.mxu0 %v4772
        %4869 = vmatprep.subr.mxu0 0.0
        %4870 = vmatpush1.msra.mxu0 %v4774
        %4871 = vmatprep.subr.mxu0 0.0
        %4872 = vmatpush1.msra.mxu0 %v4776
        %4873 = vmatprep.subr.mxu0 0.0
        %4874 = vmatpush1.msra.mxu0 %v4778
        %4875 = vmatprep.subr.mxu0 0.0
        %4876 = vmatpush1.msra.mxu0 %v4780
        %4877 = vmatprep.subr.mxu0 0.0
        %4878 = vmatpush1.msra.mxu0 %v4782
        %4879 = vmatprep.subr.mxu0 0.0
        %4880 = vmatpush1.msra.mxu0 %v4784
        %4881 = vmatprep.subr.mxu0 0.0
        %4882 = vmatpush1.msra.mxu0 %v4786
        %4883 = vmatprep.subr.mxu0 0.0
        %4884 = vmatpush1.msra.mxu0 %v4788
        %4885 = vmatprep.mubr.f32.mxu0 %v4616
        %4886 = vmatmul.mubr.f32.gmra.mrb[0].mxu0 %v4614
        %v4887 = vpop.f32.mrb[0].mxu0
        %v4888 = vadd.f32 0.0, %v4887
        %v4889 = vpop.f32.mrb[0].mxu0
        %4890 = vmatprep.mubr.f32.mxu0 %v4620
        %4891 = vmatmul.mubr.f32.gmra.mrb[0].mxu0 %v4618
        %v4892 = vpop.f32.mrb[0].mxu0
        %v4893 = vadd.f32 0.0, %v4892
        %v4894 = vpop.f32.mrb[0].mxu0
        %4895 = vmatprep.mubr.f32.mxu0 %v4624
        %4896 = vmatmul.mubr.f32.gmra.mrb[0].mxu0 %v4622
        %v4897 = vpop.f32.mrb[0].mxu0
        %v4898 = vadd.f32 0.0, %v4897
        %v4899 = vpop.f32.mrb[0].mxu0
        %4900 = vmatprep.mubr.f32.mxu0 %v4628
        %4901 = vmatmul.mubr.f32.gmra.mrb[0].mxu0 %v4626
        %v4902 = vpop.f32.mrb[0].mxu0
        %v4903 = vadd.f32 0.0, %v4902
        %v4904 = vpop.f32.mrb[0].mxu0
        %4905 = vmatprep.mubr.f32.mxu0 %v4632
        %4906 = vmatmul.mubr.f32.gmra.mrb[0].mxu0 %v4630
        %v4907 = vpop.f32.mrb[0].mxu0
        %v4908 = vadd.f32 0.0, %v4907
        %v4909 = vpop.f32.mrb[0].mxu0
        %4910 = vmatprep.mubr.f32.mxu0 %v4636
        %4911 = vmatmul.mubr.f32.gmra.mrb[0].mxu0 %v4634
        %v4912 = vpop.f32.mrb[0].mxu0
        %v4913 = vadd.f32 0.0, %v4912
        %v4914 = vpop.f32.mrb[0].mxu0
        %4915 = vmatprep.mubr.f32.mxu0 %v4640
        %4916 = vmatmul.mubr.f32.gmra.mrb[0].mxu0 %v4638
        %v4917 = vpop.f32.mrb[0].mxu0
        %v4918 = vadd.f32 0.0, %v4917
        %v4919 = vpop.f32.mrb[0].mxu0
        %4920 = vmatprep.mubr.f32.mxu0 %v4644
        %4921 = vmatmul.mubr.f32.gmra.mrb[0].mxu0 %v4642
        %v4922 = vpop.f32.mrb[0].mxu0
        %v4923 = vadd.f32 0.0, %v4922
        %v4924 = vpop.f32.mrb[0].mxu0
        %4925 = vmatprep.mubr.f32.mxu0 %v4648
        %4926 = vmatmul.mubr.f32.gmra.mrb[0].mxu0 %v4646
        %v4927 = vpop.f32.mrb[0].mxu0
        %v4928 = vadd.f32 0.0, %v4927
        %v4929 = vpop.f32.mrb[0].mxu0
        %4930 = vmatprep.mubr.f32.mxu0 %v4652
        %4931 = vmatmul.mubr.f32.gmra.mrb[0].mxu0 %v4650
        %v4932 = vpop.f32.mrb[0].mxu0
        %v4933 = vadd.f32 0.0, %v4932
        %v4934 = vpop.f32.mrb[0].mxu0
        %4935 = vmatprep.mubr.f32.mxu0 %v4656
        %4936 = vmatmul.mubr.f32.gmra.mrb[0].mxu0 %v4654
        %v4937 = vpop.f32.mrb[0].mxu0
        %v4938 = vadd.f32 0.0, %v4937
        %v4939 = vpop.f32.mrb[0].mxu0
        %4940 = vmatprep.mubr.f32.mxu0 %v4660
        %4941 = vmatmul.mubr.f32.gmra.mrb[0].mxu0 %v4658
        %v4942 = vpop.f32.mrb[0].mxu0
        %v4943 = vadd.f32 0.0, %v4942
        %v4944 = vpop.f32.mrb[0].mxu0
        %4945 = vmatprep.mubr.f32.mxu0 %v4664
        %4946 = vmatmul.mubr.f32.gmra.mrb[0].mxu0 %v4662
        %v4947 = vpop.f32.mrb[0].mxu0
        %v4948 = vadd.f32 0.0, %v4947
        %v4949 = vpop.f32.mrb[0].mxu0
        %4950 = vmatprep.mubr.f32.mxu0 %v4668
        %4951 = vmatmul.mubr.f32.gmra.mrb[0].mxu0 %v4666
        %v4952 = vpop.f32.mrb[0].mxu0
        %v4953 = vadd.f32 0.0, %v4952
        %v4954 = vpop.f32.mrb[0].mxu0
        %4955 = vmatprep.mubr.f32.mxu0 %v4672
        %4956 = vmatmul.mubr.f32.gmra.mrb[0].mxu0 %v4670
        %v4957 = vpop.f32.mrb[0].mxu0
        %v4958 = vadd.f32 0.0, %v4957
        %v4959 = vpop.f32.mrb[0].mxu0
        %4960 = vmatprep.mubr.f32.mxu0 %v4676
        %4961 = vmatmul.mubr.f32.gmra.mrb[0].mxu0 %v4674
        %v4962 = vpop.f32.mrb[0].mxu0
        %v4963 = vadd.f32 0.0, %v4962
        %v4964 = vpop.f32.mrb[0].mxu0
        %4965 = vdwg.mxu0
        %v4966 = vrcp.pop %v4679
        %v4967 = vrcp.pop %v4682
        %v4968 = vrcp.pop %v4685
        %v4969 = vrcp.pop %v4688
        %v4970 = vrcp.pop %v4691
        %v4971 = vrcp.pop %v4694
        %v4972 = vrcp.pop %v4697
        %v4973 = vrcp.pop %v4700
        %v4974 = vrcp.pop %v4703
        %v4975 = vrcp.pop %v4706
        %v4976 = vrcp.pop %v4709
        %v4977 = vrcp.pop %v4712
        %v4978 = vrcp.pop %v4715
        %v4979 = vrcp.pop %v4718
        %v4980 = vrcp.pop %v4721
        %v4981 = vrcp.pop %v4724
        %v4982 = vmul.f32 %v4888, %v4966
        %v4983 = vmul.f32 %v4893, %v4967
        %v4984 = vmul.f32 %v4898, %v4968
        %v4985 = vmul.f32 %v4903, %v4969
        %v4986 = vmul.f32 %v4908, %v4970
        %v4987 = vmul.f32 %v4913, %v4971
        %v4988 = vmul.f32 %v4918, %v4972
        %v4989 = vmul.f32 %v4923, %v4973
        %v4990 = vmul.f32 %v4928, %v4974
        %v4991 = vmul.f32 %v4933, %v4975
        %v4992 = vmul.f32 %v4938, %v4976
        %v4993 = vmul.f32 %v4943, %v4977
        %v4994 = vmul.f32 %v4948, %v4978
        %v4995 = vmul.f32 %v4953, %v4979
        %v4996 = vmul.f32 %v4958, %v4980
        %v4997 = vmul.f32 %v4963, %v4981
        %4998 = vrot.lane.b32.xlu0 %v939, 48
        %v4999 = vpop.permute.xlu0 %4998
        %5000 = vrot.lane.b32.xlu0 %v940, 48
        %v5001 = vpop.permute.xlu0 %5000
        %5002 = vrot.lane.b32.xlu0 %v941, 48
        %v5003 = vpop.permute.xlu0 %5002
        %5004 = vrot.lane.b32.xlu0 %v942, 48
        %v5005 = vpop.permute.xlu0 %5004
        %5006 = vrot.lane.b32.xlu0 %v943, 48
        %v5007 = vpop.permute.xlu0 %5006
        %5008 = vrot.lane.b32.xlu0 %v944, 48
        %v5009 = vpop.permute.xlu0 %5008
        %5010 = vrot.lane.b32.xlu0 %v945, 48
        %v5011 = vpop.permute.xlu0 %5010
        %5012 = vrot.lane.b32.xlu0 %v946, 48
        %v5013 = vpop.permute.xlu0 %5012
        %5014 = vrot.lane.b32.xlu0 %v947, 48
        %v5015 = vpop.permute.xlu0 %5014
        %5016 = vrot.lane.b32.xlu0 %v948, 48
        %v5017 = vpop.permute.xlu0 %5016
        %5018 = vrot.lane.b32.xlu0 %v949, 48
        %v5019 = vpop.permute.xlu0 %5018
        %5020 = vrot.lane.b32.xlu0 %v950, 48
        %v5021 = vpop.permute.xlu0 %5020
        %5022 = vrot.lane.b32.xlu0 %v951, 48
        %v5023 = vpop.permute.xlu0 %5022
        %5024 = vrot.lane.b32.xlu0 %v952, 48
        %v5025 = vpop.permute.xlu0 %5024
        %5026 = vrot.lane.b32.xlu0 %v953, 48
        %v5027 = vpop.permute.xlu0 %5026
        %5028 = vrot.lane.b32.xlu0 %v954, 48
        %v5029 = vpop.permute.xlu0 %5028
        %5030 = vrot.lane.b32.xlu0 %v955, 48
        %v5031 = vpop.permute.xlu0 %5030
        %5032 = vrot.lane.b32.xlu0 %v956, 48
        %v5033 = vpop.permute.xlu0 %5032
        %5034 = vrot.lane.b32.xlu0 %v957, 48
        %v5035 = vpop.permute.xlu0 %5034
        %5036 = vrot.lane.b32.xlu0 %v958, 48
        %v5037 = vpop.permute.xlu0 %5036
        %5038 = vrot.lane.b32.xlu0 %v959, 48
        %v5039 = vpop.permute.xlu0 %5038
        %5040 = vrot.lane.b32.xlu0 %v960, 48
        %v5041 = vpop.permute.xlu0 %5040
        %5042 = vrot.lane.b32.xlu0 %v961, 48
        %v5043 = vpop.permute.xlu0 %5042
        %5044 = vrot.lane.b32.xlu0 %v962, 48
        %v5045 = vpop.permute.xlu0 %5044
        %5046 = vrot.lane.b32.xlu0 %v963, 48
        %v5047 = vpop.permute.xlu0 %5046
        %5048 = vrot.lane.b32.xlu0 %v964, 48
        %v5049 = vpop.permute.xlu0 %5048
        %5050 = vrot.lane.b32.xlu0 %v965, 48
        %v5051 = vpop.permute.xlu0 %5050
        %5052 = vrot.lane.b32.xlu0 %v966, 48
        %v5053 = vpop.permute.xlu0 %5052
        %5054 = vrot.lane.b32.xlu0 %v967, 48
        %v5055 = vpop.permute.xlu0 %5054
        %5056 = vrot.lane.b32.xlu0 %v968, 48
        %v5057 = vpop.permute.xlu0 %5056
        %5058 = vrot.lane.b32.xlu0 %v969, 48
        %v5059 = vpop.permute.xlu0 %5058
        %5060 = vrot.lane.b32.xlu0 %v970, 48
        %v5061 = vpop.permute.xlu0 %5060
        %5062 = vrot.lane.b32.xlu0 %v971, 48
        %v5063 = vpop.permute.xlu0 %5062
        %5064 = vrot.lane.b32.xlu0 %v972, 48
        %v5065 = vpop.permute.xlu0 %5064
        %5066 = vrot.lane.b32.xlu0 %v973, 48
        %v5067 = vpop.permute.xlu0 %5066
        %5068 = vrot.lane.b32.xlu0 %v974, 48
        %v5069 = vpop.permute.xlu0 %5068
        %5070 = vrot.lane.b32.xlu0 %v975, 48
        %v5071 = vpop.permute.xlu0 %5070
        %5072 = vrot.lane.b32.xlu0 %v976, 48
        %v5073 = vpop.permute.xlu0 %5072
        %5074 = vrot.lane.b32.xlu0 %v977, 48
        %v5075 = vpop.permute.xlu0 %5074
        %5076 = vrot.lane.b32.xlu0 %v978, 48
        %v5077 = vpop.permute.xlu0 %5076
        %5078 = vrot.lane.b32.xlu0 %v979, 48
        %v5079 = vpop.permute.xlu0 %5078
        %5080 = vrot.lane.b32.xlu0 %v980, 48
        %v5081 = vpop.permute.xlu0 %5080
        %5082 = vrot.lane.b32.xlu0 %v981, 48
        %v5083 = vpop.permute.xlu0 %5082
        %5084 = vrot.lane.b32.xlu0 %v982, 48
        %v5085 = vpop.permute.xlu0 %5084
        %5086 = vrot.lane.b32.xlu0 %v983, 48
        %v5087 = vpop.permute.xlu0 %5086
        %5088 = vrot.lane.b32.xlu0 %v984, 48
        %v5089 = vpop.permute.xlu0 %5088
        %5090 = vrot.lane.b32.xlu0 %v985, 48
        %v5091 = vpop.permute.xlu0 %5090
        %5092 = vrot.lane.b32.xlu0 %v986, 48
        %v5093 = vpop.permute.xlu0 %5092
        %v5094 = vsel %vm1019, %v4999, 0
        %v5096 = vsel %vm1019, %v5001, 0
        %v5098 = vsel %vm1019, %v5003, 0
        %v5100 = vsel %vm1019, %v5005, 0
        %v5102 = vsel %vm1019, %v5007, 0
        %v5104 = vsel %vm1019, %v5009, 0
        %v5106 = vsel %vm1019, %v5011, 0
        %v5108 = vsel %vm1019, %v5013, 0
        %v5110 = vsel %vm1019, %v5015, 0
        %v5112 = vsel %vm1019, %v5017, 0
        %v5114 = vsel %vm1019, %v5019, 0
        %v5116 = vsel %vm1019, %v5021, 0
        %v5118 = vsel %vm1019, %v5023, 0
        %v5120 = vsel %vm1019, %v5025, 0
        %v5122 = vsel %vm1019, %v5027, 0
        %v5124 = vsel %vm1019, %v5029, 0
        %v5126 = vsel %vm1019, %v5031, 0
        %v5128 = vsel %vm1019, %v5033, 0
        %v5130 = vsel %vm1019, %v5035, 0
        %v5132 = vsel %vm1019, %v5037, 0
        %v5134 = vsel %vm1019, %v5039, 0
        %v5136 = vsel %vm1019, %v5041, 0
        %v5138 = vsel %vm1019, %v5043, 0
        %v5140 = vsel %vm1019, %v5045, 0
        %v5142 = vsel %vm1019, %v5047, 0
        %v5144 = vsel %vm1019, %v5049, 0
        %v5146 = vsel %vm1019, %v5051, 0
        %v5148 = vsel %vm1019, %v5053, 0
        %v5150 = vsel %vm1019, %v5055, 0
        %v5152 = vsel %vm1019, %v5057, 0
        %v5154 = vsel %vm1019, %v5059, 0
        %v5156 = vsel %vm1019, %v5061, 0
        %v5158 = vsel %vm1019, %v5063, 0
        %v5160 = vsel %vm1019, %v5065, 0
        %v5162 = vsel %vm1019, %v5067, 0
        %v5164 = vsel %vm1019, %v5069, 0
        %v5166 = vsel %vm1019, %v5071, 0
        %v5168 = vsel %vm1019, %v5073, 0
        %v5170 = vsel %vm1019, %v5075, 0
        %v5172 = vsel %vm1019, %v5077, 0
        %v5174 = vsel %vm1019, %v5079, 0
        %v5176 = vsel %vm1019, %v5081, 0
        %v5178 = vsel %vm1019, %v5083, 0
        %v5180 = vsel %vm1019, %v5085, 0
        %v5182 = vsel %vm1019, %v5087, 0
        %v5184 = vsel %vm1019, %v5089, 0
        %v5186 = vsel %vm1019, %v5091, 0
        %v5188 = vsel %vm1019, %v5093, 0
        %5190 = vmatprep.subr.mxu0 0.0
        %5191 = vmatpush1.xpose.msra.mxu0 %v5126
        %5192 = vmatprep.subr.mxu0 0.0
        %5193 = vmatpush1.xpose.msra.mxu0 %v5128
        %5194 = vmatprep.subr.mxu0 0.0
        %5195 = vmatpush1.xpose.msra.mxu0 %v5130
        %5196 = vmatprep.subr.mxu0 0.0
        %5197 = vmatpush1.xpose.msra.mxu0 %v5132
        %5198 = vmatprep.subr.mxu0 0.0
        %5199 = vmatpush1.xpose.msra.mxu0 %v5134
        %5200 = vmatprep.subr.mxu0 0.0
        %5201 = vmatpush1.xpose.msra.mxu0 %v5136
        %5202 = vmatprep.subr.mxu0 0.0
        %5203 = vmatpush1.xpose.msra.mxu0 %v5138
        %5204 = vmatprep.subr.mxu0 0.0
        %5205 = vmatpush1.xpose.msra.mxu0 %v5140
        %5206 = vmatprep.subr.mxu0 0.0
        %5207 = vmatpush1.xpose.msra.mxu0 %v5142
        %5208 = vmatprep.subr.mxu0 0.0
        %5209 = vmatpush1.xpose.msra.mxu0 %v5144
        %5210 = vmatprep.subr.mxu0 0.0
        %5211 = vmatpush1.xpose.msra.mxu0 %v5146
        %5212 = vmatprep.subr.mxu0 0.0
        %5213 = vmatpush1.xpose.msra.mxu0 %v5148
        %5214 = vmatprep.subr.mxu0 0.0
        %5215 = vmatpush1.xpose.msra.mxu0 %v5150
        %5216 = vmatprep.subr.mxu0 0.0
        %5217 = vmatpush1.xpose.msra.mxu0 %v5152
        %5218 = vmatprep.subr.mxu0 0.0
        %5219 = vmatpush1.xpose.msra.mxu0 %v5154
        %5220 = vmatprep.subr.mxu0 0.0
        %5221 = vmatpush1.xpose.msra.mxu0 %v5156
        %5222 = vmatprep.subr.mxu0 0.0
        %5223 = vmatpush1.xpose.msra.mxu0 %v5158
        %5224 = vmatprep.subr.mxu0 0.0
        %5225 = vmatpush1.xpose.msra.mxu0 %v5160
        %5226 = vmatprep.subr.mxu0 0.0
        %5227 = vmatpush1.xpose.msra.mxu0 %v5162
        %5228 = vmatprep.subr.mxu0 0.0
        %5229 = vmatpush1.xpose.msra.mxu0 %v5164
        %5230 = vmatprep.subr.mxu0 0.0
        %5231 = vmatpush1.xpose.msra.mxu0 %v5166
        %5232 = vmatprep.subr.mxu0 0.0
        %5233 = vmatpush1.xpose.msra.mxu0 %v5168
        %5234 = vmatprep.subr.mxu0 0.0
        %5235 = vmatpush1.xpose.msra.mxu0 %v5170
        %5236 = vmatprep.subr.mxu0 0.0
        %5237 = vmatpush1.xpose.msra.mxu0 %v5172
        %5238 = vmatprep.subr.mxu0 0.0
        %5239 = vmatpush1.xpose.msra.mxu0 %v5174
        %5240 = vmatprep.subr.mxu0 0.0
        %5241 = vmatpush1.xpose.msra.mxu0 %v5176
        %5242 = vmatprep.subr.mxu0 0.0
        %5243 = vmatpush1.xpose.msra.mxu0 %v5178
        %5244 = vmatprep.subr.mxu0 0.0
        %5245 = vmatpush1.xpose.msra.mxu0 %v5180
        %5246 = vmatprep.subr.mxu0 0.0
        %5247 = vmatpush1.xpose.msra.mxu0 %v5182
        %5248 = vmatprep.subr.mxu0 0.0
        %5249 = vmatpush1.xpose.msra.mxu0 %v5184
        %5250 = vmatprep.subr.mxu0 0.0
        %5251 = vmatpush1.xpose.msra.mxu0 %v5186
        %5252 = vmatprep.subr.mxu0 0.0
        %5253 = vmatpush1.xpose.msra.mxu0 %v5188
        %5254 = vmatprep.mubr.f32.mxu0 0.0
        %5255 = vmatmul.mubr.f32.gmra.mrb[0].mxu0 %v5094
        %v5256 = vpop.f32.mrb[0].mxu0
        %v5257 = vadd.f32 0.0, %v5256
        %v5258 = vpop.f32.mrb[0].mxu0
        %v5259 = vadd.f32 0.0, %v5258
        %5260 = vmatprep.mubr.f32.mxu0 0.0
        %5261 = vmatmul.mubr.f32.gmra.mrb[0].mxu0 %v5096
        %v5262 = vpop.f32.mrb[0].mxu0
        %v5263 = vadd.f32 0.0, %v5262
        %v5264 = vpop.f32.mrb[0].mxu0
        %v5265 = vadd.f32 0.0, %v5264
        %5266 = vmatprep.mubr.f32.mxu0 0.0
        %5267 = vmatmul.mubr.f32.gmra.mrb[0].mxu0 %v5098
        %v5268 = vpop.f32.mrb[0].mxu0
        %v5269 = vadd.f32 0.0, %v5268
        %v5270 = vpop.f32.mrb[0].mxu0
        %v5271 = vadd.f32 0.0, %v5270
        %5272 = vmatprep.mubr.f32.mxu0 0.0
        %5273 = vmatmul.mubr.f32.gmra.mrb[0].mxu0 %v5100
        %v5274 = vpop.f32.mrb[0].mxu0
        %v5275 = vadd.f32 0.0, %v5274
        %v5276 = vpop.f32.mrb[0].mxu0
        %v5277 = vadd.f32 0.0, %v5276
        %5278 = vmatprep.mubr.f32.mxu0 0.0
        %5279 = vmatmul.mubr.f32.gmra.mrb[0].mxu0 %v5102
        %v5280 = vpop.f32.mrb[0].mxu0
        %v5281 = vadd.f32 0.0, %v5280
        %v5282 = vpop.f32.mrb[0].mxu0
        %v5283 = vadd.f32 0.0, %v5282
        %5284 = vmatprep.mubr.f32.mxu0 0.0
        %5285 = vmatmul.mubr.f32.gmra.mrb[0].mxu0 %v5104
        %v5286 = vpop.f32.mrb[0].mxu0
        %v5287 = vadd.f32 0.0, %v5286
        %v5288 = vpop.f32.mrb[0].mxu0
        %v5289 = vadd.f32 0.0, %v5288
        %5290 = vmatprep.mubr.f32.mxu0 0.0
        %5291 = vmatmul.mubr.f32.gmra.mrb[0].mxu0 %v5106
        %v5292 = vpop.f32.mrb[0].mxu0
        %v5293 = vadd.f32 0.0, %v5292
        %v5294 = vpop.f32.mrb[0].mxu0
        %v5295 = vadd.f32 0.0, %v5294
        %5296 = vmatprep.mubr.f32.mxu0 0.0
        %5297 = vmatmul.mubr.f32.gmra.mrb[0].mxu0 %v5108
        %v5298 = vpop.f32.mrb[0].mxu0
        %v5299 = vadd.f32 0.0, %v5298
        %v5300 = vpop.f32.mrb[0].mxu0
        %v5301 = vadd.f32 0.0, %v5300
        %5302 = vmatprep.mubr.f32.mxu0 0.0
        %5303 = vmatmul.mubr.f32.gmra.mrb[0].mxu0 %v5110
        %v5304 = vpop.f32.mrb[0].mxu0
        %v5305 = vadd.f32 0.0, %v5304
        %v5306 = vpop.f32.mrb[0].mxu0
        %v5307 = vadd.f32 0.0, %v5306
        %5308 = vmatprep.mubr.f32.mxu0 0.0
        %5309 = vmatmul.mubr.f32.gmra.mrb[0].mxu0 %v5112
        %v5310 = vpop.f32.mrb[0].mxu0
        %v5311 = vadd.f32 0.0, %v5310
        %v5312 = vpop.f32.mrb[0].mxu0
        %v5313 = vadd.f32 0.0, %v5312
        %5314 = vmatprep.mubr.f32.mxu0 0.0
        %5315 = vmatmul.mubr.f32.gmra.mrb[0].mxu0 %v5114
        %v5316 = vpop.f32.mrb[0].mxu0
        %v5317 = vadd.f32 0.0, %v5316
        %v5318 = vpop.f32.mrb[0].mxu0
        %v5319 = vadd.f32 0.0, %v5318
        %5320 = vmatprep.mubr.f32.mxu0 0.0
        %5321 = vmatmul.mubr.f32.gmra.mrb[0].mxu0 %v5116
        %v5322 = vpop.f32.mrb[0].mxu0
        %v5323 = vadd.f32 0.0, %v5322
        %v5324 = vpop.f32.mrb[0].mxu0
        %v5325 = vadd.f32 0.0, %v5324
        %5326 = vmatprep.mubr.f32.mxu0 0.0
        %5327 = vmatmul.mubr.f32.gmra.mrb[0].mxu0 %v5118
        %v5328 = vpop.f32.mrb[0].mxu0
        %v5329 = vadd.f32 0.0, %v5328
        %v5330 = vpop.f32.mrb[0].mxu0
        %v5331 = vadd.f32 0.0, %v5330
        %5332 = vmatprep.mubr.f32.mxu0 0.0
        %5333 = vmatmul.mubr.f32.gmra.mrb[0].mxu0 %v5120
        %v5334 = vpop.f32.mrb[0].mxu0
        %v5335 = vadd.f32 0.0, %v5334
        %v5336 = vpop.f32.mrb[0].mxu0
        %v5337 = vadd.f32 0.0, %v5336
        %5338 = vmatprep.mubr.f32.mxu0 0.0
        %5339 = vmatmul.mubr.f32.gmra.mrb[0].mxu0 %v5122
        %v5340 = vpop.f32.mrb[0].mxu0
        %v5341 = vadd.f32 0.0, %v5340
        %v5342 = vpop.f32.mrb[0].mxu0
        %v5343 = vadd.f32 0.0, %v5342
        %5344 = vmatprep.mubr.f32.mxu0 0.0
        %5345 = vmatmul.mubr.f32.gmra.mrb[0].mxu0 %v5124
        %v5346 = vpop.f32.mrb[0].mxu0
        %v5347 = vadd.f32 0.0, %v5346
        %v5348 = vpop.f32.mrb[0].mxu0
        %v5349 = vadd.f32 0.0, %v5348
        %5350 = vdwg.mxu0
        %v5351 = vmax.f32 %v5257, %v5259
        %5352 = vmax.xlane.f32.xlu0 %v5351
        %v5353 = vpop.xlane.xlu0 %5352
        %v5354 = vmax.f32 %v5263, %v5265
        %5355 = vmax.xlane.f32.xlu0 %v5354
        %v5356 = vpop.xlane.xlu0 %5355
        %v5357 = vmax.f32 %v5269, %v5271
        %5358 = vmax.xlane.f32.xlu0 %v5357
        %v5359 = vpop.xlane.xlu0 %5358
        %v5360 = vmax.f32 %v5275, %v5277
        %5361 = vmax.xlane.f32.xlu0 %v5360
        %v5362 = vpop.xlane.xlu0 %5361
        %v5363 = vmax.f32 %v5281, %v5283
        %5364 = vmax.xlane.f32.xlu0 %v5363
        %v5365 = vpop.xlane.xlu0 %5364
        %v5366 = vmax.f32 %v5287, %v5289
        %5367 = vmax.xlane.f32.xlu0 %v5366
        %v5368 = vpop.xlane.xlu0 %5367
        %v5369 = vmax.f32 %v5293, %v5295
        %5370 = vmax.xlane.f32.xlu0 %v5369
        %v5371 = vpop.xlane.xlu0 %5370
        %v5372 = vmax.f32 %v5299, %v5301
        %5373 = vmax.xlane.f32.xlu0 %v5372
        %v5374 = vpop.xlane.xlu0 %5373
        %v5375 = vmax.f32 %v5305, %v5307
        %5376 = vmax.xlane.f32.xlu0 %v5375
        %v5377 = vpop.xlane.xlu0 %5376
        %v5378 = vmax.f32 %v5311, %v5313
        %5379 = vmax.xlane.f32.xlu0 %v5378
        %v5380 = vpop.xlane.xlu0 %5379
        %v5381 = vmax.f32 %v5317, %v5319
        %5382 = vmax.xlane.f32.xlu0 %v5381
        %v5383 = vpop.xlane.xlu0 %5382
        %v5384 = vmax.f32 %v5323, %v5325
        %5385 = vmax.xlane.f32.xlu0 %v5384
        %v5386 = vpop.xlane.xlu0 %5385
        %v5387 = vmax.f32 %v5329, %v5331
        %5388 = vmax.xlane.f32.xlu0 %v5387
        %v5389 = vpop.xlane.xlu0 %5388
        %v5390 = vmax.f32 %v5335, %v5337
        %5391 = vmax.xlane.f32.xlu0 %v5390
        %v5392 = vpop.xlane.xlu0 %5391
        %v5393 = vmax.f32 %v5341, %v5343
        %5394 = vmax.xlane.f32.xlu0 %v5393
        %v5395 = vpop.xlane.xlu0 %5394
        %v5396 = vmax.f32 %v5347, %v5349
        %5397 = vmax.xlane.f32.xlu0 %v5396
        %v5398 = vpop.xlane.xlu0 %5397
        %v5399 = vsub.f32 %v5257, %v5353
        %v5400 = vsub.f32 %v5259, %v5353
        %v5401 = vsub.f32 %v5263, %v5356
        %v5402 = vsub.f32 %v5265, %v5356
        %v5403 = vsub.f32 %v5269, %v5359
        %v5404 = vsub.f32 %v5271, %v5359
        %v5405 = vsub.f32 %v5275, %v5362
        %v5406 = vsub.f32 %v5277, %v5362
        %v5407 = vsub.f32 %v5281, %v5365
        %v5408 = vsub.f32 %v5283, %v5365
        %v5409 = vsub.f32 %v5287, %v5368
        %v5410 = vsub.f32 %v5289, %v5368
        %v5411 = vsub.f32 %v5293, %v5371
        %v5412 = vsub.f32 %v5295, %v5371
        %v5413 = vsub.f32 %v5299, %v5374
        %v5414 = vsub.f32 %v5301, %v5374
        %v5415 = vsub.f32 %v5305, %v5377
        %v5416 = vsub.f32 %v5307, %v5377
        %v5417 = vsub.f32 %v5311, %v5380
        %v5418 = vsub.f32 %v5313, %v5380
        %v5419 = vsub.f32 %v5317, %v5383
        %v5420 = vsub.f32 %v5319, %v5383
        %v5421 = vsub.f32 %v5323, %v5386
        %v5422 = vsub.f32 %v5325, %v5386
        %v5423 = vsub.f32 %v5329, %v5389
        %v5424 = vsub.f32 %v5331, %v5389
        %v5425 = vsub.f32 %v5335, %v5392
        %v5426 = vsub.f32 %v5337, %v5392
        %v5427 = vsub.f32 %v5341, %v5395
        %v5428 = vsub.f32 %v5343, %v5395
        %v5429 = vsub.f32 %v5347, %v5398
        %v5430 = vsub.f32 %v5349, %v5398
        %v5431 = vmul.f32 %v5399, 1.442695
        %v5432 = vpow.pop %v5431
        %v5433 = vmul.f32 %v5400, 1.442695
        %v5434 = vpow.pop %v5433
        %v5435 = vmul.f32 %v5401, 1.442695
        %v5436 = vpow.pop %v5435
        %v5437 = vmul.f32 %v5402, 1.442695
        %v5438 = vpow.pop %v5437
        %v5439 = vmul.f32 %v5403, 1.442695
        %v5440 = vpow.pop %v5439
        %v5441 = vmul.f32 %v5404, 1.442695
        %v5442 = vpow.pop %v5441
        %v5443 = vmul.f32 %v5405, 1.442695
        %v5444 = vpow.pop %v5443
        %v5445 = vmul.f32 %v5406, 1.442695
        %v5446 = vpow.pop %v5445
        %v5447 = vmul.f32 %v5407, 1.442695
        %v5448 = vpow.pop %v5447
        %v5449 = vmul.f32 %v5408, 1.442695
        %v5450 = vpow.pop %v5449
        %v5451 = vmul.f32 %v5409, 1.442695
        %v5452 = vpow.pop %v5451
        %v5453 = vmul.f32 %v5410, 1.442695
        %v5454 = vpow.pop %v5453
        %v5455 = vmul.f32 %v5411, 1.442695
        %v5456 = vpow.pop %v5455
        %v5457 = vmul.f32 %v5412, 1.442695
        %v5458 = vpow.pop %v5457
        %v5459 = vmul.f32 %v5413, 1.442695
        %v5460 = vpow.pop %v5459
        %v5461 = vmul.f32 %v5414, 1.442695
        %v5462 = vpow.pop %v5461
        %v5463 = vmul.f32 %v5415, 1.442695
        %v5464 = vpow.pop %v5463
        %v5465 = vmul.f32 %v5416, 1.442695
        %v5466 = vpow.pop %v5465
        %v5467 = vmul.f32 %v5417, 1.442695
        %v5468 = vpow.pop %v5467
        %v5469 = vmul.f32 %v5418, 1.442695
        %v5470 = vpow.pop %v5469
        %v5471 = vmul.f32 %v5419, 1.442695
        %v5472 = vpow.pop %v5471
        %v5473 = vmul.f32 %v5420, 1.442695
        %v5474 = vpow.pop %v5473
        %v5475 = vmul.f32 %v5421, 1.442695
        %v5476 = vpow.pop %v5475
        %v5477 = vmul.f32 %v5422, 1.442695
        %v5478 = vpow.pop %v5477
        %v5479 = vmul.f32 %v5423, 1.442695
        %v5480 = vpow.pop %v5479
        %v5481 = vmul.f32 %v5424, 1.442695
        %v5482 = vpow.pop %v5481
        %v5483 = vmul.f32 %v5425, 1.442695
        %v5484 = vpow.pop %v5483
        %v5485 = vmul.f32 %v5426, 1.442695
        %v5486 = vpow.pop %v5485
        %v5487 = vmul.f32 %v5427, 1.442695
        %v5488 = vpow.pop %v5487
        %v5489 = vmul.f32 %v5428, 1.442695
        %v5490 = vpow.pop %v5489
        %v5491 = vmul.f32 %v5429, 1.442695
        %v5492 = vpow.pop %v5491
        %v5493 = vmul.f32 %v5430, 1.442695
        %v5494 = vpow.pop %v5493
        %v5495 = vadd.f32 %v5432, %v5434
        %5496 = vadd.xlane.f32.xlu0 %v5495
        %v5497 = vpop.xlane.xlu0 %5496
        %v5498 = vadd.f32 %v5436, %v5438
        %5499 = vadd.xlane.f32.xlu0 %v5498
        %v5500 = vpop.xlane.xlu0 %5499
        %v5501 = vadd.f32 %v5440, %v5442
        %5502 = vadd.xlane.f32.xlu0 %v5501
        %v5503 = vpop.xlane.xlu0 %5502
        %v5504 = vadd.f32 %v5444, %v5446
        %5505 = vadd.xlane.f32.xlu0 %v5504
        %v5506 = vpop.xlane.xlu0 %5505
        %v5507 = vadd.f32 %v5448, %v5450
        %5508 = vadd.xlane.f32.xlu0 %v5507
        %v5509 = vpop.xlane.xlu0 %5508
        %v5510 = vadd.f32 %v5452, %v5454
        %5511 = vadd.xlane.f32.xlu0 %v5510
        %v5512 = vpop.xlane.xlu0 %5511
        %v5513 = vadd.f32 %v5456, %v5458
        %5514 = vadd.xlane.f32.xlu0 %v5513
        %v5515 = vpop.xlane.xlu0 %5514
        %v5516 = vadd.f32 %v5460, %v5462
        %5517 = vadd.xlane.f32.xlu0 %v5516
        %v5518 = vpop.xlane.xlu0 %5517
        %v5519 = vadd.f32 %v5464, %v5466
        %5520 = vadd.xlane.f32.xlu0 %v5519
        %v5521 = vpop.xlane.xlu0 %5520
        %v5522 = vadd.f32 %v5468, %v5470
        %5523 = vadd.xlane.f32.xlu0 %v5522
        %v5524 = vpop.xlane.xlu0 %5523
        %v5525 = vadd.f32 %v5472, %v5474
        %5526 = vadd.xlane.f32.xlu0 %v5525
        %v5527 = vpop.xlane.xlu0 %5526
        %v5528 = vadd.f32 %v5476, %v5478
        %5529 = vadd.xlane.f32.xlu0 %v5528
        %v5530 = vpop.xlane.xlu0 %5529
        %v5531 = vadd.f32 %v5480, %v5482
        %5532 = vadd.xlane.f32.xlu0 %v5531
        %v5533 = vpop.xlane.xlu0 %5532
        %v5534 = vadd.f32 %v5484, %v5486
        %5535 = vadd.xlane.f32.xlu0 %v5534
        %v5536 = vpop.xlane.xlu0 %5535
        %v5537 = vadd.f32 %v5488, %v5490
        %5538 = vadd.xlane.f32.xlu0 %v5537
        %v5539 = vpop.xlane.xlu0 %5538
        %v5540 = vadd.f32 %v5492, %v5494
        %5541 = vadd.xlane.f32.xlu0 %v5540
        %v5542 = vpop.xlane.xlu0 %5541
        %5543 = vrot.lane.b32.xlu0 %v987, 48
        %v5544 = vpop.permute.xlu0 %5543
        %5545 = vrot.lane.b32.xlu0 %v988, 48
        %v5546 = vpop.permute.xlu0 %5545
        %5547 = vrot.lane.b32.xlu0 %v989, 48
        %v5548 = vpop.permute.xlu0 %5547
        %5549 = vrot.lane.b32.xlu0 %v990, 48
        %v5550 = vpop.permute.xlu0 %5549
        %5551 = vrot.lane.b32.xlu0 %v991, 48
        %v5552 = vpop.permute.xlu0 %5551
        %5553 = vrot.lane.b32.xlu0 %v992, 48
        %v5554 = vpop.permute.xlu0 %5553
        %5555 = vrot.lane.b32.xlu0 %v993, 48
        %v5556 = vpop.permute.xlu0 %5555
        %5557 = vrot.lane.b32.xlu0 %v994, 48
        %v5558 = vpop.permute.xlu0 %5557
        %5559 = vrot.lane.b32.xlu0 %v995, 48
        %v5560 = vpop.permute.xlu0 %5559
        %5561 = vrot.lane.b32.xlu0 %v996, 48
        %v5562 = vpop.permute.xlu0 %5561
        %5563 = vrot.lane.b32.xlu0 %v997, 48
        %v5564 = vpop.permute.xlu0 %5563
        %5565 = vrot.lane.b32.xlu0 %v998, 48
        %v5566 = vpop.permute.xlu0 %5565
        %5567 = vrot.lane.b32.xlu0 %v999, 48
        %v5568 = vpop.permute.xlu0 %5567
        %5569 = vrot.lane.b32.xlu0 %v1000, 48
        %v5570 = vpop.permute.xlu0 %5569
        %5571 = vrot.lane.b32.xlu0 %v1001, 48
        %v5572 = vpop.permute.xlu0 %5571
        %5573 = vrot.lane.b32.xlu0 %v1002, 48
        %v5574 = vpop.permute.xlu0 %5573
        %5575 = vrot.lane.b32.xlu0 %v1003, 48
        %v5576 = vpop.permute.xlu0 %5575
        %5577 = vrot.lane.b32.xlu0 %v1004, 48
        %v5578 = vpop.permute.xlu0 %5577
        %5579 = vrot.lane.b32.xlu0 %v1005, 48
        %v5580 = vpop.permute.xlu0 %5579
        %5581 = vrot.lane.b32.xlu0 %v1006, 48
        %v5582 = vpop.permute.xlu0 %5581
        %5583 = vrot.lane.b32.xlu0 %v1007, 48
        %v5584 = vpop.permute.xlu0 %5583
        %5585 = vrot.lane.b32.xlu0 %v1008, 48
        %v5586 = vpop.permute.xlu0 %5585
        %5587 = vrot.lane.b32.xlu0 %v1009, 48
        %v5588 = vpop.permute.xlu0 %5587
        %5589 = vrot.lane.b32.xlu0 %v1010, 48
        %v5590 = vpop.permute.xlu0 %5589
        %5591 = vrot.lane.b32.xlu0 %v1011, 48
        %v5592 = vpop.permute.xlu0 %5591
        %5593 = vrot.lane.b32.xlu0 %v1012, 48
        %v5594 = vpop.permute.xlu0 %5593
        %5595 = vrot.lane.b32.xlu0 %v1013, 48
        %v5596 = vpop.permute.xlu0 %5595
        %5597 = vrot.lane.b32.xlu0 %v1014, 48
        %v5598 = vpop.permute.xlu0 %5597
        %5599 = vrot.lane.b32.xlu0 %v1015, 48
        %v5600 = vpop.permute.xlu0 %5599
        %5601 = vrot.lane.b32.xlu0 %v1016, 48
        %v5602 = vpop.permute.xlu0 %5601
        %5603 = vrot.lane.b32.xlu0 %v1017, 48
        %v5604 = vpop.permute.xlu0 %5603
        %5605 = vrot.lane.b32.xlu0 %v1018, 48
        %v5606 = vpop.permute.xlu0 %5605
        %5639 = vmatprep.subr.mxu0 0.0
        %5640 = vmatpush1.msra.mxu0 %v5544
        %5641 = vmatprep.subr.mxu0 0.0
        %5642 = vmatpush1.msra.mxu0 %v5546
        %5643 = vmatprep.subr.mxu0 0.0
        %5644 = vmatpush1.msra.mxu0 %v5548
        %5645 = vmatprep.subr.mxu0 0.0
        %5646 = vmatpush1.msra.mxu0 %v5550
        %5647 = vmatprep.subr.mxu0 0.0
        %5648 = vmatpush1.msra.mxu0 %v5552
        %5649 = vmatprep.subr.mxu0 0.0
        %5650 = vmatpush1.msra.mxu0 %v5554
        %5651 = vmatprep.subr.mxu0 0.0
        %5652 = vmatpush1.msra.mxu0 %v5556
        %5653 = vmatprep.subr.mxu0 0.0
        %5654 = vmatpush1.msra.mxu0 %v5558
        %5655 = vmatprep.subr.mxu0 0.0
        %5656 = vmatpush1.msra.mxu0 %v5560
        %5657 = vmatprep.subr.mxu0 0.0
        %5658 = vmatpush1.msra.mxu0 %v5562
        %5659 = vmatprep.subr.mxu0 0.0
        %5660 = vmatpush1.msra.mxu0 %v5564
        %5661 = vmatprep.subr.mxu0 0.0
        %5662 = vmatpush1.msra.mxu0 %v5566
        %5663 = vmatprep.subr.mxu0 0.0
        %5664 = vmatpush1.msra.mxu0 %v5568
        %5665 = vmatprep.subr.mxu0 0.0
        %5666 = vmatpush1.msra.mxu0 %v5570
        %5667 = vmatprep.subr.mxu0 0.0
        %5668 = vmatpush1.msra.mxu0 %v5572
        %5669 = vmatprep.subr.mxu0 0.0
        %5670 = vmatpush1.msra.mxu0 %v5574
        %5671 = vmatprep.subr.mxu0 0.0
        %5672 = vmatpush1.msra.mxu0 %v5576
        %5673 = vmatprep.subr.mxu0 0.0
        %5674 = vmatpush1.msra.mxu0 %v5578
        %5675 = vmatprep.subr.mxu0 0.0
        %5676 = vmatpush1.msra.mxu0 %v5580
        %5677 = vmatprep.subr.mxu0 0.0
        %5678 = vmatpush1.msra.mxu0 %v5582
        %5679 = vmatprep.subr.mxu0 0.0
        %5680 = vmatpush1.msra.mxu0 %v5584
        %5681 = vmatprep.subr.mxu0 0.0
        %5682 = vmatpush1.msra.mxu0 %v5586
        %5683 = vmatprep.subr.mxu0 0.0
        %5684 = vmatpush1.msra.mxu0 %v5588
        %5685 = vmatprep.subr.mxu0 0.0
        %5686 = vmatpush1.msra.mxu0 %v5590
        %5687 = vmatprep.subr.mxu0 0.0
        %5688 = vmatpush1.msra.mxu0 %v5592
        %5689 = vmatprep.subr.mxu0 0.0
        %5690 = vmatpush1.msra.mxu0 %v5594
        %5691 = vmatprep.subr.mxu0 0.0
        %5692 = vmatpush1.msra.mxu0 %v5596
        %5693 = vmatprep.subr.mxu0 0.0
        %5694 = vmatpush1.msra.mxu0 %v5598
        %5695 = vmatprep.subr.mxu0 0.0
        %5696 = vmatpush1.msra.mxu0 %v5600
        %5697 = vmatprep.subr.mxu0 0.0
        %5698 = vmatpush1.msra.mxu0 %v5602
        %5699 = vmatprep.subr.mxu0 0.0
        %5700 = vmatpush1.msra.mxu0 %v5604
        %5701 = vmatprep.subr.mxu0 0.0
        %5702 = vmatpush1.msra.mxu0 %v5606
        %5703 = vmatprep.mubr.f32.mxu0 %v5434
        %5704 = vmatmul.mubr.f32.gmra.mrb[0].mxu0 %v5432
        %v5705 = vpop.f32.mrb[0].mxu0
        %v5706 = vadd.f32 0.0, %v5705
        %v5707 = vpop.f32.mrb[0].mxu0
        %5708 = vmatprep.mubr.f32.mxu0 %v5438
        %5709 = vmatmul.mubr.f32.gmra.mrb[0].mxu0 %v5436
        %v5710 = vpop.f32.mrb[0].mxu0
        %v5711 = vadd.f32 0.0, %v5710
        %v5712 = vpop.f32.mrb[0].mxu0
        %5713 = vmatprep.mubr.f32.mxu0 %v5442
        %5714 = vmatmul.mubr.f32.gmra.mrb[0].mxu0 %v5440
        %v5715 = vpop.f32.mrb[0].mxu0
        %v5716 = vadd.f32 0.0, %v5715
        %v5717 = vpop.f32.mrb[0].mxu0
        %5718 = vmatprep.mubr.f32.mxu0 %v5446
        %5719 = vmatmul.mubr.f32.gmra.mrb[0].mxu0 %v5444
        %v5720 = vpop.f32.mrb[0].mxu0
        %v5721 = vadd.f32 0.0, %v5720
        %v5722 = vpop.f32.mrb[0].mxu0
        %5723 = vmatprep.mubr.f32.mxu0 %v5450
        %5724 = vmatmul.mubr.f32.gmra.mrb[0].mxu0 %v5448
        %v5725 = vpop.f32.mrb[0].mxu0
        %v5726 = vadd.f32 0.0, %v5725
        %v5727 = vpop.f32.mrb[0].mxu0
        %5728 = vmatprep.mubr.f32.mxu0 %v5454
        %5729 = vmatmul.mubr.f32.gmra.mrb[0].mxu0 %v5452
        %v5730 = vpop.f32.mrb[0].mxu0
        %v5731 = vadd.f32 0.0, %v5730
        %v5732 = vpop.f32.mrb[0].mxu0
        %5733 = vmatprep.mubr.f32.mxu0 %v5458
        %5734 = vmatmul.mubr.f32.gmra.mrb[0].mxu0 %v5456
        %v5735 = vpop.f32.mrb[0].mxu0
        %v5736 = vadd.f32 0.0, %v5735
        %v5737 = vpop.f32.mrb[0].mxu0
        %5738 = vmatprep.mubr.f32.mxu0 %v5462
        %5739 = vmatmul.mubr.f32.gmra.mrb[0].mxu0 %v5460
        %v5740 = vpop.f32.mrb[0].mxu0
        %v5741 = vadd.f32 0.0, %v5740
        %v5742 = vpop.f32.mrb[0].mxu0
        %5743 = vmatprep.mubr.f32.mxu0 %v5466
        %5744 = vmatmul.mubr.f32.gmra.mrb[0].mxu0 %v5464
        %v5745 = vpop.f32.mrb[0].mxu0
        %v5746 = vadd.f32 0.0, %v5745
        %v5747 = vpop.f32.mrb[0].mxu0
        %5748 = vmatprep.mubr.f32.mxu0 %v5470
        %5749 = vmatmul.mubr.f32.gmra.mrb[0].mxu0 %v5468
        %v5750 = vpop.f32.mrb[0].mxu0
        %v5751 = vadd.f32 0.0, %v5750
        %v5752 = vpop.f32.mrb[0].mxu0
        %5753 = vmatprep.mubr.f32.mxu0 %v5474
        %5754 = vmatmul.mubr.f32.gmra.mrb[0].mxu0 %v5472
        %v5755 = vpop.f32.mrb[0].mxu0
        %v5756 = vadd.f32 0.0, %v5755
        %v5757 = vpop.f32.mrb[0].mxu0
        %5758 = vmatprep.mubr.f32.mxu0 %v5478
        %5759 = vmatmul.mubr.f32.gmra.mrb[0].mxu0 %v5476
        %v5760 = vpop.f32.mrb[0].mxu0
        %v5761 = vadd.f32 0.0, %v5760
        %v5762 = vpop.f32.mrb[0].mxu0
        %5763 = vmatprep.mubr.f32.mxu0 %v5482
        %5764 = vmatmul.mubr.f32.gmra.mrb[0].mxu0 %v5480
        %v5765 = vpop.f32.mrb[0].mxu0
        %v5766 = vadd.f32 0.0, %v5765
        %v5767 = vpop.f32.mrb[0].mxu0
        %5768 = vmatprep.mubr.f32.mxu0 %v5486
        %5769 = vmatmul.mubr.f32.gmra.mrb[0].mxu0 %v5484
        %v5770 = vpop.f32.mrb[0].mxu0
        %v5771 = vadd.f32 0.0, %v5770
        %v5772 = vpop.f32.mrb[0].mxu0
        %5773 = vmatprep.mubr.f32.mxu0 %v5490
        %5774 = vmatmul.mubr.f32.gmra.mrb[0].mxu0 %v5488
        %v5775 = vpop.f32.mrb[0].mxu0
        %v5776 = vadd.f32 0.0, %v5775
        %v5777 = vpop.f32.mrb[0].mxu0
        %5778 = vmatprep.mubr.f32.mxu0 %v5494
        %5779 = vmatmul.mubr.f32.gmra.mrb[0].mxu0 %v5492
        %v5780 = vpop.f32.mrb[0].mxu0
        %v5781 = vadd.f32 0.0, %v5780
        %v5782 = vpop.f32.mrb[0].mxu0
        %5783 = vdwg.mxu0
        %v5784 = vrcp.pop %v5497
        %v5785 = vrcp.pop %v5500
        %v5786 = vrcp.pop %v5503
        %v5787 = vrcp.pop %v5506
        %v5788 = vrcp.pop %v5509
        %v5789 = vrcp.pop %v5512
        %v5790 = vrcp.pop %v5515
        %v5791 = vrcp.pop %v5518
        %v5792 = vrcp.pop %v5521
        %v5793 = vrcp.pop %v5524
        %v5794 = vrcp.pop %v5527
        %v5795 = vrcp.pop %v5530
        %v5796 = vrcp.pop %v5533
        %v5797 = vrcp.pop %v5536
        %v5798 = vrcp.pop %v5539
        %v5799 = vrcp.pop %v5542
        %v5800 = vmul.f32 %v5706, %v5784
        %v5801 = vmul.f32 %v5711, %v5785
        %v5802 = vmul.f32 %v5716, %v5786
        %v5803 = vmul.f32 %v5721, %v5787
        %v5804 = vmul.f32 %v5726, %v5788
        %v5805 = vmul.f32 %v5731, %v5789
        %v5806 = vmul.f32 %v5736, %v5790
        %v5807 = vmul.f32 %v5741, %v5791
        %v5808 = vmul.f32 %v5746, %v5792
        %v5809 = vmul.f32 %v5751, %v5793
        %v5810 = vmul.f32 %v5756, %v5794
        %v5811 = vmul.f32 %v5761, %v5795
        %v5812 = vmul.f32 %v5766, %v5796
        %v5813 = vmul.f32 %v5771, %v5797
        %v5814 = vmul.f32 %v5776, %v5798
        %v5815 = vmul.f32 %v5781, %v5799
        %5816 = vrot.lane.b32.xlu0 %v939, 32
        %v5817 = vpop.permute.xlu0 %5816
        %5818 = vrot.lane.b32.xlu0 %v940, 32
        %v5819 = vpop.permute.xlu0 %5818
        %5820 = vrot.lane.b32.xlu0 %v941, 32
        %v5821 = vpop.permute.xlu0 %5820
        %5822 = vrot.lane.b32.xlu0 %v942, 32
        %v5823 = vpop.permute.xlu0 %5822
        %5824 = vrot.lane.b32.xlu0 %v943, 32
        %v5825 = vpop.permute.xlu0 %5824
        %5826 = vrot.lane.b32.xlu0 %v944, 32
        %v5827 = vpop.permute.xlu0 %5826
        %5828 = vrot.lane.b32.xlu0 %v945, 32
        %v5829 = vpop.permute.xlu0 %5828
        %5830 = vrot.lane.b32.xlu0 %v946, 32
        %v5831 = vpop.permute.xlu0 %5830
        %5832 = vrot.lane.b32.xlu0 %v947, 32
        %v5833 = vpop.permute.xlu0 %5832
        %5834 = vrot.lane.b32.xlu0 %v948, 32
        %v5835 = vpop.permute.xlu0 %5834
        %5836 = vrot.lane.b32.xlu0 %v949, 32
        %v5837 = vpop.permute.xlu0 %5836
        %5838 = vrot.lane.b32.xlu0 %v950, 32
        %v5839 = vpop.permute.xlu0 %5838
        %5840 = vrot.lane.b32.xlu0 %v951, 32
        %v5841 = vpop.permute.xlu0 %5840
        %5842 = vrot.lane.b32.xlu0 %v952, 32
        %v5843 = vpop.permute.xlu0 %5842
        %5844 = vrot.lane.b32.xlu0 %v953, 32
        %v5845 = vpop.permute.xlu0 %5844
        %5846 = vrot.lane.b32.xlu0 %v954, 32
        %v5847 = vpop.permute.xlu0 %5846
        %5848 = vrot.lane.b32.xlu0 %v955, 32
        %v5849 = vpop.permute.xlu0 %5848
        %5850 = vrot.lane.b32.xlu0 %v956, 32
        %v5851 = vpop.permute.xlu0 %5850
        %5852 = vrot.lane.b32.xlu0 %v957, 32
        %v5853 = vpop.permute.xlu0 %5852
        %5854 = vrot.lane.b32.xlu0 %v958, 32
        %v5855 = vpop.permute.xlu0 %5854
        %5856 = vrot.lane.b32.xlu0 %v959, 32
        %v5857 = vpop.permute.xlu0 %5856
        %5858 = vrot.lane.b32.xlu0 %v960, 32
        %v5859 = vpop.permute.xlu0 %5858
        %5860 = vrot.lane.b32.xlu0 %v961, 32
        %v5861 = vpop.permute.xlu0 %5860
        %5862 = vrot.lane.b32.xlu0 %v962, 32
        %v5863 = vpop.permute.xlu0 %5862
        %5864 = vrot.lane.b32.xlu0 %v963, 32
        %v5865 = vpop.permute.xlu0 %5864
        %5866 = vrot.lane.b32.xlu0 %v964, 32
        %v5867 = vpop.permute.xlu0 %5866
        %5868 = vrot.lane.b32.xlu0 %v965, 32
        %v5869 = vpop.permute.xlu0 %5868
        %5870 = vrot.lane.b32.xlu0 %v966, 32
        %v5871 = vpop.permute.xlu0 %5870
        %5872 = vrot.lane.b32.xlu0 %v967, 32
        %v5873 = vpop.permute.xlu0 %5872
        %5874 = vrot.lane.b32.xlu0 %v968, 32
        %v5875 = vpop.permute.xlu0 %5874
        %5876 = vrot.lane.b32.xlu0 %v969, 32
        %v5877 = vpop.permute.xlu0 %5876
        %5878 = vrot.lane.b32.xlu0 %v970, 32
        %v5879 = vpop.permute.xlu0 %5878
        %5880 = vrot.lane.b32.xlu0 %v971, 32
        %v5881 = vpop.permute.xlu0 %5880
        %5882 = vrot.lane.b32.xlu0 %v972, 32
        %v5883 = vpop.permute.xlu0 %5882
        %5884 = vrot.lane.b32.xlu0 %v973, 32
        %v5885 = vpop.permute.xlu0 %5884
        %5886 = vrot.lane.b32.xlu0 %v974, 32
        %v5887 = vpop.permute.xlu0 %5886
        %5888 = vrot.lane.b32.xlu0 %v975, 32
        %v5889 = vpop.permute.xlu0 %5888
        %5890 = vrot.lane.b32.xlu0 %v976, 32
        %v5891 = vpop.permute.xlu0 %5890
        %5892 = vrot.lane.b32.xlu0 %v977, 32
        %v5893 = vpop.permute.xlu0 %5892
        %5894 = vrot.lane.b32.xlu0 %v978, 32
        %v5895 = vpop.permute.xlu0 %5894
        %5896 = vrot.lane.b32.xlu0 %v979, 32
        %v5897 = vpop.permute.xlu0 %5896
        %5898 = vrot.lane.b32.xlu0 %v980, 32
        %v5899 = vpop.permute.xlu0 %5898
        %5900 = vrot.lane.b32.xlu0 %v981, 32
        %v5901 = vpop.permute.xlu0 %5900
        %5902 = vrot.lane.b32.xlu0 %v982, 32
        %v5903 = vpop.permute.xlu0 %5902
        %5904 = vrot.lane.b32.xlu0 %v983, 32
        %v5905 = vpop.permute.xlu0 %5904
        %5906 = vrot.lane.b32.xlu0 %v984, 32
        %v5907 = vpop.permute.xlu0 %5906
        %5908 = vrot.lane.b32.xlu0 %v985, 32
        %v5909 = vpop.permute.xlu0 %5908
        %5910 = vrot.lane.b32.xlu0 %v986, 32
        %v5911 = vpop.permute.xlu0 %5910
        %v5912 = vsel %vm1019, %v5817, 0
        %v5914 = vsel %vm1019, %v5819, 0
        %v5916 = vsel %vm1019, %v5821, 0
        %v5918 = vsel %vm1019, %v5823, 0
        %v5920 = vsel %vm1019, %v5825, 0
        %v5922 = vsel %vm1019, %v5827, 0
        %v5924 = vsel %vm1019, %v5829, 0
        %v5926 = vsel %vm1019, %v5831, 0
        %v5928 = vsel %vm1019, %v5833, 0
        %v5930 = vsel %vm1019, %v5835, 0
        %v5932 = vsel %vm1019, %v5837, 0
        %v5934 = vsel %vm1019, %v5839, 0
        %v5936 = vsel %vm1019, %v5841, 0
        %v5938 = vsel %vm1019, %v5843, 0
        %v5940 = vsel %vm1019, %v5845, 0
        %v5942 = vsel %vm1019, %v5847, 0
        %v5944 = vsel %vm1019, %v5849, 0
        %v5946 = vsel %vm1019, %v5851, 0
        %v5948 = vsel %vm1019, %v5853, 0
        %v5950 = vsel %vm1019, %v5855, 0
        %v5952 = vsel %vm1019, %v5857, 0
        %v5954 = vsel %vm1019, %v5859, 0
        %v5956 = vsel %vm1019, %v5861, 0
        %v5958 = vsel %vm1019, %v5863, 0
        %v5960 = vsel %vm1019, %v5865, 0
        %v5962 = vsel %vm1019, %v5867, 0
        %v5964 = vsel %vm1019, %v5869, 0
        %v5966 = vsel %vm1019, %v5871, 0
        %v5968 = vsel %vm1019, %v5873, 0
        %v5970 = vsel %vm1019, %v5875, 0
        %v5972 = vsel %vm1019, %v5877, 0
        %v5974 = vsel %vm1019, %v5879, 0
        %v5976 = vsel %vm1019, %v5881, 0
        %v5978 = vsel %vm1019, %v5883, 0
        %v5980 = vsel %vm1019, %v5885, 0
        %v5982 = vsel %vm1019, %v5887, 0
        %v5984 = vsel %vm1019, %v5889, 0
        %v5986 = vsel %vm1019, %v5891, 0
        %v5988 = vsel %vm1019, %v5893, 0
        %v5990 = vsel %vm1019, %v5895, 0
        %v5992 = vsel %vm1019, %v5897, 0
        %v5994 = vsel %vm1019, %v5899, 0
        %v5996 = vsel %vm1019, %v5901, 0
        %v5998 = vsel %vm1019, %v5903, 0
        %v6000 = vsel %vm1019, %v5905, 0
        %v6002 = vsel %vm1019, %v5907, 0
        %v6004 = vsel %vm1019, %v5909, 0
        %v6006 = vsel %vm1019, %v5911, 0
        %6008 = vmatprep.subr.mxu0 0.0
        %6009 = vmatpush1.xpose.msra.mxu0 %v5944
        %6010 = vmatprep.subr.mxu0 0.0
        %6011 = vmatpush1.xpose.msra.mxu0 %v5946
        %6012 = vmatprep.subr.mxu0 0.0
        %6013 = vmatpush1.xpose.msra.mxu0 %v5948
        %6014 = vmatprep.subr.mxu0 0.0
        %6015 = vmatpush1.xpose.msra.mxu0 %v5950
        %6016 = vmatprep.subr.mxu0 0.0
        %6017 = vmatpush1.xpose.msra.mxu0 %v5952
        %6018 = vmatprep.subr.mxu0 0.0
        %6019 = vmatpush1.xpose.msra.mxu0 %v5954
        %6020 = vmatprep.subr.mxu0 0.0
        %6021 = vmatpush1.xpose.msra.mxu0 %v5956
        %6022 = vmatprep.subr.mxu0 0.0
        %6023 = vmatpush1.xpose.msra.mxu0 %v5958
        %6024 = vmatprep.subr.mxu0 0.0
        %6025 = vmatpush1.xpose.msra.mxu0 %v5960
        %6026 = vmatprep.subr.mxu0 0.0
        %6027 = vmatpush1.xpose.msra.mxu0 %v5962
        %6028 = vmatprep.subr.mxu0 0.0
        %6029 = vmatpush1.xpose.msra.mxu0 %v5964
        %6030 = vmatprep.subr.mxu0 0.0
        %6031 = vmatpush1.xpose.msra.mxu0 %v5966
        %6032 = vmatprep.subr.mxu0 0.0
        %6033 = vmatpush1.xpose.msra.mxu0 %v5968
        %6034 = vmatprep.subr.mxu0 0.0
        %6035 = vmatpush1.xpose.msra.mxu0 %v5970
        %6036 = vmatprep.subr.mxu0 0.0
        %6037 = vmatpush1.xpose.msra.mxu0 %v5972
        %6038 = vmatprep.subr.mxu0 0.0
        %6039 = vmatpush1.xpose.msra.mxu0 %v5974
        %6040 = vmatprep.subr.mxu0 0.0
        %6041 = vmatpush1.xpose.msra.mxu0 %v5976
        %6042 = vmatprep.subr.mxu0 0.0
        %6043 = vmatpush1.xpose.msra.mxu0 %v5978
        %6044 = vmatprep.subr.mxu0 0.0
        %6045 = vmatpush1.xpose.msra.mxu0 %v5980
        %6046 = vmatprep.subr.mxu0 0.0
        %6047 = vmatpush1.xpose.msra.mxu0 %v5982
        %6048 = vmatprep.subr.mxu0 0.0
        %6049 = vmatpush1.xpose.msra.mxu0 %v5984
        %6050 = vmatprep.subr.mxu0 0.0
        %6051 = vmatpush1.xpose.msra.mxu0 %v5986
        %6052 = vmatprep.subr.mxu0 0.0
        %6053 = vmatpush1.xpose.msra.mxu0 %v5988
        %6054 = vmatprep.subr.mxu0 0.0
        %6055 = vmatpush1.xpose.msra.mxu0 %v5990
        %6056 = vmatprep.subr.mxu0 0.0
        %6057 = vmatpush1.xpose.msra.mxu0 %v5992
        %6058 = vmatprep.subr.mxu0 0.0
        %6059 = vmatpush1.xpose.msra.mxu0 %v5994
        %6060 = vmatprep.subr.mxu0 0.0
        %6061 = vmatpush1.xpose.msra.mxu0 %v5996
        %6062 = vmatprep.subr.mxu0 0.0
        %6063 = vmatpush1.xpose.msra.mxu0 %v5998
        %6064 = vmatprep.subr.mxu0 0.0
        %6065 = vmatpush1.xpose.msra.mxu0 %v6000
        %6066 = vmatprep.subr.mxu0 0.0
        %6067 = vmatpush1.xpose.msra.mxu0 %v6002
        %6068 = vmatprep.subr.mxu0 0.0
        %6069 = vmatpush1.xpose.msra.mxu0 %v6004
        %6070 = vmatprep.subr.mxu0 0.0
        %6071 = vmatpush1.xpose.msra.mxu0 %v6006
        %6072 = vmatprep.mubr.f32.mxu0 0.0
        %6073 = vmatmul.mubr.f32.gmra.mrb[0].mxu0 %v5912
        %v6074 = vpop.f32.mrb[0].mxu0
        %v6075 = vadd.f32 0.0, %v6074
        %v6076 = vpop.f32.mrb[0].mxu0
        %v6077 = vadd.f32 0.0, %v6076
        %6078 = vmatprep.mubr.f32.mxu0 0.0
        %6079 = vmatmul.mubr.f32.gmra.mrb[0].mxu0 %v5914
        %v6080 = vpop.f32.mrb[0].mxu0
        %v6081 = vadd.f32 0.0, %v6080
        %v6082 = vpop.f32.mrb[0].mxu0
        %v6083 = vadd.f32 0.0, %v6082
        %6084 = vmatprep.mubr.f32.mxu0 0.0
        %6085 = vmatmul.mubr.f32.gmra.mrb[0].mxu0 %v5916
        %v6086 = vpop.f32.mrb[0].mxu0
        %v6087 = vadd.f32 0.0, %v6086
        %v6088 = vpop.f32.mrb[0].mxu0
        %v6089 = vadd.f32 0.0, %v6088
        %6090 = vmatprep.mubr.f32.mxu0 0.0
        %6091 = vmatmul.mubr.f32.gmra.mrb[0].mxu0 %v5918
        %v6092 = vpop.f32.mrb[0].mxu0
        %v6093 = vadd.f32 0.0, %v6092
        %v6094 = vpop.f32.mrb[0].mxu0
        %v6095 = vadd.f32 0.0, %v6094
        %6096 = vmatprep.mubr.f32.mxu0 0.0
        %6097 = vmatmul.mubr.f32.gmra.mrb[0].mxu0 %v5920
        %v6098 = vpop.f32.mrb[0].mxu0
        %v6099 = vadd.f32 0.0, %v6098
        %v6100 = vpop.f32.mrb[0].mxu0
        %v6101 = vadd.f32 0.0, %v6100
        %6102 = vmatprep.mubr.f32.mxu0 0.0
        %6103 = vmatmul.mubr.f32.gmra.mrb[0].mxu0 %v5922
        %v6104 = vpop.f32.mrb[0].mxu0
        %v6105 = vadd.f32 0.0, %v6104
        %v6106 = vpop.f32.mrb[0].mxu0
        %v6107 = vadd.f32 0.0, %v6106
        %6108 = vmatprep.mubr.f32.mxu0 0.0
        %6109 = vmatmul.mubr.f32.gmra.mrb[0].mxu0 %v5924
        %v6110 = vpop.f32.mrb[0].mxu0
        %v6111 = vadd.f32 0.0, %v6110
        %v6112 = vpop.f32.mrb[0].mxu0
        %v6113 = vadd.f32 0.0, %v6112
        %6114 = vmatprep.mubr.f32.mxu0 0.0
        %6115 = vmatmul.mubr.f32.gmra.mrb[0].mxu0 %v5926
        %v6116 = vpop.f32.mrb[0].mxu0
        %v6117 = vadd.f32 0.0, %v6116
        %v6118 = vpop.f32.mrb[0].mxu0
        %v6119 = vadd.f32 0.0, %v6118
        %6120 = vmatprep.mubr.f32.mxu0 0.0
        %6121 = vmatmul.mubr.f32.gmra.mrb[0].mxu0 %v5928
        %v6122 = vpop.f32.mrb[0].mxu0
        %v6123 = vadd.f32 0.0, %v6122
        %v6124 = vpop.f32.mrb[0].mxu0
        %v6125 = vadd.f32 0.0, %v6124
        %6126 = vmatprep.mubr.f32.mxu0 0.0
        %6127 = vmatmul.mubr.f32.gmra.mrb[0].mxu0 %v5930
        %v6128 = vpop.f32.mrb[0].mxu0
        %v6129 = vadd.f32 0.0, %v6128
        %v6130 = vpop.f32.mrb[0].mxu0
        %v6131 = vadd.f32 0.0, %v6130
        %6132 = vmatprep.mubr.f32.mxu0 0.0
        %6133 = vmatmul.mubr.f32.gmra.mrb[0].mxu0 %v5932
        %v6134 = vpop.f32.mrb[0].mxu0
        %v6135 = vadd.f32 0.0, %v6134
        %v6136 = vpop.f32.mrb[0].mxu0
        %v6137 = vadd.f32 0.0, %v6136
        %6138 = vmatprep.mubr.f32.mxu0 0.0
        %6139 = vmatmul.mubr.f32.gmra.mrb[0].mxu0 %v5934
        %v6140 = vpop.f32.mrb[0].mxu0
        %v6141 = vadd.f32 0.0, %v6140
        %v6142 = vpop.f32.mrb[0].mxu0
        %v6143 = vadd.f32 0.0, %v6142
        %6144 = vmatprep.mubr.f32.mxu0 0.0
        %6145 = vmatmul.mubr.f32.gmra.mrb[0].mxu0 %v5936
        %v6146 = vpop.f32.mrb[0].mxu0
        %v6147 = vadd.f32 0.0, %v6146
        %v6148 = vpop.f32.mrb[0].mxu0
        %v6149 = vadd.f32 0.0, %v6148
        %6150 = vmatprep.mubr.f32.mxu0 0.0
        %6151 = vmatmul.mubr.f32.gmra.mrb[0].mxu0 %v5938
        %v6152 = vpop.f32.mrb[0].mxu0
        %v6153 = vadd.f32 0.0, %v6152
        %v6154 = vpop.f32.mrb[0].mxu0
        %v6155 = vadd.f32 0.0, %v6154
        %6156 = vmatprep.mubr.f32.mxu0 0.0
        %6157 = vmatmul.mubr.f32.gmra.mrb[0].mxu0 %v5940
        %v6158 = vpop.f32.mrb[0].mxu0
        %v6159 = vadd.f32 0.0, %v6158
        %v6160 = vpop.f32.mrb[0].mxu0
        %v6161 = vadd.f32 0.0, %v6160
        %6162 = vmatprep.mubr.f32.mxu0 0.0
        %6163 = vmatmul.mubr.f32.gmra.mrb[0].mxu0 %v5942
        %v6164 = vpop.f32.mrb[0].mxu0
        %v6165 = vadd.f32 0.0, %v6164
        %v6166 = vpop.f32.mrb[0].mxu0
        %v6167 = vadd.f32 0.0, %v6166
        %6168 = vdwg.mxu0
        %v6169 = vmax.f32 %v6075, %v6077
        %6170 = vmax.xlane.f32.xlu0 %v6169
        %v6171 = vpop.xlane.xlu0 %6170
        %v6172 = vmax.f32 %v6081, %v6083
        %6173 = vmax.xlane.f32.xlu0 %v6172
        %v6174 = vpop.xlane.xlu0 %6173
        %v6175 = vmax.f32 %v6087, %v6089
        %6176 = vmax.xlane.f32.xlu0 %v6175
        %v6177 = vpop.xlane.xlu0 %6176
        %v6178 = vmax.f32 %v6093, %v6095
        %6179 = vmax.xlane.f32.xlu0 %v6178
        %v6180 = vpop.xlane.xlu0 %6179
        %v6181 = vmax.f32 %v6099, %v6101
        %6182 = vmax.xlane.f32.xlu0 %v6181
        %v6183 = vpop.xlane.xlu0 %6182
        %v6184 = vmax.f32 %v6105, %v6107
        %6185 = vmax.xlane.f32.xlu0 %v6184
        %v6186 = vpop.xlane.xlu0 %6185
        %v6187 = vmax.f32 %v6111, %v6113
        %6188 = vmax.xlane.f32.xlu0 %v6187
        %v6189 = vpop.xlane.xlu0 %6188
        %v6190 = vmax.f32 %v6117, %v6119
        %6191 = vmax.xlane.f32.xlu0 %v6190
        %v6192 = vpop.xlane.xlu0 %6191
        %v6193 = vmax.f32 %v6123, %v6125
        %6194 = vmax.xlane.f32.xlu0 %v6193
        %v6195 = vpop.xlane.xlu0 %6194
        %v6196 = vmax.f32 %v6129, %v6131
        %6197 = vmax.xlane.f32.xlu0 %v6196
        %v6198 = vpop.xlane.xlu0 %6197
        %v6199 = vmax.f32 %v6135, %v6137
        %6200 = vmax.xlane.f32.xlu0 %v6199
        %v6201 = vpop.xlane.xlu0 %6200
        %v6202 = vmax.f32 %v6141, %v6143
        %6203 = vmax.xlane.f32.xlu0 %v6202
        %v6204 = vpop.xlane.xlu0 %6203
        %v6205 = vmax.f32 %v6147, %v6149
        %6206 = vmax.xlane.f32.xlu0 %v6205
        %v6207 = vpop.xlane.xlu0 %6206
        %v6208 = vmax.f32 %v6153, %v6155
        %6209 = vmax.xlane.f32.xlu0 %v6208
        %v6210 = vpop.xlane.xlu0 %6209
        %v6211 = vmax.f32 %v6159, %v6161
        %6212 = vmax.xlane.f32.xlu0 %v6211
        %v6213 = vpop.xlane.xlu0 %6212
        %v6214 = vmax.f32 %v6165, %v6167
        %6215 = vmax.xlane.f32.xlu0 %v6214
        %v6216 = vpop.xlane.xlu0 %6215
        %v6217 = vsub.f32 %v6075, %v6171
        %v6218 = vsub.f32 %v6077, %v6171
        %v6219 = vsub.f32 %v6081, %v6174
        %v6220 = vsub.f32 %v6083, %v6174
        %v6221 = vsub.f32 %v6087, %v6177
        %v6222 = vsub.f32 %v6089, %v6177
        %v6223 = vsub.f32 %v6093, %v6180
        %v6224 = vsub.f32 %v6095, %v6180
        %v6225 = vsub.f32 %v6099, %v6183
        %v6226 = vsub.f32 %v6101, %v6183
        %v6227 = vsub.f32 %v6105, %v6186
        %v6228 = vsub.f32 %v6107, %v6186
        %v6229 = vsub.f32 %v6111, %v6189
        %v6230 = vsub.f32 %v6113, %v6189
        %v6231 = vsub.f32 %v6117, %v6192
        %v6232 = vsub.f32 %v6119, %v6192
        %v6233 = vsub.f32 %v6123, %v6195
        %v6234 = vsub.f32 %v6125, %v6195
        %v6235 = vsub.f32 %v6129, %v6198
        %v6236 = vsub.f32 %v6131, %v6198
        %v6237 = vsub.f32 %v6135, %v6201
        %v6238 = vsub.f32 %v6137, %v6201
        %v6239 = vsub.f32 %v6141, %v6204
        %v6240 = vsub.f32 %v6143, %v6204
        %v6241 = vsub.f32 %v6147, %v6207
        %v6242 = vsub.f32 %v6149, %v6207
        %v6243 = vsub.f32 %v6153, %v6210
        %v6244 = vsub.f32 %v6155, %v6210
        %v6245 = vsub.f32 %v6159, %v6213
        %v6246 = vsub.f32 %v6161, %v6213
        %v6247 = vsub.f32 %v6165, %v6216
        %v6248 = vsub.f32 %v6167, %v6216
        %v6249 = vmul.f32 %v6217, 1.442695
        %v6250 = vpow.pop %v6249
        %v6251 = vmul.f32 %v6218, 1.442695
        %v6252 = vpow.pop %v6251
        %v6253 = vmul.f32 %v6219, 1.442695
        %v6254 = vpow.pop %v6253
        %v6255 = vmul.f32 %v6220, 1.442695
        %v6256 = vpow.pop %v6255
        %v6257 = vmul.f32 %v6221, 1.442695
        %v6258 = vpow.pop %v6257
        %v6259 = vmul.f32 %v6222, 1.442695
        %v6260 = vpow.pop %v6259
        %v6261 = vmul.f32 %v6223, 1.442695
        %v6262 = vpow.pop %v6261
        %v6263 = vmul.f32 %v6224, 1.442695
        %v6264 = vpow.pop %v6263
        %v6265 = vmul.f32 %v6225, 1.442695
        %v6266 = vpow.pop %v6265
        %v6267 = vmul.f32 %v6226, 1.442695
        %v6268 = vpow.pop %v6267
        %v6269 = vmul.f32 %v6227, 1.442695
        %v6270 = vpow.pop %v6269
        %v6271 = vmul.f32 %v6228, 1.442695
        %v6272 = vpow.pop %v6271
        %v6273 = vmul.f32 %v6229, 1.442695
        %v6274 = vpow.pop %v6273
        %v6275 = vmul.f32 %v6230, 1.442695
        %v6276 = vpow.pop %v6275
        %v6277 = vmul.f32 %v6231, 1.442695
        %v6278 = vpow.pop %v6277
        %v6279 = vmul.f32 %v6232, 1.442695
        %v6280 = vpow.pop %v6279
        %v6281 = vmul.f32 %v6233, 1.442695
        %v6282 = vpow.pop %v6281
        %v6283 = vmul.f32 %v6234, 1.442695
        %v6284 = vpow.pop %v6283
        %v6285 = vmul.f32 %v6235, 1.442695
        %v6286 = vpow.pop %v6285
        %v6287 = vmul.f32 %v6236, 1.442695
        %v6288 = vpow.pop %v6287
        %v6289 = vmul.f32 %v6237, 1.442695
        %v6290 = vpow.pop %v6289
        %v6291 = vmul.f32 %v6238, 1.442695
        %v6292 = vpow.pop %v6291
        %v6293 = vmul.f32 %v6239, 1.442695
        %v6294 = vpow.pop %v6293
        %v6295 = vmul.f32 %v6240, 1.442695
        %v6296 = vpow.pop %v6295
        %v6297 = vmul.f32 %v6241, 1.442695
        %v6298 = vpow.pop %v6297
        %v6299 = vmul.f32 %v6242, 1.442695
        %v6300 = vpow.pop %v6299
        %v6301 = vmul.f32 %v6243, 1.442695
        %v6302 = vpow.pop %v6301
        %v6303 = vmul.f32 %v6244, 1.442695
        %v6304 = vpow.pop %v6303
        %v6305 = vmul.f32 %v6245, 1.442695
        %v6306 = vpow.pop %v6305
        %v6307 = vmul.f32 %v6246, 1.442695
        %v6308 = vpow.pop %v6307
        %v6309 = vmul.f32 %v6247, 1.442695
        %v6310 = vpow.pop %v6309
        %v6311 = vmul.f32 %v6248, 1.442695
        %v6312 = vpow.pop %v6311
        %v6313 = vadd.f32 %v6250, %v6252
        %6314 = vadd.xlane.f32.xlu0 %v6313
        %v6315 = vpop.xlane.xlu0 %6314
        %v6316 = vadd.f32 %v6254, %v6256
        %6317 = vadd.xlane.f32.xlu0 %v6316
        %v6318 = vpop.xlane.xlu0 %6317
        %v6319 = vadd.f32 %v6258, %v6260
        %6320 = vadd.xlane.f32.xlu0 %v6319
        %v6321 = vpop.xlane.xlu0 %6320
        %v6322 = vadd.f32 %v6262, %v6264
        %6323 = vadd.xlane.f32.xlu0 %v6322
        %v6324 = vpop.xlane.xlu0 %6323
        %v6325 = vadd.f32 %v6266, %v6268
        %6326 = vadd.xlane.f32.xlu0 %v6325
        %v6327 = vpop.xlane.xlu0 %6326
        %v6328 = vadd.f32 %v6270, %v6272
        %6329 = vadd.xlane.f32.xlu0 %v6328
        %v6330 = vpop.xlane.xlu0 %6329
        %v6331 = vadd.f32 %v6274, %v6276
        %6332 = vadd.xlane.f32.xlu0 %v6331
        %v6333 = vpop.xlane.xlu0 %6332
        %v6334 = vadd.f32 %v6278, %v6280
        %6335 = vadd.xlane.f32.xlu0 %v6334
        %v6336 = vpop.xlane.xlu0 %6335
        %v6337 = vadd.f32 %v6282, %v6284
        %6338 = vadd.xlane.f32.xlu0 %v6337
        %v6339 = vpop.xlane.xlu0 %6338
        %v6340 = vadd.f32 %v6286, %v6288
        %6341 = vadd.xlane.f32.xlu0 %v6340
        %v6342 = vpop.xlane.xlu0 %6341
        %v6343 = vadd.f32 %v6290, %v6292
        %6344 = vadd.xlane.f32.xlu0 %v6343
        %v6345 = vpop.xlane.xlu0 %6344
        %v6346 = vadd.f32 %v6294, %v6296
        %6347 = vadd.xlane.f32.xlu0 %v6346
        %v6348 = vpop.xlane.xlu0 %6347
        %v6349 = vadd.f32 %v6298, %v6300
        %6350 = vadd.xlane.f32.xlu0 %v6349
        %v6351 = vpop.xlane.xlu0 %6350
        %v6352 = vadd.f32 %v6302, %v6304
        %6353 = vadd.xlane.f32.xlu0 %v6352
        %v6354 = vpop.xlane.xlu0 %6353
        %v6355 = vadd.f32 %v6306, %v6308
        %6356 = vadd.xlane.f32.xlu0 %v6355
        %v6357 = vpop.xlane.xlu0 %6356
        %v6358 = vadd.f32 %v6310, %v6312
        %6359 = vadd.xlane.f32.xlu0 %v6358
        %v6360 = vpop.xlane.xlu0 %6359
        %6361 = vrot.lane.b32.xlu0 %v987, 32
        %v6362 = vpop.permute.xlu0 %6361
        %6363 = vrot.lane.b32.xlu0 %v988, 32
        %v6364 = vpop.permute.xlu0 %6363
        %6365 = vrot.lane.b32.xlu0 %v989, 32
        %v6366 = vpop.permute.xlu0 %6365
        %6367 = vrot.lane.b32.xlu0 %v990, 32
        %v6368 = vpop.permute.xlu0 %6367
        %6369 = vrot.lane.b32.xlu0 %v991, 32
        %v6370 = vpop.permute.xlu0 %6369
        %6371 = vrot.lane.b32.xlu0 %v992, 32
        %v6372 = vpop.permute.xlu0 %6371
        %6373 = vrot.lane.b32.xlu0 %v993, 32
        %v6374 = vpop.permute.xlu0 %6373
        %6375 = vrot.lane.b32.xlu0 %v994, 32
        %v6376 = vpop.permute.xlu0 %6375
        %6377 = vrot.lane.b32.xlu0 %v995, 32
        %v6378 = vpop.permute.xlu0 %6377
        %6379 = vrot.lane.b32.xlu0 %v996, 32
        %v6380 = vpop.permute.xlu0 %6379
        %6381 = vrot.lane.b32.xlu0 %v997, 32
        %v6382 = vpop.permute.xlu0 %6381
        %6383 = vrot.lane.b32.xlu0 %v998, 32
        %v6384 = vpop.permute.xlu0 %6383
        %6385 = vrot.lane.b32.xlu0 %v999, 32
        %v6386 = vpop.permute.xlu0 %6385
        %6387 = vrot.lane.b32.xlu0 %v1000, 32
        %v6388 = vpop.permute.xlu0 %6387
        %6389 = vrot.lane.b32.xlu0 %v1001, 32
        %v6390 = vpop.permute.xlu0 %6389
        %6391 = vrot.lane.b32.xlu0 %v1002, 32
        %v6392 = vpop.permute.xlu0 %6391
        %6393 = vrot.lane.b32.xlu0 %v1003, 32
        %v6394 = vpop.permute.xlu0 %6393
        %6395 = vrot.lane.b32.xlu0 %v1004, 32
        %v6396 = vpop.permute.xlu0 %6395
        %6397 = vrot.lane.b32.xlu0 %v1005, 32
        %v6398 = vpop.permute.xlu0 %6397
        %6399 = vrot.lane.b32.xlu0 %v1006, 32
        %v6400 = vpop.permute.xlu0 %6399
        %6401 = vrot.lane.b32.xlu0 %v1007, 32
        %v6402 = vpop.permute.xlu0 %6401
        %6403 = vrot.lane.b32.xlu0 %v1008, 32
        %v6404 = vpop.permute.xlu0 %6403
        %6405 = vrot.lane.b32.xlu0 %v1009, 32
        %v6406 = vpop.permute.xlu0 %6405
        %6407 = vrot.lane.b32.xlu0 %v1010, 32
        %v6408 = vpop.permute.xlu0 %6407
        %6409 = vrot.lane.b32.xlu0 %v1011, 32
        %v6410 = vpop.permute.xlu0 %6409
        %6411 = vrot.lane.b32.xlu0 %v1012, 32
        %v6412 = vpop.permute.xlu0 %6411
        %6413 = vrot.lane.b32.xlu0 %v1013, 32
        %v6414 = vpop.permute.xlu0 %6413
        %6415 = vrot.lane.b32.xlu0 %v1014, 32
        %v6416 = vpop.permute.xlu0 %6415
        %6417 = vrot.lane.b32.xlu0 %v1015, 32
        %v6418 = vpop.permute.xlu0 %6417
        %6419 = vrot.lane.b32.xlu0 %v1016, 32
        %v6420 = vpop.permute.xlu0 %6419
        %6421 = vrot.lane.b32.xlu0 %v1017, 32
        %v6422 = vpop.permute.xlu0 %6421
        %6423 = vrot.lane.b32.xlu0 %v1018, 32
        %v6424 = vpop.permute.xlu0 %6423
        %6457 = vmatprep.subr.mxu0 0.0
        %6458 = vmatpush1.msra.mxu0 %v6362
        %6459 = vmatprep.subr.mxu0 0.0
        %6460 = vmatpush1.msra.mxu0 %v6364
        %6461 = vmatprep.subr.mxu0 0.0
        %6462 = vmatpush1.msra.mxu0 %v6366
        %6463 = vmatprep.subr.mxu0 0.0
        %6464 = vmatpush1.msra.mxu0 %v6368
        %6465 = vmatprep.subr.mxu0 0.0
        %6466 = vmatpush1.msra.mxu0 %v6370
        %6467 = vmatprep.subr.mxu0 0.0
        %6468 = vmatpush1.msra.mxu0 %v6372
        %6469 = vmatprep.subr.mxu0 0.0
        %6470 = vmatpush1.msra.mxu0 %v6374
        %6471 = vmatprep.subr.mxu0 0.0
        %6472 = vmatpush1.msra.mxu0 %v6376
        %6473 = vmatprep.subr.mxu0 0.0
        %6474 = vmatpush1.msra.mxu0 %v6378
        %6475 = vmatprep.subr.mxu0 0.0
        %6476 = vmatpush1.msra.mxu0 %v6380
        %6477 = vmatprep.subr.mxu0 0.0
        %6478 = vmatpush1.msra.mxu0 %v6382
        %6479 = vmatprep.subr.mxu0 0.0
        %6480 = vmatpush1.msra.mxu0 %v6384
        %6481 = vmatprep.subr.mxu0 0.0
        %6482 = vmatpush1.msra.mxu0 %v6386
        %6483 = vmatprep.subr.mxu0 0.0
        %6484 = vmatpush1.msra.mxu0 %v6388
        %6485 = vmatprep.subr.mxu0 0.0
        %6486 = vmatpush1.msra.mxu0 %v6390
        %6487 = vmatprep.subr.mxu0 0.0
        %6488 = vmatpush1.msra.mxu0 %v6392
        %6489 = vmatprep.subr.mxu0 0.0
        %6490 = vmatpush1.msra.mxu0 %v6394
        %6491 = vmatprep.subr.mxu0 0.0
        %6492 = vmatpush1.msra.mxu0 %v6396
        %6493 = vmatprep.subr.mxu0 0.0
        %6494 = vmatpush1.msra.mxu0 %v6398
        %6495 = vmatprep.subr.mxu0 0.0
        %6496 = vmatpush1.msra.mxu0 %v6400
        %6497 = vmatprep.subr.mxu0 0.0
        %6498 = vmatpush1.msra.mxu0 %v6402
        %6499 = vmatprep.subr.mxu0 0.0
        %6500 = vmatpush1.msra.mxu0 %v6404
        %6501 = vmatprep.subr.mxu0 0.0
        %6502 = vmatpush1.msra.mxu0 %v6406
        %6503 = vmatprep.subr.mxu0 0.0
        %6504 = vmatpush1.msra.mxu0 %v6408
        %6505 = vmatprep.subr.mxu0 0.0
        %6506 = vmatpush1.msra.mxu0 %v6410
        %6507 = vmatprep.subr.mxu0 0.0
        %6508 = vmatpush1.msra.mxu0 %v6412
        %6509 = vmatprep.subr.mxu0 0.0
        %6510 = vmatpush1.msra.mxu0 %v6414
        %6511 = vmatprep.subr.mxu0 0.0
        %6512 = vmatpush1.msra.mxu0 %v6416
        %6513 = vmatprep.subr.mxu0 0.0
        %6514 = vmatpush1.msra.mxu0 %v6418
        %6515 = vmatprep.subr.mxu0 0.0
        %6516 = vmatpush1.msra.mxu0 %v6420
        %6517 = vmatprep.subr.mxu0 0.0
        %6518 = vmatpush1.msra.mxu0 %v6422
        %6519 = vmatprep.subr.mxu0 0.0
        %6520 = vmatpush1.msra.mxu0 %v6424
        %6521 = vmatprep.mubr.f32.mxu0 %v6252
        %6522 = vmatmul.mubr.f32.gmra.mrb[0].mxu0 %v6250
        %v6523 = vpop.f32.mrb[0].mxu0
        %v6524 = vadd.f32 0.0, %v6523
        %v6525 = vpop.f32.mrb[0].mxu0
        %6526 = vmatprep.mubr.f32.mxu0 %v6256
        %6527 = vmatmul.mubr.f32.gmra.mrb[0].mxu0 %v6254
        %v6528 = vpop.f32.mrb[0].mxu0
        %v6529 = vadd.f32 0.0, %v6528
        %v6530 = vpop.f32.mrb[0].mxu0
        %6531 = vmatprep.mubr.f32.mxu0 %v6260
        %6532 = vmatmul.mubr.f32.gmra.mrb[0].mxu0 %v6258
        %v6533 = vpop.f32.mrb[0].mxu0
        %v6534 = vadd.f32 0.0, %v6533
        %v6535 = vpop.f32.mrb[0].mxu0
        %6536 = vmatprep.mubr.f32.mxu0 %v6264
        %6537 = vmatmul.mubr.f32.gmra.mrb[0].mxu0 %v6262
        %v6538 = vpop.f32.mrb[0].mxu0
        %v6539 = vadd.f32 0.0, %v6538
        %v6540 = vpop.f32.mrb[0].mxu0
        %6541 = vmatprep.mubr.f32.mxu0 %v6268
        %6542 = vmatmul.mubr.f32.gmra.mrb[0].mxu0 %v6266
        %v6543 = vpop.f32.mrb[0].mxu0
        %v6544 = vadd.f32 0.0, %v6543
        %v6545 = vpop.f32.mrb[0].mxu0
        %6546 = vmatprep.mubr.f32.mxu0 %v6272
        %6547 = vmatmul.mubr.f32.gmra.mrb[0].mxu0 %v6270
        %v6548 = vpop.f32.mrb[0].mxu0
        %v6549 = vadd.f32 0.0, %v6548
        %v6550 = vpop.f32.mrb[0].mxu0
        %6551 = vmatprep.mubr.f32.mxu0 %v6276
        %6552 = vmatmul.mubr.f32.gmra.mrb[0].mxu0 %v6274
        %v6553 = vpop.f32.mrb[0].mxu0
        %v6554 = vadd.f32 0.0, %v6553
        %v6555 = vpop.f32.mrb[0].mxu0
        %6556 = vmatprep.mubr.f32.mxu0 %v6280
        %6557 = vmatmul.mubr.f32.gmra.mrb[0].mxu0 %v6278
        %v6558 = vpop.f32.mrb[0].mxu0
        %v6559 = vadd.f32 0.0, %v6558
        %v6560 = vpop.f32.mrb[0].mxu0
        %6561 = vmatprep.mubr.f32.mxu0 %v6284
        %6562 = vmatmul.mubr.f32.gmra.mrb[0].mxu0 %v6282
        %v6563 = vpop.f32.mrb[0].mxu0
        %v6564 = vadd.f32 0.0, %v6563
        %v6565 = vpop.f32.mrb[0].mxu0
        %6566 = vmatprep.mubr.f32.mxu0 %v6288
        %6567 = vmatmul.mubr.f32.gmra.mrb[0].mxu0 %v6286
        %v6568 = vpop.f32.mrb[0].mxu0
        %v6569 = vadd.f32 0.0, %v6568
        %v6570 = vpop.f32.mrb[0].mxu0
        %6571 = vmatprep.mubr.f32.mxu0 %v6292
        %6572 = vmatmul.mubr.f32.gmra.mrb[0].mxu0 %v6290
        %v6573 = vpop.f32.mrb[0].mxu0
        %v6574 = vadd.f32 0.0, %v6573
        %v6575 = vpop.f32.mrb[0].mxu0
        %6576 = vmatprep.mubr.f32.mxu0 %v6296
        %6577 = vmatmul.mubr.f32.gmra.mrb[0].mxu0 %v6294
        %v6578 = vpop.f32.mrb[0].mxu0
        %v6579 = vadd.f32 0.0, %v6578
        %v6580 = vpop.f32.mrb[0].mxu0
        %6581 = vmatprep.mubr.f32.mxu0 %v6300
        %6582 = vmatmul.mubr.f32.gmra.mrb[0].mxu0 %v6298
        %v6583 = vpop.f32.mrb[0].mxu0
        %v6584 = vadd.f32 0.0, %v6583
        %v6585 = vpop.f32.mrb[0].mxu0
        %6586 = vmatprep.mubr.f32.mxu0 %v6304
        %6587 = vmatmul.mubr.f32.gmra.mrb[0].mxu0 %v6302
        %v6588 = vpop.f32.mrb[0].mxu0
        %v6589 = vadd.f32 0.0, %v6588
        %v6590 = vpop.f32.mrb[0].mxu0
        %6591 = vmatprep.mubr.f32.mxu0 %v6308
        %6592 = vmatmul.mubr.f32.gmra.mrb[0].mxu0 %v6306
        %v6593 = vpop.f32.mrb[0].mxu0
        %v6594 = vadd.f32 0.0, %v6593
        %v6595 = vpop.f32.mrb[0].mxu0
        %6596 = vmatprep.mubr.f32.mxu0 %v6312
        %6597 = vmatmul.mubr.f32.gmra.mrb[0].mxu0 %v6310
        %v6598 = vpop.f32.mrb[0].mxu0
        %v6599 = vadd.f32 0.0, %v6598
        %v6600 = vpop.f32.mrb[0].mxu0
        %6601 = vdwg.mxu0
        %v6602 = vrcp.pop %v6315
        %v6603 = vrcp.pop %v6318
        %v6604 = vrcp.pop %v6321
        %v6605 = vrcp.pop %v6324
        %v6606 = vrcp.pop %v6327
        %v6607 = vrcp.pop %v6330
        %v6608 = vrcp.pop %v6333
        %v6609 = vrcp.pop %v6336
        %v6610 = vrcp.pop %v6339
        %v6611 = vrcp.pop %v6342
        %v6612 = vrcp.pop %v6345
        %v6613 = vrcp.pop %v6348
        %v6614 = vrcp.pop %v6351
        %v6615 = vrcp.pop %v6354
        %v6616 = vrcp.pop %v6357
        %v6617 = vrcp.pop %v6360
        %v6618 = vmul.f32 %v6524, %v6602
        %v6619 = vmul.f32 %v6529, %v6603
        %v6620 = vmul.f32 %v6534, %v6604
        %v6621 = vmul.f32 %v6539, %v6605
        %v6622 = vmul.f32 %v6544, %v6606
        %v6623 = vmul.f32 %v6549, %v6607
        %v6624 = vmul.f32 %v6554, %v6608
        %v6625 = vmul.f32 %v6559, %v6609
        %v6626 = vmul.f32 %v6564, %v6610
        %v6627 = vmul.f32 %v6569, %v6611
        %v6628 = vmul.f32 %v6574, %v6612
        %v6629 = vmul.f32 %v6579, %v6613
        %v6630 = vmul.f32 %v6584, %v6614
        %v6631 = vmul.f32 %v6589, %v6615
        %v6632 = vmul.f32 %v6594, %v6616
        %v6633 = vmul.f32 %v6599, %v6617
        %6634 = vrot.lane.b32.xlu0 %v939, 16
        %v6635 = vpop.permute.xlu0 %6634
        %6636 = vrot.lane.b32.xlu0 %v940, 16
        %v6637 = vpop.permute.xlu0 %6636
        %6638 = vrot.lane.b32.xlu0 %v941, 16
        %v6639 = vpop.permute.xlu0 %6638
        %6640 = vrot.lane.b32.xlu0 %v942, 16
        %v6641 = vpop.permute.xlu0 %6640
        %6642 = vrot.lane.b32.xlu0 %v943, 16
        %v6643 = vpop.permute.xlu0 %6642
        %6644 = vrot.lane.b32.xlu0 %v944, 16
        %v6645 = vpop.permute.xlu0 %6644
        %6646 = vrot.lane.b32.xlu0 %v945, 16
        %v6647 = vpop.permute.xlu0 %6646
        %6648 = vrot.lane.b32.xlu0 %v946, 16
        %v6649 = vpop.permute.xlu0 %6648
        %6650 = vrot.lane.b32.xlu0 %v947, 16
        %v6651 = vpop.permute.xlu0 %6650
        %6652 = vrot.lane.b32.xlu0 %v948, 16
        %v6653 = vpop.permute.xlu0 %6652
        %6654 = vrot.lane.b32.xlu0 %v949, 16
        %v6655 = vpop.permute.xlu0 %6654
        %6656 = vrot.lane.b32.xlu0 %v950, 16
        %v6657 = vpop.permute.xlu0 %6656
        %6658 = vrot.lane.b32.xlu0 %v951, 16
        %v6659 = vpop.permute.xlu0 %6658
        %6660 = vrot.lane.b32.xlu0 %v952, 16
        %v6661 = vpop.permute.xlu0 %6660
        %6662 = vrot.lane.b32.xlu0 %v953, 16
        %v6663 = vpop.permute.xlu0 %6662
        %6664 = vrot.lane.b32.xlu0 %v954, 16
        %v6665 = vpop.permute.xlu0 %6664
        %6666 = vrot.lane.b32.xlu0 %v955, 16
        %v6667 = vpop.permute.xlu0 %6666
        %6668 = vrot.lane.b32.xlu0 %v956, 16
        %v6669 = vpop.permute.xlu0 %6668
        %6670 = vrot.lane.b32.xlu0 %v957, 16
        %v6671 = vpop.permute.xlu0 %6670
        %6672 = vrot.lane.b32.xlu0 %v958, 16
        %v6673 = vpop.permute.xlu0 %6672
        %6674 = vrot.lane.b32.xlu0 %v959, 16
        %v6675 = vpop.permute.xlu0 %6674
        %6676 = vrot.lane.b32.xlu0 %v960, 16
        %v6677 = vpop.permute.xlu0 %6676
        %6678 = vrot.lane.b32.xlu0 %v961, 16
        %v6679 = vpop.permute.xlu0 %6678
        %6680 = vrot.lane.b32.xlu0 %v962, 16
        %v6681 = vpop.permute.xlu0 %6680
        %6682 = vrot.lane.b32.xlu0 %v963, 16
        %v6683 = vpop.permute.xlu0 %6682
        %6684 = vrot.lane.b32.xlu0 %v964, 16
        %v6685 = vpop.permute.xlu0 %6684
        %6686 = vrot.lane.b32.xlu0 %v965, 16
        %v6687 = vpop.permute.xlu0 %6686
        %6688 = vrot.lane.b32.xlu0 %v966, 16
        %v6689 = vpop.permute.xlu0 %6688
        %6690 = vrot.lane.b32.xlu0 %v967, 16
        %v6691 = vpop.permute.xlu0 %6690
        %6692 = vrot.lane.b32.xlu0 %v968, 16
        %v6693 = vpop.permute.xlu0 %6692
        %6694 = vrot.lane.b32.xlu0 %v969, 16
        %v6695 = vpop.permute.xlu0 %6694
        %6696 = vrot.lane.b32.xlu0 %v970, 16
        %v6697 = vpop.permute.xlu0 %6696
        %6698 = vrot.lane.b32.xlu0 %v971, 16
        %v6699 = vpop.permute.xlu0 %6698
        %6700 = vrot.lane.b32.xlu0 %v972, 16
        %v6701 = vpop.permute.xlu0 %6700
        %6702 = vrot.lane.b32.xlu0 %v973, 16
        %v6703 = vpop.permute.xlu0 %6702
        %6704 = vrot.lane.b32.xlu0 %v974, 16
        %v6705 = vpop.permute.xlu0 %6704
        %6706 = vrot.lane.b32.xlu0 %v975, 16
        %v6707 = vpop.permute.xlu0 %6706
        %6708 = vrot.lane.b32.xlu0 %v976, 16
        %v6709 = vpop.permute.xlu0 %6708
        %6710 = vrot.lane.b32.xlu0 %v977, 16
        %v6711 = vpop.permute.xlu0 %6710
        %6712 = vrot.lane.b32.xlu0 %v978, 16
        %v6713 = vpop.permute.xlu0 %6712
        %6714 = vrot.lane.b32.xlu0 %v979, 16
        %v6715 = vpop.permute.xlu0 %6714
        %6716 = vrot.lane.b32.xlu0 %v980, 16
        %v6717 = vpop.permute.xlu0 %6716
        %6718 = vrot.lane.b32.xlu0 %v981, 16
        %v6719 = vpop.permute.xlu0 %6718
        %6720 = vrot.lane.b32.xlu0 %v982, 16
        %v6721 = vpop.permute.xlu0 %6720
        %6722 = vrot.lane.b32.xlu0 %v983, 16
        %v6723 = vpop.permute.xlu0 %6722
        %6724 = vrot.lane.b32.xlu0 %v984, 16
        %v6725 = vpop.permute.xlu0 %6724
        %6726 = vrot.lane.b32.xlu0 %v985, 16
        %v6727 = vpop.permute.xlu0 %6726
        %6728 = vrot.lane.b32.xlu0 %v986, 16
        %v6729 = vpop.permute.xlu0 %6728
        %v6730 = vsel %vm1019, %v6635, 0
        %v6732 = vsel %vm1019, %v6637, 0
        %v6734 = vsel %vm1019, %v6639, 0
        %v6736 = vsel %vm1019, %v6641, 0
        %v6738 = vsel %vm1019, %v6643, 0
        %v6740 = vsel %vm1019, %v6645, 0
        %v6742 = vsel %vm1019, %v6647, 0
        %v6744 = vsel %vm1019, %v6649, 0
        %v6746 = vsel %vm1019, %v6651, 0
        %v6748 = vsel %vm1019, %v6653, 0
        %v6750 = vsel %vm1019, %v6655, 0
        %v6752 = vsel %vm1019, %v6657, 0
        %v6754 = vsel %vm1019, %v6659, 0
        %v6756 = vsel %vm1019, %v6661, 0
        %v6758 = vsel %vm1019, %v6663, 0
        %v6760 = vsel %vm1019, %v6665, 0
        %v6762 = vsel %vm1019, %v6667, 0
        %v6764 = vsel %vm1019, %v6669, 0
        %v6766 = vsel %vm1019, %v6671, 0
        %v6768 = vsel %vm1019, %v6673, 0
        %v6770 = vsel %vm1019, %v6675, 0
        %v6772 = vsel %vm1019, %v6677, 0
        %v6774 = vsel %vm1019, %v6679, 0
        %v6776 = vsel %vm1019, %v6681, 0
        %v6778 = vsel %vm1019, %v6683, 0
        %v6780 = vsel %vm1019, %v6685, 0
        %v6782 = vsel %vm1019, %v6687, 0
        %v6784 = vsel %vm1019, %v6689, 0
        %v6786 = vsel %vm1019, %v6691, 0
        %v6788 = vsel %vm1019, %v6693, 0
        %v6790 = vsel %vm1019, %v6695, 0
        %v6792 = vsel %vm1019, %v6697, 0
        %v6794 = vsel %vm1019, %v6699, 0
        %v6796 = vsel %vm1019, %v6701, 0
        %v6798 = vsel %vm1019, %v6703, 0
        %v6800 = vsel %vm1019, %v6705, 0
        %v6802 = vsel %vm1019, %v6707, 0
        %v6804 = vsel %vm1019, %v6709, 0
        %v6806 = vsel %vm1019, %v6711, 0
        %v6808 = vsel %vm1019, %v6713, 0
        %v6810 = vsel %vm1019, %v6715, 0
        %v6812 = vsel %vm1019, %v6717, 0
        %v6814 = vsel %vm1019, %v6719, 0
        %v6816 = vsel %vm1019, %v6721, 0
        %v6818 = vsel %vm1019, %v6723, 0
        %v6820 = vsel %vm1019, %v6725, 0
        %v6822 = vsel %vm1019, %v6727, 0
        %v6824 = vsel %vm1019, %v6729, 0
        %6826 = vmatprep.subr.mxu0 0.0
        %6827 = vmatpush1.xpose.msra.mxu0 %v6762
        %6828 = vmatprep.subr.mxu0 0.0
        %6829 = vmatpush1.xpose.msra.mxu0 %v6764
        %6830 = vmatprep.subr.mxu0 0.0
        %6831 = vmatpush1.xpose.msra.mxu0 %v6766
        %6832 = vmatprep.subr.mxu0 0.0
        %6833 = vmatpush1.xpose.msra.mxu0 %v6768
        %6834 = vmatprep.subr.mxu0 0.0
        %6835 = vmatpush1.xpose.msra.mxu0 %v6770
        %6836 = vmatprep.subr.mxu0 0.0
        %6837 = vmatpush1.xpose.msra.mxu0 %v6772
        %6838 = vmatprep.subr.mxu0 0.0
        %6839 = vmatpush1.xpose.msra.mxu0 %v6774
        %6840 = vmatprep.subr.mxu0 0.0
        %6841 = vmatpush1.xpose.msra.mxu0 %v6776
        %6842 = vmatprep.subr.mxu0 0.0
        %6843 = vmatpush1.xpose.msra.mxu0 %v6778
        %6844 = vmatprep.subr.mxu0 0.0
        %6845 = vmatpush1.xpose.msra.mxu0 %v6780
        %6846 = vmatprep.subr.mxu0 0.0
        %6847 = vmatpush1.xpose.msra.mxu0 %v6782
        %6848 = vmatprep.subr.mxu0 0.0
        %6849 = vmatpush1.xpose.msra.mxu0 %v6784
        %6850 = vmatprep.subr.mxu0 0.0
        %6851 = vmatpush1.xpose.msra.mxu0 %v6786
        %6852 = vmatprep.subr.mxu0 0.0
        %6853 = vmatpush1.xpose.msra.mxu0 %v6788
        %6854 = vmatprep.subr.mxu0 0.0
        %6855 = vmatpush1.xpose.msra.mxu0 %v6790
        %6856 = vmatprep.subr.mxu0 0.0
        %6857 = vmatpush1.xpose.msra.mxu0 %v6792
        %6858 = vmatprep.subr.mxu0 0.0
        %6859 = vmatpush1.xpose.msra.mxu0 %v6794
        %6860 = vmatprep.subr.mxu0 0.0
        %6861 = vmatpush1.xpose.msra.mxu0 %v6796
        %6862 = vmatprep.subr.mxu0 0.0
        %6863 = vmatpush1.xpose.msra.mxu0 %v6798
        %6864 = vmatprep.subr.mxu0 0.0
        %6865 = vmatpush1.xpose.msra.mxu0 %v6800
        %6866 = vmatprep.subr.mxu0 0.0
        %6867 = vmatpush1.xpose.msra.mxu0 %v6802
        %6868 = vmatprep.subr.mxu0 0.0
        %6869 = vmatpush1.xpose.msra.mxu0 %v6804
        %6870 = vmatprep.subr.mxu0 0.0
        %6871 = vmatpush1.xpose.msra.mxu0 %v6806
        %6872 = vmatprep.subr.mxu0 0.0
        %6873 = vmatpush1.xpose.msra.mxu0 %v6808
        %6874 = vmatprep.subr.mxu0 0.0
        %6875 = vmatpush1.xpose.msra.mxu0 %v6810
        %6876 = vmatprep.subr.mxu0 0.0
        %6877 = vmatpush1.xpose.msra.mxu0 %v6812
        %6878 = vmatprep.subr.mxu0 0.0
        %6879 = vmatpush1.xpose.msra.mxu0 %v6814
        %6880 = vmatprep.subr.mxu0 0.0
        %6881 = vmatpush1.xpose.msra.mxu0 %v6816
        %6882 = vmatprep.subr.mxu0 0.0
        %6883 = vmatpush1.xpose.msra.mxu0 %v6818
        %6884 = vmatprep.subr.mxu0 0.0
        %6885 = vmatpush1.xpose.msra.mxu0 %v6820
        %6886 = vmatprep.subr.mxu0 0.0
        %6887 = vmatpush1.xpose.msra.mxu0 %v6822
        %6888 = vmatprep.subr.mxu0 0.0
        %6889 = vmatpush1.xpose.msra.mxu0 %v6824
        %6890 = vmatprep.mubr.f32.mxu0 0.0
        %6891 = vmatmul.mubr.f32.gmra.mrb[0].mxu0 %v6730
        %v6892 = vpop.f32.mrb[0].mxu0
        %v6893 = vadd.f32 0.0, %v6892
        %v6894 = vpop.f32.mrb[0].mxu0
        %v6895 = vadd.f32 0.0, %v6894
        %6896 = vmatprep.mubr.f32.mxu0 0.0
        %6897 = vmatmul.mubr.f32.gmra.mrb[0].mxu0 %v6732
        %v6898 = vpop.f32.mrb[0].mxu0
        %v6899 = vadd.f32 0.0, %v6898
        %v6900 = vpop.f32.mrb[0].mxu0
        %v6901 = vadd.f32 0.0, %v6900
        %6902 = vmatprep.mubr.f32.mxu0 0.0
        %6903 = vmatmul.mubr.f32.gmra.mrb[0].mxu0 %v6734
        %v6904 = vpop.f32.mrb[0].mxu0
        %v6905 = vadd.f32 0.0, %v6904
        %v6906 = vpop.f32.mrb[0].mxu0
        %v6907 = vadd.f32 0.0, %v6906
        %6908 = vmatprep.mubr.f32.mxu0 0.0
        %6909 = vmatmul.mubr.f32.gmra.mrb[0].mxu0 %v6736
        %v6910 = vpop.f32.mrb[0].mxu0
        %v6911 = vadd.f32 0.0, %v6910
        %v6912 = vpop.f32.mrb[0].mxu0
        %v6913 = vadd.f32 0.0, %v6912
        %6914 = vmatprep.mubr.f32.mxu0 0.0
        %6915 = vmatmul.mubr.f32.gmra.mrb[0].mxu0 %v6738
        %v6916 = vpop.f32.mrb[0].mxu0
        %v6917 = vadd.f32 0.0, %v6916
        %v6918 = vpop.f32.mrb[0].mxu0
        %v6919 = vadd.f32 0.0, %v6918
        %6920 = vmatprep.mubr.f32.mxu0 0.0
        %6921 = vmatmul.mubr.f32.gmra.mrb[0].mxu0 %v6740
        %v6922 = vpop.f32.mrb[0].mxu0
        %v6923 = vadd.f32 0.0, %v6922
        %v6924 = vpop.f32.mrb[0].mxu0
        %v6925 = vadd.f32 0.0, %v6924
        %6926 = vmatprep.mubr.f32.mxu0 0.0
        %6927 = vmatmul.mubr.f32.gmra.mrb[0].mxu0 %v6742
        %v6928 = vpop.f32.mrb[0].mxu0
        %v6929 = vadd.f32 0.0, %v6928
        %v6930 = vpop.f32.mrb[0].mxu0
        %v6931 = vadd.f32 0.0, %v6930
        %6932 = vmatprep.mubr.f32.mxu0 0.0
        %6933 = vmatmul.mubr.f32.gmra.mrb[0].mxu0 %v6744
        %v6934 = vpop.f32.mrb[0].mxu0
        %v6935 = vadd.f32 0.0, %v6934
        %v6936 = vpop.f32.mrb[0].mxu0
        %v6937 = vadd.f32 0.0, %v6936
        %6938 = vmatprep.mubr.f32.mxu0 0.0
        %6939 = vmatmul.mubr.f32.gmra.mrb[0].mxu0 %v6746
        %v6940 = vpop.f32.mrb[0].mxu0
        %v6941 = vadd.f32 0.0, %v6940
        %v6942 = vpop.f32.mrb[0].mxu0
        %v6943 = vadd.f32 0.0, %v6942
        %6944 = vmatprep.mubr.f32.mxu0 0.0
        %6945 = vmatmul.mubr.f32.gmra.mrb[0].mxu0 %v6748
        %v6946 = vpop.f32.mrb[0].mxu0
        %v6947 = vadd.f32 0.0, %v6946
        %v6948 = vpop.f32.mrb[0].mxu0
        %v6949 = vadd.f32 0.0, %v6948
        %6950 = vmatprep.mubr.f32.mxu0 0.0
        %6951 = vmatmul.mubr.f32.gmra.mrb[0].mxu0 %v6750
        %v6952 = vpop.f32.mrb[0].mxu0
        %v6953 = vadd.f32 0.0, %v6952
        %v6954 = vpop.f32.mrb[0].mxu0
        %v6955 = vadd.f32 0.0, %v6954
        %6956 = vmatprep.mubr.f32.mxu0 0.0
        %6957 = vmatmul.mubr.f32.gmra.mrb[0].mxu0 %v6752
        %v6958 = vpop.f32.mrb[0].mxu0
        %v6959 = vadd.f32 0.0, %v6958
        %v6960 = vpop.f32.mrb[0].mxu0
        %v6961 = vadd.f32 0.0, %v6960
        %6962 = vmatprep.mubr.f32.mxu0 0.0
        %6963 = vmatmul.mubr.f32.gmra.mrb[0].mxu0 %v6754
        %v6964 = vpop.f32.mrb[0].mxu0
        %v6965 = vadd.f32 0.0, %v6964
        %v6966 = vpop.f32.mrb[0].mxu0
        %v6967 = vadd.f32 0.0, %v6966
        %6968 = vmatprep.mubr.f32.mxu0 0.0
        %6969 = vmatmul.mubr.f32.gmra.mrb[0].mxu0 %v6756
        %v6970 = vpop.f32.mrb[0].mxu0
        %v6971 = vadd.f32 0.0, %v6970
        %v6972 = vpop.f32.mrb[0].mxu0
        %v6973 = vadd.f32 0.0, %v6972
        %6974 = vmatprep.mubr.f32.mxu0 0.0
        %6975 = vmatmul.mubr.f32.gmra.mrb[0].mxu0 %v6758
        %v6976 = vpop.f32.mrb[0].mxu0
        %v6977 = vadd.f32 0.0, %v6976
        %v6978 = vpop.f32.mrb[0].mxu0
        %v6979 = vadd.f32 0.0, %v6978
        %6980 = vmatprep.mubr.f32.mxu0 0.0
        %6981 = vmatmul.mubr.f32.gmra.mrb[0].mxu0 %v6760
        %v6982 = vpop.f32.mrb[0].mxu0
        %v6983 = vadd.f32 0.0, %v6982
        %v6984 = vpop.f32.mrb[0].mxu0
        %v6985 = vadd.f32 0.0, %v6984
        %6986 = vdwg.mxu0
        %v6987 = vmax.f32 %v6893, %v6895
        %6988 = vmax.xlane.f32.xlu0 %v6987
        %v6989 = vpop.xlane.xlu0 %6988
        %v6990 = vmax.f32 %v6899, %v6901
        %6991 = vmax.xlane.f32.xlu0 %v6990
        %v6992 = vpop.xlane.xlu0 %6991
        %v6993 = vmax.f32 %v6905, %v6907
        %6994 = vmax.xlane.f32.xlu0 %v6993
        %v6995 = vpop.xlane.xlu0 %6994
        %v6996 = vmax.f32 %v6911, %v6913
        %6997 = vmax.xlane.f32.xlu0 %v6996
        %v6998 = vpop.xlane.xlu0 %6997
        %v6999 = vmax.f32 %v6917, %v6919
        %7000 = vmax.xlane.f32.xlu0 %v6999
        %v7001 = vpop.xlane.xlu0 %7000
        %v7002 = vmax.f32 %v6923, %v6925
        %7003 = vmax.xlane.f32.xlu0 %v7002
        %v7004 = vpop.xlane.xlu0 %7003
        %v7005 = vmax.f32 %v6929, %v6931
        %7006 = vmax.xlane.f32.xlu0 %v7005
        %v7007 = vpop.xlane.xlu0 %7006
        %v7008 = vmax.f32 %v6935, %v6937
        %7009 = vmax.xlane.f32.xlu0 %v7008
        %v7010 = vpop.xlane.xlu0 %7009
        %v7011 = vmax.f32 %v6941, %v6943
        %7012 = vmax.xlane.f32.xlu0 %v7011
        %v7013 = vpop.xlane.xlu0 %7012
        %v7014 = vmax.f32 %v6947, %v6949
        %7015 = vmax.xlane.f32.xlu0 %v7014
        %v7016 = vpop.xlane.xlu0 %7015
        %v7017 = vmax.f32 %v6953, %v6955
        %7018 = vmax.xlane.f32.xlu0 %v7017
        %v7019 = vpop.xlane.xlu0 %7018
        %v7020 = vmax.f32 %v6959, %v6961
        %7021 = vmax.xlane.f32.xlu0 %v7020
        %v7022 = vpop.xlane.xlu0 %7021
        %v7023 = vmax.f32 %v6965, %v6967
        %7024 = vmax.xlane.f32.xlu0 %v7023
        %v7025 = vpop.xlane.xlu0 %7024
        %v7026 = vmax.f32 %v6971, %v6973
        %7027 = vmax.xlane.f32.xlu0 %v7026
        %v7028 = vpop.xlane.xlu0 %7027
        %v7029 = vmax.f32 %v6977, %v6979
        %7030 = vmax.xlane.f32.xlu0 %v7029
        %v7031 = vpop.xlane.xlu0 %7030
        %v7032 = vmax.f32 %v6983, %v6985
        %7033 = vmax.xlane.f32.xlu0 %v7032
        %v7034 = vpop.xlane.xlu0 %7033
        %v7035 = vsub.f32 %v6893, %v6989
        %v7036 = vsub.f32 %v6895, %v6989
        %v7037 = vsub.f32 %v6899, %v6992
        %v7038 = vsub.f32 %v6901, %v6992
        %v7039 = vsub.f32 %v6905, %v6995
        %v7040 = vsub.f32 %v6907, %v6995
        %v7041 = vsub.f32 %v6911, %v6998
        %v7042 = vsub.f32 %v6913, %v6998
        %v7043 = vsub.f32 %v6917, %v7001
        %v7044 = vsub.f32 %v6919, %v7001
        %v7045 = vsub.f32 %v6923, %v7004
        %v7046 = vsub.f32 %v6925, %v7004
        %v7047 = vsub.f32 %v6929, %v7007
        %v7048 = vsub.f32 %v6931, %v7007
        %v7049 = vsub.f32 %v6935, %v7010
        %v7050 = vsub.f32 %v6937, %v7010
        %v7051 = vsub.f32 %v6941, %v7013
        %v7052 = vsub.f32 %v6943, %v7013
        %v7053 = vsub.f32 %v6947, %v7016
        %v7054 = vsub.f32 %v6949, %v7016
        %v7055 = vsub.f32 %v6953, %v7019
        %v7056 = vsub.f32 %v6955, %v7019
        %v7057 = vsub.f32 %v6959, %v7022
        %v7058 = vsub.f32 %v6961, %v7022
        %v7059 = vsub.f32 %v6965, %v7025
        %v7060 = vsub.f32 %v6967, %v7025
        %v7061 = vsub.f32 %v6971, %v7028
        %v7062 = vsub.f32 %v6973, %v7028
        %v7063 = vsub.f32 %v6977, %v7031
        %v7064 = vsub.f32 %v6979, %v7031
        %v7065 = vsub.f32 %v6983, %v7034
        %v7066 = vsub.f32 %v6985, %v7034
        %v7067 = vmul.f32 %v7035, 1.442695
        %v7068 = vpow.pop %v7067
        %v7069 = vmul.f32 %v7036, 1.442695
        %v7070 = vpow.pop %v7069
        %v7071 = vmul.f32 %v7037, 1.442695
        %v7072 = vpow.pop %v7071
        %v7073 = vmul.f32 %v7038, 1.442695
        %v7074 = vpow.pop %v7073
        %v7075 = vmul.f32 %v7039, 1.442695
        %v7076 = vpow.pop %v7075
        %v7077 = vmul.f32 %v7040, 1.442695
        %v7078 = vpow.pop %v7077
        %v7079 = vmul.f32 %v7041, 1.442695
        %v7080 = vpow.pop %v7079
        %v7081 = vmul.f32 %v7042, 1.442695
        %v7082 = vpow.pop %v7081
        %v7083 = vmul.f32 %v7043, 1.442695
        %v7084 = vpow.pop %v7083
        %v7085 = vmul.f32 %v7044, 1.442695
        %v7086 = vpow.pop %v7085
        %v7087 = vmul.f32 %v7045, 1.442695
        %v7088 = vpow.pop %v7087
        %v7089 = vmul.f32 %v7046, 1.442695
        %v7090 = vpow.pop %v7089
        %v7091 = vmul.f32 %v7047, 1.442695
        %v7092 = vpow.pop %v7091
        %v7093 = vmul.f32 %v7048, 1.442695
        %v7094 = vpow.pop %v7093
        %v7095 = vmul.f32 %v7049, 1.442695
        %v7096 = vpow.pop %v7095
        %v7097 = vmul.f32 %v7050, 1.442695
        %v7098 = vpow.pop %v7097
        %v7099 = vmul.f32 %v7051, 1.442695
        %v7100 = vpow.pop %v7099
        %v7101 = vmul.f32 %v7052, 1.442695
        %v7102 = vpow.pop %v7101
        %v7103 = vmul.f32 %v7053, 1.442695
        %v7104 = vpow.pop %v7103
        %v7105 = vmul.f32 %v7054, 1.442695
        %v7106 = vpow.pop %v7105
        %v7107 = vmul.f32 %v7055, 1.442695
        %v7108 = vpow.pop %v7107
        %v7109 = vmul.f32 %v7056, 1.442695
        %v7110 = vpow.pop %v7109
        %v7111 = vmul.f32 %v7057, 1.442695
        %v7112 = vpow.pop %v7111
        %v7113 = vmul.f32 %v7058, 1.442695
        %v7114 = vpow.pop %v7113
        %v7115 = vmul.f32 %v7059, 1.442695
        %v7116 = vpow.pop %v7115
        %v7117 = vmul.f32 %v7060, 1.442695
        %v7118 = vpow.pop %v7117
        %v7119 = vmul.f32 %v7061, 1.442695
        %v7120 = vpow.pop %v7119
        %v7121 = vmul.f32 %v7062, 1.442695
        %v7122 = vpow.pop %v7121
        %v7123 = vmul.f32 %v7063, 1.442695
        %v7124 = vpow.pop %v7123
        %v7125 = vmul.f32 %v7064, 1.442695
        %v7126 = vpow.pop %v7125
        %v7127 = vmul.f32 %v7065, 1.442695
        %v7128 = vpow.pop %v7127
        %v7129 = vmul.f32 %v7066, 1.442695
        %v7130 = vpow.pop %v7129
        %v7131 = vadd.f32 %v7068, %v7070
        %7132 = vadd.xlane.f32.xlu0 %v7131
        %v7133 = vpop.xlane.xlu0 %7132
        %v7134 = vadd.f32 %v7072, %v7074
        %7135 = vadd.xlane.f32.xlu0 %v7134
        %v7136 = vpop.xlane.xlu0 %7135
        %v7137 = vadd.f32 %v7076, %v7078
        %7138 = vadd.xlane.f32.xlu0 %v7137
        %v7139 = vpop.xlane.xlu0 %7138
        %v7140 = vadd.f32 %v7080, %v7082
        %7141 = vadd.xlane.f32.xlu0 %v7140
        %v7142 = vpop.xlane.xlu0 %7141
        %v7143 = vadd.f32 %v7084, %v7086
        %7144 = vadd.xlane.f32.xlu0 %v7143
        %v7145 = vpop.xlane.xlu0 %7144
        %v7146 = vadd.f32 %v7088, %v7090
        %7147 = vadd.xlane.f32.xlu0 %v7146
        %v7148 = vpop.xlane.xlu0 %7147
        %v7149 = vadd.f32 %v7092, %v7094
        %7150 = vadd.xlane.f32.xlu0 %v7149
        %v7151 = vpop.xlane.xlu0 %7150
        %v7152 = vadd.f32 %v7096, %v7098
        %7153 = vadd.xlane.f32.xlu0 %v7152
        %v7154 = vpop.xlane.xlu0 %7153
        %v7155 = vadd.f32 %v7100, %v7102
        %7156 = vadd.xlane.f32.xlu0 %v7155
        %v7157 = vpop.xlane.xlu0 %7156
        %v7158 = vadd.f32 %v7104, %v7106
        %7159 = vadd.xlane.f32.xlu0 %v7158
        %v7160 = vpop.xlane.xlu0 %7159
        %v7161 = vadd.f32 %v7108, %v7110
        %7162 = vadd.xlane.f32.xlu0 %v7161
        %v7163 = vpop.xlane.xlu0 %7162
        %v7164 = vadd.f32 %v7112, %v7114
        %7165 = vadd.xlane.f32.xlu0 %v7164
        %v7166 = vpop.xlane.xlu0 %7165
        %v7167 = vadd.f32 %v7116, %v7118
        %7168 = vadd.xlane.f32.xlu0 %v7167
        %v7169 = vpop.xlane.xlu0 %7168
        %v7170 = vadd.f32 %v7120, %v7122
        %7171 = vadd.xlane.f32.xlu0 %v7170
        %v7172 = vpop.xlane.xlu0 %7171
        %v7173 = vadd.f32 %v7124, %v7126
        %7174 = vadd.xlane.f32.xlu0 %v7173
        %v7175 = vpop.xlane.xlu0 %7174
        %v7176 = vadd.f32 %v7128, %v7130
        %7177 = vadd.xlane.f32.xlu0 %v7176
        %v7178 = vpop.xlane.xlu0 %7177
        %7179 = vrot.lane.b32.xlu0 %v987, 16
        %v7180 = vpop.permute.xlu0 %7179
        %7181 = vrot.lane.b32.xlu0 %v988, 16
        %v7182 = vpop.permute.xlu0 %7181
        %7183 = vrot.lane.b32.xlu0 %v989, 16
        %v7184 = vpop.permute.xlu0 %7183
        %7185 = vrot.lane.b32.xlu0 %v990, 16
        %v7186 = vpop.permute.xlu0 %7185
        %7187 = vrot.lane.b32.xlu0 %v991, 16
        %v7188 = vpop.permute.xlu0 %7187
        %7189 = vrot.lane.b32.xlu0 %v992, 16
        %v7190 = vpop.permute.xlu0 %7189
        %7191 = vrot.lane.b32.xlu0 %v993, 16
        %v7192 = vpop.permute.xlu0 %7191
        %7193 = vrot.lane.b32.xlu0 %v994, 16
        %v7194 = vpop.permute.xlu0 %7193
        %7195 = vrot.lane.b32.xlu0 %v995, 16
        %v7196 = vpop.permute.xlu0 %7195
        %7197 = vrot.lane.b32.xlu0 %v996, 16
        %v7198 = vpop.permute.xlu0 %7197
        %7199 = vrot.lane.b32.xlu0 %v997, 16
        %v7200 = vpop.permute.xlu0 %7199
        %7201 = vrot.lane.b32.xlu0 %v998, 16
        %v7202 = vpop.permute.xlu0 %7201
        %7203 = vrot.lane.b32.xlu0 %v999, 16
        %v7204 = vpop.permute.xlu0 %7203
        %7205 = vrot.lane.b32.xlu0 %v1000, 16
        %v7206 = vpop.permute.xlu0 %7205
        %7207 = vrot.lane.b32.xlu0 %v1001, 16
        %v7208 = vpop.permute.xlu0 %7207
        %7209 = vrot.lane.b32.xlu0 %v1002, 16
        %v7210 = vpop.permute.xlu0 %7209
        %7211 = vrot.lane.b32.xlu0 %v1003, 16
        %v7212 = vpop.permute.xlu0 %7211
        %7213 = vrot.lane.b32.xlu0 %v1004, 16
        %v7214 = vpop.permute.xlu0 %7213
        %7215 = vrot.lane.b32.xlu0 %v1005, 16
        %v7216 = vpop.permute.xlu0 %7215
        %7217 = vrot.lane.b32.xlu0 %v1006, 16
        %v7218 = vpop.permute.xlu0 %7217
        %7219 = vrot.lane.b32.xlu0 %v1007, 16
        %v7220 = vpop.permute.xlu0 %7219
        %7221 = vrot.lane.b32.xlu0 %v1008, 16
        %v7222 = vpop.permute.xlu0 %7221
        %7223 = vrot.lane.b32.xlu0 %v1009, 16
        %v7224 = vpop.permute.xlu0 %7223
        %7225 = vrot.lane.b32.xlu0 %v1010, 16
        %v7226 = vpop.permute.xlu0 %7225
        %7227 = vrot.lane.b32.xlu0 %v1011, 16
        %v7228 = vpop.permute.xlu0 %7227
        %7229 = vrot.lane.b32.xlu0 %v1012, 16
        %v7230 = vpop.permute.xlu0 %7229
        %7231 = vrot.lane.b32.xlu0 %v1013, 16
        %v7232 = vpop.permute.xlu0 %7231
        %7233 = vrot.lane.b32.xlu0 %v1014, 16
        %v7234 = vpop.permute.xlu0 %7233
        %7235 = vrot.lane.b32.xlu0 %v1015, 16
        %v7236 = vpop.permute.xlu0 %7235
        %7237 = vrot.lane.b32.xlu0 %v1016, 16
        %v7238 = vpop.permute.xlu0 %7237
        %7239 = vrot.lane.b32.xlu0 %v1017, 16
        %v7240 = vpop.permute.xlu0 %7239
        %7241 = vrot.lane.b32.xlu0 %v1018, 16
        %v7242 = vpop.permute.xlu0 %7241
        %7275 = vmatprep.subr.mxu0 0.0
        %7276 = vmatpush1.msra.mxu0 %v7180
        %7277 = vmatprep.subr.mxu0 0.0
        %7278 = vmatpush1.msra.mxu0 %v7182
        %7279 = vmatprep.subr.mxu0 0.0
        %7280 = vmatpush1.msra.mxu0 %v7184
        %7281 = vmatprep.subr.mxu0 0.0
        %7282 = vmatpush1.msra.mxu0 %v7186
        %7283 = vmatprep.subr.mxu0 0.0
        %7284 = vmatpush1.msra.mxu0 %v7188
        %7285 = vmatprep.subr.mxu0 0.0
        %7286 = vmatpush1.msra.mxu0 %v7190
        %7287 = vmatprep.subr.mxu0 0.0
        %7288 = vmatpush1.msra.mxu0 %v7192
        %7289 = vmatprep.subr.mxu0 0.0
        %7290 = vmatpush1.msra.mxu0 %v7194
        %7291 = vmatprep.subr.mxu0 0.0
        %7292 = vmatpush1.msra.mxu0 %v7196
        %7293 = vmatprep.subr.mxu0 0.0
        %7294 = vmatpush1.msra.mxu0 %v7198
        %7295 = vmatprep.subr.mxu0 0.0
        %7296 = vmatpush1.msra.mxu0 %v7200
        %7297 = vmatprep.subr.mxu0 0.0
        %7298 = vmatpush1.msra.mxu0 %v7202
        %7299 = vmatprep.subr.mxu0 0.0
        %7300 = vmatpush1.msra.mxu0 %v7204
        %7301 = vmatprep.subr.mxu0 0.0
        %7302 = vmatpush1.msra.mxu0 %v7206
        %7303 = vmatprep.subr.mxu0 0.0
        %7304 = vmatpush1.msra.mxu0 %v7208
        %7305 = vmatprep.subr.mxu0 0.0
        %7306 = vmatpush1.msra.mxu0 %v7210
        %7307 = vmatprep.subr.mxu0 0.0
        %7308 = vmatpush1.msra.mxu0 %v7212
        %7309 = vmatprep.subr.mxu0 0.0
        %7310 = vmatpush1.msra.mxu0 %v7214
        %7311 = vmatprep.subr.mxu0 0.0
        %7312 = vmatpush1.msra.mxu0 %v7216
        %7313 = vmatprep.subr.mxu0 0.0
        %7314 = vmatpush1.msra.mxu0 %v7218
        %7315 = vmatprep.subr.mxu0 0.0
        %7316 = vmatpush1.msra.mxu0 %v7220
        %7317 = vmatprep.subr.mxu0 0.0
        %7318 = vmatpush1.msra.mxu0 %v7222
        %7319 = vmatprep.subr.mxu0 0.0
        %7320 = vmatpush1.msra.mxu0 %v7224
        %7321 = vmatprep.subr.mxu0 0.0
        %7322 = vmatpush1.msra.mxu0 %v7226
        %7323 = vmatprep.subr.mxu0 0.0
        %7324 = vmatpush1.msra.mxu0 %v7228
        %7325 = vmatprep.subr.mxu0 0.0
        %7326 = vmatpush1.msra.mxu0 %v7230
        %7327 = vmatprep.subr.mxu0 0.0
        %7328 = vmatpush1.msra.mxu0 %v7232
        %7329 = vmatprep.subr.mxu0 0.0
        %7330 = vmatpush1.msra.mxu0 %v7234
        %7331 = vmatprep.subr.mxu0 0.0
        %7332 = vmatpush1.msra.mxu0 %v7236
        %7333 = vmatprep.subr.mxu0 0.0
        %7334 = vmatpush1.msra.mxu0 %v7238
        %7335 = vmatprep.subr.mxu0 0.0
        %7336 = vmatpush1.msra.mxu0 %v7240
        %7337 = vmatprep.subr.mxu0 0.0
        %7338 = vmatpush1.msra.mxu0 %v7242
        %7339 = vmatprep.mubr.f32.mxu0 %v7070
        %7340 = vmatmul.mubr.f32.gmra.mrb[0].mxu0 %v7068
        %v7341 = vpop.f32.mrb[0].mxu0
        %v7342 = vadd.f32 0.0, %v7341
        %v7343 = vpop.f32.mrb[0].mxu0
        %7344 = vmatprep.mubr.f32.mxu0 %v7074
        %7345 = vmatmul.mubr.f32.gmra.mrb[0].mxu0 %v7072
        %v7346 = vpop.f32.mrb[0].mxu0
        %v7347 = vadd.f32 0.0, %v7346
        %v7348 = vpop.f32.mrb[0].mxu0
        %7349 = vmatprep.mubr.f32.mxu0 %v7078
        %7350 = vmatmul.mubr.f32.gmra.mrb[0].mxu0 %v7076
        %v7351 = vpop.f32.mrb[0].mxu0
        %v7352 = vadd.f32 0.0, %v7351
        %v7353 = vpop.f32.mrb[0].mxu0
        %7354 = vmatprep.mubr.f32.mxu0 %v7082
        %7355 = vmatmul.mubr.f32.gmra.mrb[0].mxu0 %v7080
        %v7356 = vpop.f32.mrb[0].mxu0
        %v7357 = vadd.f32 0.0, %v7356
        %v7358 = vpop.f32.mrb[0].mxu0
        %7359 = vmatprep.mubr.f32.mxu0 %v7086
        %7360 = vmatmul.mubr.f32.gmra.mrb[0].mxu0 %v7084
        %v7361 = vpop.f32.mrb[0].mxu0
        %v7362 = vadd.f32 0.0, %v7361
        %v7363 = vpop.f32.mrb[0].mxu0
        %7364 = vmatprep.mubr.f32.mxu0 %v7090
        %7365 = vmatmul.mubr.f32.gmra.mrb[0].mxu0 %v7088
        %v7366 = vpop.f32.mrb[0].mxu0
        %v7367 = vadd.f32 0.0, %v7366
        %v7368 = vpop.f32.mrb[0].mxu0
        %7369 = vmatprep.mubr.f32.mxu0 %v7094
        %7370 = vmatmul.mubr.f32.gmra.mrb[0].mxu0 %v7092
        %v7371 = vpop.f32.mrb[0].mxu0
        %v7372 = vadd.f32 0.0, %v7371
        %v7373 = vpop.f32.mrb[0].mxu0
        %7374 = vmatprep.mubr.f32.mxu0 %v7098
        %7375 = vmatmul.mubr.f32.gmra.mrb[0].mxu0 %v7096
        %v7376 = vpop.f32.mrb[0].mxu0
        %v7377 = vadd.f32 0.0, %v7376
        %v7378 = vpop.f32.mrb[0].mxu0
        %7379 = vmatprep.mubr.f32.mxu0 %v7102
        %7380 = vmatmul.mubr.f32.gmra.mrb[0].mxu0 %v7100
        %v7381 = vpop.f32.mrb[0].mxu0
        %v7382 = vadd.f32 0.0, %v7381
        %v7383 = vpop.f32.mrb[0].mxu0
        %7384 = vmatprep.mubr.f32.mxu0 %v7106
        %7385 = vmatmul.mubr.f32.gmra.mrb[0].mxu0 %v7104
        %v7386 = vpop.f32.mrb[0].mxu0
        %v7387 = vadd.f32 0.0, %v7386
        %v7388 = vpop.f32.mrb[0].mxu0
        %7389 = vmatprep.mubr.f32.mxu0 %v7110
        %7390 = vmatmul.mubr.f32.gmra.mrb[0].mxu0 %v7108
        %v7391 = vpop.f32.mrb[0].mxu0
        %v7392 = vadd.f32 0.0, %v7391
        %v7393 = vpop.f32.mrb[0].mxu0
        %7394 = vmatprep.mubr.f32.mxu0 %v7114
        %7395 = vmatmul.mubr.f32.gmra.mrb[0].mxu0 %v7112
        %v7396 = vpop.f32.mrb[0].mxu0
        %v7397 = vadd.f32 0.0, %v7396
        %v7398 = vpop.f32.mrb[0].mxu0
        %7399 = vmatprep.mubr.f32.mxu0 %v7118
        %7400 = vmatmul.mubr.f32.gmra.mrb[0].mxu0 %v7116
        %v7401 = vpop.f32.mrb[0].mxu0
        %v7402 = vadd.f32 0.0, %v7401
        %v7403 = vpop.f32.mrb[0].mxu0
        %7404 = vmatprep.mubr.f32.mxu0 %v7122
        %7405 = vmatmul.mubr.f32.gmra.mrb[0].mxu0 %v7120
        %v7406 = vpop.f32.mrb[0].mxu0
        %v7407 = vadd.f32 0.0, %v7406
        %v7408 = vpop.f32.mrb[0].mxu0
        %7409 = vmatprep.mubr.f32.mxu0 %v7126
        %7410 = vmatmul.mubr.f32.gmra.mrb[0].mxu0 %v7124
        %v7411 = vpop.f32.mrb[0].mxu0
        %v7412 = vadd.f32 0.0, %v7411
        %v7413 = vpop.f32.mrb[0].mxu0
        %7414 = vmatprep.mubr.f32.mxu0 %v7130
        %7415 = vmatmul.mubr.f32.gmra.mrb[0].mxu0 %v7128
        %v7416 = vpop.f32.mrb[0].mxu0
        %v7417 = vadd.f32 0.0, %v7416
        %v7418 = vpop.f32.mrb[0].mxu0
        %7419 = vdwg.mxu0
        %v7420 = vrcp.pop %v7133
        %v7421 = vrcp.pop %v7136
        %v7422 = vrcp.pop %v7139
        %v7423 = vrcp.pop %v7142
        %v7424 = vrcp.pop %v7145
        %v7425 = vrcp.pop %v7148
        %v7426 = vrcp.pop %v7151
        %v7427 = vrcp.pop %v7154
        %v7428 = vrcp.pop %v7157
        %v7429 = vrcp.pop %v7160
        %v7430 = vrcp.pop %v7163
        %v7431 = vrcp.pop %v7166
        %v7432 = vrcp.pop %v7169
        %v7433 = vrcp.pop %v7172
        %v7434 = vrcp.pop %v7175
        %v7435 = vrcp.pop %v7178
        %v7436 = vmul.f32 %v7342, %v7420
        %v7437 = vmul.f32 %v7347, %v7421
        %v7438 = vmul.f32 %v7352, %v7422
        %v7439 = vmul.f32 %v7357, %v7423
        %v7440 = vmul.f32 %v7362, %v7424
        %v7441 = vmul.f32 %v7367, %v7425
        %v7442 = vmul.f32 %v7372, %v7426
        %v7443 = vmul.f32 %v7377, %v7427
        %v7444 = vmul.f32 %v7382, %v7428
        %v7445 = vmul.f32 %v7387, %v7429
        %v7446 = vmul.f32 %v7392, %v7430
        %v7447 = vmul.f32 %v7397, %v7431
        %v7448 = vmul.f32 %v7402, %v7432
        %v7449 = vmul.f32 %v7407, %v7433
        %v7450 = vmul.f32 %v7412, %v7434
        %v7451 = vmul.f32 %v7417, %v7435
        %7468 = vrot.lane.b32.xlu0 %v2528, 16
        %v7469 = vpop.permute.xlu0 %7468
        %7470 = vrot.lane.b32.xlu0 %v2529, 16
        %v7471 = vpop.permute.xlu0 %7470
        %7472 = vrot.lane.b32.xlu0 %v2530, 16
        %v7473 = vpop.permute.xlu0 %7472
        %7474 = vrot.lane.b32.xlu0 %v2531, 16
        %v7475 = vpop.permute.xlu0 %7474
        %7476 = vrot.lane.b32.xlu0 %v2532, 16
        %v7477 = vpop.permute.xlu0 %7476
        %7478 = vrot.lane.b32.xlu0 %v2533, 16
        %v7479 = vpop.permute.xlu0 %7478
        %7480 = vrot.lane.b32.xlu0 %v2534, 16
        %v7481 = vpop.permute.xlu0 %7480
        %7482 = vrot.lane.b32.xlu0 %v2535, 16
        %v7483 = vpop.permute.xlu0 %7482
        %7484 = vrot.lane.b32.xlu0 %v2536, 16
        %v7485 = vpop.permute.xlu0 %7484
        %7486 = vrot.lane.b32.xlu0 %v2537, 16
        %v7487 = vpop.permute.xlu0 %7486
        %7488 = vrot.lane.b32.xlu0 %v2538, 16
        %v7489 = vpop.permute.xlu0 %7488
        %7490 = vrot.lane.b32.xlu0 %v2539, 16
        %v7491 = vpop.permute.xlu0 %7490
        %7492 = vrot.lane.b32.xlu0 %v2540, 16
        %v7493 = vpop.permute.xlu0 %7492
        %7494 = vrot.lane.b32.xlu0 %v2541, 16
        %v7495 = vpop.permute.xlu0 %7494
        %7496 = vrot.lane.b32.xlu0 %v2542, 16
        %v7497 = vpop.permute.xlu0 %7496
        %7498 = vrot.lane.b32.xlu0 %v2543, 16
        %v7499 = vpop.permute.xlu0 %7498
        %7532 = vrot.lane.b32.xlu0 %v3346, 32
        %v7533 = vpop.permute.xlu0 %7532
        %7534 = vrot.lane.b32.xlu0 %v3347, 32
        %v7535 = vpop.permute.xlu0 %7534
        %7536 = vrot.lane.b32.xlu0 %v3348, 32
        %v7537 = vpop.permute.xlu0 %7536
        %7538 = vrot.lane.b32.xlu0 %v3349, 32
        %v7539 = vpop.permute.xlu0 %7538
        %7540 = vrot.lane.b32.xlu0 %v3350, 32
        %v7541 = vpop.permute.xlu0 %7540
        %7542 = vrot.lane.b32.xlu0 %v3351, 32
        %v7543 = vpop.permute.xlu0 %7542
        %7544 = vrot.lane.b32.xlu0 %v3352, 32
        %v7545 = vpop.permute.xlu0 %7544
        %7546 = vrot.lane.b32.xlu0 %v3353, 32
        %v7547 = vpop.permute.xlu0 %7546
        %7548 = vrot.lane.b32.xlu0 %v3354, 32
        %v7549 = vpop.permute.xlu0 %7548
        %7550 = vrot.lane.b32.xlu0 %v3355, 32
        %v7551 = vpop.permute.xlu0 %7550
        %7552 = vrot.lane.b32.xlu0 %v3356, 32
        %v7553 = vpop.permute.xlu0 %7552
        %7554 = vrot.lane.b32.xlu0 %v3357, 32
        %v7555 = vpop.permute.xlu0 %7554
        %7556 = vrot.lane.b32.xlu0 %v3358, 32
        %v7557 = vpop.permute.xlu0 %7556
        %7558 = vrot.lane.b32.xlu0 %v3359, 32
        %v7559 = vpop.permute.xlu0 %7558
        %7560 = vrot.lane.b32.xlu0 %v3360, 32
        %v7561 = vpop.permute.xlu0 %7560
        %7562 = vrot.lane.b32.xlu0 %v3361, 32
        %v7563 = vpop.permute.xlu0 %7562
        %7596 = vrot.lane.b32.xlu0 %v4164, 48
        %v7597 = vpop.permute.xlu0 %7596
        %7598 = vrot.lane.b32.xlu0 %v4165, 48
        %v7599 = vpop.permute.xlu0 %7598
        %7600 = vrot.lane.b32.xlu0 %v4166, 48
        %v7601 = vpop.permute.xlu0 %7600
        %7602 = vrot.lane.b32.xlu0 %v4167, 48
        %v7603 = vpop.permute.xlu0 %7602
        %7604 = vrot.lane.b32.xlu0 %v4168, 48
        %v7605 = vpop.permute.xlu0 %7604
        %7606 = vrot.lane.b32.xlu0 %v4169, 48
        %v7607 = vpop.permute.xlu0 %7606
        %7608 = vrot.lane.b32.xlu0 %v4170, 48
        %v7609 = vpop.permute.xlu0 %7608
        %7610 = vrot.lane.b32.xlu0 %v4171, 48
        %v7611 = vpop.permute.xlu0 %7610
        %7612 = vrot.lane.b32.xlu0 %v4172, 48
        %v7613 = vpop.permute.xlu0 %7612
        %7614 = vrot.lane.b32.xlu0 %v4173, 48
        %v7615 = vpop.permute.xlu0 %7614
        %7616 = vrot.lane.b32.xlu0 %v4174, 48
        %v7617 = vpop.permute.xlu0 %7616
        %7618 = vrot.lane.b32.xlu0 %v4175, 48
        %v7619 = vpop.permute.xlu0 %7618
        %7620 = vrot.lane.b32.xlu0 %v4176, 48
        %v7621 = vpop.permute.xlu0 %7620
        %7622 = vrot.lane.b32.xlu0 %v4177, 48
        %v7623 = vpop.permute.xlu0 %7622
        %7624 = vrot.lane.b32.xlu0 %v4178, 48
        %v7625 = vpop.permute.xlu0 %7624
        %7626 = vrot.lane.b32.xlu0 %v4179, 48
        %v7627 = vpop.permute.xlu0 %7626
        %7660 = vrot.lane.b32.xlu0 %v4982, 64
        %v7661 = vpop.permute.xlu0 %7660
        %7662 = vrot.lane.b32.xlu0 %v4983, 64
        %v7663 = vpop.permute.xlu0 %7662
        %7664 = vrot.lane.b32.xlu0 %v4984, 64
        %v7665 = vpop.permute.xlu0 %7664
        %7666 = vrot.lane.b32.xlu0 %v4985, 64
        %v7667 = vpop.permute.xlu0 %7666
        %7668 = vrot.lane.b32.xlu0 %v4986, 64
        %v7669 = vpop.permute.xlu0 %7668
        %7670 = vrot.lane.b32.xlu0 %v4987, 64
        %v7671 = vpop.permute.xlu0 %7670
        %7672 = vrot.lane.b32.xlu0 %v4988, 64
        %v7673 = vpop.permute.xlu0 %7672
        %7674 = vrot.lane.b32.xlu0 %v4989, 64
        %v7675 = vpop.permute.xlu0 %7674
        %7676 = vrot.lane.b32.xlu0 %v4990, 64
        %v7677 = vpop.permute.xlu0 %7676
        %7678 = vrot.lane.b32.xlu0 %v4991, 64
        %v7679 = vpop.permute.xlu0 %7678
        %7680 = vrot.lane.b32.xlu0 %v4992, 64
        %v7681 = vpop.permute.xlu0 %7680
        %7682 = vrot.lane.b32.xlu0 %v4993, 64
        %v7683 = vpop.permute.xlu0 %7682
        %7684 = vrot.lane.b32.xlu0 %v4994, 64
        %v7685 = vpop.permute.xlu0 %7684
        %7686 = vrot.lane.b32.xlu0 %v4995, 64
        %v7687 = vpop.permute.xlu0 %7686
        %7688 = vrot.lane.b32.xlu0 %v4996, 64
        %v7689 = vpop.permute.xlu0 %7688
        %7690 = vrot.lane.b32.xlu0 %v4997, 64
        %v7691 = vpop.permute.xlu0 %7690
        %7724 = vrot.lane.b32.xlu0 %v5800, 80
        %v7725 = vpop.permute.xlu0 %7724
        %7726 = vrot.lane.b32.xlu0 %v5801, 80
        %v7727 = vpop.permute.xlu0 %7726
        %7728 = vrot.lane.b32.xlu0 %v5802, 80
        %v7729 = vpop.permute.xlu0 %7728
        %7730 = vrot.lane.b32.xlu0 %v5803, 80
        %v7731 = vpop.permute.xlu0 %7730
        %7732 = vrot.lane.b32.xlu0 %v5804, 80
        %v7733 = vpop.permute.xlu0 %7732
        %7734 = vrot.lane.b32.xlu0 %v5805, 80
        %v7735 = vpop.permute.xlu0 %7734
        %7736 = vrot.lane.b32.xlu0 %v5806, 80
        %v7737 = vpop.permute.xlu0 %7736
        %7738 = vrot.lane.b32.xlu0 %v5807, 80
        %v7739 = vpop.permute.xlu0 %7738
        %7740 = vrot.lane.b32.xlu0 %v5808, 80
        %v7741 = vpop.permute.xlu0 %7740
        %7742 = vrot.lane.b32.xlu0 %v5809, 80
        %v7743 = vpop.permute.xlu0 %7742
        %7744 = vrot.lane.b32.xlu0 %v5810, 80
        %v7745 = vpop.permute.xlu0 %7744
        %7746 = vrot.lane.b32.xlu0 %v5811, 80
        %v7747 = vpop.permute.xlu0 %7746
        %7748 = vrot.lane.b32.xlu0 %v5812, 80
        %v7749 = vpop.permute.xlu0 %7748
        %7750 = vrot.lane.b32.xlu0 %v5813, 80
        %v7751 = vpop.permute.xlu0 %7750
        %7752 = vrot.lane.b32.xlu0 %v5814, 80
        %v7753 = vpop.permute.xlu0 %7752
        %7754 = vrot.lane.b32.xlu0 %v5815, 80
        %v7755 = vpop.permute.xlu0 %7754
        %7788 = vrot.lane.b32.xlu0 %v6618, 96
        %v7789 = vpop.permute.xlu0 %7788
        %7790 = vrot.lane.b32.xlu0 %v6619, 96
        %v7791 = vpop.permute.xlu0 %7790
        %7792 = vrot.lane.b32.xlu0 %v6620, 96
        %v7793 = vpop.permute.xlu0 %7792
        %7794 = vrot.lane.b32.xlu0 %v6621, 96
        %v7795 = vpop.permute.xlu0 %7794
        %7796 = vrot.lane.b32.xlu0 %v6622, 96
        %v7797 = vpop.permute.xlu0 %7796
        %7798 = vrot.lane.b32.xlu0 %v6623, 96
        %v7799 = vpop.permute.xlu0 %7798
        %7800 = vrot.lane.b32.xlu0 %v6624, 96
        %v7801 = vpop.permute.xlu0 %7800
        %7802 = vrot.lane.b32.xlu0 %v6625, 96
        %v7803 = vpop.permute.xlu0 %7802
        %7804 = vrot.lane.b32.xlu0 %v6626, 96
        %v7805 = vpop.permute.xlu0 %7804
        %7806 = vrot.lane.b32.xlu0 %v6627, 96
        %v7807 = vpop.permute.xlu0 %7806
        %7808 = vrot.lane.b32.xlu0 %v6628, 96
        %v7809 = vpop.permute.xlu0 %7808
        %7810 = vrot.lane.b32.xlu0 %v6629, 96
        %v7811 = vpop.permute.xlu0 %7810
        %7812 = vrot.lane.b32.xlu0 %v6630, 96
        %v7813 = vpop.permute.xlu0 %7812
        %7814 = vrot.lane.b32.xlu0 %v6631, 96
        %v7815 = vpop.permute.xlu0 %7814
        %7816 = vrot.lane.b32.xlu0 %v6632, 96
        %v7817 = vpop.permute.xlu0 %7816
        %7818 = vrot.lane.b32.xlu0 %v6633, 96
        %v7819 = vpop.permute.xlu0 %7818
        %7852 = vrot.lane.b32.xlu0 %v7436, 112
        %v7853 = vpop.permute.xlu0 %7852
        %7854 = vrot.lane.b32.xlu0 %v7437, 112
        %v7855 = vpop.permute.xlu0 %7854
        %7856 = vrot.lane.b32.xlu0 %v7438, 112
        %v7857 = vpop.permute.xlu0 %7856
        %7858 = vrot.lane.b32.xlu0 %v7439, 112
        %v7859 = vpop.permute.xlu0 %7858
        %7860 = vrot.lane.b32.xlu0 %v7440, 112
        %v7861 = vpop.permute.xlu0 %7860
        %7862 = vrot.lane.b32.xlu0 %v7441, 112
        %v7863 = vpop.permute.xlu0 %7862
        %7864 = vrot.lane.b32.xlu0 %v7442, 112
        %v7865 = vpop.permute.xlu0 %7864
        %7866 = vrot.lane.b32.xlu0 %v7443, 112
        %v7867 = vpop.permute.xlu0 %7866
        %7868 = vrot.lane.b32.xlu0 %v7444, 112
        %v7869 = vpop.permute.xlu0 %7868
        %7870 = vrot.lane.b32.xlu0 %v7445, 112
        %v7871 = vpop.permute.xlu0 %7870
        %7872 = vrot.lane.b32.xlu0 %v7446, 112
        %v7873 = vpop.permute.xlu0 %7872
        %7874 = vrot.lane.b32.xlu0 %v7447, 112
        %v7875 = vpop.permute.xlu0 %7874
        %7876 = vrot.lane.b32.xlu0 %v7448, 112
        %v7877 = vpop.permute.xlu0 %7876
        %7878 = vrot.lane.b32.xlu0 %v7449, 112
        %v7879 = vpop.permute.xlu0 %7878
        %7880 = vrot.lane.b32.xlu0 %v7450, 112
        %v7881 = vpop.permute.xlu0 %7880
        %7882 = vrot.lane.b32.xlu0 %v7451, 112
        %v7883 = vpop.permute.xlu0 %7882
        %v7900 = vsel %vm1019, %v1678, %v7469
        %v7901 = vsel %vm1019, %v1679, %v7471
        %v7902 = vsel %vm1019, %v1680, %v7473
        %v7903 = vsel %vm1019, %v1681, %v7475
        %v7904 = vsel %vm1019, %v1682, %v7477
        %v7905 = vsel %vm1019, %v1683, %v7479
        %v7906 = vsel %vm1019, %v1684, %v7481
        %v7907 = vsel %vm1019, %v1685, %v7483
        %v7908 = vsel %vm1019, %v1686, %v7485
        %v7909 = vsel %vm1019, %v1687, %v7487
        %v7910 = vsel %vm1019, %v1688, %v7489
        %v7911 = vsel %vm1019, %v1689, %v7491
        %v7912 = vsel %vm1019, %v1690, %v7493
        %v7913 = vsel %vm1019, %v1691, %v7495
        %v7914 = vsel %vm1019, %v1692, %v7497
        %v7915 = vsel %vm1019, %v1693, %v7499
        %vm7916 = vcmask 261120
        %v7917 = vsel %vm7916, %v7900, %v7533
        %v7918 = vsel %vm7916, %v7901, %v7535
        %v7919 = vsel %vm7916, %v7902, %v7537
        %v7920 = vsel %vm7916, %v7903, %v7539
        %v7921 = vsel %vm7916, %v7904, %v7541
        %v7922 = vsel %vm7916, %v7905, %v7543
        %v7923 = vsel %vm7916, %v7906, %v7545
        %v7924 = vsel %vm7916, %v7907, %v7547
        %v7925 = vsel %vm7916, %v7908, %v7549
        %v7926 = vsel %vm7916, %v7909, %v7551
        %v7927 = vsel %vm7916, %v7910, %v7553
        %v7928 = vsel %vm7916, %v7911, %v7555
        %v7929 = vsel %vm7916, %v7912, %v7557
        %v7930 = vsel %vm7916, %v7913, %v7559
        %v7931 = vsel %vm7916, %v7914, %v7561
        %v7932 = vsel %vm7916, %v7915, %v7563
        %vm7933 = vcmask 392192
        %v7934 = vsel %vm7933, %v7917, %v7597
        %v7935 = vsel %vm7933, %v7918, %v7599
        %v7936 = vsel %vm7933, %v7919, %v7601
        %v7937 = vsel %vm7933, %v7920, %v7603
        %v7938 = vsel %vm7933, %v7921, %v7605
        %v7939 = vsel %vm7933, %v7922, %v7607
        %v7940 = vsel %vm7933, %v7923, %v7609
        %v7941 = vsel %vm7933, %v7924, %v7611
        %v7942 = vsel %vm7933, %v7925, %v7613
        %v7943 = vsel %vm7933, %v7926, %v7615
        %v7944 = vsel %vm7933, %v7927, %v7617
        %v7945 = vsel %vm7933, %v7928, %v7619
        %v7946 = vsel %vm7933, %v7929, %v7621
        %v7947 = vsel %vm7933, %v7930, %v7623
        %v7948 = vsel %vm7933, %v7931, %v7625
        %v7949 = vsel %vm7933, %v7932, %v7627
        %vm7950 = vcmask 523264
        %v7951 = vsel %vm7950, %v7934, %v7661
        %v7952 = vsel %vm7950, %v7935, %v7663
        %v7953 = vsel %vm7950, %v7936, %v7665
        %v7954 = vsel %vm7950, %v7937, %v7667
        %v7955 = vsel %vm7950, %v7938, %v7669
        %v7956 = vsel %vm7950, %v7939, %v7671
        %v7957 = vsel %vm7950, %v7940, %v7673
        %v7958 = vsel %vm7950, %v7941, %v7675
        %v7959 = vsel %vm7950, %v7942, %v7677
        %v7960 = vsel %vm7950, %v7943, %v7679
        %v7961 = vsel %vm7950, %v7944, %v7681
        %v7962 = vsel %vm7950, %v7945, %v7683
        %v7963 = vsel %vm7950, %v7946, %v7685
        %v7964 = vsel %vm7950, %v7947, %v7687
        %v7965 = vsel %vm7950, %v7948, %v7689
        %v7966 = vsel %vm7950, %v7949, %v7691
        %vm7967 = vcmask 654336
        %v7968 = vsel %vm7967, %v7951, %v7725
        %v7969 = vsel %vm7967, %v7952, %v7727
        %v7970 = vsel %vm7967, %v7953, %v7729
        %v7971 = vsel %vm7967, %v7954, %v7731
        %v7972 = vsel %vm7967, %v7955, %v7733
        %v7973 = vsel %vm7967, %v7956, %v7735
        %v7974 = vsel %vm7967, %v7957, %v7737
        %v7975 = vsel %vm7967, %v7958, %v7739
        %v7976 = vsel %vm7967, %v7959, %v7741
        %v7977 = vsel %vm7967, %v7960, %v7743
        %v7978 = vsel %vm7967, %v7961, %v7745
        %v7979 = vsel %vm7967, %v7962, %v7747
        %v7980 = vsel %vm7967, %v7963, %v7749
        %v7981 = vsel %vm7967, %v7964, %v7751
        %v7982 = vsel %vm7967, %v7965, %v7753
        %v7983 = vsel %vm7967, %v7966, %v7755
        %vm7984 = vcmask 785408
        %v7985 = vsel %vm7984, %v7968, %v7789
        %v7986 = vsel %vm7984, %v7969, %v7791
        %v7987 = vsel %vm7984, %v7970, %v7793
        %v7988 = vsel %vm7984, %v7971, %v7795
        %v7989 = vsel %vm7984, %v7972, %v7797
        %v7990 = vsel %vm7984, %v7973, %v7799
        %v7991 = vsel %vm7984, %v7974, %v7801
        %v7992 = vsel %vm7984, %v7975, %v7803
        %v7993 = vsel %vm7984, %v7976, %v7805
        %v7994 = vsel %vm7984, %v7977, %v7807
        %v7995 = vsel %vm7984, %v7978, %v7809
        %v7996 = vsel %vm7984, %v7979, %v7811
        %v7997 = vsel %vm7984, %v7980, %v7813
        %v7998 = vsel %vm7984, %v7981, %v7815
        %v7999 = vsel %vm7984, %v7982, %v7817
        %v8000 = vsel %vm7984, %v7983, %v7819
        %vm8001 = vcmask 916480
        %v8002 = vsel %vm8001, %v7985, %v7853
        %v8003 = vsel %vm8001, %v7986, %v7855
        %v8004 = vsel %vm8001, %v7987, %v7857
        %v8005 = vsel %vm8001, %v7988, %v7859
        %v8006 = vsel %vm8001, %v7989, %v7861
        %v8007 = vsel %vm8001, %v7990, %v7863
        %v8008 = vsel %vm8001, %v7991, %v7865
        %v8009 = vsel %vm8001, %v7992, %v7867
        %v8010 = vsel %vm8001, %v7993, %v7869
        %v8011 = vsel %vm8001, %v7994, %v7871
        %v8012 = vsel %vm8001, %v7995, %v7873
        %v8013 = vsel %vm8001, %v7996, %v7875
        %v8014 = vsel %vm8001, %v7997, %v7877
        %v8015 = vsel %vm8001, %v7998, %v7879
        %v8016 = vsel %vm8001, %v7999, %v7881
        %v8017 = vsel %vm8001, %v8000, %v7883
        %v8018 = vld [vmem:[#allocation11] sm:$0xff]
        %v8019 = vld [vmem:[#allocation11 + $0x8] sm:$0xff]
        %v8020 = vld [vmem:[#allocation11 + $0x10] sm:$0xff]
        %v8021 = vld [vmem:[#allocation11 + $0x18] sm:$0xff]
        %v8022 = vld [vmem:[#allocation11 + $0x20] sm:$0xff]
        %v8023 = vld [vmem:[#allocation11 + $0x28] sm:$0xff]
        %v8024 = vld [vmem:[#allocation11 + $0x30] sm:$0xff]
        %v8025 = vld [vmem:[#allocation11 + $0x38] sm:$0xff]
        %v8026 = vld [vmem:[#allocation11 + $0x40] sm:$0xff]
        %v8027 = vld [vmem:[#allocation11 + $0x48] sm:$0xff]
        %v8028 = vld [vmem:[#allocation11 + $0x50] sm:$0xff]
        %v8029 = vld [vmem:[#allocation11 + $0x58] sm:$0xff]
        %v8030 = vld [vmem:[#allocation11 + $0x60] sm:$0xff]
        %v8031 = vld [vmem:[#allocation11 + $0x68] sm:$0xff]
        %v8032 = vld [vmem:[#allocation11 + $0x70] sm:$0xff]
        %v8033 = vld [vmem:[#allocation11 + $0x78] sm:$0xff]
        %v8034 = vld [vmem:[%s5] sm:$0x1]
        %v8036 = vlaneseq
        %v8037 = vshrl.u32 %v8036, 7
        %v8038 = vsub.s32 0, %v8037
        %v8039 = vrot.slane %v8034, %v8038
        %8041 = vmatprep.subr.mxu0 0.0
        %8042 = vmatpush1.msra.mxu0 %v8018
        %8043 = vmatprep.subr.mxu0 0.0
        %8044 = vmatpush1.msra.mxu0 %v8019
        %8045 = vmatprep.subr.mxu0 0.0
        %8046 = vmatpush1.msra.mxu0 %v8020
        %8047 = vmatprep.subr.mxu0 0.0
        %8048 = vmatpush1.msra.mxu0 %v8021
        %8049 = vmatprep.subr.mxu0 0.0
        %8050 = vmatpush1.msra.mxu0 %v8022
        %8051 = vmatprep.subr.mxu0 0.0
        %8052 = vmatpush1.msra.mxu0 %v8023
        %8053 = vmatprep.subr.mxu0 0.0
        %8054 = vmatpush1.msra.mxu0 %v8024
        %8055 = vmatprep.subr.mxu0 0.0
        %8056 = vmatpush1.msra.mxu0 %v8025
        %8057 = vmatprep.subr.mxu0 0.0
        %8058 = vmatpush1.msra.mxu0 %v8026
        %8059 = vmatprep.subr.mxu0 0.0
        %8060 = vmatpush1.msra.mxu0 %v8027
        %8061 = vmatprep.subr.mxu0 0.0
        %8062 = vmatpush1.msra.mxu0 %v8028
        %8063 = vmatprep.subr.mxu0 0.0
        %8064 = vmatpush1.msra.mxu0 %v8029
        %8065 = vmatprep.subr.mxu0 0.0
        %8066 = vmatpush1.msra.mxu0 %v8030
        %8067 = vmatprep.subr.mxu0 0.0
        %8068 = vmatpush1.msra.mxu0 %v8031
        %8069 = vmatprep.subr.mxu0 0.0
        %8070 = vmatpush1.msra.mxu0 %v8032
        %8071 = vmatprep.subr.mxu0 0.0
        %8072 = vmatpush1.msra.mxu0 %v8033
        %8073 = vmatprep.subr.mxu0 0.0
        %8074 = vmatpush1.msra.mxu0 0.0
        %8075 = vmatprep.subr.mxu0 0.0
        %8076 = vmatpush1.msra.mxu0 0.0
        %8077 = vmatprep.subr.mxu0 0.0
        %8078 = vmatpush1.msra.mxu0 0.0
        %8079 = vmatprep.subr.mxu0 0.0
        %8080 = vmatpush1.msra.mxu0 0.0
        %8081 = vmatprep.subr.mxu0 0.0
        %8082 = vmatpush1.msra.mxu0 0.0
        %8083 = vmatprep.subr.mxu0 0.0
        %8084 = vmatpush1.msra.mxu0 0.0
        %8085 = vmatprep.subr.mxu0 0.0
        %8086 = vmatpush1.msra.mxu0 0.0
        %8087 = vmatprep.subr.mxu0 0.0
        %8088 = vmatpush1.msra.mxu0 0.0
        %8089 = vmatprep.subr.mxu0 0.0
        %8090 = vmatpush1.msra.mxu0 0.0
        %8091 = vmatprep.subr.mxu0 0.0
        %8092 = vmatpush1.msra.mxu0 0.0
        %8093 = vmatprep.subr.mxu0 0.0
        %8094 = vmatpush1.msra.mxu0 0.0
        %8095 = vmatprep.subr.mxu0 0.0
        %8096 = vmatpush1.msra.mxu0 0.0
        %8097 = vmatprep.subr.mxu0 0.0
        %8098 = vmatpush1.msra.mxu0 0.0
        %8099 = vmatprep.subr.mxu0 0.0
        %8100 = vmatpush1.msra.mxu0 0.0
        %8101 = vmatprep.subr.mxu0 0.0
        %8102 = vmatpush1.msra.mxu0 0.0
        %8103 = vmatprep.subr.mxu0 0.0
        %8104 = vmatpush1.msra.mxu0 0.0
        %8105 = vmatprep.mubr.f32.mxu0 0.0
        %8106 = vmatmul.mubr.f32.gmra.mrb[0].mxu0 %v8002
        %v8107 = vpop.f32.mrb[0].mxu0
        %v8108 = vadd.f32 %v8039, %v8107
        %v8109 = vpop.f32.mrb[0].mxu0
        %8110 = vmatprep.mubr.f32.mxu0 0.0
        %8111 = vmatmul.mubr.f32.gmra.mrb[0].mxu0 %v8003
        %v8112 = vpop.f32.mrb[0].mxu0
        %v8113 = vadd.f32 %v8039, %v8112
        %v8114 = vpop.f32.mrb[0].mxu0
        %8115 = vmatprep.mubr.f32.mxu0 0.0
        %8116 = vmatmul.mubr.f32.gmra.mrb[0].mxu0 %v8004
        %v8117 = vpop.f32.mrb[0].mxu0
        %v8118 = vadd.f32 %v8039, %v8117
        %v8119 = vpop.f32.mrb[0].mxu0
        %8120 = vmatprep.mubr.f32.mxu0 0.0
        %8121 = vmatmul.mubr.f32.gmra.mrb[0].mxu0 %v8005
        %v8122 = vpop.f32.mrb[0].mxu0
        %v8123 = vadd.f32 %v8039, %v8122
        %v8124 = vpop.f32.mrb[0].mxu0
        %8125 = vmatprep.mubr.f32.mxu0 0.0
        %8126 = vmatmul.mubr.f32.gmra.mrb[0].mxu0 %v8006
        %v8127 = vpop.f32.mrb[0].mxu0
        %v8128 = vadd.f32 %v8039, %v8127
        %v8129 = vpop.f32.mrb[0].mxu0
        %8130 = vmatprep.mubr.f32.mxu0 0.0
        %8131 = vmatmul.mubr.f32.gmra.mrb[0].mxu0 %v8007
        %v8132 = vpop.f32.mrb[0].mxu0
        %v8133 = vadd.f32 %v8039, %v8132
        %v8134 = vpop.f32.mrb[0].mxu0
        %8135 = vmatprep.mubr.f32.mxu0 0.0
        %8136 = vmatmul.mubr.f32.gmra.mrb[0].mxu0 %v8008
        %v8137 = vpop.f32.mrb[0].mxu0
        %v8138 = vadd.f32 %v8039, %v8137
        %v8139 = vpop.f32.mrb[0].mxu0
        %8140 = vmatprep.mubr.f32.mxu0 0.0
        %8141 = vmatmul.mubr.f32.gmra.mrb[0].mxu0 %v8009
        %v8142 = vpop.f32.mrb[0].mxu0
        %v8143 = vadd.f32 %v8039, %v8142
        %v8144 = vpop.f32.mrb[0].mxu0
        %8145 = vmatprep.mubr.f32.mxu0 0.0
        %8146 = vmatmul.mubr.f32.gmra.mrb[0].mxu0 %v8010
        %v8147 = vpop.f32.mrb[0].mxu0
        %v8148 = vadd.f32 %v8039, %v8147
        %v8149 = vpop.f32.mrb[0].mxu0
        %8150 = vmatprep.mubr.f32.mxu0 0.0
        %8151 = vmatmul.mubr.f32.gmra.mrb[0].mxu0 %v8011
        %v8152 = vpop.f32.mrb[0].mxu0
        %v8153 = vadd.f32 %v8039, %v8152
        %v8154 = vpop.f32.mrb[0].mxu0
        %8155 = vmatprep.mubr.f32.mxu0 0.0
        %8156 = vmatmul.mubr.f32.gmra.mrb[0].mxu0 %v8012
        %v8157 = vpop.f32.mrb[0].mxu0
        %v8158 = vadd.f32 %v8039, %v8157
        %v8159 = vpop.f32.mrb[0].mxu0
        %8160 = vmatprep.mubr.f32.mxu0 0.0
        %8161 = vmatmul.mubr.f32.gmra.mrb[0].mxu0 %v8013
        %v8162 = vpop.f32.mrb[0].mxu0
        %v8163 = vadd.f32 %v8039, %v8162
        %v8164 = vpop.f32.mrb[0].mxu0
        %8165 = vmatprep.mubr.f32.mxu0 0.0
        %8166 = vmatmul.mubr.f32.gmra.mrb[0].mxu0 %v8014
        %v8167 = vpop.f32.mrb[0].mxu0
        %v8168 = vadd.f32 %v8039, %v8167
        %v8169 = vpop.f32.mrb[0].mxu0
        %8170 = vmatprep.mubr.f32.mxu0 0.0
        %8171 = vmatmul.mubr.f32.gmra.mrb[0].mxu0 %v8015
        %v8172 = vpop.f32.mrb[0].mxu0
        %v8173 = vadd.f32 %v8039, %v8172
        %v8174 = vpop.f32.mrb[0].mxu0
        %8175 = vmatprep.mubr.f32.mxu0 0.0
        %8176 = vmatmul.mubr.f32.gmra.mrb[0].mxu0 %v8016
        %v8177 = vpop.f32.mrb[0].mxu0
        %v8178 = vadd.f32 %v8039, %v8177
        %v8179 = vpop.f32.mrb[0].mxu0
        %8180 = vmatprep.mubr.f32.mxu0 0.0
        %8181 = vmatmul.mubr.f32.gmra.mrb[0].mxu0 %v8017
        %v8182 = vpop.f32.mrb[0].mxu0
        %v8183 = vadd.f32 %v8039, %v8182
        %v8184 = vpop.f32.mrb[0].mxu0
        %8185 = vdwg.mxu0
        %8186 = vst [vmem:[%s370] sm:$0xff] %v8108
        %8187 = vst [vmem:[%s370 + $0x8] sm:$0xff] %v8113
        %8188 = vst [vmem:[%s370 + $0x10] sm:$0xff] %v8118
        %8189 = vst [vmem:[%s370 + $0x18] sm:$0xff] %v8123
        %8190 = vst [vmem:[%s370 + $0x20] sm:$0xff] %v8128
        %8191 = vst [vmem:[%s370 + $0x28] sm:$0xff] %v8133
        %8192 = vst [vmem:[%s370 + $0x30] sm:$0xff] %v8138
        %8193 = vst [vmem:[%s370 + $0x38] sm:$0xff] %v8143
        %8194 = vst [vmem:[%s370 + $0x40] sm:$0xff] %v8148
        %8195 = vst [vmem:[%s370 + $0x48] sm:$0xff] %v8153
        %8196 = vst [vmem:[%s370 + $0x50] sm:$0xff] %v8158
        %8197 = vst [vmem:[%s370 + $0x58] sm:$0xff] %v8163
        %8198 = vst [vmem:[%s370 + $0x60] sm:$0xff] %v8168
        %8199 = vst [vmem:[%s370 + $0x68] sm:$0xff] %v8173
        %8200 = vst [vmem:[%s370 + $0x70] sm:$0xff] %v8178
        %8201 = vst [vmem:[%s370 + $0x78] sm:$0xff] %v8183
        %s8202 = sand.u32 %s187, 1
        %s8203 = scalar_lea.sflag [#allocation5], %s8202
        %s8204 = sand.u32 %s187, 1
        %s8205 = smul.addr %s8204, 128
        %s8206 = scalar_lea.vmem [#allocation12], %s8205
        // Predicated region
        $region69: #{attention_forward.1} parent=43 // pred_check
          %p8207 = pneg %p197
        $region70: #{attention_forward.1} parent=43 // pred_check_branch
          %8209 = sbr.rel (%p8207) target = $region72
        $region71: #{attention_forward.1} parent=43 // pred_region
          %s8210 = smul.u32 16, %s32
          %s8212 = ssub.s32 2048, 2048
          %8213 = vsyncadd %s8203, %s8212
          %s8214 = smul.addr %s31, 32
          %s8215 = sadd.s32 %s8210, %s8214
          %s8216 = smul.addr %s8215, 128
          %s8217 = scalar_lea.hbm %s6, %s8216
          %s8218 = sshll.u32 %s8206, 4
          %s8219 = int_to_ptr.vmem [resolvable:$true] %s8218
          %8224 = dma.vmem_to_hbm [thread:$0]  %s8219, 2048, %s8217, %s8203, 128, 128, 8
        $region72: #{attention_forward.1} parent=43 // pred_fallthru
          _
      $region44: #{attention_forward.1} parent=5 // pred_fallthru
        _
      %p8225 = scmp.le.s32.totalorder 2, %s22
      // Predicated region
      $region73: #{attention_forward.1} parent=5 // pred_check
        %p8226 = pneg %p8225
      $region74: #{attention_forward.1} parent=5 // pred_check_branch
        %8228 = sbr.rel (%p8226) target = $region76
      $region75: #{attention_forward.1} parent=5 // pred_region
        %s8229 = ssub.s32 %s22, 2
        // Predicated region
        $region77: #{attention_forward.1} parent=75 // pred_check
          %p8230 = pneg %p203
        $region78: #{attention_forward.1} parent=75 // pred_check_branch
          %8232 = sbr.rel (%p8230) target = $region80
        $region79: #{attention_forward.1} parent=75 // pred_region
          %s8233 = sand.u32 %s188, 1
          %s8234 = scalar_lea.sflag [#allocation5], %s8233
          %s8235 = sand.u32 %s188, 1
          %s8236 = smul.addr %s8235, 128
          %s8237 = scalar_lea.vmem [#allocation12], %s8236
          %8238 = dma.done %s8234, 2048
        $region80: #{attention_forward.1} parent=75 // pred_fallthru
          _
      $region76: #{attention_forward.1} parent=5 // pred_fallthru
        _
    $region6: #{attention_forward.1} parent=1 // loop_footer
      %s26 = sadd.s32 1, %s22
    $region7: #{attention_forward.1} parent=1 // loop_footer_branch
      %21 = sbr.rel target = $region3
    $region8: #{attention_forward.1} parent=1 // loop_exit
      _
    %8239 = vsyncpa [#allocation4], 1
    %s8240 = scalar_lea.sflag [#allocation4], 1
    %8241 = vsyncpa %s8240, 1
    %8242 = vsyncpa [#allocation7], 1
    %s8243 = scalar_lea.sflag [#allocation7], 1
    %8244 = vsyncpa %s8243, 1
    %8245 = vsyncpa [#allocation10], 1
    %8246 = vsyncpa [#allocation5], 1
    %s8247 = scalar_lea.sflag [#allocation5], 1
    %8248 = vsyncpa %s8247, 1

</llo_original>
